<compile_context>
chip_gen: v6e
topology: v6e:2x2x1
jax: 0.10.0
libtpu: 0.0.40
codegen_flags: <defaults>
</compile_context>

<pallas_src>
import numpy as np
import jax
import jax.numpy as jnp
from jax.experimental import pallas as pl
from jax.experimental.pallas import tpu as pltpu

# ---------------- module hyper-parameters & problem sizes ----------------
IN_CH, OUT_CH = 4, 4
K = 3            # kernel_size
STRIDE = 2
PAD = 1
N, D, H, W = 2, 4, 8, 8                 # input x: (N, C_in, D, H, W)

PD = K - 1 - PAD                        # edge pad of the dilated input
DP = (D - 1) * STRIDE + 1 + 2 * PD      # dilated + padded spatial sizes
HP = (H - 1) * STRIDE + 1 + 2 * PD
WP = (W - 1) * STRIDE + 1 + 2 * PD
DOUT = (D - 1) * STRIDE - 2 * PAD + K   # ConvTranspose3d output sizes
HOUT = (H - 1) * STRIDE - 2 * PAD + K
WOUT = (W - 1) * STRIDE - 2 * PAD + K

CK = IN_CH * K * K * K                  # 108  contraction (im2col) size
NSPAT = DOUT * HOUT * WOUT              # 1575 flattened output spatial size

CKP = 128                               # contraction padded to lane-tile
NSPATP = ((NSPAT + 127) // 128) * 128   # 1664 = 13 * 128 lanes (lane-dense)
COP = 8                                 # out-channels padded to sublane tile


def _kernel(p_ref, w_ref, wse_ref, bse_ref, o_ref):
    # p_ref  : (1, CKP, NSPATP)   VMEM  im2col patches of sign(x), one sample
    # w_ref  : (COP, CKP)         VMEM  flipped deconv weights as a GEMM matrix
    # wse_ref: (COP, COP)         VMEM  SE 1x1x1 conv weight (zero-padded)
    # bse_ref: (COP, 1)           VMEM  SE bias (zero-padded)
    # o_ref  : (1, COP, NSPATP)   VMEM  per-sample output block (lane-dense)

    # ConvTranspose3d == one MXU matmul over the im2col patches.  Result stays
    # in vregs (no accumulator scratch, single store at the end).
    y = jnp.dot(w_ref[...], p_ref[0],
                preferred_element_type=jnp.float32,
                precision=jax.lax.Precision.HIGHEST)          # (COP, NSPATP)

    # SEGating: global average pool (padded lanes/rows are exactly zero, so
    # they do not perturb the sum; divide by the true spatial count), then the
    # 1x1x1 channel-mixing conv + sigmoid computed on a tiny (COP, 1) vector.
    inv_n = np.float32(1.0 / NSPAT)
    pooled = jnp.sum(y, axis=1, keepdims=True) * inv_n        # (COP, 1)
    wse = wse_ref[...]                                        # (COP, COP)
    z = bse_ref[...]                                          # (COP, 1)
    for c2 in range(OUT_CH):                                  # only real chans
        z = z + wse[:, c2:c2 + 1] * pooled[c2:c2 + 1, :]
    gate = jax.nn.sigmoid(z)                                  # (COP, 1)

    # Scale + ReLU, one aligned unmasked store of the whole block.
    o_ref[0] = jnp.maximum(y * gate, 0.0)


@jax.jit
def bin_conv_transpose3d(x, w, w_se, b_se):
    """x: (N, IN_CH, D, H, W) f32 -> (N, OUT_CH, DOUT, HOUT, WOUT) f32."""
    # ---- layout glue in the wrapper (pure data movement) ----
    # BinActive on the small undilated input, then zero-dilate + edge-pad.
    xb = jnp.sign(x)
    x_dil = jax.lax.pad(
        xb, jnp.float32(0),
        [(0, 0, 0), (0, 0, 0),
         (PD, PD, STRIDE - 1), (PD, PD, STRIDE - 1), (PD, PD, STRIDE - 1)])

    # im2col: patches[n, ci*K^3 + tap, flat_output_pos] = x_dil[n, ci, od+kd, oh+kh, ow+kw]
    rows = []
    for ci in range(IN_CH):
        for kd in range(K):
            for kh in range(K):
                for kw in range(K):
                    rows.append(
                        x_dil[:, ci, kd:kd + DOUT, kh:kh + HOUT, kw:kw + WOUT]
                        .reshape(N, NSPAT))
    patches = jnp.stack(rows, axis=1)                              # (N, CK, NSPAT)
    patches = jnp.pad(patches,
                      ((0, 0), (0, CKP - CK), (0, NSPATP - NSPAT)))  # lane-dense

    # Flipped deconv weights as a GEMM matrix: W_mat[co, ci*K^3 + tap].
    w_flip = w[:, :, ::-1, ::-1, ::-1]                             # (Cin,Cout,K,K,K)
    w_mat = jnp.transpose(w_flip, (1, 0, 2, 3, 4)).reshape(OUT_CH, CK)
    w_mat = jnp.pad(w_mat, ((0, COP - OUT_CH), (0, CKP - CK)))     # (COP, CKP)

    wse_p = jnp.pad(w_se, ((0, COP - OUT_CH), (0, COP - OUT_CH)))  # (COP, COP)
    bse_p = jnp.pad(b_se.reshape(OUT_CH, 1), ((0, COP - OUT_CH), (0, 0)))

    out_p = pl.pallas_call(
        _kernel,
        out_shape=jax.ShapeDtypeStruct((N, COP, NSPATP), jnp.float32),
        grid=(N,),
        in_specs=[
            pl.BlockSpec((1, CKP, NSPATP), lambda n: (n, 0, 0)),
            pl.BlockSpec((COP, CKP), lambda n: (0, 0)),
            pl.BlockSpec((COP, COP), lambda n: (0, 0)),
            pl.BlockSpec((COP, 1), lambda n: (0, 0)),
        ],
        out_specs=pl.BlockSpec((1, COP, NSPATP), lambda n: (n, 0, 0)),
        compiler_params=pltpu.CompilerParams(
            dimension_semantics=("parallel",)),   # batch is independent -> 2 TCs on v7x
    )(patches, w_mat, wse_p, bse_p)

    out = out_p[:, :OUT_CH, :NSPAT].reshape(N, OUT_CH, DOUT, HOUT, WOUT)
    return out


def _reference_numpy(x, w, w_se, b_se):
    """Direct (scatter) PyTorch-style reference: sign -> deconv -> SE -> ReLU."""
    xb = np.sign(x).astype(np.float32)
    out = np.zeros((N, OUT_CH, DOUT, HOUT, WOUT), np.float32)
    for n in range(N):
        for ci in range(IN_CH):
            for d in range(D):
                for h in range(H):
                    for wi in range(W):
                        v = xb[n, ci, d, h, wi]
                        if v == 0.0:
                            continue
                        for kd in range(K):
                            od = d * STRIDE - PAD + kd
                            if od < 0 or od >= DOUT:
                                continue
                            for kh in range(K):
                                oh = h * STRIDE - PAD + kh
                                if oh < 0 or oh >= HOUT:
                                    continue
                                for kw in range(K):
                                    ow = wi * STRIDE - PAD + kw
                                    if ow < 0 or ow >= WOUT:
                                        continue
                                    out[n, :, od, oh, ow] += v * w[ci, :, kd, kh, kw]
    pooled = out.mean(axis=(2, 3, 4))                      # (N, Cout)
    z = pooled @ w_se.T + b_se[None, :]
    gate = 1.0 / (1.0 + np.exp(-z))
    return np.maximum(out * gate[:, :, None, None, None], 0.0)


if __name__ == "__main__":
    key = jax.random.PRNGKey(0)
    kx, kw, kwse, kbse = jax.random.split(key, 4)
    x = jax.random.normal(kx, (N, IN_CH, D, H, W), jnp.float32)
    w = jax.random.normal(kw, (IN_CH, OUT_CH, K, K, K), jnp.float32) * 0.1
    w_se = jax.random.normal(kwse, (OUT_CH, OUT_CH), jnp.float32) * 0.1
    b_se = jax.random.normal(kbse, (OUT_CH,), jnp.float32) * 0.1

    out = jax.block_until_ready(bin_conv_transpose3d(x, w, w_se, b_se))

    ref = _reference_numpy(np.asarray(x), np.asarray(w),
                           np.asarray(w_se), np.asarray(b_se))
    assert out.shape == ref.shape, (out.shape, ref.shape)
    err = np.abs(np.asarray(out) - ref).max()
    if not np.allclose(np.asarray(out), ref, rtol=1e-3, atol=1e-3):
        raise SystemExit("mismatch: max abs err = %g" % err)
    print("KERNEL_OK")
</pallas_src>

<mosaic_0001>
module attributes {stable_mosaic.version = 11 : i64} {
  func.func @_kernel(%arg0: i32, %arg1: memref<1x128x1664xf32, #tpu.memory_space<vmem>>, %arg2: memref<8x128xf32, #tpu.memory_space<vmem>>, %arg3: memref<8x8xf32, #tpu.memory_space<vmem>>, %arg4: memref<8x1xf32, #tpu.memory_space<vmem>>, %arg5: memref<1x8x1664xf32, #tpu.memory_space<vmem>>) attributes {dimension_semantics = [#tpu.dimension_semantics<parallel>], iteration_bounds = array<i64: 2>, scalar_prefetch = 0 : i64, scratch_operands = 0 : i64, tpu.core_type = #tpu.core_type<tc>, window_params = [{transform_indices = @transform_0, window_bounds = array<i64: 1, 128, 1664>}, {pipeline_mode = #tpu.pipeline_mode<synchronous>, transform_indices = @transform_1, window_bounds = array<i64: 8, 128>}, {pipeline_mode = #tpu.pipeline_mode<synchronous>, transform_indices = @transform_2, window_bounds = array<i64: 8, 8>}, {pipeline_mode = #tpu.pipeline_mode<synchronous>, transform_indices = @transform_3, window_bounds = array<i64: 8, 1>}, {transform_indices = @transform_4, window_bounds = array<i64: 1, 8, 1664>}]} {
    %c0 = arith.constant 0 : index
    %c0_0 = arith.constant 0 : index
    %0 = vector.load %arg2[%c0, %c0_0] : memref<8x128xf32, #tpu.memory_space<vmem>>, vector<8x128xf32>
    %c0_1 = arith.constant 0 : index
    %c0_2 = arith.constant 0 : index
    %c0_3 = arith.constant 0 : index
    %1 = vector.load %arg1[%c0_1, %c0_2, %c0_3] : memref<1x128x1664xf32, #tpu.memory_space<vmem>>, vector<1x128x1664xf32>
    %2 = vector.shape_cast %1 : vector<1x128x1664xf32> to vector<128x1664xf32>
    %cst = arith.constant dense<0.000000e+00> : vector<8x1664xf32>
    %3 = tpu.matmul %0, %2, %cst {dimension_numbers = #tpu.dot_dimension_numbers<[1], [0], [0], [1], [0, 0, 1, 1], [], []>, precision = #tpu.contract_precision<fp32>} : vector<8x128xf32>, vector<128x1664xf32>, vector<8x1664xf32> -> vector<8x1664xf32>
    %cst_4 = arith.constant dense<0.000000e+00> : vector<8xf32>
    %4 = vector.multi_reduction <add>, %3, %cst_4 [1] : vector<8x1664xf32> to vector<8xf32>
    %5 = vector.shape_cast %4 : vector<8xf32> to vector<8x1xf32>
    %cst_5 = arith.constant 6.34920609E-4 : f32
    %6 = vector.broadcast %cst_5 : f32 to vector<8x1xf32>
    %7 = arith.mulf %5, %6 : vector<8x1xf32>
    %c0_6 = arith.constant 0 : index
    %c0_7 = arith.constant 0 : index
    %8 = vector.load %arg3[%c0_6, %c0_7] : memref<8x8xf32, #tpu.memory_space<vmem>>, vector<8x8xf32>
    %c0_8 = arith.constant 0 : index
    %c0_9 = arith.constant 0 : index
    %9 = vector.load %arg4[%c0_8, %c0_9] : memref<8x1xf32, #tpu.memory_space<vmem>>, vector<8x1xf32>
    %10 = vector.extract_strided_slice %8 {offsets = [0, 0], sizes = [8, 1], strides = [1, 1]} : vector<8x8xf32> to vector<8x1xf32>
    %11 = vector.extract_strided_slice %7 {offsets = [0, 0], sizes = [1, 1], strides = [1, 1]} : vector<8x1xf32> to vector<1x1xf32>
    %12 = vector.broadcast %11 : vector<1x1xf32> to vector<8x1xf32>
    %13 = arith.mulf %10, %12 : vector<8x1xf32>
    %14 = arith.addf %9, %13 : vector<8x1xf32>
    %15 = vector.extract_strided_slice %8 {offsets = [0, 1], sizes = [8, 1], strides = [1, 1]} : vector<8x8xf32> to vector<8x1xf32>
    %16 = vector.extract_strided_slice %7 {offsets = [1, 0], sizes = [1, 1], strides = [1, 1]} : vector<8x1xf32> to vector<1x1xf32>
    %17 = vector.broadcast %16 : vector<1x1xf32> to vector<8x1xf32>
    %18 = arith.mulf %15, %17 : vector<8x1xf32>
    %19 = arith.addf %14, %18 : vector<8x1xf32>
    %20 = vector.extract_strided_slice %8 {offsets = [0, 2], sizes = [8, 1], strides = [1, 1]} : vector<8x8xf32> to vector<8x1xf32>
    %21 = vector.extract_strided_slice %7 {offsets = [2, 0], sizes = [1, 1], strides = [1, 1]} : vector<8x1xf32> to vector<1x1xf32>
    %22 = vector.broadcast %21 : vector<1x1xf32> to vector<8x1xf32>
    %23 = arith.mulf %20, %22 : vector<8x1xf32>
    %24 = arith.addf %19, %23 : vector<8x1xf32>
    %25 = vector.extract_strided_slice %8 {offsets = [0, 3], sizes = [8, 1], strides = [1, 1]} : vector<8x8xf32> to vector<8x1xf32>
    %26 = vector.extract_strided_slice %7 {offsets = [3, 0], sizes = [1, 1], strides = [1, 1]} : vector<8x1xf32> to vector<1x1xf32>
    %27 = vector.broadcast %26 : vector<1x1xf32> to vector<8x1xf32>
    %28 = arith.mulf %25, %27 : vector<8x1xf32>
    %29 = arith.addf %24, %28 : vector<8x1xf32>
    %30 = arith.negf %29 : vector<8x1xf32>
    %31 = math.exp %30 : vector<8x1xf32>
    %cst_10 = arith.constant 1.000000e+00 : f32
    %32 = vector.broadcast %cst_10 : f32 to vector<8x1xf32>
    %33 = arith.addf %32, %31 : vector<8x1xf32>
    %34 = arith.divf %32, %33 : vector<8x1xf32>
    %35 = vector.broadcast %34 : vector<8x1xf32> to vector<8x1664xf32>
    %36 = arith.mulf %3, %35 : vector<8x1664xf32>
    %cst_11 = arith.constant 0.000000e+00 : f32
    %37 = vector.broadcast %cst_11 : f32 to vector<8x1664xf32>
    %38 = arith.maximumf %36, %37 : vector<8x1664xf32>
    %c0_12 = arith.constant 0 : index
    %c0_13 = arith.constant 0 : index
    %c0_14 = arith.constant 0 : index
    %39 = vector.load %arg5[%c0_12, %c0_13, %c0_14] : memref<1x8x1664xf32, #tpu.memory_space<vmem>>, vector<1x8x1664xf32>
    %40 = vector.shape_cast %39 : vector<1x8x1664xf32> to vector<8x1664xf32>
    %41 = vector.shape_cast %38 : vector<8x1664xf32> to vector<1x8x1664xf32>
    tpu.vector_store %arg5[%c0_12, %c0_13, %c0_14], %41 {strides = array<i32>} : memref<1x8x1664xf32, #tpu.memory_space<vmem>>, vector<1x8x1664xf32>,
    return
  }
  func.func @transform_0(%arg0: i32) -> (i32, i32, i32) {
    %c0_i32 = arith.constant 0 : i32
    %c0_i32_0 = arith.constant 0 : i32
    %c0_i32_1 = arith.constant 0 : i32
    return %arg0, %c0_i32, %c0_i32_0 : i32, i32, i32
  }
  func.func @transform_1(%arg0: i32) -> (i32, i32) {
    %c0_i32 = arith.constant 0 : i32
    %c0_i32_0 = arith.constant 0 : i32
    %c0_i32_1 = arith.constant 0 : i32
    return %c0_i32, %c0_i32_0 : i32, i32
  }
  func.func @transform_2(%arg0: i32) -> (i32, i32) {
    %c0_i32 = arith.constant 0 : i32
    %c0_i32_0 = arith.constant 0 : i32
    %c0_i32_1 = arith.constant 0 : i32
    return %c0_i32, %c0_i32_0 : i32, i32
  }
  func.func @transform_3(%arg0: i32) -> (i32, i32) {
    %c0_i32 = arith.constant 0 : i32
    %c0_i32_0 = arith.constant 0 : i32
    %c0_i32_1 = arith.constant 0 : i32
    return %c0_i32, %c0_i32_0 : i32, i32
  }
  func.func @transform_4(%arg0: i32) -> (i32, i32, i32) {
    %c0_i32 = arith.constant 0 : i32
    %c0_i32_0 = arith.constant 0 : i32
    %c0_i32_1 = arith.constant 0 : i32
    return %arg0, %c0_i32, %c0_i32_0 : i32, i32, i32
  }
}

</mosaic_0001>

<llo_original>
// kernel: squeeze.121
$region0: #{squeeze.121}
  %s0 = inlined_call_operand.vmem [shape: f32[2,1,7,15,15], index: 0, kind: input, shape index: {}]
  %s1 = inlined_call_operand.vmem [shape: f32[2,1,1575], index: 1, kind: output, shape index: {}]
  $region1: #{squeeze.121} parent=0
    #allocation0 [shape = 'u8[106496]{0}', space=vmem, size = 0x1a000, scoped, tag = 'scoped mem for output reshape']
    %s2 = smov 3
    %v3 = vld [vmem:[%s0] ss:$112 sm:%s2]
    %vm4 = vcmask 121856
    %5 = vst.msk [vmem:[#allocation0] ss:$104 sm:$0x3] %vm4, %v3
    %s6 = scalar_lea.vmem %s0, 18
    %s7 = smov 3
    %v8 = vld [vmem:[%s6] ss:$112 sm:%s7]
    %s9 = scalar_lea.vmem %s0, 18
    %s10 = smov 3
    %v11 = vld [vmem:[%s9] ss:$112 sm:%s10]
    %vm12 = vcmask 7168
    %v13 = vsel %vm12, %v11, %v8
    %14 = vrot.lane.b32.xlu0 %v13, 127
    %v15 = vpop.permute.xlu0 %14
    %vm16 = vcmask 113664
    %s17 = scalar_lea.vmem [#allocation0], 16
    %18 = vst.msk [vmem:[%s17] ss:$104 sm:$0x3] %vm16, %v15
    %vm19 = vcmask 1048568
    %s20 = scalar_lea.vmem [#allocation0], 8
    %21 = vst.msk [vmem:[%s20] ss:$104 sm:$0x3] %vm19, %v15
    %s22 = scalar_lea.vmem %s0, 36
    %s23 = smov 3
    %v24 = vld [vmem:[%s22] ss:$112 sm:%s23]
    %s25 = scalar_lea.vmem %s0, 148
    %s26 = smov 3
    %v27 = vld [vmem:[%s25] ss:$-112 sm:%s26]
    %vm28 = vcmask 15360
    %v29 = vsel %vm28, %v27, %v24
    %30 = vrot.lane.b32.xlu0 %v29, 126
    %v31 = vpop.permute.xlu0 %30
    %vm32 = vcmask 105472
    %s33 = scalar_lea.vmem [#allocation0], 32
    %34 = vst.msk [vmem:[%s33] ss:$104 sm:$0x3] %vm32, %v31
    %vm35 = vcmask 1048560
    %s36 = scalar_lea.vmem [#allocation0], 128
    %37 = vst.msk [vmem:[%s36] ss:$-104 sm:$0x3] %vm35, %v31
    %s38 = scalar_lea.vmem %s0, 54
    %s39 = smov 3
    %v40 = vld [vmem:[%s38] ss:$112 sm:%s39]
    %s41 = scalar_lea.vmem %s0, 54
    %s42 = smov 3
    %v43 = vld [vmem:[%s41] ss:$112 sm:%s42]
    %vm44 = vcmask 23552
    %v45 = vsel %vm44, %v43, %v40
    %46 = vrot.lane.b32.xlu0 %v45, 125
    %v47 = vpop.permute.xlu0 %46
    %vm48 = vcmask 97280
    %s49 = scalar_lea.vmem [#allocation0], 48
    %50 = vst.msk [vmem:[%s49] ss:$104 sm:$0x3] %vm48, %v47
    %vm51 = vcmask 1048552
    %s52 = scalar_lea.vmem [#allocation0], 40
    %53 = vst.msk [vmem:[%s52] ss:$104 sm:$0x3] %vm51, %v47
    %s54 = scalar_lea.vmem %s0, 72
    %s55 = smov 3
    %v56 = vld [vmem:[%s54] ss:$112 sm:%s55]
    %s57 = scalar_lea.vmem %s0, 184
    %s58 = smov 3
    %v59 = vld [vmem:[%s57] ss:$-112 sm:%s58]
    %vm60 = vcmask 31744
    %v61 = vsel %vm60, %v59, %v56
    %62 = vrot.lane.b32.xlu0 %v61, 124
    %v63 = vpop.permute.xlu0 %62
    %vm64 = vcmask 89088
    %s65 = scalar_lea.vmem [#allocation0], 64
    %66 = vst.msk [vmem:[%s65] ss:$104 sm:$0x3] %vm64, %v63
    %vm67 = vcmask 1048544
    %s68 = scalar_lea.vmem [#allocation0], 160
    %69 = vst.msk [vmem:[%s68] ss:$-104 sm:$0x3] %vm67, %v63
    %s70 = scalar_lea.vmem %s0, 90
    %s71 = smov 3
    %v72 = vld [vmem:[%s70] ss:$112 sm:%s71]
    %s73 = scalar_lea.vmem %s0, 90
    %s74 = smov 3
    %v75 = vld [vmem:[%s73] ss:$112 sm:%s74]
    %vm76 = vcmask 39936
    %v77 = vsel %vm76, %v75, %v72
    %78 = vrot.lane.b32.xlu0 %v77, 123
    %v79 = vpop.permute.xlu0 %78
    %vm80 = vcmask 80896
    %s81 = scalar_lea.vmem [#allocation0], 80
    %82 = vst.msk [vmem:[%s81] ss:$104 sm:$0x3] %vm80, %v79
    %vm83 = vcmask 1048536
    %s84 = scalar_lea.vmem [#allocation0], 72
    %85 = vst.msk [vmem:[%s84] ss:$104 sm:$0x3] %vm83, %v79
    %s86 = scalar_lea.vmem %s0, 108
    %s87 = smov 3
    %v88 = vld [vmem:[%s86] ss:$112 sm:%s87]
    %s89 = scalar_lea.vmem %s0, 220
    %s90 = smov 3
    %v91 = vld [vmem:[%s89] ss:$-112 sm:%s90]
    %vm92 = vcmask 48128
    %v93 = vsel %vm92, %v91, %v88
    %94 = vrot.lane.b32.xlu0 %v93, 122
    %v95 = vpop.permute.xlu0 %94
    %vm96 = vcmask 72704
    %s97 = scalar_lea.vmem [#allocation0], 96
    %98 = vst.msk [vmem:[%s97] ss:$104 sm:$0x3] %vm96, %v95
    %vm99 = vcmask 1048528
    %s100 = scalar_lea.vmem [#allocation0], 192
    %101 = vst.msk [vmem:[%s100] ss:$-104 sm:$0x3] %vm99, %v95
    %s102 = scalar_lea.vmem %s0, 8
    %s103 = smov 3
    %v104 = vld [vmem:[%s102] ss:$112 sm:%s103]
    %s105 = scalar_lea.vmem %s0, 8
    %s106 = smov 3
    %v107 = vld [vmem:[%s105] ss:$112 sm:%s106]
    %vm108 = vcmask 64512
    %v109 = vsel %vm108, %v107, %v104
    %110 = vrot.lane.b32.xlu0 %v109, 120
    %v111 = vpop.permute.xlu0 %110
    %vm112 = vcmask 56320
    %s113 = scalar_lea.vmem [#allocation0], 8
    %114 = vst.msk [vmem:[%s113] ss:$104 sm:$0x3] %vm112, %v111
    %vm115 = vcmask 1048512
    %116 = vst.msk [vmem:[#allocation0] ss:$104 sm:$0x3] %vm115, %v111
    %s117 = scalar_lea.vmem %s0, 138
    %s118 = smov 3
    %v119 = vld [vmem:[%s117] ss:$-112 sm:%s118]
    %s120 = scalar_lea.vmem %s0, 26
    %s121 = smov 3
    %v122 = vld [vmem:[%s120] ss:$112 sm:%s121]
    %vm123 = vcmask 72704
    %v124 = vsel %vm123, %v122, %v119
    %125 = vrot.lane.b32.xlu0 %v124, 119
    %v126 = vpop.permute.xlu0 %125
    %vm127 = vcmask 48128
    %s128 = scalar_lea.vmem [#allocation0], 128
    %129 = vst.msk [vmem:[%s128] ss:$-104 sm:$0x3] %vm127, %v126
    %vm130 = vcmask 1048504
    %s131 = scalar_lea.vmem [#allocation0], 16
    %132 = vst.msk [vmem:[%s131] ss:$104 sm:$0x3] %vm130, %v126
    %s133 = scalar_lea.vmem %s0, 44
    %s134 = smov 3
    %v135 = vld [vmem:[%s133] ss:$112 sm:%s134]
    %s136 = scalar_lea.vmem %s0, 44
    %s137 = smov 3
    %v138 = vld [vmem:[%s136] ss:$112 sm:%s137]
    %vm139 = vcmask 80896
    %v140 = vsel %vm139, %v138, %v135
    %141 = vrot.lane.b32.xlu0 %v140, 118
    %v142 = vpop.permute.xlu0 %141
    %vm143 = vcmask 39936
    %s144 = scalar_lea.vmem [#allocation0], 40
    %145 = vst.msk [vmem:[%s144] ss:$104 sm:$0x3] %vm143, %v142
    %vm146 = vcmask 1048496
    %s147 = scalar_lea.vmem [#allocation0], 32
    %148 = vst.msk [vmem:[%s147] ss:$104 sm:$0x3] %vm146, %v142
    %s149 = scalar_lea.vmem %s0, 174
    %s150 = smov 3
    %v151 = vld [vmem:[%s149] ss:$-112 sm:%s150]
    %s152 = scalar_lea.vmem %s0, 62
    %s153 = smov 3
    %v154 = vld [vmem:[%s152] ss:$112 sm:%s153]
    %vm155 = vcmask 89088
    %v156 = vsel %vm155, %v154, %v151
    %157 = vrot.lane.b32.xlu0 %v156, 117
    %v158 = vpop.permute.xlu0 %157
    %vm159 = vcmask 31744
    %s160 = scalar_lea.vmem [#allocation0], 160
    %161 = vst.msk [vmem:[%s160] ss:$-104 sm:$0x3] %vm159, %v158
    %vm162 = vcmask 1048488
    %s163 = scalar_lea.vmem [#allocation0], 48
    %164 = vst.msk [vmem:[%s163] ss:$104 sm:$0x3] %vm162, %v158
    %s165 = scalar_lea.vmem %s0, 81
    %s166 = smov 3
    %v167 = vld [vmem:[%s165] ss:$112 sm:%s166]
    %s168 = scalar_lea.vmem %s0, 81
    %s169 = smov 3
    %v170 = vld [vmem:[%s168] ss:$112 sm:%s169]
    %vm171 = vcmask 97280
    %v172 = vsel %vm171, %v170, %v167
    %173 = vrot.lane.b32.xlu0 %v172, 116
    %v174 = vpop.permute.xlu0 %173
    %vm175 = vcmask 23552
    %s176 = scalar_lea.vmem [#allocation0], 72
    %177 = vst.msk [vmem:[%s176] ss:$104 sm:$0x3] %vm175, %v174
    %vm178 = vcmask 1048480
    %s179 = scalar_lea.vmem [#allocation0], 64
    %180 = vst.msk [vmem:[%s179] ss:$104 sm:$0x3] %vm178, %v174
    %s181 = scalar_lea.vmem %s0, 211
    %s182 = smov 3
    %v183 = vld [vmem:[%s181] ss:$-112 sm:%s182]
    %s184 = scalar_lea.vmem %s0, 99
    %s185 = smov 3
    %v186 = vld [vmem:[%s184] ss:$112 sm:%s185]
    %vm187 = vcmask 105472
    %v188 = vsel %vm187, %v186, %v183
    %189 = vrot.lane.b32.xlu0 %v188, 115
    %v190 = vpop.permute.xlu0 %189
    %vm191 = vcmask 15360
    %s192 = scalar_lea.vmem [#allocation0], 192
    %193 = vst.msk [vmem:[%s192] ss:$-104 sm:$0x3] %vm191, %v190
    %vm194 = vcmask 1048472
    %s195 = scalar_lea.vmem [#allocation0], 80
    %196 = vst.msk [vmem:[%s195] ss:$104 sm:$0x3] %vm194, %v190
    %s197 = scalar_lea.vmem %s0, 17
    %s198 = smov 3
    %v199 = vld [vmem:[%s197] ss:$112 sm:%s198]
    %200 = vrot.lane.b32.xlu0 %v199, 112
    %v201 = vpop.permute.xlu0 %200
    %vm202 = vcmask 1040256
    %s203 = scalar_lea.vmem [#allocation0], 8
    %204 = vst.msk [vmem:[%s203] ss:$104 sm:$0x3] %vm202, %v201
    %s205 = scalar_lea.vmem %s0, 147
    %s206 = smov 3
    %v207 = vld [vmem:[%s205] ss:$-112 sm:%s206]
    %208 = vrot.lane.b32.xlu0 %v207, 111
    %v209 = vpop.permute.xlu0 %208
    %vm210 = vcmask 1032056
    %s211 = scalar_lea.vmem [#allocation0], 128
    %212 = vst.msk [vmem:[%s211] ss:$-104 sm:$0x3] %vm210, %v209
    %s213 = scalar_lea.vmem %s0, 53
    %s214 = smov 3
    %v215 = vld [vmem:[%s213] ss:$112 sm:%s214]
    %216 = vrot.lane.b32.xlu0 %v215, 110
    %v217 = vpop.permute.xlu0 %216
    %vm218 = vcmask 1023856
    %s219 = scalar_lea.vmem [#allocation0], 40
    %220 = vst.msk [vmem:[%s219] ss:$104 sm:$0x3] %vm218, %v217
    %s221 = scalar_lea.vmem %s0, 183
    %s222 = smov 3
    %v223 = vld [vmem:[%s221] ss:$-112 sm:%s222]
    %224 = vrot.lane.b32.xlu0 %v223, 109
    %v225 = vpop.permute.xlu0 %224
    %vm226 = vcmask 1015656
    %s227 = scalar_lea.vmem [#allocation0], 160
    %228 = vst.msk [vmem:[%s227] ss:$-104 sm:$0x3] %vm226, %v225
    %s229 = scalar_lea.vmem %s0, 89
    %s230 = smov 3
    %v231 = vld [vmem:[%s229] ss:$112 sm:%s230]
    %232 = vrot.lane.b32.xlu0 %v231, 108
    %v233 = vpop.permute.xlu0 %232
    %vm234 = vcmask 1007456
    %s235 = scalar_lea.vmem [#allocation0], 72
    %236 = vst.msk [vmem:[%s235] ss:$104 sm:$0x3] %vm234, %v233
    %s237 = scalar_lea.vmem %s0, 219
    %s238 = smov 3
    %v239 = vld [vmem:[%s237] ss:$-112 sm:%s238]
    %240 = vrot.lane.b32.xlu0 %v239, 107
    %v241 = vpop.permute.xlu0 %240
    %vm242 = vcmask 999256
    %s243 = scalar_lea.vmem [#allocation0], 192
    %244 = vst.msk [vmem:[%s243] ss:$-104 sm:$0x3] %vm242, %v241
    %s245 = scalar_lea.vmem %s0, 7
    %s246 = smov 3
    %v247 = vld [vmem:[%s245] ss:$112 sm:%s246]
    %248 = vrot.lane.b32.xlu0 %v247, 105
    %v249 = vpop.permute.xlu0 %248
    %vm250 = vcmask 982856
    %251 = vst.msk [vmem:[#allocation0] ss:$104 sm:$0x3] %vm250, %v249
    %s252 = scalar_lea.vmem %s0, 25
    %s253 = smov 3
    %v254 = vld [vmem:[%s252] ss:$112 sm:%s253]
    %255 = vrot.lane.b32.xlu0 %v254, 104
    %v256 = vpop.permute.xlu0 %255
    %vm257 = vcmask 974656
    %s258 = scalar_lea.vmem [#allocation0], 16
    %259 = vst.msk [vmem:[%s258] ss:$104 sm:$0x3] %vm257, %v256
    %s260 = scalar_lea.vmem %s0, 43
    %s261 = smov 3
    %v262 = vld [vmem:[%s260] ss:$112 sm:%s261]
    %263 = vrot.lane.b32.xlu0 %v262, 103
    %v264 = vpop.permute.xlu0 %263
    %vm265 = vcmask 966456
    %s266 = scalar_lea.vmem [#allocation0], 32
    %267 = vst.msk [vmem:[%s266] ss:$104 sm:$0x3] %vm265, %v264
    %s268 = scalar_lea.vmem %s0, 61
    %s269 = smov 3
    %v270 = vld [vmem:[%s268] ss:$112 sm:%s269]
    %271 = vrot.lane.b32.xlu0 %v270, 102
    %v272 = vpop.permute.xlu0 %271
    %vm273 = vcmask 958256
    %s274 = scalar_lea.vmem [#allocation0], 48
    %275 = vst.msk [vmem:[%s274] ss:$104 sm:$0x3] %vm273, %v272
    %s276 = scalar_lea.vmem %s0, 80
    %s277 = smov 3
    %v278 = vld [vmem:[%s276] ss:$112 sm:%s277]
    %279 = vrot.lane.b32.xlu0 %v278, 101
    %v280 = vpop.permute.xlu0 %279
    %vm281 = vcmask 950056
    %s282 = scalar_lea.vmem [#allocation0], 64
    %283 = vst.msk [vmem:[%s282] ss:$104 sm:$0x3] %vm281, %v280
    %s284 = scalar_lea.vmem %s0, 98
    %s285 = smov 3
    %v286 = vld [vmem:[%s284] ss:$112 sm:%s285]
    %287 = vrot.lane.b32.xlu0 %v286, 100
    %v288 = vpop.permute.xlu0 %287
    %vm289 = vcmask 941856
    %s290 = scalar_lea.vmem [#allocation0], 80
    %291 = vst.msk [vmem:[%s290] ss:$104 sm:$0x3] %vm289, %v288
    %s292 = scalar_lea.vmem %s0, 16
    %s293 = smov 3
    %v294 = vld [vmem:[%s292] ss:$112 sm:%s293]
    %295 = vrot.lane.b32.xlu0 %v294, 97
    %v296 = vpop.permute.xlu0 %295
    %vm297 = vcmask 917256
    %s298 = scalar_lea.vmem [#allocation0], 8
    %299 = vst.msk [vmem:[%s298] ss:$104 sm:$0x3] %vm297, %v296
    %s300 = scalar_lea.vmem %s0, 146
    %s301 = smov 3
    %v302 = vld [vmem:[%s300] ss:$-112 sm:%s301]
    %303 = vrot.lane.b32.xlu0 %v302, 96
    %v304 = vpop.permute.xlu0 %303
    %vm305 = vcmask 909056
    %s306 = scalar_lea.vmem [#allocation0], 128
    %307 = vst.msk [vmem:[%s306] ss:$-104 sm:$0x3] %vm305, %v304
    %s308 = scalar_lea.vmem %s0, 52
    %s309 = smov 3
    %v310 = vld [vmem:[%s308] ss:$112 sm:%s309]
    %311 = vrot.lane.b32.xlu0 %v310, 95
    %v312 = vpop.permute.xlu0 %311
    %vm313 = vcmask 900856
    %s314 = scalar_lea.vmem [#allocation0], 40
    %315 = vst.msk [vmem:[%s314] ss:$104 sm:$0x3] %vm313, %v312
    %s316 = scalar_lea.vmem %s0, 182
    %s317 = smov 3
    %v318 = vld [vmem:[%s316] ss:$-112 sm:%s317]
    %319 = vrot.lane.b32.xlu0 %v318, 94
    %v320 = vpop.permute.xlu0 %319
    %vm321 = vcmask 892656
    %s322 = scalar_lea.vmem [#allocation0], 160
    %323 = vst.msk [vmem:[%s322] ss:$-104 sm:$0x3] %vm321, %v320
    %s324 = scalar_lea.vmem %s0, 88
    %s325 = smov 3
    %v326 = vld [vmem:[%s324] ss:$112 sm:%s325]
    %327 = vrot.lane.b32.xlu0 %v326, 93
    %v328 = vpop.permute.xlu0 %327
    %vm329 = vcmask 884456
    %s330 = scalar_lea.vmem [#allocation0], 72
    %331 = vst.msk [vmem:[%s330] ss:$104 sm:$0x3] %vm329, %v328
    %s332 = scalar_lea.vmem %s0, 218
    %s333 = smov 3
    %v334 = vld [vmem:[%s332] ss:$-112 sm:%s333]
    %335 = vrot.lane.b32.xlu0 %v334, 92
    %v336 = vpop.permute.xlu0 %335
    %vm337 = vcmask 876256
    %s338 = scalar_lea.vmem [#allocation0], 192
    %339 = vst.msk [vmem:[%s338] ss:$-104 sm:$0x3] %vm337, %v336
    %s340 = scalar_lea.vmem %s0, 6
    %s341 = smov 3
    %v342 = vld [vmem:[%s340] ss:$112 sm:%s341]
    %343 = vrot.lane.b32.xlu0 %v342, 90
    %v344 = vpop.permute.xlu0 %343
    %vm345 = vcmask 859856
    %346 = vst.msk [vmem:[#allocation0] ss:$104 sm:$0x3] %vm345, %v344
    %s347 = scalar_lea.vmem %s0, 24
    %s348 = smov 3
    %v349 = vld [vmem:[%s347] ss:$112 sm:%s348]
    %350 = vrot.lane.b32.xlu0 %v349, 89
    %v351 = vpop.permute.xlu0 %350
    %vm352 = vcmask 851656
    %s353 = scalar_lea.vmem [#allocation0], 16
    %354 = vst.msk [vmem:[%s353] ss:$104 sm:$0x3] %vm352, %v351
    %s355 = scalar_lea.vmem %s0, 42
    %s356 = smov 3
    %v357 = vld [vmem:[%s355] ss:$112 sm:%s356]
    %358 = vrot.lane.b32.xlu0 %v357, 88
    %v359 = vpop.permute.xlu0 %358
    %vm360 = vcmask 843456
    %s361 = scalar_lea.vmem [#allocation0], 32
    %362 = vst.msk [vmem:[%s361] ss:$104 sm:$0x3] %vm360, %v359
    %s363 = scalar_lea.vmem %s0, 60
    %s364 = smov 3
    %v365 = vld [vmem:[%s363] ss:$112 sm:%s364]
    %366 = vrot.lane.b32.xlu0 %v365, 87
    %v367 = vpop.permute.xlu0 %366
    %vm368 = vcmask 835256
    %s369 = scalar_lea.vmem [#allocation0], 48
    %370 = vst.msk [vmem:[%s369] ss:$104 sm:$0x3] %vm368, %v367
    %s371 = scalar_lea.vmem %s0, 78
    %s372 = smov 3
    %v373 = vld [vmem:[%s371] ss:$112 sm:%s372]
    %374 = vrot.lane.b32.xlu0 %v373, 86
    %v375 = vpop.permute.xlu0 %374
    %vm376 = vcmask 827056
    %s377 = scalar_lea.vmem [#allocation0], 64
    %378 = vst.msk [vmem:[%s377] ss:$104 sm:$0x3] %vm376, %v375
    %s379 = scalar_lea.vmem %s0, 97
    %s380 = smov 3
    %v381 = vld [vmem:[%s379] ss:$112 sm:%s380]
    %382 = vrot.lane.b32.xlu0 %v381, 85
    %v383 = vpop.permute.xlu0 %382
    %vm384 = vcmask 818856
    %s385 = scalar_lea.vmem [#allocation0], 80
    %386 = vst.msk [vmem:[%s385] ss:$104 sm:$0x3] %vm384, %v383
    %s387 = scalar_lea.vmem %s0, 14
    %s388 = smov 3
    %v389 = vld [vmem:[%s387] ss:$112 sm:%s388]
    %390 = vrot.lane.b32.xlu0 %v389, 82
    %v391 = vpop.permute.xlu0 %390
    %vm392 = vcmask 794256
    %s393 = scalar_lea.vmem [#allocation0], 8
    %394 = vst.msk [vmem:[%s393] ss:$104 sm:$0x3] %vm392, %v391
    %s395 = scalar_lea.vmem %s0, 145
    %s396 = smov 3
    %v397 = vld [vmem:[%s395] ss:$-112 sm:%s396]
    %398 = vrot.lane.b32.xlu0 %v397, 81
    %v399 = vpop.permute.xlu0 %398
    %vm400 = vcmask 786056
    %s401 = scalar_lea.vmem [#allocation0], 128
    %402 = vst.msk [vmem:[%s401] ss:$-104 sm:$0x3] %vm400, %v399
    %s403 = scalar_lea.vmem %s0, 51
    %s404 = smov 3
    %v405 = vld [vmem:[%s403] ss:$112 sm:%s404]
    %406 = vrot.lane.b32.xlu0 %v405, 80
    %v407 = vpop.permute.xlu0 %406
    %vm408 = vcmask 777856
    %s409 = scalar_lea.vmem [#allocation0], 40
    %410 = vst.msk [vmem:[%s409] ss:$104 sm:$0x3] %vm408, %v407
    %s411 = scalar_lea.vmem %s0, 181
    %s412 = smov 3
    %v413 = vld [vmem:[%s411] ss:$-112 sm:%s412]
    %414 = vrot.lane.b32.xlu0 %v413, 79
    %v415 = vpop.permute.xlu0 %414
    %vm416 = vcmask 769656
    %s417 = scalar_lea.vmem [#allocation0], 160
    %418 = vst.msk [vmem:[%s417] ss:$-104 sm:$0x3] %vm416, %v415
    %s419 = scalar_lea.vmem %s0, 87
    %s420 = smov 3
    %v421 = vld [vmem:[%s419] ss:$112 sm:%s420]
    %422 = vrot.lane.b32.xlu0 %v421, 78
    %v423 = vpop.permute.xlu0 %422
    %vm424 = vcmask 761456
    %s425 = scalar_lea.vmem [#allocation0], 72
    %426 = vst.msk [vmem:[%s425] ss:$104 sm:$0x3] %vm424, %v423
    %s427 = scalar_lea.vmem %s0, 217
    %s428 = smov 3
    %v429 = vld [vmem:[%s427] ss:$-112 sm:%s428]
    %430 = vrot.lane.b32.xlu0 %v429, 77
    %v431 = vpop.permute.xlu0 %430
    %vm432 = vcmask 753256
    %s433 = scalar_lea.vmem [#allocation0], 192
    %434 = vst.msk [vmem:[%s433] ss:$-104 sm:$0x3] %vm432, %v431
    %s435 = scalar_lea.vmem %s0, 5
    %s436 = smov 3
    %v437 = vld [vmem:[%s435] ss:$112 sm:%s436]
    %438 = vrot.lane.b32.xlu0 %v437, 75
    %v439 = vpop.permute.xlu0 %438
    %vm440 = vcmask 736856
    %441 = vst.msk [vmem:[#allocation0] ss:$104 sm:$0x3] %vm440, %v439
    %s442 = scalar_lea.vmem %s0, 23
    %s443 = smov 3
    %v444 = vld [vmem:[%s442] ss:$112 sm:%s443]
    %445 = vrot.lane.b32.xlu0 %v444, 74
    %v446 = vpop.permute.xlu0 %445
    %vm447 = vcmask 728656
    %s448 = scalar_lea.vmem [#allocation0], 16
    %449 = vst.msk [vmem:[%s448] ss:$104 sm:$0x3] %vm447, %v446
    %s450 = scalar_lea.vmem %s0, 41
    %s451 = smov 3
    %v452 = vld [vmem:[%s450] ss:$112 sm:%s451]
    %453 = vrot.lane.b32.xlu0 %v452, 73
    %v454 = vpop.permute.xlu0 %453
    %vm455 = vcmask 720456
    %s456 = scalar_lea.vmem [#allocation0], 32
    %457 = vst.msk [vmem:[%s456] ss:$104 sm:$0x3] %vm455, %v454
    %s458 = scalar_lea.vmem %s0, 59
    %s459 = smov 3
    %v460 = vld [vmem:[%s458] ss:$112 sm:%s459]
    %461 = vrot.lane.b32.xlu0 %v460, 72
    %v462 = vpop.permute.xlu0 %461
    %vm463 = vcmask 712256
    %s464 = scalar_lea.vmem [#allocation0], 48
    %465 = vst.msk [vmem:[%s464] ss:$104 sm:$0x3] %vm463, %v462
    %s466 = scalar_lea.vmem %s0, 77
    %s467 = smov 3
    %v468 = vld [vmem:[%s466] ss:$112 sm:%s467]
    %469 = vrot.lane.b32.xlu0 %v468, 71
    %v470 = vpop.permute.xlu0 %469
    %vm471 = vcmask 704056
    %s472 = scalar_lea.vmem [#allocation0], 64
    %473 = vst.msk [vmem:[%s472] ss:$104 sm:$0x3] %vm471, %v470
    %s474 = scalar_lea.vmem %s0, 96
    %s475 = smov 3
    %v476 = vld [vmem:[%s474] ss:$112 sm:%s475]
    %477 = vrot.lane.b32.xlu0 %v476, 70
    %v478 = vpop.permute.xlu0 %477
    %vm479 = vcmask 695856
    %s480 = scalar_lea.vmem [#allocation0], 80
    %481 = vst.msk [vmem:[%s480] ss:$104 sm:$0x3] %vm479, %v478
    %s482 = scalar_lea.vmem %s0, 13
    %s483 = smov 3
    %v484 = vld [vmem:[%s482] ss:$112 sm:%s483]
    %485 = vrot.lane.b32.xlu0 %v484, 67
    %v486 = vpop.permute.xlu0 %485
    %vm487 = vcmask 671256
    %s488 = scalar_lea.vmem [#allocation0], 8
    %489 = vst.msk [vmem:[%s488] ss:$104 sm:$0x3] %vm487, %v486
    %s490 = scalar_lea.vmem %s0, 144
    %s491 = smov 3
    %v492 = vld [vmem:[%s490] ss:$-112 sm:%s491]
    %493 = vrot.lane.b32.xlu0 %v492, 66
    %v494 = vpop.permute.xlu0 %493
    %vm495 = vcmask 663056
    %s496 = scalar_lea.vmem [#allocation0], 128
    %497 = vst.msk [vmem:[%s496] ss:$-104 sm:$0x3] %vm495, %v494
    %s498 = scalar_lea.vmem %s0, 50
    %s499 = smov 3
    %v500 = vld [vmem:[%s498] ss:$112 sm:%s499]
    %501 = vrot.lane.b32.xlu0 %v500, 65
    %v502 = vpop.permute.xlu0 %501
    %vm503 = vcmask 654856
    %s504 = scalar_lea.vmem [#allocation0], 40
    %505 = vst.msk [vmem:[%s504] ss:$104 sm:$0x3] %vm503, %v502
    %s506 = scalar_lea.vmem %s0, 180
    %s507 = smov 3
    %v508 = vld [vmem:[%s506] ss:$-112 sm:%s507]
    %509 = vrot.lane.b32.xlu0 %v508, 64
    %v510 = vpop.permute.xlu0 %509
    %vm511 = vcmask 646656
    %s512 = scalar_lea.vmem [#allocation0], 160
    %513 = vst.msk [vmem:[%s512] ss:$-104 sm:$0x3] %vm511, %v510
    %s514 = scalar_lea.vmem %s0, 86
    %s515 = smov 3
    %v516 = vld [vmem:[%s514] ss:$112 sm:%s515]
    %517 = vrot.lane.b32.xlu0 %v516, 63
    %v518 = vpop.permute.xlu0 %517
    %vm519 = vcmask 638456
    %s520 = scalar_lea.vmem [#allocation0], 72
    %521 = vst.msk [vmem:[%s520] ss:$104 sm:$0x3] %vm519, %v518
    %s522 = scalar_lea.vmem %s0, 216
    %s523 = smov 3
    %v524 = vld [vmem:[%s522] ss:$-112 sm:%s523]
    %525 = vrot.lane.b32.xlu0 %v524, 62
    %v526 = vpop.permute.xlu0 %525
    %vm527 = vcmask 630256
    %s528 = scalar_lea.vmem [#allocation0], 192
    %529 = vst.msk [vmem:[%s528] ss:$-104 sm:$0x3] %vm527, %v526
    %s530 = scalar_lea.vmem %s0, 4
    %s531 = smov 3
    %v532 = vld [vmem:[%s530] ss:$112 sm:%s531]
    %533 = vrot.lane.b32.xlu0 %v532, 60
    %v534 = vpop.permute.xlu0 %533
    %vm535 = vcmask 613856
    %536 = vst.msk [vmem:[#allocation0] ss:$104 sm:$0x3] %vm535, %v534
    %s537 = scalar_lea.vmem %s0, 22
    %s538 = smov 3
    %v539 = vld [vmem:[%s537] ss:$112 sm:%s538]
    %540 = vrot.lane.b32.xlu0 %v539, 59
    %v541 = vpop.permute.xlu0 %540
    %vm542 = vcmask 605656
    %s543 = scalar_lea.vmem [#allocation0], 16
    %544 = vst.msk [vmem:[%s543] ss:$104 sm:$0x3] %vm542, %v541
    %s545 = scalar_lea.vmem %s0, 40
    %s546 = smov 3
    %v547 = vld [vmem:[%s545] ss:$112 sm:%s546]
    %548 = vrot.lane.b32.xlu0 %v547, 58
    %v549 = vpop.permute.xlu0 %548
    %vm550 = vcmask 597456
    %s551 = scalar_lea.vmem [#allocation0], 32
    %552 = vst.msk [vmem:[%s551] ss:$104 sm:$0x3] %vm550, %v549
    %s553 = scalar_lea.vmem %s0, 58
    %s554 = smov 3
    %v555 = vld [vmem:[%s553] ss:$112 sm:%s554]
    %556 = vrot.lane.b32.xlu0 %v555, 57
    %v557 = vpop.permute.xlu0 %556
    %vm558 = vcmask 589256
    %s559 = scalar_lea.vmem [#allocation0], 48
    %560 = vst.msk [vmem:[%s559] ss:$104 sm:$0x3] %vm558, %v557
    %s561 = scalar_lea.vmem %s0, 76
    %s562 = smov 3
    %v563 = vld [vmem:[%s561] ss:$112 sm:%s562]
    %564 = vrot.lane.b32.xlu0 %v563, 56
    %v565 = vpop.permute.xlu0 %564
    %vm566 = vcmask 581056
    %s567 = scalar_lea.vmem [#allocation0], 64
    %568 = vst.msk [vmem:[%s567] ss:$104 sm:$0x3] %vm566, %v565
    %s569 = scalar_lea.vmem %s0, 94
    %s570 = smov 3
    %v571 = vld [vmem:[%s569] ss:$112 sm:%s570]
    %572 = vrot.lane.b32.xlu0 %v571, 55
    %v573 = vpop.permute.xlu0 %572
    %vm574 = vcmask 572856
    %s575 = scalar_lea.vmem [#allocation0], 80
    %576 = vst.msk [vmem:[%s575] ss:$104 sm:$0x3] %vm574, %v573
    %s577 = scalar_lea.vmem %s0, 12
    %s578 = smov 3
    %v579 = vld [vmem:[%s577] ss:$112 sm:%s578]
    %580 = vrot.lane.b32.xlu0 %v579, 52
    %v581 = vpop.permute.xlu0 %580
    %vm582 = vcmask 548256
    %s583 = scalar_lea.vmem [#allocation0], 8
    %584 = vst.msk [vmem:[%s583] ss:$104 sm:$0x3] %vm582, %v581
    %s585 = scalar_lea.vmem %s0, 142
    %s586 = smov 3
    %v587 = vld [vmem:[%s585] ss:$-112 sm:%s586]
    %588 = vrot.lane.b32.xlu0 %v587, 51
    %v589 = vpop.permute.xlu0 %588
    %vm590 = vcmask 540056
    %s591 = scalar_lea.vmem [#allocation0], 128
    %592 = vst.msk [vmem:[%s591] ss:$-104 sm:$0x3] %vm590, %v589
    %s593 = scalar_lea.vmem %s0, 49
    %s594 = smov 3
    %v595 = vld [vmem:[%s593] ss:$112 sm:%s594]
    %596 = vrot.lane.b32.xlu0 %v595, 50
    %v597 = vpop.permute.xlu0 %596
    %vm598 = vcmask 531856
    %s599 = scalar_lea.vmem [#allocation0], 40
    %600 = vst.msk [vmem:[%s599] ss:$104 sm:$0x3] %vm598, %v597
    %s601 = scalar_lea.vmem %s0, 179
    %s602 = smov 3
    %v603 = vld [vmem:[%s601] ss:$-112 sm:%s602]
    %604 = vrot.lane.b32.xlu0 %v603, 49
    %v605 = vpop.permute.xlu0 %604
    %vm606 = vcmask 523656
    %s607 = scalar_lea.vmem [#allocation0], 160
    %608 = vst.msk [vmem:[%s607] ss:$-104 sm:$0x3] %vm606, %v605
    %s609 = scalar_lea.vmem %s0, 85
    %s610 = smov 3
    %v611 = vld [vmem:[%s609] ss:$112 sm:%s610]
    %612 = vrot.lane.b32.xlu0 %v611, 48
    %v613 = vpop.permute.xlu0 %612
    %vm614 = vcmask 515456
    %s615 = scalar_lea.vmem [#allocation0], 72
    %616 = vst.msk [vmem:[%s615] ss:$104 sm:$0x3] %vm614, %v613
    %s617 = scalar_lea.vmem %s0, 215
    %s618 = smov 3
    %v619 = vld [vmem:[%s617] ss:$-112 sm:%s618]
    %620 = vrot.lane.b32.xlu0 %v619, 47
    %v621 = vpop.permute.xlu0 %620
    %vm622 = vcmask 507256
    %s623 = scalar_lea.vmem [#allocation0], 192
    %624 = vst.msk [vmem:[%s623] ss:$-104 sm:$0x3] %vm622, %v621
    %s625 = scalar_lea.vmem %s0, 3
    %s626 = smov 3
    %v627 = vld [vmem:[%s625] ss:$112 sm:%s626]
    %628 = vrot.lane.b32.xlu0 %v627, 45
    %v629 = vpop.permute.xlu0 %628
    %vm630 = vcmask 490856
    %631 = vst.msk [vmem:[#allocation0] ss:$104 sm:$0x3] %vm630, %v629
    %s632 = scalar_lea.vmem %s0, 21
    %s633 = smov 3
    %v634 = vld [vmem:[%s632] ss:$112 sm:%s633]
    %635 = vrot.lane.b32.xlu0 %v634, 44
    %v636 = vpop.permute.xlu0 %635
    %vm637 = vcmask 482656
    %s638 = scalar_lea.vmem [#allocation0], 16
    %639 = vst.msk [vmem:[%s638] ss:$104 sm:$0x3] %vm637, %v636
    %s640 = scalar_lea.vmem %s0, 39
    %s641 = smov 3
    %v642 = vld [vmem:[%s640] ss:$112 sm:%s641]
    %643 = vrot.lane.b32.xlu0 %v642, 43
    %v644 = vpop.permute.xlu0 %643
    %vm645 = vcmask 474456
    %s646 = scalar_lea.vmem [#allocation0], 32
    %647 = vst.msk [vmem:[%s646] ss:$104 sm:$0x3] %vm645, %v644
    %s648 = scalar_lea.vmem %s0, 57
    %s649 = smov 3
    %v650 = vld [vmem:[%s648] ss:$112 sm:%s649]
    %651 = vrot.lane.b32.xlu0 %v650, 42
    %v652 = vpop.permute.xlu0 %651
    %vm653 = vcmask 466256
    %s654 = scalar_lea.vmem [#allocation0], 48
    %655 = vst.msk [vmem:[%s654] ss:$104 sm:$0x3] %vm653, %v652
    %s656 = scalar_lea.vmem %s0, 75
    %s657 = smov 3
    %v658 = vld [vmem:[%s656] ss:$112 sm:%s657]
    %659 = vrot.lane.b32.xlu0 %v658, 41
    %v660 = vpop.permute.xlu0 %659
    %vm661 = vcmask 458056
    %s662 = scalar_lea.vmem [#allocation0], 64
    %663 = vst.msk [vmem:[%s662] ss:$104 sm:$0x3] %vm661, %v660
    %s664 = scalar_lea.vmem %s0, 93
    %s665 = smov 3
    %v666 = vld [vmem:[%s664] ss:$112 sm:%s665]
    %667 = vrot.lane.b32.xlu0 %v666, 40
    %v668 = vpop.permute.xlu0 %667
    %vm669 = vcmask 449856
    %s670 = scalar_lea.vmem [#allocation0], 80
    %671 = vst.msk [vmem:[%s670] ss:$104 sm:$0x3] %vm669, %v668
    %s672 = scalar_lea.vmem %s0, 11
    %s673 = smov 3
    %v674 = vld [vmem:[%s672] ss:$112 sm:%s673]
    %675 = vrot.lane.b32.xlu0 %v674, 37
    %v676 = vpop.permute.xlu0 %675
    %vm677 = vcmask 425256
    %s678 = scalar_lea.vmem [#allocation0], 8
    %679 = vst.msk [vmem:[%s678] ss:$104 sm:$0x3] %vm677, %v676
    %s680 = scalar_lea.vmem %s0, 141
    %s681 = smov 3
    %v682 = vld [vmem:[%s680] ss:$-112 sm:%s681]
    %683 = vrot.lane.b32.xlu0 %v682, 36
    %v684 = vpop.permute.xlu0 %683
    %vm685 = vcmask 417056
    %s686 = scalar_lea.vmem [#allocation0], 128
    %687 = vst.msk [vmem:[%s686] ss:$-104 sm:$0x3] %vm685, %v684
    %s688 = scalar_lea.vmem %s0, 48
    %s689 = smov 3
    %v690 = vld [vmem:[%s688] ss:$112 sm:%s689]
    %691 = vrot.lane.b32.xlu0 %v690, 35
    %v692 = vpop.permute.xlu0 %691
    %vm693 = vcmask 408856
    %s694 = scalar_lea.vmem [#allocation0], 40
    %695 = vst.msk [vmem:[%s694] ss:$104 sm:$0x3] %vm693, %v692
    %s696 = scalar_lea.vmem %s0, 178
    %s697 = smov 3
    %v698 = vld [vmem:[%s696] ss:$-112 sm:%s697]
    %699 = vrot.lane.b32.xlu0 %v698, 34
    %v700 = vpop.permute.xlu0 %699
    %vm701 = vcmask 400656
    %s702 = scalar_lea.vmem [#allocation0], 160
    %703 = vst.msk [vmem:[%s702] ss:$-104 sm:$0x3] %vm701, %v700
    %s704 = scalar_lea.vmem %s0, 84
    %s705 = smov 3
    %v706 = vld [vmem:[%s704] ss:$112 sm:%s705]
    %707 = vrot.lane.b32.xlu0 %v706, 33
    %v708 = vpop.permute.xlu0 %707
    %vm709 = vcmask 392456
    %s710 = scalar_lea.vmem [#allocation0], 72
    %711 = vst.msk [vmem:[%s710] ss:$104 sm:$0x3] %vm709, %v708
    %s712 = scalar_lea.vmem %s0, 214
    %s713 = smov 3
    %v714 = vld [vmem:[%s712] ss:$-112 sm:%s713]
    %715 = vrot.lane.b32.xlu0 %v714, 32
    %v716 = vpop.permute.xlu0 %715
    %vm717 = vcmask 384256
    %s718 = scalar_lea.vmem [#allocation0], 192
    %719 = vst.msk [vmem:[%s718] ss:$-104 sm:$0x3] %vm717, %v716
    %s720 = scalar_lea.vmem %s0, 2
    %s721 = smov 3
    %v722 = vld [vmem:[%s720] ss:$112 sm:%s721]
    %723 = vrot.lane.b32.xlu0 %v722, 30
    %v724 = vpop.permute.xlu0 %723
    %vm725 = vcmask 367856
    %726 = vst.msk [vmem:[#allocation0] ss:$104 sm:$0x3] %vm725, %v724
    %s727 = scalar_lea.vmem %s0, 20
    %s728 = smov 3
    %v729 = vld [vmem:[%s727] ss:$112 sm:%s728]
    %730 = vrot.lane.b32.xlu0 %v729, 29
    %v731 = vpop.permute.xlu0 %730
    %vm732 = vcmask 359656
    %s733 = scalar_lea.vmem [#allocation0], 16
    %734 = vst.msk [vmem:[%s733] ss:$104 sm:$0x3] %vm732, %v731
    %s735 = scalar_lea.vmem %s0, 38
    %s736 = smov 3
    %v737 = vld [vmem:[%s735] ss:$112 sm:%s736]
    %738 = vrot.lane.b32.xlu0 %v737, 28
    %v739 = vpop.permute.xlu0 %738
    %vm740 = vcmask 351456
    %s741 = scalar_lea.vmem [#allocation0], 32
    %742 = vst.msk [vmem:[%s741] ss:$104 sm:$0x3] %vm740, %v739
    %s743 = scalar_lea.vmem %s0, 56
    %s744 = smov 3
    %v745 = vld [vmem:[%s743] ss:$112 sm:%s744]
    %746 = vrot.lane.b32.xlu0 %v745, 27
    %v747 = vpop.permute.xlu0 %746
    %vm748 = vcmask 343256
    %s749 = scalar_lea.vmem [#allocation0], 48
    %750 = vst.msk [vmem:[%s749] ss:$104 sm:$0x3] %vm748, %v747
    %s751 = scalar_lea.vmem %s0, 74
    %s752 = smov 3
    %v753 = vld [vmem:[%s751] ss:$112 sm:%s752]
    %754 = vrot.lane.b32.xlu0 %v753, 26
    %v755 = vpop.permute.xlu0 %754
    %vm756 = vcmask 335056
    %s757 = scalar_lea.vmem [#allocation0], 64
    %758 = vst.msk [vmem:[%s757] ss:$104 sm:$0x3] %vm756, %v755
    %s759 = scalar_lea.vmem %s0, 92
    %s760 = smov 3
    %v761 = vld [vmem:[%s759] ss:$112 sm:%s760]
    %762 = vrot.lane.b32.xlu0 %v761, 25
    %v763 = vpop.permute.xlu0 %762
    %vm764 = vcmask 326856
    %s765 = scalar_lea.vmem [#allocation0], 80
    %766 = vst.msk [vmem:[%s765] ss:$104 sm:$0x3] %vm764, %v763
    %s767 = scalar_lea.vmem %s0, 110
    %s768 = smov 3
    %v769 = vld [vmem:[%s767] ss:$112 sm:%s768]
    %770 = vrot.lane.b32.xlu0 %v769, 24
    %v771 = vpop.permute.xlu0 %770
    %vm772 = vcmask 318656
    %s773 = scalar_lea.vmem [#allocation0], 96
    %774 = vst.msk [vmem:[%s773] ss:$104 sm:$0x3] %vm772, %v771
    %s775 = scalar_lea.vmem %s0, 10
    %s776 = smov 3
    %v777 = vld [vmem:[%s775] ss:$112 sm:%s776]
    %778 = vrot.lane.b32.xlu0 %v777, 22
    %v779 = vpop.permute.xlu0 %778
    %vm780 = vcmask 302256
    %s781 = scalar_lea.vmem [#allocation0], 8
    %782 = vst.msk [vmem:[%s781] ss:$104 sm:$0x3] %vm780, %v779
    %s783 = scalar_lea.vmem %s0, 140
    %s784 = smov 3
    %v785 = vld [vmem:[%s783] ss:$-112 sm:%s784]
    %786 = vrot.lane.b32.xlu0 %v785, 21
    %v787 = vpop.permute.xlu0 %786
    %vm788 = vcmask 294056
    %s789 = scalar_lea.vmem [#allocation0], 128
    %790 = vst.msk [vmem:[%s789] ss:$-104 sm:$0x3] %vm788, %v787
    %s791 = scalar_lea.vmem %s0, 46
    %s792 = smov 3
    %v793 = vld [vmem:[%s791] ss:$112 sm:%s792]
    %794 = vrot.lane.b32.xlu0 %v793, 20
    %v795 = vpop.permute.xlu0 %794
    %vm796 = vcmask 285856
    %s797 = scalar_lea.vmem [#allocation0], 40
    %798 = vst.msk [vmem:[%s797] ss:$104 sm:$0x3] %vm796, %v795
    %s799 = scalar_lea.vmem %s0, 177
    %s800 = smov 3
    %v801 = vld [vmem:[%s799] ss:$-112 sm:%s800]
    %802 = vrot.lane.b32.xlu0 %v801, 19
    %v803 = vpop.permute.xlu0 %802
    %vm804 = vcmask 277656
    %s805 = scalar_lea.vmem [#allocation0], 160
    %806 = vst.msk [vmem:[%s805] ss:$-104 sm:$0x3] %vm804, %v803
    %s807 = scalar_lea.vmem %s0, 83
    %s808 = smov 3
    %v809 = vld [vmem:[%s807] ss:$112 sm:%s808]
    %810 = vrot.lane.b32.xlu0 %v809, 18
    %v811 = vpop.permute.xlu0 %810
    %vm812 = vcmask 269456
    %s813 = scalar_lea.vmem [#allocation0], 72
    %814 = vst.msk [vmem:[%s813] ss:$104 sm:$0x3] %vm812, %v811
    %s815 = scalar_lea.vmem %s0, 213
    %s816 = smov 3
    %v817 = vld [vmem:[%s815] ss:$-112 sm:%s816]
    %818 = vrot.lane.b32.xlu0 %v817, 17
    %v819 = vpop.permute.xlu0 %818
    %vm820 = vcmask 261256
    %s821 = scalar_lea.vmem [#allocation0], 192
    %822 = vst.msk [vmem:[%s821] ss:$-104 sm:$0x3] %vm820, %v819
    %s823 = scalar_lea.vmem %s0, 1
    %s824 = smov 3
    %v825 = vld [vmem:[%s823] ss:$112 sm:%s824]
    %826 = vrot.lane.b32.xlu0 %v825, 15
    %v827 = vpop.permute.xlu0 %826
    %vm828 = vcmask 244856
    %829 = vst.msk [vmem:[#allocation0] ss:$104 sm:$0x3] %vm828, %v827
    %s830 = scalar_lea.vmem %s0, 19
    %s831 = smov 3
    %v832 = vld [vmem:[%s830] ss:$112 sm:%s831]
    %833 = vrot.lane.b32.xlu0 %v832, 14
    %v834 = vpop.permute.xlu0 %833
    %vm835 = vcmask 236656
    %s836 = scalar_lea.vmem [#allocation0], 16
    %837 = vst.msk [vmem:[%s836] ss:$104 sm:$0x3] %vm835, %v834
    %s838 = scalar_lea.vmem %s0, 37
    %s839 = smov 3
    %v840 = vld [vmem:[%s838] ss:$112 sm:%s839]
    %841 = vrot.lane.b32.xlu0 %v840, 13
    %v842 = vpop.permute.xlu0 %841
    %vm843 = vcmask 228456
    %s844 = scalar_lea.vmem [#allocation0], 32
    %845 = vst.msk [vmem:[%s844] ss:$104 sm:$0x3] %vm843, %v842
    %s846 = scalar_lea.vmem %s0, 55
    %s847 = smov 3
    %v848 = vld [vmem:[%s846] ss:$112 sm:%s847]
    %849 = vrot.lane.b32.xlu0 %v848, 12
    %v850 = vpop.permute.xlu0 %849
    %vm851 = vcmask 220256
    %s852 = scalar_lea.vmem [#allocation0], 48
    %853 = vst.msk [vmem:[%s852] ss:$104 sm:$0x3] %vm851, %v850
    %s854 = scalar_lea.vmem %s0, 73
    %s855 = smov 3
    %v856 = vld [vmem:[%s854] ss:$112 sm:%s855]
    %857 = vrot.lane.b32.xlu0 %v856, 11
    %v858 = vpop.permute.xlu0 %857
    %vm859 = vcmask 212056
    %s860 = scalar_lea.vmem [#allocation0], 64
    %861 = vst.msk [vmem:[%s860] ss:$104 sm:$0x3] %vm859, %v858
    %s862 = scalar_lea.vmem %s0, 91
    %s863 = smov 3
    %v864 = vld [vmem:[%s862] ss:$112 sm:%s863]
    %865 = vrot.lane.b32.xlu0 %v864, 10
    %v866 = vpop.permute.xlu0 %865
    %vm867 = vcmask 203856
    %s868 = scalar_lea.vmem [#allocation0], 80
    %869 = vst.msk [vmem:[%s868] ss:$104 sm:$0x3] %vm867, %v866
    %s870 = scalar_lea.vmem %s0, 109
    %s871 = smov 3
    %v872 = vld [vmem:[%s870] ss:$112 sm:%s871]
    %873 = vrot.lane.b32.xlu0 %v872, 9
    %v874 = vpop.permute.xlu0 %873
    %vm875 = vcmask 195656
    %s876 = scalar_lea.vmem [#allocation0], 96
    %877 = vst.msk [vmem:[%s876] ss:$104 sm:$0x3] %vm875, %v874
    %s878 = scalar_lea.vmem %s0, 9
    %s879 = smov 3
    %v880 = vld [vmem:[%s878] ss:$112 sm:%s879]
    %881 = vrot.lane.b32.xlu0 %v880, 7
    %v882 = vpop.permute.xlu0 %881
    %vm883 = vcmask 179256
    %s884 = scalar_lea.vmem [#allocation0], 8
    %885 = vst.msk [vmem:[%s884] ss:$104 sm:$0x3] %vm883, %v882
    %s886 = scalar_lea.vmem %s0, 139
    %s887 = smov 3
    %v888 = vld [vmem:[%s886] ss:$-112 sm:%s887]
    %889 = vrot.lane.b32.xlu0 %v888, 6
    %v890 = vpop.permute.xlu0 %889
    %vm891 = vcmask 171056
    %s892 = scalar_lea.vmem [#allocation0], 128
    %893 = vst.msk [vmem:[%s892] ss:$-104 sm:$0x3] %vm891, %v890
    %s894 = scalar_lea.vmem %s0, 45
    %s895 = smov 3
    %v896 = vld [vmem:[%s894] ss:$112 sm:%s895]
    %897 = vrot.lane.b32.xlu0 %v896, 5
    %v898 = vpop.permute.xlu0 %897
    %vm899 = vcmask 162856
    %s900 = scalar_lea.vmem [#allocation0], 40
    %901 = vst.msk [vmem:[%s900] ss:$104 sm:$0x3] %vm899, %v898
    %s902 = scalar_lea.vmem %s0, 176
    %s903 = smov 3
    %v904 = vld [vmem:[%s902] ss:$-112 sm:%s903]
    %905 = vrot.lane.b32.xlu0 %v904, 4
    %v906 = vpop.permute.xlu0 %905
    %vm907 = vcmask 154656
    %s908 = scalar_lea.vmem [#allocation0], 160
    %909 = vst.msk [vmem:[%s908] ss:$-104 sm:$0x3] %vm907, %v906
    %s910 = scalar_lea.vmem %s0, 82
    %s911 = smov 3
    %v912 = vld [vmem:[%s910] ss:$112 sm:%s911]
    %913 = vrot.lane.b32.xlu0 %v912, 3
    %v914 = vpop.permute.xlu0 %913
    %vm915 = vcmask 146456
    %s916 = scalar_lea.vmem [#allocation0], 72
    %917 = vst.msk [vmem:[%s916] ss:$104 sm:$0x3] %vm915, %v914
    %s918 = scalar_lea.vmem %s0, 212
    %s919 = smov 3
    %v920 = vld [vmem:[%s918] ss:$-112 sm:%s919]
    %921 = vrot.lane.b32.xlu0 %v920, 2
    %v922 = vpop.permute.xlu0 %921
    %vm923 = vcmask 138256
    %s924 = scalar_lea.vmem [#allocation0], 192
    %925 = vst.msk [vmem:[%s924] ss:$-104 sm:$0x3] %vm923, %v922
    %s927 = sshll.u32 1, 1
    %s928 = ssub.s32 %s927, 1
    %v930 = vld [vmem:[#allocation0] sm:%s928]
    %s931 = sshll.u32 1, 1
    %s932 = ssub.s32 %s931, 1
    %933 = vst [vmem:[%s1] sm:%s932] %v930
    %s934 = scalar_lea.vmem [#allocation0], 8
    %v935 = vld [vmem:[%s934] sm:%s928]
    %s936 = sshll.u32 1, 1
    %s937 = ssub.s32 %s936, 1
    %s938 = scalar_lea.vmem %s1, 1
    %939 = vst [vmem:[%s938] sm:%s937] %v935
    %s940 = scalar_lea.vmem [#allocation0], 16
    %v941 = vld [vmem:[%s940] sm:%s928]
    %s942 = sshll.u32 1, 1
    %s943 = ssub.s32 %s942, 1
    %s944 = smul.addr 1, 2
    %s945 = scalar_lea.vmem %s1, %s944
    %946 = vst [vmem:[%s945] sm:%s943] %v941
    %s947 = scalar_lea.vmem [#allocation0], 24
    %v948 = vld [vmem:[%s947] sm:%s928]
    %s949 = sshll.u32 1, 1
    %s950 = ssub.s32 %s949, 1
    %s951 = smul.addr 1, 3
    %s952 = scalar_lea.vmem %s1, %s951
    %953 = vst [vmem:[%s952] sm:%s950] %v948
    %s954 = scalar_lea.vmem [#allocation0], 32
    %v955 = vld [vmem:[%s954] sm:%s928]
    %s956 = sshll.u32 1, 1
    %s957 = ssub.s32 %s956, 1
    %s958 = smul.addr 1, 4
    %s959 = scalar_lea.vmem %s1, %s958
    %960 = vst [vmem:[%s959] sm:%s957] %v955
    %s961 = scalar_lea.vmem [#allocation0], 40
    %v962 = vld [vmem:[%s961] sm:%s928]
    %s963 = sshll.u32 1, 1
    %s964 = ssub.s32 %s963, 1
    %s965 = smul.addr 1, 5
    %s966 = scalar_lea.vmem %s1, %s965
    %967 = vst [vmem:[%s966] sm:%s964] %v962
    %s968 = scalar_lea.vmem [#allocation0], 48
    %v969 = vld [vmem:[%s968] sm:%s928]
    %s970 = sshll.u32 1, 1
    %s971 = ssub.s32 %s970, 1
    %s972 = smul.addr 1, 6
    %s973 = scalar_lea.vmem %s1, %s972
    %974 = vst [vmem:[%s973] sm:%s971] %v969
    %s975 = scalar_lea.vmem [#allocation0], 56
    %v976 = vld [vmem:[%s975] sm:%s928]
    %s977 = sshll.u32 1, 1
    %s978 = ssub.s32 %s977, 1
    %s979 = smul.addr 1, 7
    %s980 = scalar_lea.vmem %s1, %s979
    %981 = vst [vmem:[%s980] sm:%s978] %v976
    %s982 = scalar_lea.vmem [#allocation0], 64
    %v983 = vld [vmem:[%s982] sm:%s928]
    %s984 = sshll.u32 1, 1
    %s985 = ssub.s32 %s984, 1
    %s986 = smul.addr 1, 8
    %s987 = scalar_lea.vmem %s1, %s986
    %988 = vst [vmem:[%s987] sm:%s985] %v983
    %s989 = scalar_lea.vmem [#allocation0], 72
    %v990 = vld [vmem:[%s989] sm:%s928]
    %s991 = sshll.u32 1, 1
    %s992 = ssub.s32 %s991, 1
    %s993 = smul.addr 1, 9
    %s994 = scalar_lea.vmem %s1, %s993
    %995 = vst [vmem:[%s994] sm:%s992] %v990
    %s996 = scalar_lea.vmem [#allocation0], 80
    %v997 = vld [vmem:[%s996] sm:%s928]
    %s998 = sshll.u32 1, 1
    %s999 = ssub.s32 %s998, 1
    %s1000 = smul.addr 1, 10
    %s1001 = scalar_lea.vmem %s1, %s1000
    %1002 = vst [vmem:[%s1001] sm:%s999] %v997
    %s1003 = scalar_lea.vmem [#allocation0], 88
    %v1004 = vld [vmem:[%s1003] sm:%s928]
    %s1005 = sshll.u32 1, 1
    %s1006 = ssub.s32 %s1005, 1
    %s1007 = smul.addr 1, 11
    %s1008 = scalar_lea.vmem %s1, %s1007
    %1009 = vst [vmem:[%s1008] sm:%s1006] %v1004
    %s1010 = scalar_lea.vmem [#allocation0], 96
    %v1011 = vld [vmem:[%s1010] sm:%s928]
    %s1012 = sshll.u32 1, 1
    %s1013 = ssub.s32 %s1012, 1
    %s1014 = smul.addr 1, 12
    %s1015 = scalar_lea.vmem %s1, %s1014
    %1016 = vst [vmem:[%s1015] sm:%s1013] %v1011
    %s1017 = scalar_lea.vmem [#allocation0], 104
    %v1018 = vld [vmem:[%s1017] sm:%s928]
    %s1019 = sshll.u32 1, 1
    %s1020 = ssub.s32 %s1019, 1
    %s1021 = smul.addr 1, 13
    %s1022 = scalar_lea.vmem %s1, %s1021
    %1023 = vst [vmem:[%s1022] sm:%s1020] %v1018
    %s1024 = scalar_lea.vmem [#allocation0], 112
    %v1025 = vld [vmem:[%s1024] sm:%s928]
    %s1026 = sshll.u32 1, 1
    %s1027 = ssub.s32 %s1026, 1
    %s1028 = smul.addr 1, 14
    %s1029 = scalar_lea.vmem %s1, %s1028
    %1030 = vst [vmem:[%s1029] sm:%s1027] %v1025
    %s1031 = scalar_lea.vmem [#allocation0], 120
    %v1032 = vld [vmem:[%s1031] sm:%s928]
    %s1033 = sshll.u32 1, 1
    %s1034 = ssub.s32 %s1033, 1
    %s1035 = smul.addr 1, 15
    %s1036 = scalar_lea.vmem %s1, %s1035
    %1037 = vst [vmem:[%s1036] sm:%s1034] %v1032
    %s1038 = scalar_lea.vmem [#allocation0], 128
    %v1039 = vld [vmem:[%s1038] sm:%s928]
    %s1040 = sshll.u32 1, 1
    %s1041 = ssub.s32 %s1040, 1
    %s1042 = smul.addr 1, 16
    %s1043 = scalar_lea.vmem %s1, %s1042
    %1044 = vst [vmem:[%s1043] sm:%s1041] %v1039
    %s1045 = scalar_lea.vmem [#allocation0], 136
    %v1046 = vld [vmem:[%s1045] sm:%s928]
    %s1047 = sshll.u32 1, 1
    %s1048 = ssub.s32 %s1047, 1
    %s1049 = smul.addr 1, 17
    %s1050 = scalar_lea.vmem %s1, %s1049
    %1051 = vst [vmem:[%s1050] sm:%s1048] %v1046
    %s1052 = scalar_lea.vmem [#allocation0], 144
    %v1053 = vld [vmem:[%s1052] sm:%s928]
    %s1054 = sshll.u32 1, 1
    %s1055 = ssub.s32 %s1054, 1
    %s1056 = smul.addr 1, 18
    %s1057 = scalar_lea.vmem %s1, %s1056
    %1058 = vst [vmem:[%s1057] sm:%s1055] %v1053
    %s1059 = scalar_lea.vmem [#allocation0], 152
    %v1060 = vld [vmem:[%s1059] sm:%s928]
    %s1061 = sshll.u32 1, 1
    %s1062 = ssub.s32 %s1061, 1
    %s1063 = smul.addr 1, 19
    %s1064 = scalar_lea.vmem %s1, %s1063
    %1065 = vst [vmem:[%s1064] sm:%s1062] %v1060
    %s1066 = scalar_lea.vmem [#allocation0], 160
    %v1067 = vld [vmem:[%s1066] sm:%s928]
    %s1068 = sshll.u32 1, 1
    %s1069 = ssub.s32 %s1068, 1
    %s1070 = smul.addr 1, 20
    %s1071 = scalar_lea.vmem %s1, %s1070
    %1072 = vst [vmem:[%s1071] sm:%s1069] %v1067
    %s1073 = scalar_lea.vmem [#allocation0], 168
    %v1074 = vld [vmem:[%s1073] sm:%s928]
    %s1075 = sshll.u32 1, 1
    %s1076 = ssub.s32 %s1075, 1
    %s1077 = smul.addr 1, 21
    %s1078 = scalar_lea.vmem %s1, %s1077
    %1079 = vst [vmem:[%s1078] sm:%s1076] %v1074
    %s1080 = scalar_lea.vmem [#allocation0], 176
    %v1081 = vld [vmem:[%s1080] sm:%s928]
    %s1082 = sshll.u32 1, 1
    %s1083 = ssub.s32 %s1082, 1
    %s1084 = smul.addr 1, 22
    %s1085 = scalar_lea.vmem %s1, %s1084
    %1086 = vst [vmem:[%s1085] sm:%s1083] %v1081
    %s1087 = scalar_lea.vmem [#allocation0], 184
    %v1088 = vld [vmem:[%s1087] sm:%s928]
    %s1089 = sshll.u32 1, 1
    %s1090 = ssub.s32 %s1089, 1
    %s1091 = smul.addr 1, 23
    %s1092 = scalar_lea.vmem %s1, %s1091
    %1093 = vst [vmem:[%s1092] sm:%s1090] %v1088
    %s1094 = scalar_lea.vmem [#allocation0], 192
    %v1095 = vld [vmem:[%s1094] sm:%s928]
    %s1096 = sshll.u32 1, 1
    %s1097 = ssub.s32 %s1096, 1
    %s1098 = smul.addr 1, 24
    %s1099 = scalar_lea.vmem %s1, %s1098
    %1100 = vst [vmem:[%s1099] sm:%s1097] %v1095
    %s1101 = scalar_lea.vmem [#allocation0], 200
    %v1102 = vld [vmem:[%s1101] sm:%s928]
    %s1103 = sshll.u32 1, 1
    %s1104 = ssub.s32 %s1103, 1
    %s1105 = smul.addr 1, 25
    %s1106 = scalar_lea.vmem %s1, %s1105
    %1107 = vst [vmem:[%s1106] sm:%s1104] %v1102

// kernel: bin_conv_transpose3d.1
$region0: #{bin_conv_transpose3d.1}
  #allocation0 [shape = 'u32[]', space=smem, size = 0x4, offset = 0x4, fixed_abs, tag = 'smem constant byte address 0x4 - core index']
  #allocation1 [shape = 'u32[144,128]{1,0:T(1,128)}', space=vmem, size = 0x12000, scoped, tag = 'internal scratch']
  %s0 = inlined_call_operand.vmem [shape: f32[2,128,1664], index: 0, kind: input, shape index: {}]
  %s1 = inlined_call_operand.vmem [shape: f32[8,128], index: 1, kind: input, shape index: {}]
  %s2 = inlined_call_operand.vmem [shape: f32[8,8], index: 2, kind: input, shape index: {}]
  %s3 = inlined_call_operand.vmem [shape: f32[8,1], index: 3, kind: input, shape index: {}]
  %s4 = inlined_call_operand.vmem [shape: f32[2,8,1664], index: 4, kind: output, shape index: {}]
  %s5 = sld [smem:[#allocation0]]
  $region49: #{bin_conv_transpose3d.1} parent=0
    _
  %s7 = ssub.s32 1, %s5
  %s8 = scalar_select 0, %s7, %s5
  loop: start=0, step=1, limit=4
  $region2: #{bin_conv_transpose3d.1} parent=0 // loop_pre_header
    _
  $region3: #{bin_conv_transpose3d.1} parent=0 // loop_header
    %s10 = sphi 0, %s14
    %p11 = scmp.ge.s32.totalorder %s10, 4
    %s20 = sphi 0, %s22
    %s23 = sphi 0, %s20
    %s24 = sphi 0, %s23
    %s40 = sphi 0, %s24
    %s44 = sphi 0, %s44
    %s46 = sphi 0, %s44
    %s47 = sphi 0, %s46
    %s61 = sphi 0, %s47
    %s65 = sphi 0, %s65
    %s67 = sphi 0, %s65
    %s68 = sphi 0, %s67
    %s82 = sphi 0, %s68
    %s86 = sphi 0, %s86
    %s88 = sphi 0, %s86
    %s89 = sphi 0, %s88
    %s103 = sphi 0, %s89
    %s109 = sphi 0, %s111
    %s112 = sphi 0, %s109
    %s113 = sphi 0, %s112
    %s129 = sphi 0, %s113
  $region4: #{bin_conv_transpose3d.1} parent=0 // loop_header_branch
    %13 = sbr.rel (%p11) target = $region8
  $region5: #{bin_conv_transpose3d.1} parent=0 // loop_body
    %s15 = ssub.s32 %s10, 1
    %s16 = ssub.s32 %s10, 2
    %s17 = sadd.s32 %s10, 1
    %s18 = ssub.s32 %s10, %s17
    %p19 = scmp.eq.s32.totalorder %s18, 0
    %s21 = sadd.s32 %s20, 1
    %s22 = scalar_select %p19, %s20, %s21
    %p25 = pneg %p19
    %p26 = scmp.eq.s32.totalorder %s10, 1
    %p27 = por %p25, %p26
    %p28 = scmp.ne.s32.totalorder %s20, %s23
    %p29 = scmp.eq.s32.totalorder %s10, 0
    %p30 = por %p28, %p29
    %p31 = scmp.ne.s32.totalorder %s20, %s23
    %p32 = scmp.eq.s32.totalorder %s15, 1
    %p33 = por %p31, %p32
    %p34 = scmp.ne.s32.totalorder %s23, %s24
    %p35 = scmp.eq.s32.totalorder %s15, 0
    %p36 = por %p34, %p35
    %p37 = scmp.ne.s32.totalorder %s23, %s24
    %p38 = scmp.eq.s32.totalorder %s16, 1
    %p39 = por %p37, %p38
    %p41 = scmp.ne.s32.totalorder %s24, %s40
    %p42 = scmp.eq.s32.totalorder %s16, 0
    %p43 = por %p41, %p42
    %s45 = sadd.s32 %s44, 1
    %p48 = scmp.eq.s32.totalorder %s10, 1
    %p49 = scmp.ne.s32.totalorder %s44, %s46
    %p50 = scmp.eq.s32.totalorder %s10, 0
    %p51 = por %p49, %p50
    %p52 = scmp.ne.s32.totalorder %s44, %s46
    %p53 = scmp.eq.s32.totalorder %s15, 1
    %p54 = por %p52, %p53
    %p55 = scmp.ne.s32.totalorder %s46, %s47
    %p56 = scmp.eq.s32.totalorder %s15, 0
    %p57 = por %p55, %p56
    %p58 = scmp.ne.s32.totalorder %s46, %s47
    %p59 = scmp.eq.s32.totalorder %s16, 1
    %p60 = por %p58, %p59
    %p62 = scmp.ne.s32.totalorder %s47, %s61
    %p63 = scmp.eq.s32.totalorder %s16, 0
    %p64 = por %p62, %p63
    %s66 = sadd.s32 %s65, 1
    %p69 = scmp.eq.s32.totalorder %s10, 1
    %p70 = scmp.ne.s32.totalorder %s65, %s67
    %p71 = scmp.eq.s32.totalorder %s10, 0
    %p72 = por %p70, %p71
    %p73 = scmp.ne.s32.totalorder %s65, %s67
    %p74 = scmp.eq.s32.totalorder %s15, 1
    %p75 = por %p73, %p74
    %p76 = scmp.ne.s32.totalorder %s67, %s68
    %p77 = scmp.eq.s32.totalorder %s15, 0
    %p78 = por %p76, %p77
    %p79 = scmp.ne.s32.totalorder %s67, %s68
    %p80 = scmp.eq.s32.totalorder %s16, 1
    %p81 = por %p79, %p80
    %p83 = scmp.ne.s32.totalorder %s68, %s82
    %p84 = scmp.eq.s32.totalorder %s16, 0
    %p85 = por %p83, %p84
    %s87 = sadd.s32 %s86, 1
    %p90 = scmp.eq.s32.totalorder %s10, 1
    %p91 = scmp.ne.s32.totalorder %s86, %s88
    %p92 = scmp.eq.s32.totalorder %s10, 0
    %p93 = por %p91, %p92
    %p94 = scmp.ne.s32.totalorder %s86, %s88
    %p95 = scmp.eq.s32.totalorder %s15, 1
    %p96 = por %p94, %p95
    %p97 = scmp.ne.s32.totalorder %s88, %s89
    %p98 = scmp.eq.s32.totalorder %s15, 0
    %p99 = por %p97, %p98
    %p100 = scmp.ne.s32.totalorder %s88, %s89
    %p101 = scmp.eq.s32.totalorder %s16, 1
    %p102 = por %p100, %p101
    %p104 = scmp.ne.s32.totalorder %s89, %s103
    %p105 = scmp.eq.s32.totalorder %s16, 0
    %p106 = por %p104, %p105
    %s107 = ssub.s32 %s10, %s17
    %p108 = scmp.eq.s32.totalorder %s107, 0
    %s110 = sadd.s32 %s109, 1
    %s111 = scalar_select %p108, %s109, %s110
    %p114 = pneg %p108
    %p115 = scmp.eq.s32.totalorder %s10, 1
    %p116 = por %p114, %p115
    %p117 = scmp.ne.s32.totalorder %s109, %s112
    %p118 = scmp.eq.s32.totalorder %s10, 0
    %p119 = por %p117, %p118
    %p120 = scmp.ne.s32.totalorder %s109, %s112
    %p121 = scmp.eq.s32.totalorder %s15, 1
    %p122 = por %p120, %p121
    %p123 = scmp.ne.s32.totalorder %s112, %s113
    %p124 = scmp.eq.s32.totalorder %s15, 0
    %p125 = por %p123, %p124
    %p126 = scmp.ne.s32.totalorder %s112, %s113
    %p127 = scmp.eq.s32.totalorder %s16, 1
    %p128 = por %p126, %p127
    %p130 = scmp.ne.s32.totalorder %s113, %s129
    %p131 = scmp.eq.s32.totalorder %s16, 0
    %p132 = por %p130, %p131
    %p133 = scmp.le.s32.totalorder 1, %s10
    %p134 = scmp.lt.s32.totalorder %s10, 3
    %p135 = pnand %p133, %p134
    %p136 = pneg %p135
    // Predicated region
    $region9: #{bin_conv_transpose3d.1} parent=5 // pred_check
      _
    $region10: #{bin_conv_transpose3d.1} parent=5 // pred_check_branch
      %138 = sbr.rel (%p135) target = $region12
    $region11: #{bin_conv_transpose3d.1} parent=5 // pred_region
      %s139 = ssub.s32 %s10, 1
      // Predicated region
      $region13: #{bin_conv_transpose3d.1} parent=11 // pred_check
        %p140 = pneg %p57
      $region14: #{bin_conv_transpose3d.1} parent=11 // pred_check_branch
        %142 = sbr.rel (%p140) target = $region16
      $region15: #{bin_conv_transpose3d.1} parent=11 // pred_region
        _
      $region16: #{bin_conv_transpose3d.1} parent=11 // pred_fallthru
        _
      // Predicated region
      $region17: #{bin_conv_transpose3d.1} parent=11 // pred_check
        %p143 = pneg %p78
      $region18: #{bin_conv_transpose3d.1} parent=11 // pred_check_branch
        %145 = sbr.rel (%p143) target = $region20
      $region19: #{bin_conv_transpose3d.1} parent=11 // pred_region
        _
      $region20: #{bin_conv_transpose3d.1} parent=11 // pred_fallthru
        _
      // Predicated region
      $region21: #{bin_conv_transpose3d.1} parent=11 // pred_check
        %p146 = pneg %p99
      $region22: #{bin_conv_transpose3d.1} parent=11 // pred_check_branch
        %148 = sbr.rel (%p146) target = $region24
      $region23: #{bin_conv_transpose3d.1} parent=11 // pred_region
        _
      $region24: #{bin_conv_transpose3d.1} parent=11 // pred_fallthru
        _
    $region12: #{bin_conv_transpose3d.1} parent=5 // pred_fallthru
      _
    %p149 = scmp.lt.s32.totalorder %s10, 2
    // Predicated region
    $region25: #{bin_conv_transpose3d.1} parent=5 // pred_check
      %p150 = pneg %p149
    $region26: #{bin_conv_transpose3d.1} parent=5 // pred_check_branch
      %152 = sbr.rel (%p150) target = $region28
    $region27: #{bin_conv_transpose3d.1} parent=5 // pred_region
      // Predicated region
      $region29: #{bin_conv_transpose3d.1} parent=27 // pred_check
        %p153 = pneg %p30
      $region30: #{bin_conv_transpose3d.1} parent=27 // pred_check_branch
        %155 = sbr.rel (%p153) target = $region32
      $region31: #{bin_conv_transpose3d.1} parent=27 // pred_region
        %p156 = scmp.lt.s32.totalorder %s10, 1
        %s157 = scalar_select %p156, %s10, 1
        %s158 = smul.addr %s157, 208
        %s159 = smul.addr %s158, 8
        %s160 = scalar_lea.vmem %s0, %s159
      $region32: #{bin_conv_transpose3d.1} parent=27 // pred_fallthru
        _
    $region28: #{bin_conv_transpose3d.1} parent=5 // pred_fallthru
      _
    %p161 = scmp.le.s32.totalorder 1, %s10
    %p162 = scmp.lt.s32.totalorder %s10, 3
    %p163 = pnand %p161, %p162
    %p164 = pneg %p163
    // Predicated region
    $region33: #{bin_conv_transpose3d.1} parent=5 // pred_check
      _
    $region34: #{bin_conv_transpose3d.1} parent=5 // pred_check_branch
      %166 = sbr.rel (%p163) target = $region36
    $region35: #{bin_conv_transpose3d.1} parent=5 // pred_region
      %s167 = ssub.s32 %s10, 1
      %p168 = scmp.lt.s32.totalorder %s15, 1
      %s169 = scalar_select %p168, %s15, 1
      %s170 = smul.addr %s169, 208
      %s171 = smul.addr %s170, 8
      %s172 = scalar_lea.vmem %s0, %s171
      %p173 = pneg %p36
      %p174 = pneg %p33
      %p175 = pneg %p57
      %p176 = pneg %p54
      %p177 = pneg %p78
      %p178 = pneg %p75
      %p179 = pneg %p99
      %p180 = pneg %p96
      %p181 = pneg %p125
      %p182 = pneg %p122
      %p183 = scmp.lt.s32.totalorder %s15, 1
      %s184 = scalar_select %p183, %s15, 1
      %s185 = smul.addr %s184, 13
      %s186 = smul.addr %s185, 8
      %s187 = scalar_lea.vmem %s4, %s186
      %p188 = scmp.lt.s32.totalorder %s15, 1
      %s189 = scalar_select %p188, %s15, 1
      %s190 = smul.addr %s189, 208
      %s191 = smul.addr %s190, 8
      %s192 = scalar_lea.vmem %s0, %s191
      %p193 = scmp.lt.s32.totalorder %s15, 1
      %s194 = scalar_select %p193, %s15, 1
      %s195 = smul.addr %s194, 13
      %s196 = smul.addr %s195, 8
      %s197 = scalar_lea.vmem %s4, %s196
      %v198 = vld [vmem:[%s1] sm:$0xff]
      %v199 = vld [vmem:[%s192] sm:$0xff]
      %v200 = vld [vmem:[%s192 + $0x8] sm:$0xff]
      %v201 = vld [vmem:[%s192 + $0x10] sm:$0xff]
      %v202 = vld [vmem:[%s192 + $0x18] sm:$0xff]
      %v203 = vld [vmem:[%s192 + $0x20] sm:$0xff]
      %v204 = vld [vmem:[%s192 + $0x28] sm:$0xff]
      %v205 = vld [vmem:[%s192 + $0x30] sm:$0xff]
      %v206 = vld [vmem:[%s192 + $0x38] sm:$0xff]
      %v207 = vld [vmem:[%s192 + $0x40] sm:$0xff]
      %v208 = vld [vmem:[%s192 + $0x48] sm:$0xff]
      %v209 = vld [vmem:[%s192 + $0x50] sm:$0xff]
      %v210 = vld [vmem:[%s192 + $0x58] sm:$0xff]
      %v211 = vld [vmem:[%s192 + $0x60] sm:$0xff]
      %v212 = vld [vmem:[%s192 + $0x68] sm:$0xff]
      %v213 = vld [vmem:[%s192 + $0x70] sm:$0xff]
      %v214 = vld [vmem:[%s192 + $0x78] sm:$0xff]
      %v215 = vld [vmem:[%s192 + $0x80] sm:$0xff]
      %v216 = vld [vmem:[%s192 + $0x88] sm:$0xff]
      %v217 = vld [vmem:[%s192 + $0x90] sm:$0xff]
      %v218 = vld [vmem:[%s192 + $0x98] sm:$0xff]
      %v219 = vld [vmem:[%s192 + $0xa0] sm:$0xff]
      %v220 = vld [vmem:[%s192 + $0xa8] sm:$0xff]
      %v221 = vld [vmem:[%s192 + $0xb0] sm:$0xff]
      %v222 = vld [vmem:[%s192 + $0xb8] sm:$0xff]
      %v223 = vld [vmem:[%s192 + $0xc0] sm:$0xff]
      %v224 = vld [vmem:[%s192 + $0xc8] sm:$0xff]
      %v225 = vld [vmem:[%s192 + $0xd0] sm:$0xff]
      %v226 = vld [vmem:[%s192 + $0xd8] sm:$0xff]
      %v227 = vld [vmem:[%s192 + $0xe0] sm:$0xff]
      %v228 = vld [vmem:[%s192 + $0xe8] sm:$0xff]
      %v229 = vld [vmem:[%s192 + $0xf0] sm:$0xff]
      %v230 = vld [vmem:[%s192 + $0xf8] sm:$0xff]
      %v231 = vld [vmem:[%s192 + $0x100] sm:$0xff]
      %v232 = vld [vmem:[%s192 + $0x108] sm:$0xff]
      %v233 = vld [vmem:[%s192 + $0x110] sm:$0xff]
      %v234 = vld [vmem:[%s192 + $0x118] sm:$0xff]
      %v235 = vld [vmem:[%s192 + $0x120] sm:$0xff]
      %v236 = vld [vmem:[%s192 + $0x128] sm:$0xff]
      %v237 = vld [vmem:[%s192 + $0x130] sm:$0xff]
      %v238 = vld [vmem:[%s192 + $0x138] sm:$0xff]
      %v239 = vld [vmem:[%s192 + $0x140] sm:$0xff]
      %v240 = vld [vmem:[%s192 + $0x148] sm:$0xff]
      %v241 = vld [vmem:[%s192 + $0x150] sm:$0xff]
      %v242 = vld [vmem:[%s192 + $0x158] sm:$0xff]
      %v243 = vld [vmem:[%s192 + $0x160] sm:$0xff]
      %v244 = vld [vmem:[%s192 + $0x168] sm:$0xff]
      %v245 = vld [vmem:[%s192 + $0x170] sm:$0xff]
      %v246 = vld [vmem:[%s192 + $0x178] sm:$0xff]
      %v247 = vld [vmem:[%s192 + $0x180] sm:$0xff]
      %v248 = vld [vmem:[%s192 + $0x188] sm:$0xff]
      %v249 = vld [vmem:[%s192 + $0x190] sm:$0xff]
      %v250 = vld [vmem:[%s192 + $0x198] sm:$0xff]
      %v251 = vld [vmem:[%s192 + $0x1a0] sm:$0xff]
      %v252 = vld [vmem:[%s192 + $0x1a8] sm:$0xff]
      %v253 = vld [vmem:[%s192 + $0x1b0] sm:$0xff]
      %v254 = vld [vmem:[%s192 + $0x1b8] sm:$0xff]
      %v255 = vld [vmem:[%s192 + $0x1c0] sm:$0xff]
      %v256 = vld [vmem:[%s192 + $0x1c8] sm:$0xff]
      %v257 = vld [vmem:[%s192 + $0x1d0] sm:$0xff]
      %v258 = vld [vmem:[%s192 + $0x1d8] sm:$0xff]
      %v259 = vld [vmem:[%s192 + $0x1e0] sm:$0xff]
      %v260 = vld [vmem:[%s192 + $0x1e8] sm:$0xff]
      %v261 = vld [vmem:[%s192 + $0x1f0] sm:$0xff]
      %v262 = vld [vmem:[%s192 + $0x1f8] sm:$0xff]
      %v263 = vld [vmem:[%s192 + $0x200] sm:$0xff]
      %v264 = vld [vmem:[%s192 + $0x208] sm:$0xff]
      %v265 = vld [vmem:[%s192 + $0x210] sm:$0xff]
      %v266 = vld [vmem:[%s192 + $0x218] sm:$0xff]
      %v267 = vld [vmem:[%s192 + $0x220] sm:$0xff]
      %v268 = vld [vmem:[%s192 + $0x228] sm:$0xff]
      %v269 = vld [vmem:[%s192 + $0x230] sm:$0xff]
      %v270 = vld [vmem:[%s192 + $0x238] sm:$0xff]
      %v271 = vld [vmem:[%s192 + $0x240] sm:$0xff]
      %v272 = vld [vmem:[%s192 + $0x248] sm:$0xff]
      %v273 = vld [vmem:[%s192 + $0x250] sm:$0xff]
      %v274 = vld [vmem:[%s192 + $0x258] sm:$0xff]
      %v275 = vld [vmem:[%s192 + $0x260] sm:$0xff]
      %v276 = vld [vmem:[%s192 + $0x268] sm:$0xff]
      %v277 = vld [vmem:[%s192 + $0x270] sm:$0xff]
      %v278 = vld [vmem:[%s192 + $0x278] sm:$0xff]
      %v279 = vld [vmem:[%s192 + $0x280] sm:$0xff]
      %v280 = vld [vmem:[%s192 + $0x288] sm:$0xff]
      %v281 = vld [vmem:[%s192 + $0x290] sm:$0xff]
      %v282 = vld [vmem:[%s192 + $0x298] sm:$0xff]
      %v283 = vld [vmem:[%s192 + $0x2a0] sm:$0xff]
      %v284 = vld [vmem:[%s192 + $0x2a8] sm:$0xff]
      %v285 = vld [vmem:[%s192 + $0x2b0] sm:$0xff]
      %v286 = vld [vmem:[%s192 + $0x2b8] sm:$0xff]
      %v287 = vld [vmem:[%s192 + $0x2c0] sm:$0xff]
      %v288 = vld [vmem:[%s192 + $0x2c8] sm:$0xff]
      %v289 = vld [vmem:[%s192 + $0x2d0] sm:$0xff]
      %v290 = vld [vmem:[%s192 + $0x2d8] sm:$0xff]
      %v291 = vld [vmem:[%s192 + $0x2e0] sm:$0xff]
      %v292 = vld [vmem:[%s192 + $0x2e8] sm:$0xff]
      %v293 = vld [vmem:[%s192 + $0x2f0] sm:$0xff]
      %v294 = vld [vmem:[%s192 + $0x2f8] sm:$0xff]
      %v295 = vld [vmem:[%s192 + $0x300] sm:$0xff]
      %v296 = vld [vmem:[%s192 + $0x308] sm:$0xff]
      %v297 = vld [vmem:[%s192 + $0x310] sm:$0xff]
      %v298 = vld [vmem:[%s192 + $0x318] sm:$0xff]
      %v299 = vld [vmem:[%s192 + $0x320] sm:$0xff]
      %v300 = vld [vmem:[%s192 + $0x328] sm:$0xff]
      %v301 = vld [vmem:[%s192 + $0x330] sm:$0xff]
      %v302 = vld [vmem:[%s192 + $0x338] sm:$0xff]
      %v303 = vld [vmem:[%s192 + $0x340] sm:$0xff]
      %v304 = vld [vmem:[%s192 + $0x348] sm:$0xff]
      %v305 = vld [vmem:[%s192 + $0x350] sm:$0xff]
      %v306 = vld [vmem:[%s192 + $0x358] sm:$0xff]
      %v307 = vld [vmem:[%s192 + $0x360] sm:$0xff]
      %v308 = vld [vmem:[%s192 + $0x368] sm:$0xff]
      %v309 = vld [vmem:[%s192 + $0x370] sm:$0xff]
      %v310 = vld [vmem:[%s192 + $0x378] sm:$0xff]
      %v311 = vld [vmem:[%s192 + $0x380] sm:$0xff]
      %v312 = vld [vmem:[%s192 + $0x388] sm:$0xff]
      %v313 = vld [vmem:[%s192 + $0x390] sm:$0xff]
      %v314 = vld [vmem:[%s192 + $0x398] sm:$0xff]
      %v315 = vld [vmem:[%s192 + $0x3a0] sm:$0xff]
      %v316 = vld [vmem:[%s192 + $0x3a8] sm:$0xff]
      %v317 = vld [vmem:[%s192 + $0x3b0] sm:$0xff]
      %v318 = vld [vmem:[%s192 + $0x3b8] sm:$0xff]
      %v319 = vld [vmem:[%s192 + $0x3c0] sm:$0xff]
      %v320 = vld [vmem:[%s192 + $0x3c8] sm:$0xff]
      %v321 = vld [vmem:[%s192 + $0x3d0] sm:$0xff]
      %v322 = vld [vmem:[%s192 + $0x3d8] sm:$0xff]
      %v323 = vld [vmem:[%s192 + $0x3e0] sm:$0xff]
      %v324 = vld [vmem:[%s192 + $0x3e8] sm:$0xff]
      %v325 = vld [vmem:[%s192 + $0x3f0] sm:$0xff]
      %v326 = vld [vmem:[%s192 + $0x3f8] sm:$0xff]
      %v327 = vld [vmem:[%s192 + $0x400] sm:$0xff]
      %v328 = vld [vmem:[%s192 + $0x408] sm:$0xff]
      %v329 = vld [vmem:[%s192 + $0x410] sm:$0xff]
      %v330 = vld [vmem:[%s192 + $0x418] sm:$0xff]
      %v331 = vld [vmem:[%s192 + $0x420] sm:$0xff]
      %v332 = vld [vmem:[%s192 + $0x428] sm:$0xff]
      %v333 = vld [vmem:[%s192 + $0x430] sm:$0xff]
      %v334 = vld [vmem:[%s192 + $0x438] sm:$0xff]
      %v335 = vld [vmem:[%s192 + $0x440] sm:$0xff]
      %v336 = vld [vmem:[%s192 + $0x448] sm:$0xff]
      %v337 = vld [vmem:[%s192 + $0x450] sm:$0xff]
      %v338 = vld [vmem:[%s192 + $0x458] sm:$0xff]
      %v339 = vld [vmem:[%s192 + $0x460] sm:$0xff]
      %v340 = vld [vmem:[%s192 + $0x468] sm:$0xff]
      %v341 = vld [vmem:[%s192 + $0x470] sm:$0xff]
      %v342 = vld [vmem:[%s192 + $0x478] sm:$0xff]
      %v343 = vld [vmem:[%s192 + $0x480] sm:$0xff]
      %v344 = vld [vmem:[%s192 + $0x488] sm:$0xff]
      %v345 = vld [vmem:[%s192 + $0x490] sm:$0xff]
      %v346 = vld [vmem:[%s192 + $0x498] sm:$0xff]
      %v347 = vld [vmem:[%s192 + $0x4a0] sm:$0xff]
      %v348 = vld [vmem:[%s192 + $0x4a8] sm:$0xff]
      %v349 = vld [vmem:[%s192 + $0x4b0] sm:$0xff]
      %v350 = vld [vmem:[%s192 + $0x4b8] sm:$0xff]
      %v351 = vld [vmem:[%s192 + $0x4c0] sm:$0xff]
      %v352 = vld [vmem:[%s192 + $0x4c8] sm:$0xff]
      %v353 = vld [vmem:[%s192 + $0x4d0] sm:$0xff]
      %v354 = vld [vmem:[%s192 + $0x4d8] sm:$0xff]
      %v355 = vld [vmem:[%s192 + $0x4e0] sm:$0xff]
      %v356 = vld [vmem:[%s192 + $0x4e8] sm:$0xff]
      %v357 = vld [vmem:[%s192 + $0x4f0] sm:$0xff]
      %v358 = vld [vmem:[%s192 + $0x4f8] sm:$0xff]
      %v359 = vld [vmem:[%s192 + $0x500] sm:$0xff]
      %v360 = vld [vmem:[%s192 + $0x508] sm:$0xff]
      %v361 = vld [vmem:[%s192 + $0x510] sm:$0xff]
      %v362 = vld [vmem:[%s192 + $0x518] sm:$0xff]
      %v363 = vld [vmem:[%s192 + $0x520] sm:$0xff]
      %v364 = vld [vmem:[%s192 + $0x528] sm:$0xff]
      %v365 = vld [vmem:[%s192 + $0x530] sm:$0xff]
      %v366 = vld [vmem:[%s192 + $0x538] sm:$0xff]
      %v367 = vld [vmem:[%s192 + $0x540] sm:$0xff]
      %v368 = vld [vmem:[%s192 + $0x548] sm:$0xff]
      %v369 = vld [vmem:[%s192 + $0x550] sm:$0xff]
      %v370 = vld [vmem:[%s192 + $0x558] sm:$0xff]
      %v371 = vld [vmem:[%s192 + $0x560] sm:$0xff]
      %v372 = vld [vmem:[%s192 + $0x568] sm:$0xff]
      %v373 = vld [vmem:[%s192 + $0x570] sm:$0xff]
      %v374 = vld [vmem:[%s192 + $0x578] sm:$0xff]
      %v375 = vld [vmem:[%s192 + $0x580] sm:$0xff]
      %v376 = vld [vmem:[%s192 + $0x588] sm:$0xff]
      %v377 = vld [vmem:[%s192 + $0x590] sm:$0xff]
      %v378 = vld [vmem:[%s192 + $0x598] sm:$0xff]
      %v379 = vld [vmem:[%s192 + $0x5a0] sm:$0xff]
      %v380 = vld [vmem:[%s192 + $0x5a8] sm:$0xff]
      %v381 = vld [vmem:[%s192 + $0x5b0] sm:$0xff]
      %v382 = vld [vmem:[%s192 + $0x5b8] sm:$0xff]
      %v383 = vld [vmem:[%s192 + $0x5c0] sm:$0xff]
      %v384 = vld [vmem:[%s192 + $0x5c8] sm:$0xff]
      %v385 = vld [vmem:[%s192 + $0x5d0] sm:$0xff]
      %v386 = vld [vmem:[%s192 + $0x5d8] sm:$0xff]
      %v387 = vld [vmem:[%s192 + $0x5e0] sm:$0xff]
      %v388 = vld [vmem:[%s192 + $0x5e8] sm:$0xff]
      %v389 = vld [vmem:[%s192 + $0x5f0] sm:$0xff]
      %v390 = vld [vmem:[%s192 + $0x5f8] sm:$0xff]
      %v391 = vld [vmem:[%s192 + $0x600] sm:$0xff]
      %v392 = vld [vmem:[%s192 + $0x608] sm:$0xff]
      %v393 = vld [vmem:[%s192 + $0x610] sm:$0xff]
      %v394 = vld [vmem:[%s192 + $0x618] sm:$0xff]
      %v395 = vld [vmem:[%s192 + $0x620] sm:$0xff]
      %v396 = vld [vmem:[%s192 + $0x628] sm:$0xff]
      %v397 = vld [vmem:[%s192 + $0x630] sm:$0xff]
      %v398 = vld [vmem:[%s192 + $0x638] sm:$0xff]
      %v399 = vld [vmem:[%s192 + $0x640] sm:$0xff]
      %v400 = vld [vmem:[%s192 + $0x648] sm:$0xff]
      %v401 = vld [vmem:[%s192 + $0x650] sm:$0xff]
      %v402 = vld [vmem:[%s192 + $0x658] sm:$0xff]
      %v403 = vld [vmem:[%s192 + $0x660] sm:$0xff]
      %v404 = vld [vmem:[%s192 + $0x668] sm:$0xff]
      %v405 = vld [vmem:[%s192 + $0x670] sm:$0xff]
      %v406 = vld [vmem:[%s192 + $0x678] sm:$0xff]
      %v407 = vand.u32 %v395, 4294901760
      %408 = vmatprep.subr.mxu0 %v407
      %v409 = vand.u32 %v394, 4294901760
      %410 = vmatpush1.msra.mxu0 %v409
      %v411 = vand.u32 %v382, 4294901760
      %412 = vmatprep.subr.mxu0 %v411
      %v413 = vand.u32 %v381, 4294901760
      %414 = vmatpush1.msra.mxu0 %v413
      %v415 = vand.u32 %v369, 4294901760
      %416 = vmatprep.subr.mxu0 %v415
      %v417 = vand.u32 %v368, 4294901760
      %418 = vmatpush1.msra.mxu0 %v417
      %v419 = vand.u32 %v356, 4294901760
      %420 = vmatprep.subr.mxu0 %v419
      %v421 = vand.u32 %v355, 4294901760
      %422 = vmatpush1.msra.mxu0 %v421
      %v423 = vand.u32 %v343, 4294901760
      %424 = vmatprep.subr.mxu0 %v423
      %v425 = vand.u32 %v342, 4294901760
      %426 = vmatpush1.msra.mxu0 %v425
      %v427 = vand.u32 %v330, 4294901760
      %428 = vmatprep.subr.mxu0 %v427
      %v429 = vand.u32 %v329, 4294901760
      %430 = vmatpush1.msra.mxu0 %v429
      %v431 = vand.u32 %v317, 4294901760
      %432 = vmatprep.subr.mxu0 %v431
      %v433 = vand.u32 %v316, 4294901760
      %434 = vmatpush1.msra.mxu0 %v433
      %v435 = vand.u32 %v304, 4294901760
      %436 = vmatprep.subr.mxu0 %v435
      %v437 = vand.u32 %v303, 4294901760
      %438 = vmatpush1.msra.mxu0 %v437
      %v439 = vand.u32 %v291, 4294901760
      %440 = vmatprep.subr.mxu0 %v439
      %v441 = vand.u32 %v290, 4294901760
      %442 = vmatpush1.msra.mxu0 %v441
      %v443 = vand.u32 %v278, 4294901760
      %444 = vmatprep.subr.mxu0 %v443
      %v445 = vand.u32 %v277, 4294901760
      %446 = vmatpush1.msra.mxu0 %v445
      %v447 = vand.u32 %v265, 4294901760
      %448 = vmatprep.subr.mxu0 %v447
      %v449 = vand.u32 %v264, 4294901760
      %450 = vmatpush1.msra.mxu0 %v449
      %v451 = vand.u32 %v252, 4294901760
      %452 = vmatprep.subr.mxu0 %v451
      %v453 = vand.u32 %v251, 4294901760
      %454 = vmatpush1.msra.mxu0 %v453
      %v455 = vand.u32 %v239, 4294901760
      %456 = vmatprep.subr.mxu0 %v455
      %v457 = vand.u32 %v238, 4294901760
      %458 = vmatpush1.msra.mxu0 %v457
      %v459 = vand.u32 %v226, 4294901760
      %460 = vmatprep.subr.mxu0 %v459
      %v461 = vand.u32 %v225, 4294901760
      %462 = vmatpush1.msra.mxu0 %v461
      %v463 = vand.u32 %v213, 4294901760
      %464 = vmatprep.subr.mxu0 %v463
      %v465 = vand.u32 %v212, 4294901760
      %466 = vmatpush1.msra.mxu0 %v465
      %v467 = vand.u32 %v200, 4294901760
      %468 = vmatprep.subr.mxu0 %v467
      %v469 = vand.u32 %v199, 4294901760
      %470 = vmatpush1.msra.mxu0 %v469
      %471 = vmatprep.subr.mxu0 0.0
      %472 = vmatpush2.msra.mxu0 0.0
      %473 = vmatprep.subr.mxu0 0.0
      %474 = vmatpush2.msra.mxu0 0.0
      %475 = vmatprep.subr.mxu0 0.0
      %476 = vmatpush2.msra.mxu0 0.0
      %477 = vmatprep.subr.mxu0 0.0
      %478 = vmatpush2.msra.mxu0 0.0
      %479 = vmatprep.subr.mxu0 0.0
      %480 = vmatpush2.msra.mxu0 0.0
      %481 = vmatprep.subr.mxu0 0.0
      %482 = vmatpush2.msra.mxu0 0.0
      %483 = vmatprep.subr.mxu0 0.0
      %484 = vmatpush2.msra.mxu0 0.0
      %485 = vmatprep.subr.mxu0 0.0
      %486 = vmatpush2.msra.mxu0 0.0
      %487 = vmatprep.subr.mxu0 0.0
      %488 = vmatpush2.msra.mxu0 0.0
      %489 = vmatprep.subr.mxu0 0.0
      %490 = vmatpush2.msra.mxu0 0.0
      %491 = vmatprep.subr.mxu0 0.0
      %492 = vmatpush2.msra.mxu0 0.0
      %493 = vmatprep.subr.mxu0 0.0
      %494 = vmatpush2.msra.mxu0 0.0
      %495 = vmatprep.subr.mxu0 0.0
      %496 = vmatpush2.msra.mxu0 0.0
      %497 = vmatprep.subr.mxu0 0.0
      %498 = vmatpush2.msra.mxu0 0.0
      %499 = vmatprep.subr.mxu0 0.0
      %500 = vmatpush2.msra.mxu0 0.0
      %501 = vmatprep.subr.mxu0 0.0
      %502 = vmatpush2.msra.mxu0 0.0
      %503 = vmatprep.mubr.f32.mxu0 0.0
      %v504 = vand.u32 %v198, 4294901760
      %v505 = vsub.f32 %v198, %v504
      %v506 = vand.u32 %v505, 4294901760
      %v507 = vsub.f32 %v505, %v506
      %v508 = vand.u32 %v507, 4294901760
      %509 = vmatmul.mubr.f32.gmra.mxu0 %v508
      %v510 = vpop.f32.mrf.mxu0
      %v511 = vadd.f32 0.0, %v510
      %v512 = vpop.f32.mrf.mxu0
      %v513 = vadd.f32 0.0, %v512
      %514 = vdwg.mxu0
      %v515 = vand.u32 %v395, 4294901760
      %v516 = vsub.f32 %v395, %v515
      %v517 = vand.u32 %v516, 4294901760
      %v518 = vsub.f32 %v516, %v517
      %v519 = vand.u32 %v518, 4294901760
      %520 = vmatprep.subr.mxu0 %v519
      %v521 = vand.u32 %v394, 4294901760
      %v522 = vsub.f32 %v394, %v521
      %v523 = vand.u32 %v522, 4294901760
      %v524 = vsub.f32 %v522, %v523
      %v525 = vand.u32 %v524, 4294901760
      %526 = vmatpush1.msra.mxu0 %v525
      %v527 = vand.u32 %v382, 4294901760
      %v528 = vsub.f32 %v382, %v527
      %v529 = vand.u32 %v528, 4294901760
      %v530 = vsub.f32 %v528, %v529
      %v531 = vand.u32 %v530, 4294901760
      %532 = vmatprep.subr.mxu0 %v531
      %v533 = vand.u32 %v381, 4294901760
      %v534 = vsub.f32 %v381, %v533
      %v535 = vand.u32 %v534, 4294901760
      %v536 = vsub.f32 %v534, %v535
      %v537 = vand.u32 %v536, 4294901760
      %538 = vmatpush1.msra.mxu0 %v537
      %v539 = vand.u32 %v369, 4294901760
      %v540 = vsub.f32 %v369, %v539
      %v541 = vand.u32 %v540, 4294901760
      %v542 = vsub.f32 %v540, %v541
      %v543 = vand.u32 %v542, 4294901760
      %544 = vmatprep.subr.mxu0 %v543
      %v545 = vand.u32 %v368, 4294901760
      %v546 = vsub.f32 %v368, %v545
      %v547 = vand.u32 %v546, 4294901760
      %v548 = vsub.f32 %v546, %v547
      %v549 = vand.u32 %v548, 4294901760
      %550 = vmatpush1.msra.mxu0 %v549
      %v551 = vand.u32 %v356, 4294901760
      %v552 = vsub.f32 %v356, %v551
      %v553 = vand.u32 %v552, 4294901760
      %v554 = vsub.f32 %v552, %v553
      %v555 = vand.u32 %v554, 4294901760
      %556 = vmatprep.subr.mxu0 %v555
      %v557 = vand.u32 %v355, 4294901760
      %v558 = vsub.f32 %v355, %v557
      %v559 = vand.u32 %v558, 4294901760
      %v560 = vsub.f32 %v558, %v559
      %v561 = vand.u32 %v560, 4294901760
      %562 = vmatpush1.msra.mxu0 %v561
      %v563 = vand.u32 %v343, 4294901760
      %v564 = vsub.f32 %v343, %v563
      %v565 = vand.u32 %v564, 4294901760
      %v566 = vsub.f32 %v564, %v565
      %v567 = vand.u32 %v566, 4294901760
      %568 = vmatprep.subr.mxu0 %v567
      %v569 = vand.u32 %v342, 4294901760
      %v570 = vsub.f32 %v342, %v569
      %v571 = vand.u32 %v570, 4294901760
      %v572 = vsub.f32 %v570, %v571
      %v573 = vand.u32 %v572, 4294901760
      %574 = vmatpush1.msra.mxu0 %v573
      %v575 = vand.u32 %v330, 4294901760
      %v576 = vsub.f32 %v330, %v575
      %v577 = vand.u32 %v576, 4294901760
      %v578 = vsub.f32 %v576, %v577
      %v579 = vand.u32 %v578, 4294901760
      %580 = vmatprep.subr.mxu0 %v579
      %v581 = vand.u32 %v329, 4294901760
      %v582 = vsub.f32 %v329, %v581
      %v583 = vand.u32 %v582, 4294901760
      %v584 = vsub.f32 %v582, %v583
      %v585 = vand.u32 %v584, 4294901760
      %586 = vmatpush1.msra.mxu0 %v585
      %v587 = vand.u32 %v317, 4294901760
      %v588 = vsub.f32 %v317, %v587
      %v589 = vand.u32 %v588, 4294901760
      %v590 = vsub.f32 %v588, %v589
      %v591 = vand.u32 %v590, 4294901760
      %592 = vmatprep.subr.mxu0 %v591
      %v593 = vand.u32 %v316, 4294901760
      %v594 = vsub.f32 %v316, %v593
      %v595 = vand.u32 %v594, 4294901760
      %v596 = vsub.f32 %v594, %v595
      %v597 = vand.u32 %v596, 4294901760
      %598 = vmatpush1.msra.mxu0 %v597
      %v599 = vand.u32 %v304, 4294901760
      %v600 = vsub.f32 %v304, %v599
      %v601 = vand.u32 %v600, 4294901760
      %v602 = vsub.f32 %v600, %v601
      %v603 = vand.u32 %v602, 4294901760
      %604 = vmatprep.subr.mxu0 %v603
      %v605 = vand.u32 %v303, 4294901760
      %v606 = vsub.f32 %v303, %v605
      %v607 = vand.u32 %v606, 4294901760
      %v608 = vsub.f32 %v606, %v607
      %v609 = vand.u32 %v608, 4294901760
      %610 = vmatpush1.msra.mxu0 %v609
      %v611 = vand.u32 %v291, 4294901760
      %v612 = vsub.f32 %v291, %v611
      %v613 = vand.u32 %v612, 4294901760
      %v614 = vsub.f32 %v612, %v613
      %v615 = vand.u32 %v614, 4294901760
      %616 = vmatprep.subr.mxu0 %v615
      %v617 = vand.u32 %v290, 4294901760
      %v618 = vsub.f32 %v290, %v617
      %v619 = vand.u32 %v618, 4294901760
      %v620 = vsub.f32 %v618, %v619
      %v621 = vand.u32 %v620, 4294901760
      %622 = vmatpush1.msra.mxu0 %v621
      %v623 = vand.u32 %v278, 4294901760
      %v624 = vsub.f32 %v278, %v623
      %v625 = vand.u32 %v624, 4294901760
      %v626 = vsub.f32 %v624, %v625
      %v627 = vand.u32 %v626, 4294901760
      %628 = vmatprep.subr.mxu0 %v627
      %v629 = vand.u32 %v277, 4294901760
      %v630 = vsub.f32 %v277, %v629
      %v631 = vand.u32 %v630, 4294901760
      %v632 = vsub.f32 %v630, %v631
      %v633 = vand.u32 %v632, 4294901760
      %634 = vmatpush1.msra.mxu0 %v633
      %v635 = vand.u32 %v265, 4294901760
      %v636 = vsub.f32 %v265, %v635
      %v637 = vand.u32 %v636, 4294901760
      %v638 = vsub.f32 %v636, %v637
      %v639 = vand.u32 %v638, 4294901760
      %640 = vmatprep.subr.mxu0 %v639
      %v641 = vand.u32 %v264, 4294901760
      %v642 = vsub.f32 %v264, %v641
      %v643 = vand.u32 %v642, 4294901760
      %v644 = vsub.f32 %v642, %v643
      %v645 = vand.u32 %v644, 4294901760
      %646 = vmatpush1.msra.mxu0 %v645
      %v647 = vand.u32 %v252, 4294901760
      %v648 = vsub.f32 %v252, %v647
      %v649 = vand.u32 %v648, 4294901760
      %v650 = vsub.f32 %v648, %v649
      %v651 = vand.u32 %v650, 4294901760
      %652 = vmatprep.subr.mxu0 %v651
      %v653 = vand.u32 %v251, 4294901760
      %v654 = vsub.f32 %v251, %v653
      %v655 = vand.u32 %v654, 4294901760
      %v656 = vsub.f32 %v654, %v655
      %v657 = vand.u32 %v656, 4294901760
      %658 = vmatpush1.msra.mxu0 %v657
      %v659 = vand.u32 %v239, 4294901760
      %v660 = vsub.f32 %v239, %v659
      %v661 = vand.u32 %v660, 4294901760
      %v662 = vsub.f32 %v660, %v661
      %v663 = vand.u32 %v662, 4294901760
      %664 = vmatprep.subr.mxu0 %v663
      %v665 = vand.u32 %v238, 4294901760
      %v666 = vsub.f32 %v238, %v665
      %v667 = vand.u32 %v666, 4294901760
      %v668 = vsub.f32 %v666, %v667
      %v669 = vand.u32 %v668, 4294901760
      %670 = vmatpush1.msra.mxu0 %v669
      %v671 = vand.u32 %v226, 4294901760
      %v672 = vsub.f32 %v226, %v671
      %v673 = vand.u32 %v672, 4294901760
      %v674 = vsub.f32 %v672, %v673
      %v675 = vand.u32 %v674, 4294901760
      %676 = vmatprep.subr.mxu0 %v675
      %v677 = vand.u32 %v225, 4294901760
      %v678 = vsub.f32 %v225, %v677
      %v679 = vand.u32 %v678, 4294901760
      %v680 = vsub.f32 %v678, %v679
      %v681 = vand.u32 %v680, 4294901760
      %682 = vmatpush1.msra.mxu0 %v681
      %v683 = vand.u32 %v213, 4294901760
      %v684 = vsub.f32 %v213, %v683
      %v685 = vand.u32 %v684, 4294901760
      %v686 = vsub.f32 %v684, %v685
      %v687 = vand.u32 %v686, 4294901760
      %688 = vmatprep.subr.mxu0 %v687
      %v689 = vand.u32 %v212, 4294901760
      %v690 = vsub.f32 %v212, %v689
      %v691 = vand.u32 %v690, 4294901760
      %v692 = vsub.f32 %v690, %v691
      %v693 = vand.u32 %v692, 4294901760
      %694 = vmatpush1.msra.mxu0 %v693
      %v695 = vand.u32 %v200, 4294901760
      %v696 = vsub.f32 %v200, %v695
      %v697 = vand.u32 %v696, 4294901760
      %v698 = vsub.f32 %v696, %v697
      %v699 = vand.u32 %v698, 4294901760
      %700 = vmatprep.subr.mxu0 %v699
      %v701 = vand.u32 %v199, 4294901760
      %v702 = vsub.f32 %v199, %v701
      %v703 = vand.u32 %v702, 4294901760
      %v704 = vsub.f32 %v702, %v703
      %v705 = vand.u32 %v704, 4294901760
      %706 = vmatpush1.msra.mxu0 %v705
      %707 = vmatprep.subr.mxu0 0.0
      %708 = vmatpush2.msra.mxu0 0.0
      %709 = vmatprep.subr.mxu0 0.0
      %710 = vmatpush2.msra.mxu0 0.0
      %711 = vmatprep.subr.mxu0 0.0
      %712 = vmatpush2.msra.mxu0 0.0
      %713 = vmatprep.subr.mxu0 0.0
      %714 = vmatpush2.msra.mxu0 0.0
      %715 = vmatprep.subr.mxu0 0.0
      %716 = vmatpush2.msra.mxu0 0.0
      %717 = vmatprep.subr.mxu0 0.0
      %718 = vmatpush2.msra.mxu0 0.0
      %719 = vmatprep.subr.mxu0 0.0
      %720 = vmatpush2.msra.mxu0 0.0
      %721 = vmatprep.subr.mxu0 0.0
      %722 = vmatpush2.msra.mxu0 0.0
      %723 = vmatprep.subr.mxu0 0.0
      %724 = vmatpush2.msra.mxu0 0.0
      %725 = vmatprep.subr.mxu0 0.0
      %726 = vmatpush2.msra.mxu0 0.0
      %727 = vmatprep.subr.mxu0 0.0
      %728 = vmatpush2.msra.mxu0 0.0
      %729 = vmatprep.subr.mxu0 0.0
      %730 = vmatpush2.msra.mxu0 0.0
      %731 = vmatprep.subr.mxu0 0.0
      %732 = vmatpush2.msra.mxu0 0.0
      %733 = vmatprep.subr.mxu0 0.0
      %734 = vmatpush2.msra.mxu0 0.0
      %735 = vmatprep.subr.mxu0 0.0
      %736 = vmatpush2.msra.mxu0 0.0
      %737 = vmatprep.subr.mxu0 0.0
      %738 = vmatpush2.msra.mxu0 0.0
      %739 = vmatprep.mubr.f32.mxu0 0.0
      %v740 = vand.u32 %v198, 4294901760
      %741 = vmatmul.mubr.f32.gmra.mxu0 %v740
      %v742 = vpop.f32.mrf.mxu0
      %v743 = vadd.f32 %v511, %v742
      %v744 = vpop.f32.mrf.mxu0
      %v745 = vadd.f32 %v513, %v744
      %746 = vdwg.mxu0
      %v747 = vand.u32 %v395, 4294901760
      %v748 = vsub.f32 %v395, %v747
      %749 = vmatprep.subr.mxu0 %v748
      %v750 = vand.u32 %v394, 4294901760
      %v751 = vsub.f32 %v394, %v750
      %752 = vmatpush1.msra.mxu0 %v751
      %v753 = vand.u32 %v382, 4294901760
      %v754 = vsub.f32 %v382, %v753
      %755 = vmatprep.subr.mxu0 %v754
      %v756 = vand.u32 %v381, 4294901760
      %v757 = vsub.f32 %v381, %v756
      %758 = vmatpush1.msra.mxu0 %v757
      %v759 = vand.u32 %v369, 4294901760
      %v760 = vsub.f32 %v369, %v759
      %761 = vmatprep.subr.mxu0 %v760
      %v762 = vand.u32 %v368, 4294901760
      %v763 = vsub.f32 %v368, %v762
      %764 = vmatpush1.msra.mxu0 %v763
      %v765 = vand.u32 %v356, 4294901760
      %v766 = vsub.f32 %v356, %v765
      %767 = vmatprep.subr.mxu0 %v766
      %v768 = vand.u32 %v355, 4294901760
      %v769 = vsub.f32 %v355, %v768
      %770 = vmatpush1.msra.mxu0 %v769
      %v771 = vand.u32 %v343, 4294901760
      %v772 = vsub.f32 %v343, %v771
      %773 = vmatprep.subr.mxu0 %v772
      %v774 = vand.u32 %v342, 4294901760
      %v775 = vsub.f32 %v342, %v774
      %776 = vmatpush1.msra.mxu0 %v775
      %v777 = vand.u32 %v330, 4294901760
      %v778 = vsub.f32 %v330, %v777
      %779 = vmatprep.subr.mxu0 %v778
      %v780 = vand.u32 %v329, 4294901760
      %v781 = vsub.f32 %v329, %v780
      %782 = vmatpush1.msra.mxu0 %v781
      %v783 = vand.u32 %v317, 4294901760
      %v784 = vsub.f32 %v317, %v783
      %785 = vmatprep.subr.mxu0 %v784
      %v786 = vand.u32 %v316, 4294901760
      %v787 = vsub.f32 %v316, %v786
      %788 = vmatpush1.msra.mxu0 %v787
      %v789 = vand.u32 %v304, 4294901760
      %v790 = vsub.f32 %v304, %v789
      %791 = vmatprep.subr.mxu0 %v790
      %v792 = vand.u32 %v303, 4294901760
      %v793 = vsub.f32 %v303, %v792
      %794 = vmatpush1.msra.mxu0 %v793
      %v795 = vand.u32 %v291, 4294901760
      %v796 = vsub.f32 %v291, %v795
      %797 = vmatprep.subr.mxu0 %v796
      %v798 = vand.u32 %v290, 4294901760
      %v799 = vsub.f32 %v290, %v798
      %800 = vmatpush1.msra.mxu0 %v799
      %v801 = vand.u32 %v278, 4294901760
      %v802 = vsub.f32 %v278, %v801
      %803 = vmatprep.subr.mxu0 %v802
      %v804 = vand.u32 %v277, 4294901760
      %v805 = vsub.f32 %v277, %v804
      %806 = vmatpush1.msra.mxu0 %v805
      %v807 = vand.u32 %v265, 4294901760
      %v808 = vsub.f32 %v265, %v807
      %809 = vmatprep.subr.mxu0 %v808
      %v810 = vand.u32 %v264, 4294901760
      %v811 = vsub.f32 %v264, %v810
      %812 = vmatpush1.msra.mxu0 %v811
      %v813 = vand.u32 %v252, 4294901760
      %v814 = vsub.f32 %v252, %v813
      %815 = vmatprep.subr.mxu0 %v814
      %v816 = vand.u32 %v251, 4294901760
      %v817 = vsub.f32 %v251, %v816
      %818 = vmatpush1.msra.mxu0 %v817
      %v819 = vand.u32 %v239, 4294901760
      %v820 = vsub.f32 %v239, %v819
      %821 = vmatprep.subr.mxu0 %v820
      %v822 = vand.u32 %v238, 4294901760
      %v823 = vsub.f32 %v238, %v822
      %824 = vmatpush1.msra.mxu0 %v823
      %v825 = vand.u32 %v226, 4294901760
      %v826 = vsub.f32 %v226, %v825
      %827 = vmatprep.subr.mxu0 %v826
      %v828 = vand.u32 %v225, 4294901760
      %v829 = vsub.f32 %v225, %v828
      %830 = vmatpush1.msra.mxu0 %v829
      %v831 = vand.u32 %v213, 4294901760
      %v832 = vsub.f32 %v213, %v831
      %833 = vmatprep.subr.mxu0 %v832
      %v834 = vand.u32 %v212, 4294901760
      %v835 = vsub.f32 %v212, %v834
      %836 = vmatpush1.msra.mxu0 %v835
      %v837 = vand.u32 %v200, 4294901760
      %v838 = vsub.f32 %v200, %v837
      %839 = vmatprep.subr.mxu0 %v838
      %v840 = vand.u32 %v199, 4294901760
      %v841 = vsub.f32 %v199, %v840
      %842 = vmatpush1.msra.mxu0 %v841
      %843 = vmatprep.subr.mxu0 0.0
      %844 = vmatpush2.msra.mxu0 0.0
      %845 = vmatprep.subr.mxu0 0.0
      %846 = vmatpush2.msra.mxu0 0.0
      %847 = vmatprep.subr.mxu0 0.0
      %848 = vmatpush2.msra.mxu0 0.0
      %849 = vmatprep.subr.mxu0 0.0
      %850 = vmatpush2.msra.mxu0 0.0
      %851 = vmatprep.subr.mxu0 0.0
      %852 = vmatpush2.msra.mxu0 0.0
      %853 = vmatprep.subr.mxu0 0.0
      %854 = vmatpush2.msra.mxu0 0.0
      %855 = vmatprep.subr.mxu0 0.0
      %856 = vmatpush2.msra.mxu0 0.0
      %857 = vmatprep.subr.mxu0 0.0
      %858 = vmatpush2.msra.mxu0 0.0
      %859 = vmatprep.subr.mxu0 0.0
      %860 = vmatpush2.msra.mxu0 0.0
      %861 = vmatprep.subr.mxu0 0.0
      %862 = vmatpush2.msra.mxu0 0.0
      %863 = vmatprep.subr.mxu0 0.0
      %864 = vmatpush2.msra.mxu0 0.0
      %865 = vmatprep.subr.mxu0 0.0
      %866 = vmatpush2.msra.mxu0 0.0
      %867 = vmatprep.subr.mxu0 0.0
      %868 = vmatpush2.msra.mxu0 0.0
      %869 = vmatprep.subr.mxu0 0.0
      %870 = vmatpush2.msra.mxu0 0.0
      %871 = vmatprep.subr.mxu0 0.0
      %872 = vmatpush2.msra.mxu0 0.0
      %873 = vmatprep.subr.mxu0 0.0
      %874 = vmatpush2.msra.mxu0 0.0
      %875 = vmatprep.mubr.f32.mxu0 0.0
      %v876 = vand.u32 %v198, 4294901760
      %v877 = vsub.f32 %v198, %v876
      %878 = vmatmul.mubr.f32.gmra.mxu0 %v877
      %v879 = vpop.f32.mrf.mxu0
      %v880 = vadd.f32 %v743, %v879
      %v881 = vpop.f32.mrf.mxu0
      %v882 = vadd.f32 %v745, %v881
      %883 = vdwg.mxu0
      %v884 = vand.u32 %v395, 4294901760
      %885 = vmatprep.subr.mxu0 %v884
      %v886 = vand.u32 %v394, 4294901760
      %887 = vmatpush1.msra.mxu0 %v886
      %v888 = vand.u32 %v382, 4294901760
      %889 = vmatprep.subr.mxu0 %v888
      %v890 = vand.u32 %v381, 4294901760
      %891 = vmatpush1.msra.mxu0 %v890
      %v892 = vand.u32 %v369, 4294901760
      %893 = vmatprep.subr.mxu0 %v892
      %v894 = vand.u32 %v368, 4294901760
      %895 = vmatpush1.msra.mxu0 %v894
      %v896 = vand.u32 %v356, 4294901760
      %897 = vmatprep.subr.mxu0 %v896
      %v898 = vand.u32 %v355, 4294901760
      %899 = vmatpush1.msra.mxu0 %v898
      %v900 = vand.u32 %v343, 4294901760
      %901 = vmatprep.subr.mxu0 %v900
      %v902 = vand.u32 %v342, 4294901760
      %903 = vmatpush1.msra.mxu0 %v902
      %v904 = vand.u32 %v330, 4294901760
      %905 = vmatprep.subr.mxu0 %v904
      %v906 = vand.u32 %v329, 4294901760
      %907 = vmatpush1.msra.mxu0 %v906
      %v908 = vand.u32 %v317, 4294901760
      %909 = vmatprep.subr.mxu0 %v908
      %v910 = vand.u32 %v316, 4294901760
      %911 = vmatpush1.msra.mxu0 %v910
      %v912 = vand.u32 %v304, 4294901760
      %913 = vmatprep.subr.mxu0 %v912
      %v914 = vand.u32 %v303, 4294901760
      %915 = vmatpush1.msra.mxu0 %v914
      %v916 = vand.u32 %v291, 4294901760
      %917 = vmatprep.subr.mxu0 %v916
      %v918 = vand.u32 %v290, 4294901760
      %919 = vmatpush1.msra.mxu0 %v918
      %v920 = vand.u32 %v278, 4294901760
      %921 = vmatprep.subr.mxu0 %v920
      %v922 = vand.u32 %v277, 4294901760
      %923 = vmatpush1.msra.mxu0 %v922
      %v924 = vand.u32 %v265, 4294901760
      %925 = vmatprep.subr.mxu0 %v924
      %v926 = vand.u32 %v264, 4294901760
      %927 = vmatpush1.msra.mxu0 %v926
      %v928 = vand.u32 %v252, 4294901760
      %929 = vmatprep.subr.mxu0 %v928
      %v930 = vand.u32 %v251, 4294901760
      %931 = vmatpush1.msra.mxu0 %v930
      %v932 = vand.u32 %v239, 4294901760
      %933 = vmatprep.subr.mxu0 %v932
      %v934 = vand.u32 %v238, 4294901760
      %935 = vmatpush1.msra.mxu0 %v934
      %v936 = vand.u32 %v226, 4294901760
      %937 = vmatprep.subr.mxu0 %v936
      %v938 = vand.u32 %v225, 4294901760
      %939 = vmatpush1.msra.mxu0 %v938
      %v940 = vand.u32 %v213, 4294901760
      %941 = vmatprep.subr.mxu0 %v940
      %v942 = vand.u32 %v212, 4294901760
      %943 = vmatpush1.msra.mxu0 %v942
      %v944 = vand.u32 %v200, 4294901760
      %945 = vmatprep.subr.mxu0 %v944
      %v946 = vand.u32 %v199, 4294901760
      %947 = vmatpush1.msra.mxu0 %v946
      %948 = vmatprep.subr.mxu0 0.0
      %949 = vmatpush2.msra.mxu0 0.0
      %950 = vmatprep.subr.mxu0 0.0
      %951 = vmatpush2.msra.mxu0 0.0
      %952 = vmatprep.subr.mxu0 0.0
      %953 = vmatpush2.msra.mxu0 0.0
      %954 = vmatprep.subr.mxu0 0.0
      %955 = vmatpush2.msra.mxu0 0.0
      %956 = vmatprep.subr.mxu0 0.0
      %957 = vmatpush2.msra.mxu0 0.0
      %958 = vmatprep.subr.mxu0 0.0
      %959 = vmatpush2.msra.mxu0 0.0
      %960 = vmatprep.subr.mxu0 0.0
      %961 = vmatpush2.msra.mxu0 0.0
      %962 = vmatprep.subr.mxu0 0.0
      %963 = vmatpush2.msra.mxu0 0.0
      %964 = vmatprep.subr.mxu0 0.0
      %965 = vmatpush2.msra.mxu0 0.0
      %966 = vmatprep.subr.mxu0 0.0
      %967 = vmatpush2.msra.mxu0 0.0
      %968 = vmatprep.subr.mxu0 0.0
      %969 = vmatpush2.msra.mxu0 0.0
      %970 = vmatprep.subr.mxu0 0.0
      %971 = vmatpush2.msra.mxu0 0.0
      %972 = vmatprep.subr.mxu0 0.0
      %973 = vmatpush2.msra.mxu0 0.0
      %974 = vmatprep.subr.mxu0 0.0
      %975 = vmatpush2.msra.mxu0 0.0
      %976 = vmatprep.subr.mxu0 0.0
      %977 = vmatpush2.msra.mxu0 0.0
      %978 = vmatprep.subr.mxu0 0.0
      %979 = vmatpush2.msra.mxu0 0.0
      %980 = vmatprep.mubr.f32.mxu0 0.0
      %v981 = vand.u32 %v198, 4294901760
      %v982 = vsub.f32 %v198, %v981
      %v983 = vand.u32 %v982, 4294901760
      %984 = vmatmul.mubr.f32.gmra.mxu0 %v983
      %v985 = vpop.f32.mrf.mxu0
      %v986 = vadd.f32 %v880, %v985
      %v987 = vpop.f32.mrf.mxu0
      %v988 = vadd.f32 %v882, %v987
      %989 = vdwg.mxu0
      %v990 = vand.u32 %v395, 4294901760
      %v991 = vsub.f32 %v395, %v990
      %v992 = vand.u32 %v991, 4294901760
      %993 = vmatprep.subr.mxu0 %v992
      %v994 = vand.u32 %v394, 4294901760
      %v995 = vsub.f32 %v394, %v994
      %v996 = vand.u32 %v995, 4294901760
      %997 = vmatpush1.msra.mxu0 %v996
      %v998 = vand.u32 %v382, 4294901760
      %v999 = vsub.f32 %v382, %v998
      %v1000 = vand.u32 %v999, 4294901760
      %1001 = vmatprep.subr.mxu0 %v1000
      %v1002 = vand.u32 %v381, 4294901760
      %v1003 = vsub.f32 %v381, %v1002
      %v1004 = vand.u32 %v1003, 4294901760
      %1005 = vmatpush1.msra.mxu0 %v1004
      %v1006 = vand.u32 %v369, 4294901760
      %v1007 = vsub.f32 %v369, %v1006
      %v1008 = vand.u32 %v1007, 4294901760
      %1009 = vmatprep.subr.mxu0 %v1008
      %v1010 = vand.u32 %v368, 4294901760
      %v1011 = vsub.f32 %v368, %v1010
      %v1012 = vand.u32 %v1011, 4294901760
      %1013 = vmatpush1.msra.mxu0 %v1012
      %v1014 = vand.u32 %v356, 4294901760
      %v1015 = vsub.f32 %v356, %v1014
      %v1016 = vand.u32 %v1015, 4294901760
      %1017 = vmatprep.subr.mxu0 %v1016
      %v1018 = vand.u32 %v355, 4294901760
      %v1019 = vsub.f32 %v355, %v1018
      %v1020 = vand.u32 %v1019, 4294901760
      %1021 = vmatpush1.msra.mxu0 %v1020
      %v1022 = vand.u32 %v343, 4294901760
      %v1023 = vsub.f32 %v343, %v1022
      %v1024 = vand.u32 %v1023, 4294901760
      %1025 = vmatprep.subr.mxu0 %v1024
      %v1026 = vand.u32 %v342, 4294901760
      %v1027 = vsub.f32 %v342, %v1026
      %v1028 = vand.u32 %v1027, 4294901760
      %1029 = vmatpush1.msra.mxu0 %v1028
      %v1030 = vand.u32 %v330, 4294901760
      %v1031 = vsub.f32 %v330, %v1030
      %v1032 = vand.u32 %v1031, 4294901760
      %1033 = vmatprep.subr.mxu0 %v1032
      %v1034 = vand.u32 %v329, 4294901760
      %v1035 = vsub.f32 %v329, %v1034
      %v1036 = vand.u32 %v1035, 4294901760
      %1037 = vmatpush1.msra.mxu0 %v1036
      %v1038 = vand.u32 %v317, 4294901760
      %v1039 = vsub.f32 %v317, %v1038
      %v1040 = vand.u32 %v1039, 4294901760
      %1041 = vmatprep.subr.mxu0 %v1040
      %v1042 = vand.u32 %v316, 4294901760
      %v1043 = vsub.f32 %v316, %v1042
      %v1044 = vand.u32 %v1043, 4294901760
      %1045 = vmatpush1.msra.mxu0 %v1044
      %v1046 = vand.u32 %v304, 4294901760
      %v1047 = vsub.f32 %v304, %v1046
      %v1048 = vand.u32 %v1047, 4294901760
      %1049 = vmatprep.subr.mxu0 %v1048
      %v1050 = vand.u32 %v303, 4294901760
      %v1051 = vsub.f32 %v303, %v1050
      %v1052 = vand.u32 %v1051, 4294901760
      %1053 = vmatpush1.msra.mxu0 %v1052
      %v1054 = vand.u32 %v291, 4294901760
      %v1055 = vsub.f32 %v291, %v1054
      %v1056 = vand.u32 %v1055, 4294901760
      %1057 = vmatprep.subr.mxu0 %v1056
      %v1058 = vand.u32 %v290, 4294901760
      %v1059 = vsub.f32 %v290, %v1058
      %v1060 = vand.u32 %v1059, 4294901760
      %1061 = vmatpush1.msra.mxu0 %v1060
      %v1062 = vand.u32 %v278, 4294901760
      %v1063 = vsub.f32 %v278, %v1062
      %v1064 = vand.u32 %v1063, 4294901760
      %1065 = vmatprep.subr.mxu0 %v1064
      %v1066 = vand.u32 %v277, 4294901760
      %v1067 = vsub.f32 %v277, %v1066
      %v1068 = vand.u32 %v1067, 4294901760
      %1069 = vmatpush1.msra.mxu0 %v1068
      %v1070 = vand.u32 %v265, 4294901760
      %v1071 = vsub.f32 %v265, %v1070
      %v1072 = vand.u32 %v1071, 4294901760
      %1073 = vmatprep.subr.mxu0 %v1072
      %v1074 = vand.u32 %v264, 4294901760
      %v1075 = vsub.f32 %v264, %v1074
      %v1076 = vand.u32 %v1075, 4294901760
      %1077 = vmatpush1.msra.mxu0 %v1076
      %v1078 = vand.u32 %v252, 4294901760
      %v1079 = vsub.f32 %v252, %v1078
      %v1080 = vand.u32 %v1079, 4294901760
      %1081 = vmatprep.subr.mxu0 %v1080
      %v1082 = vand.u32 %v251, 4294901760
      %v1083 = vsub.f32 %v251, %v1082
      %v1084 = vand.u32 %v1083, 4294901760
      %1085 = vmatpush1.msra.mxu0 %v1084
      %v1086 = vand.u32 %v239, 4294901760
      %v1087 = vsub.f32 %v239, %v1086
      %v1088 = vand.u32 %v1087, 4294901760
      %1089 = vmatprep.subr.mxu0 %v1088
      %v1090 = vand.u32 %v238, 4294901760
      %v1091 = vsub.f32 %v238, %v1090
      %v1092 = vand.u32 %v1091, 4294901760
      %1093 = vmatpush1.msra.mxu0 %v1092
      %v1094 = vand.u32 %v226, 4294901760
      %v1095 = vsub.f32 %v226, %v1094
      %v1096 = vand.u32 %v1095, 4294901760
      %1097 = vmatprep.subr.mxu0 %v1096
      %v1098 = vand.u32 %v225, 4294901760
      %v1099 = vsub.f32 %v225, %v1098
      %v1100 = vand.u32 %v1099, 4294901760
      %1101 = vmatpush1.msra.mxu0 %v1100
      %v1102 = vand.u32 %v213, 4294901760
      %v1103 = vsub.f32 %v213, %v1102
      %v1104 = vand.u32 %v1103, 4294901760
      %1105 = vmatprep.subr.mxu0 %v1104
      %v1106 = vand.u32 %v212, 4294901760
      %v1107 = vsub.f32 %v212, %v1106
      %v1108 = vand.u32 %v1107, 4294901760
      %1109 = vmatpush1.msra.mxu0 %v1108
      %v1110 = vand.u32 %v200, 4294901760
      %v1111 = vsub.f32 %v200, %v1110
      %v1112 = vand.u32 %v1111, 4294901760
      %1113 = vmatprep.subr.mxu0 %v1112
      %v1114 = vand.u32 %v199, 4294901760
      %v1115 = vsub.f32 %v199, %v1114
      %v1116 = vand.u32 %v1115, 4294901760
      %1117 = vmatpush1.msra.mxu0 %v1116
      %1118 = vmatprep.subr.mxu0 0.0
      %1119 = vmatpush2.msra.mxu0 0.0
      %1120 = vmatprep.subr.mxu0 0.0
      %1121 = vmatpush2.msra.mxu0 0.0
      %1122 = vmatprep.subr.mxu0 0.0
      %1123 = vmatpush2.msra.mxu0 0.0
      %1124 = vmatprep.subr.mxu0 0.0
      %1125 = vmatpush2.msra.mxu0 0.0
      %1126 = vmatprep.subr.mxu0 0.0
      %1127 = vmatpush2.msra.mxu0 0.0
      %1128 = vmatprep.subr.mxu0 0.0
      %1129 = vmatpush2.msra.mxu0 0.0
      %1130 = vmatprep.subr.mxu0 0.0
      %1131 = vmatpush2.msra.mxu0 0.0
      %1132 = vmatprep.subr.mxu0 0.0
      %1133 = vmatpush2.msra.mxu0 0.0
      %1134 = vmatprep.subr.mxu0 0.0
      %1135 = vmatpush2.msra.mxu0 0.0
      %1136 = vmatprep.subr.mxu0 0.0
      %1137 = vmatpush2.msra.mxu0 0.0
      %1138 = vmatprep.subr.mxu0 0.0
      %1139 = vmatpush2.msra.mxu0 0.0
      %1140 = vmatprep.subr.mxu0 0.0
      %1141 = vmatpush2.msra.mxu0 0.0
      %1142 = vmatprep.subr.mxu0 0.0
      %1143 = vmatpush2.msra.mxu0 0.0
      %1144 = vmatprep.subr.mxu0 0.0
      %1145 = vmatpush2.msra.mxu0 0.0
      %1146 = vmatprep.subr.mxu0 0.0
      %1147 = vmatpush2.msra.mxu0 0.0
      %1148 = vmatprep.subr.mxu0 0.0
      %1149 = vmatpush2.msra.mxu0 0.0
      %1150 = vmatprep.mubr.f32.mxu0 0.0
      %v1151 = vand.u32 %v198, 4294901760
      %1152 = vmatmul.mubr.f32.gmra.mxu0 %v1151
      %v1153 = vpop.f32.mrf.mxu0
      %v1154 = vadd.f32 %v986, %v1153
      %v1155 = vpop.f32.mrf.mxu0
      %v1156 = vadd.f32 %v988, %v1155
      %1157 = vdwg.mxu0
      %v1158 = vand.u32 %v395, 4294901760
      %1159 = vmatprep.subr.mxu0 %v1158
      %v1160 = vand.u32 %v394, 4294901760
      %1161 = vmatpush1.msra.mxu0 %v1160
      %v1162 = vand.u32 %v382, 4294901760
      %1163 = vmatprep.subr.mxu0 %v1162
      %v1164 = vand.u32 %v381, 4294901760
      %1165 = vmatpush1.msra.mxu0 %v1164
      %v1166 = vand.u32 %v369, 4294901760
      %1167 = vmatprep.subr.mxu0 %v1166
      %v1168 = vand.u32 %v368, 4294901760
      %1169 = vmatpush1.msra.mxu0 %v1168
      %v1170 = vand.u32 %v356, 4294901760
      %1171 = vmatprep.subr.mxu0 %v1170
      %v1172 = vand.u32 %v355, 4294901760
      %1173 = vmatpush1.msra.mxu0 %v1172
      %v1174 = vand.u32 %v343, 4294901760
      %1175 = vmatprep.subr.mxu0 %v1174
      %v1176 = vand.u32 %v342, 4294901760
      %1177 = vmatpush1.msra.mxu0 %v1176
      %v1178 = vand.u32 %v330, 4294901760
      %1179 = vmatprep.subr.mxu0 %v1178
      %v1180 = vand.u32 %v329, 4294901760
      %1181 = vmatpush1.msra.mxu0 %v1180
      %v1182 = vand.u32 %v317, 4294901760
      %1183 = vmatprep.subr.mxu0 %v1182
      %v1184 = vand.u32 %v316, 4294901760
      %1185 = vmatpush1.msra.mxu0 %v1184
      %v1186 = vand.u32 %v304, 4294901760
      %1187 = vmatprep.subr.mxu0 %v1186
      %v1188 = vand.u32 %v303, 4294901760
      %1189 = vmatpush1.msra.mxu0 %v1188
      %v1190 = vand.u32 %v291, 4294901760
      %1191 = vmatprep.subr.mxu0 %v1190
      %v1192 = vand.u32 %v290, 4294901760
      %1193 = vmatpush1.msra.mxu0 %v1192
      %v1194 = vand.u32 %v278, 4294901760
      %1195 = vmatprep.subr.mxu0 %v1194
      %v1196 = vand.u32 %v277, 4294901760
      %1197 = vmatpush1.msra.mxu0 %v1196
      %v1198 = vand.u32 %v265, 4294901760
      %1199 = vmatprep.subr.mxu0 %v1198
      %v1200 = vand.u32 %v264, 4294901760
      %1201 = vmatpush1.msra.mxu0 %v1200
      %v1202 = vand.u32 %v252, 4294901760
      %1203 = vmatprep.subr.mxu0 %v1202
      %v1204 = vand.u32 %v251, 4294901760
      %1205 = vmatpush1.msra.mxu0 %v1204
      %v1206 = vand.u32 %v239, 4294901760
      %1207 = vmatprep.subr.mxu0 %v1206
      %v1208 = vand.u32 %v238, 4294901760
      %1209 = vmatpush1.msra.mxu0 %v1208
      %v1210 = vand.u32 %v226, 4294901760
      %1211 = vmatprep.subr.mxu0 %v1210
      %v1212 = vand.u32 %v225, 4294901760
      %1213 = vmatpush1.msra.mxu0 %v1212
      %v1214 = vand.u32 %v213, 4294901760
      %1215 = vmatprep.subr.mxu0 %v1214
      %v1216 = vand.u32 %v212, 4294901760
      %1217 = vmatpush1.msra.mxu0 %v1216
      %v1218 = vand.u32 %v200, 4294901760
      %1219 = vmatprep.subr.mxu0 %v1218
      %v1220 = vand.u32 %v199, 4294901760
      %1221 = vmatpush1.msra.mxu0 %v1220
      %1222 = vmatprep.subr.mxu0 0.0
      %1223 = vmatpush2.msra.mxu0 0.0
      %1224 = vmatprep.subr.mxu0 0.0
      %1225 = vmatpush2.msra.mxu0 0.0
      %1226 = vmatprep.subr.mxu0 0.0
      %1227 = vmatpush2.msra.mxu0 0.0
      %1228 = vmatprep.subr.mxu0 0.0
      %1229 = vmatpush2.msra.mxu0 0.0
      %1230 = vmatprep.subr.mxu0 0.0
      %1231 = vmatpush2.msra.mxu0 0.0
      %1232 = vmatprep.subr.mxu0 0.0
      %1233 = vmatpush2.msra.mxu0 0.0
      %1234 = vmatprep.subr.mxu0 0.0
      %1235 = vmatpush2.msra.mxu0 0.0
      %1236 = vmatprep.subr.mxu0 0.0
      %1237 = vmatpush2.msra.mxu0 0.0
      %1238 = vmatprep.subr.mxu0 0.0
      %1239 = vmatpush2.msra.mxu0 0.0
      %1240 = vmatprep.subr.mxu0 0.0
      %1241 = vmatpush2.msra.mxu0 0.0
      %1242 = vmatprep.subr.mxu0 0.0
      %1243 = vmatpush2.msra.mxu0 0.0
      %1244 = vmatprep.subr.mxu0 0.0
      %1245 = vmatpush2.msra.mxu0 0.0
      %1246 = vmatprep.subr.mxu0 0.0
      %1247 = vmatpush2.msra.mxu0 0.0
      %1248 = vmatprep.subr.mxu0 0.0
      %1249 = vmatpush2.msra.mxu0 0.0
      %1250 = vmatprep.subr.mxu0 0.0
      %1251 = vmatpush2.msra.mxu0 0.0
      %1252 = vmatprep.subr.mxu0 0.0
      %1253 = vmatpush2.msra.mxu0 0.0
      %1254 = vmatprep.mubr.f32.mxu0 0.0
      %v1255 = vand.u32 %v198, 4294901760
      %1256 = vmatmul.mubr.f32.gmra.mxu0 %v1255
      %v1257 = vpop.f32.mrf.mxu0
      %v1258 = vadd.f32 %v1154, %v1257
      %v1259 = vpop.f32.mrf.mxu0
      %v1260 = vadd.f32 %v1156, %v1259
      %1261 = vdwg.mxu0
      %v1262 = vand.u32 %v397, 4294901760
      %1263 = vmatprep.subr.mxu0 %v1262
      %v1264 = vand.u32 %v396, 4294901760
      %1265 = vmatpush1.msra.mxu0 %v1264
      %v1266 = vand.u32 %v384, 4294901760
      %1267 = vmatprep.subr.mxu0 %v1266
      %v1268 = vand.u32 %v383, 4294901760
      %1269 = vmatpush1.msra.mxu0 %v1268
      %v1270 = vand.u32 %v371, 4294901760
      %1271 = vmatprep.subr.mxu0 %v1270
      %v1272 = vand.u32 %v370, 4294901760
      %1273 = vmatpush1.msra.mxu0 %v1272
      %v1274 = vand.u32 %v358, 4294901760
      %1275 = vmatprep.subr.mxu0 %v1274
      %v1276 = vand.u32 %v357, 4294901760
      %1277 = vmatpush1.msra.mxu0 %v1276
      %v1278 = vand.u32 %v345, 4294901760
      %1279 = vmatprep.subr.mxu0 %v1278
      %v1280 = vand.u32 %v344, 4294901760
      %1281 = vmatpush1.msra.mxu0 %v1280
      %v1282 = vand.u32 %v332, 4294901760
      %1283 = vmatprep.subr.mxu0 %v1282
      %v1284 = vand.u32 %v331, 4294901760
      %1285 = vmatpush1.msra.mxu0 %v1284
      %v1286 = vand.u32 %v319, 4294901760
      %1287 = vmatprep.subr.mxu0 %v1286
      %v1288 = vand.u32 %v318, 4294901760
      %1289 = vmatpush1.msra.mxu0 %v1288
      %v1290 = vand.u32 %v306, 4294901760
      %1291 = vmatprep.subr.mxu0 %v1290
      %v1292 = vand.u32 %v305, 4294901760
      %1293 = vmatpush1.msra.mxu0 %v1292
      %v1294 = vand.u32 %v293, 4294901760
      %1295 = vmatprep.subr.mxu0 %v1294
      %v1296 = vand.u32 %v292, 4294901760
      %1297 = vmatpush1.msra.mxu0 %v1296
      %v1298 = vand.u32 %v280, 4294901760
      %1299 = vmatprep.subr.mxu0 %v1298
      %v1300 = vand.u32 %v279, 4294901760
      %1301 = vmatpush1.msra.mxu0 %v1300
      %v1302 = vand.u32 %v267, 4294901760
      %1303 = vmatprep.subr.mxu0 %v1302
      %v1304 = vand.u32 %v266, 4294901760
      %1305 = vmatpush1.msra.mxu0 %v1304
      %v1306 = vand.u32 %v254, 4294901760
      %1307 = vmatprep.subr.mxu0 %v1306
      %v1308 = vand.u32 %v253, 4294901760
      %1309 = vmatpush1.msra.mxu0 %v1308
      %v1310 = vand.u32 %v241, 4294901760
      %1311 = vmatprep.subr.mxu0 %v1310
      %v1312 = vand.u32 %v240, 4294901760
      %1313 = vmatpush1.msra.mxu0 %v1312
      %v1314 = vand.u32 %v228, 4294901760
      %1315 = vmatprep.subr.mxu0 %v1314
      %v1316 = vand.u32 %v227, 4294901760
      %1317 = vmatpush1.msra.mxu0 %v1316
      %v1318 = vand.u32 %v215, 4294901760
      %1319 = vmatprep.subr.mxu0 %v1318
      %v1320 = vand.u32 %v214, 4294901760
      %1321 = vmatpush1.msra.mxu0 %v1320
      %v1322 = vand.u32 %v202, 4294901760
      %1323 = vmatprep.subr.mxu0 %v1322
      %v1324 = vand.u32 %v201, 4294901760
      %1325 = vmatpush1.msra.mxu0 %v1324
      %1326 = vmatprep.subr.mxu0 0.0
      %1327 = vmatpush2.msra.mxu0 0.0
      %1328 = vmatprep.subr.mxu0 0.0
      %1329 = vmatpush2.msra.mxu0 0.0
      %1330 = vmatprep.subr.mxu0 0.0
      %1331 = vmatpush2.msra.mxu0 0.0
      %1332 = vmatprep.subr.mxu0 0.0
      %1333 = vmatpush2.msra.mxu0 0.0
      %1334 = vmatprep.subr.mxu0 0.0
      %1335 = vmatpush2.msra.mxu0 0.0
      %1336 = vmatprep.subr.mxu0 0.0
      %1337 = vmatpush2.msra.mxu0 0.0
      %1338 = vmatprep.subr.mxu0 0.0
      %1339 = vmatpush2.msra.mxu0 0.0
      %1340 = vmatprep.subr.mxu0 0.0
      %1341 = vmatpush2.msra.mxu0 0.0
      %1342 = vmatprep.subr.mxu0 0.0
      %1343 = vmatpush2.msra.mxu0 0.0
      %1344 = vmatprep.subr.mxu0 0.0
      %1345 = vmatpush2.msra.mxu0 0.0
      %1346 = vmatprep.subr.mxu0 0.0
      %1347 = vmatpush2.msra.mxu0 0.0
      %1348 = vmatprep.subr.mxu0 0.0
      %1349 = vmatpush2.msra.mxu0 0.0
      %1350 = vmatprep.subr.mxu0 0.0
      %1351 = vmatpush2.msra.mxu0 0.0
      %1352 = vmatprep.subr.mxu0 0.0
      %1353 = vmatpush2.msra.mxu0 0.0
      %1354 = vmatprep.subr.mxu0 0.0
      %1355 = vmatpush2.msra.mxu0 0.0
      %1356 = vmatprep.subr.mxu0 0.0
      %1357 = vmatpush2.msra.mxu0 0.0
      %1358 = vmatprep.mubr.f32.mxu0 0.0
      %v1359 = vand.u32 %v198, 4294901760
      %v1360 = vsub.f32 %v198, %v1359
      %v1361 = vand.u32 %v1360, 4294901760
      %v1362 = vsub.f32 %v1360, %v1361
      %v1363 = vand.u32 %v1362, 4294901760
      %1364 = vmatmul.mubr.f32.gmra.mxu0 %v1363
      %v1365 = vpop.f32.mrf.mxu0
      %v1366 = vadd.f32 0.0, %v1365
      %v1367 = vpop.f32.mrf.mxu0
      %v1368 = vadd.f32 0.0, %v1367
      %1369 = vdwg.mxu0
      %v1370 = vand.u32 %v397, 4294901760
      %v1371 = vsub.f32 %v397, %v1370
      %v1372 = vand.u32 %v1371, 4294901760
      %v1373 = vsub.f32 %v1371, %v1372
      %v1374 = vand.u32 %v1373, 4294901760
      %1375 = vmatprep.subr.mxu0 %v1374
      %v1376 = vand.u32 %v396, 4294901760
      %v1377 = vsub.f32 %v396, %v1376
      %v1378 = vand.u32 %v1377, 4294901760
      %v1379 = vsub.f32 %v1377, %v1378
      %v1380 = vand.u32 %v1379, 4294901760
      %1381 = vmatpush1.msra.mxu0 %v1380
      %v1382 = vand.u32 %v384, 4294901760
      %v1383 = vsub.f32 %v384, %v1382
      %v1384 = vand.u32 %v1383, 4294901760
      %v1385 = vsub.f32 %v1383, %v1384
      %v1386 = vand.u32 %v1385, 4294901760
      %1387 = vmatprep.subr.mxu0 %v1386
      %v1388 = vand.u32 %v383, 4294901760
      %v1389 = vsub.f32 %v383, %v1388
      %v1390 = vand.u32 %v1389, 4294901760
      %v1391 = vsub.f32 %v1389, %v1390
      %v1392 = vand.u32 %v1391, 4294901760
      %1393 = vmatpush1.msra.mxu0 %v1392
      %v1394 = vand.u32 %v371, 4294901760
      %v1395 = vsub.f32 %v371, %v1394
      %v1396 = vand.u32 %v1395, 4294901760
      %v1397 = vsub.f32 %v1395, %v1396
      %v1398 = vand.u32 %v1397, 4294901760
      %1399 = vmatprep.subr.mxu0 %v1398
      %v1400 = vand.u32 %v370, 4294901760
      %v1401 = vsub.f32 %v370, %v1400
      %v1402 = vand.u32 %v1401, 4294901760
      %v1403 = vsub.f32 %v1401, %v1402
      %v1404 = vand.u32 %v1403, 4294901760
      %1405 = vmatpush1.msra.mxu0 %v1404
      %v1406 = vand.u32 %v358, 4294901760
      %v1407 = vsub.f32 %v358, %v1406
      %v1408 = vand.u32 %v1407, 4294901760
      %v1409 = vsub.f32 %v1407, %v1408
      %v1410 = vand.u32 %v1409, 4294901760
      %1411 = vmatprep.subr.mxu0 %v1410
      %v1412 = vand.u32 %v357, 4294901760
      %v1413 = vsub.f32 %v357, %v1412
      %v1414 = vand.u32 %v1413, 4294901760
      %v1415 = vsub.f32 %v1413, %v1414
      %v1416 = vand.u32 %v1415, 4294901760
      %1417 = vmatpush1.msra.mxu0 %v1416
      %v1418 = vand.u32 %v345, 4294901760
      %v1419 = vsub.f32 %v345, %v1418
      %v1420 = vand.u32 %v1419, 4294901760
      %v1421 = vsub.f32 %v1419, %v1420
      %v1422 = vand.u32 %v1421, 4294901760
      %1423 = vmatprep.subr.mxu0 %v1422
      %v1424 = vand.u32 %v344, 4294901760
      %v1425 = vsub.f32 %v344, %v1424
      %v1426 = vand.u32 %v1425, 4294901760
      %v1427 = vsub.f32 %v1425, %v1426
      %v1428 = vand.u32 %v1427, 4294901760
      %1429 = vmatpush1.msra.mxu0 %v1428
      %v1430 = vand.u32 %v332, 4294901760
      %v1431 = vsub.f32 %v332, %v1430
      %v1432 = vand.u32 %v1431, 4294901760
      %v1433 = vsub.f32 %v1431, %v1432
      %v1434 = vand.u32 %v1433, 4294901760
      %1435 = vmatprep.subr.mxu0 %v1434
      %v1436 = vand.u32 %v331, 4294901760
      %v1437 = vsub.f32 %v331, %v1436
      %v1438 = vand.u32 %v1437, 4294901760
      %v1439 = vsub.f32 %v1437, %v1438
      %v1440 = vand.u32 %v1439, 4294901760
      %1441 = vmatpush1.msra.mxu0 %v1440
      %v1442 = vand.u32 %v319, 4294901760
      %v1443 = vsub.f32 %v319, %v1442
      %v1444 = vand.u32 %v1443, 4294901760
      %v1445 = vsub.f32 %v1443, %v1444
      %v1446 = vand.u32 %v1445, 4294901760
      %1447 = vmatprep.subr.mxu0 %v1446
      %v1448 = vand.u32 %v318, 4294901760
      %v1449 = vsub.f32 %v318, %v1448
      %v1450 = vand.u32 %v1449, 4294901760
      %v1451 = vsub.f32 %v1449, %v1450
      %v1452 = vand.u32 %v1451, 4294901760
      %1453 = vmatpush1.msra.mxu0 %v1452
      %v1454 = vand.u32 %v306, 4294901760
      %v1455 = vsub.f32 %v306, %v1454
      %v1456 = vand.u32 %v1455, 4294901760
      %v1457 = vsub.f32 %v1455, %v1456
      %v1458 = vand.u32 %v1457, 4294901760
      %1459 = vmatprep.subr.mxu0 %v1458
      %v1460 = vand.u32 %v305, 4294901760
      %v1461 = vsub.f32 %v305, %v1460
      %v1462 = vand.u32 %v1461, 4294901760
      %v1463 = vsub.f32 %v1461, %v1462
      %v1464 = vand.u32 %v1463, 4294901760
      %1465 = vmatpush1.msra.mxu0 %v1464
      %v1466 = vand.u32 %v293, 4294901760
      %v1467 = vsub.f32 %v293, %v1466
      %v1468 = vand.u32 %v1467, 4294901760
      %v1469 = vsub.f32 %v1467, %v1468
      %v1470 = vand.u32 %v1469, 4294901760
      %1471 = vmatprep.subr.mxu0 %v1470
      %v1472 = vand.u32 %v292, 4294901760
      %v1473 = vsub.f32 %v292, %v1472
      %v1474 = vand.u32 %v1473, 4294901760
      %v1475 = vsub.f32 %v1473, %v1474
      %v1476 = vand.u32 %v1475, 4294901760
      %1477 = vmatpush1.msra.mxu0 %v1476
      %v1478 = vand.u32 %v280, 4294901760
      %v1479 = vsub.f32 %v280, %v1478
      %v1480 = vand.u32 %v1479, 4294901760
      %v1481 = vsub.f32 %v1479, %v1480
      %v1482 = vand.u32 %v1481, 4294901760
      %1483 = vmatprep.subr.mxu0 %v1482
      %v1484 = vand.u32 %v279, 4294901760
      %v1485 = vsub.f32 %v279, %v1484
      %v1486 = vand.u32 %v1485, 4294901760
      %v1487 = vsub.f32 %v1485, %v1486
      %v1488 = vand.u32 %v1487, 4294901760
      %1489 = vmatpush1.msra.mxu0 %v1488
      %v1490 = vand.u32 %v267, 4294901760
      %v1491 = vsub.f32 %v267, %v1490
      %v1492 = vand.u32 %v1491, 4294901760
      %v1493 = vsub.f32 %v1491, %v1492
      %v1494 = vand.u32 %v1493, 4294901760
      %1495 = vmatprep.subr.mxu0 %v1494
      %v1496 = vand.u32 %v266, 4294901760
      %v1497 = vsub.f32 %v266, %v1496
      %v1498 = vand.u32 %v1497, 4294901760
      %v1499 = vsub.f32 %v1497, %v1498
      %v1500 = vand.u32 %v1499, 4294901760
      %1501 = vmatpush1.msra.mxu0 %v1500
      %v1502 = vand.u32 %v254, 4294901760
      %v1503 = vsub.f32 %v254, %v1502
      %v1504 = vand.u32 %v1503, 4294901760
      %v1505 = vsub.f32 %v1503, %v1504
      %v1506 = vand.u32 %v1505, 4294901760
      %1507 = vmatprep.subr.mxu0 %v1506
      %v1508 = vand.u32 %v253, 4294901760
      %v1509 = vsub.f32 %v253, %v1508
      %v1510 = vand.u32 %v1509, 4294901760
      %v1511 = vsub.f32 %v1509, %v1510
      %v1512 = vand.u32 %v1511, 4294901760
      %1513 = vmatpush1.msra.mxu0 %v1512
      %v1514 = vand.u32 %v241, 4294901760
      %v1515 = vsub.f32 %v241, %v1514
      %v1516 = vand.u32 %v1515, 4294901760
      %v1517 = vsub.f32 %v1515, %v1516
      %v1518 = vand.u32 %v1517, 4294901760
      %1519 = vmatprep.subr.mxu0 %v1518
      %v1520 = vand.u32 %v240, 4294901760
      %v1521 = vsub.f32 %v240, %v1520
      %v1522 = vand.u32 %v1521, 4294901760
      %v1523 = vsub.f32 %v1521, %v1522
      %v1524 = vand.u32 %v1523, 4294901760
      %1525 = vmatpush1.msra.mxu0 %v1524
      %v1526 = vand.u32 %v228, 4294901760
      %v1527 = vsub.f32 %v228, %v1526
      %v1528 = vand.u32 %v1527, 4294901760
      %v1529 = vsub.f32 %v1527, %v1528
      %v1530 = vand.u32 %v1529, 4294901760
      %1531 = vmatprep.subr.mxu0 %v1530
      %v1532 = vand.u32 %v227, 4294901760
      %v1533 = vsub.f32 %v227, %v1532
      %v1534 = vand.u32 %v1533, 4294901760
      %v1535 = vsub.f32 %v1533, %v1534
      %v1536 = vand.u32 %v1535, 4294901760
      %1537 = vmatpush1.msra.mxu0 %v1536
      %v1538 = vand.u32 %v215, 4294901760
      %v1539 = vsub.f32 %v215, %v1538
      %v1540 = vand.u32 %v1539, 4294901760
      %v1541 = vsub.f32 %v1539, %v1540
      %v1542 = vand.u32 %v1541, 4294901760
      %1543 = vmatprep.subr.mxu0 %v1542
      %v1544 = vand.u32 %v214, 4294901760
      %v1545 = vsub.f32 %v214, %v1544
      %v1546 = vand.u32 %v1545, 4294901760
      %v1547 = vsub.f32 %v1545, %v1546
      %v1548 = vand.u32 %v1547, 4294901760
      %1549 = vmatpush1.msra.mxu0 %v1548
      %v1550 = vand.u32 %v202, 4294901760
      %v1551 = vsub.f32 %v202, %v1550
      %v1552 = vand.u32 %v1551, 4294901760
      %v1553 = vsub.f32 %v1551, %v1552
      %v1554 = vand.u32 %v1553, 4294901760
      %1555 = vmatprep.subr.mxu0 %v1554
      %v1556 = vand.u32 %v201, 4294901760
      %v1557 = vsub.f32 %v201, %v1556
      %v1558 = vand.u32 %v1557, 4294901760
      %v1559 = vsub.f32 %v1557, %v1558
      %v1560 = vand.u32 %v1559, 4294901760
      %1561 = vmatpush1.msra.mxu0 %v1560
      %1562 = vmatprep.subr.mxu0 0.0
      %1563 = vmatpush2.msra.mxu0 0.0
      %1564 = vmatprep.subr.mxu0 0.0
      %1565 = vmatpush2.msra.mxu0 0.0
      %1566 = vmatprep.subr.mxu0 0.0
      %1567 = vmatpush2.msra.mxu0 0.0
      %1568 = vmatprep.subr.mxu0 0.0
      %1569 = vmatpush2.msra.mxu0 0.0
      %1570 = vmatprep.subr.mxu0 0.0
      %1571 = vmatpush2.msra.mxu0 0.0
      %1572 = vmatprep.subr.mxu0 0.0
      %1573 = vmatpush2.msra.mxu0 0.0
      %1574 = vmatprep.subr.mxu0 0.0
      %1575 = vmatpush2.msra.mxu0 0.0
      %1576 = vmatprep.subr.mxu0 0.0
      %1577 = vmatpush2.msra.mxu0 0.0
      %1578 = vmatprep.subr.mxu0 0.0
      %1579 = vmatpush2.msra.mxu0 0.0
      %1580 = vmatprep.subr.mxu0 0.0
      %1581 = vmatpush2.msra.mxu0 0.0
      %1582 = vmatprep.subr.mxu0 0.0
      %1583 = vmatpush2.msra.mxu0 0.0
      %1584 = vmatprep.subr.mxu0 0.0
      %1585 = vmatpush2.msra.mxu0 0.0
      %1586 = vmatprep.subr.mxu0 0.0
      %1587 = vmatpush2.msra.mxu0 0.0
      %1588 = vmatprep.subr.mxu0 0.0
      %1589 = vmatpush2.msra.mxu0 0.0
      %1590 = vmatprep.subr.mxu0 0.0
      %1591 = vmatpush2.msra.mxu0 0.0
      %1592 = vmatprep.subr.mxu0 0.0
      %1593 = vmatpush2.msra.mxu0 0.0
      %1594 = vmatprep.mubr.f32.mxu0 0.0
      %v1595 = vand.u32 %v198, 4294901760
      %1596 = vmatmul.mubr.f32.gmra.mxu0 %v1595
      %v1597 = vpop.f32.mrf.mxu0
      %v1598 = vadd.f32 %v1366, %v1597
      %v1599 = vpop.f32.mrf.mxu0
      %v1600 = vadd.f32 %v1368, %v1599
      %1601 = vdwg.mxu0
      %v1602 = vand.u32 %v397, 4294901760
      %v1603 = vsub.f32 %v397, %v1602
      %1604 = vmatprep.subr.mxu0 %v1603
      %v1605 = vand.u32 %v396, 4294901760
      %v1606 = vsub.f32 %v396, %v1605
      %1607 = vmatpush1.msra.mxu0 %v1606
      %v1608 = vand.u32 %v384, 4294901760
      %v1609 = vsub.f32 %v384, %v1608
      %1610 = vmatprep.subr.mxu0 %v1609
      %v1611 = vand.u32 %v383, 4294901760
      %v1612 = vsub.f32 %v383, %v1611
      %1613 = vmatpush1.msra.mxu0 %v1612
      %v1614 = vand.u32 %v371, 4294901760
      %v1615 = vsub.f32 %v371, %v1614
      %1616 = vmatprep.subr.mxu0 %v1615
      %v1617 = vand.u32 %v370, 4294901760
      %v1618 = vsub.f32 %v370, %v1617
      %1619 = vmatpush1.msra.mxu0 %v1618
      %v1620 = vand.u32 %v358, 4294901760
      %v1621 = vsub.f32 %v358, %v1620
      %1622 = vmatprep.subr.mxu0 %v1621
      %v1623 = vand.u32 %v357, 4294901760
      %v1624 = vsub.f32 %v357, %v1623
      %1625 = vmatpush1.msra.mxu0 %v1624
      %v1626 = vand.u32 %v345, 4294901760
      %v1627 = vsub.f32 %v345, %v1626
      %1628 = vmatprep.subr.mxu0 %v1627
      %v1629 = vand.u32 %v344, 4294901760
      %v1630 = vsub.f32 %v344, %v1629
      %1631 = vmatpush1.msra.mxu0 %v1630
      %v1632 = vand.u32 %v332, 4294901760
      %v1633 = vsub.f32 %v332, %v1632
      %1634 = vmatprep.subr.mxu0 %v1633
      %v1635 = vand.u32 %v331, 4294901760
      %v1636 = vsub.f32 %v331, %v1635
      %1637 = vmatpush1.msra.mxu0 %v1636
      %v1638 = vand.u32 %v319, 4294901760
      %v1639 = vsub.f32 %v319, %v1638
      %1640 = vmatprep.subr.mxu0 %v1639
      %v1641 = vand.u32 %v318, 4294901760
      %v1642 = vsub.f32 %v318, %v1641
      %1643 = vmatpush1.msra.mxu0 %v1642
      %v1644 = vand.u32 %v306, 4294901760
      %v1645 = vsub.f32 %v306, %v1644
      %1646 = vmatprep.subr.mxu0 %v1645
      %v1647 = vand.u32 %v305, 4294901760
      %v1648 = vsub.f32 %v305, %v1647
      %1649 = vmatpush1.msra.mxu0 %v1648
      %v1650 = vand.u32 %v293, 4294901760
      %v1651 = vsub.f32 %v293, %v1650
      %1652 = vmatprep.subr.mxu0 %v1651
      %v1653 = vand.u32 %v292, 4294901760
      %v1654 = vsub.f32 %v292, %v1653
      %1655 = vmatpush1.msra.mxu0 %v1654
      %v1656 = vand.u32 %v280, 4294901760
      %v1657 = vsub.f32 %v280, %v1656
      %1658 = vmatprep.subr.mxu0 %v1657
      %v1659 = vand.u32 %v279, 4294901760
      %v1660 = vsub.f32 %v279, %v1659
      %1661 = vmatpush1.msra.mxu0 %v1660
      %v1662 = vand.u32 %v267, 4294901760
      %v1663 = vsub.f32 %v267, %v1662
      %1664 = vmatprep.subr.mxu0 %v1663
      %v1665 = vand.u32 %v266, 4294901760
      %v1666 = vsub.f32 %v266, %v1665
      %1667 = vmatpush1.msra.mxu0 %v1666
      %v1668 = vand.u32 %v254, 4294901760
      %v1669 = vsub.f32 %v254, %v1668
      %1670 = vmatprep.subr.mxu0 %v1669
      %v1671 = vand.u32 %v253, 4294901760
      %v1672 = vsub.f32 %v253, %v1671
      %1673 = vmatpush1.msra.mxu0 %v1672
      %v1674 = vand.u32 %v241, 4294901760
      %v1675 = vsub.f32 %v241, %v1674
      %1676 = vmatprep.subr.mxu0 %v1675
      %v1677 = vand.u32 %v240, 4294901760
      %v1678 = vsub.f32 %v240, %v1677
      %1679 = vmatpush1.msra.mxu0 %v1678
      %v1680 = vand.u32 %v228, 4294901760
      %v1681 = vsub.f32 %v228, %v1680
      %1682 = vmatprep.subr.mxu0 %v1681
      %v1683 = vand.u32 %v227, 4294901760
      %v1684 = vsub.f32 %v227, %v1683
      %1685 = vmatpush1.msra.mxu0 %v1684
      %v1686 = vand.u32 %v215, 4294901760
      %v1687 = vsub.f32 %v215, %v1686
      %1688 = vmatprep.subr.mxu0 %v1687
      %v1689 = vand.u32 %v214, 4294901760
      %v1690 = vsub.f32 %v214, %v1689
      %1691 = vmatpush1.msra.mxu0 %v1690
      %v1692 = vand.u32 %v202, 4294901760
      %v1693 = vsub.f32 %v202, %v1692
      %1694 = vmatprep.subr.mxu0 %v1693
      %v1695 = vand.u32 %v201, 4294901760
      %v1696 = vsub.f32 %v201, %v1695
      %1697 = vmatpush1.msra.mxu0 %v1696
      %1698 = vmatprep.subr.mxu0 0.0
      %1699 = vmatpush2.msra.mxu0 0.0
      %1700 = vmatprep.subr.mxu0 0.0
      %1701 = vmatpush2.msra.mxu0 0.0
      %1702 = vmatprep.subr.mxu0 0.0
      %1703 = vmatpush2.msra.mxu0 0.0
      %1704 = vmatprep.subr.mxu0 0.0
      %1705 = vmatpush2.msra.mxu0 0.0
      %1706 = vmatprep.subr.mxu0 0.0
      %1707 = vmatpush2.msra.mxu0 0.0
      %1708 = vmatprep.subr.mxu0 0.0
      %1709 = vmatpush2.msra.mxu0 0.0
      %1710 = vmatprep.subr.mxu0 0.0
      %1711 = vmatpush2.msra.mxu0 0.0
      %1712 = vmatprep.subr.mxu0 0.0
      %1713 = vmatpush2.msra.mxu0 0.0
      %1714 = vmatprep.subr.mxu0 0.0
      %1715 = vmatpush2.msra.mxu0 0.0
      %1716 = vmatprep.subr.mxu0 0.0
      %1717 = vmatpush2.msra.mxu0 0.0
      %1718 = vmatprep.subr.mxu0 0.0
      %1719 = vmatpush2.msra.mxu0 0.0
      %1720 = vmatprep.subr.mxu0 0.0
      %1721 = vmatpush2.msra.mxu0 0.0
      %1722 = vmatprep.subr.mxu0 0.0
      %1723 = vmatpush2.msra.mxu0 0.0
      %1724 = vmatprep.subr.mxu0 0.0
      %1725 = vmatpush2.msra.mxu0 0.0
      %1726 = vmatprep.subr.mxu0 0.0
      %1727 = vmatpush2.msra.mxu0 0.0
      %1728 = vmatprep.subr.mxu0 0.0
      %1729 = vmatpush2.msra.mxu0 0.0
      %1730 = vmatprep.mubr.f32.mxu0 0.0
      %v1731 = vand.u32 %v198, 4294901760
      %v1732 = vsub.f32 %v198, %v1731
      %1733 = vmatmul.mubr.f32.gmra.mxu0 %v1732
      %v1734 = vpop.f32.mrf.mxu0
      %v1735 = vadd.f32 %v1598, %v1734
      %v1736 = vpop.f32.mrf.mxu0
      %v1737 = vadd.f32 %v1600, %v1736
      %1738 = vdwg.mxu0
      %v1739 = vand.u32 %v397, 4294901760
      %1740 = vmatprep.subr.mxu0 %v1739
      %v1741 = vand.u32 %v396, 4294901760
      %1742 = vmatpush1.msra.mxu0 %v1741
      %v1743 = vand.u32 %v384, 4294901760
      %1744 = vmatprep.subr.mxu0 %v1743
      %v1745 = vand.u32 %v383, 4294901760
      %1746 = vmatpush1.msra.mxu0 %v1745
      %v1747 = vand.u32 %v371, 4294901760
      %1748 = vmatprep.subr.mxu0 %v1747
      %v1749 = vand.u32 %v370, 4294901760
      %1750 = vmatpush1.msra.mxu0 %v1749
      %v1751 = vand.u32 %v358, 4294901760
      %1752 = vmatprep.subr.mxu0 %v1751
      %v1753 = vand.u32 %v357, 4294901760
      %1754 = vmatpush1.msra.mxu0 %v1753
      %v1755 = vand.u32 %v345, 4294901760
      %1756 = vmatprep.subr.mxu0 %v1755
      %v1757 = vand.u32 %v344, 4294901760
      %1758 = vmatpush1.msra.mxu0 %v1757
      %v1759 = vand.u32 %v332, 4294901760
      %1760 = vmatprep.subr.mxu0 %v1759
      %v1761 = vand.u32 %v331, 4294901760
      %1762 = vmatpush1.msra.mxu0 %v1761
      %v1763 = vand.u32 %v319, 4294901760
      %1764 = vmatprep.subr.mxu0 %v1763
      %v1765 = vand.u32 %v318, 4294901760
      %1766 = vmatpush1.msra.mxu0 %v1765
      %v1767 = vand.u32 %v306, 4294901760
      %1768 = vmatprep.subr.mxu0 %v1767
      %v1769 = vand.u32 %v305, 4294901760
      %1770 = vmatpush1.msra.mxu0 %v1769
      %v1771 = vand.u32 %v293, 4294901760
      %1772 = vmatprep.subr.mxu0 %v1771
      %v1773 = vand.u32 %v292, 4294901760
      %1774 = vmatpush1.msra.mxu0 %v1773
      %v1775 = vand.u32 %v280, 4294901760
      %1776 = vmatprep.subr.mxu0 %v1775
      %v1777 = vand.u32 %v279, 4294901760
      %1778 = vmatpush1.msra.mxu0 %v1777
      %v1779 = vand.u32 %v267, 4294901760
      %1780 = vmatprep.subr.mxu0 %v1779
      %v1781 = vand.u32 %v266, 4294901760
      %1782 = vmatpush1.msra.mxu0 %v1781
      %v1783 = vand.u32 %v254, 4294901760
      %1784 = vmatprep.subr.mxu0 %v1783
      %v1785 = vand.u32 %v253, 4294901760
      %1786 = vmatpush1.msra.mxu0 %v1785
      %v1787 = vand.u32 %v241, 4294901760
      %1788 = vmatprep.subr.mxu0 %v1787
      %v1789 = vand.u32 %v240, 4294901760
      %1790 = vmatpush1.msra.mxu0 %v1789
      %v1791 = vand.u32 %v228, 4294901760
      %1792 = vmatprep.subr.mxu0 %v1791
      %v1793 = vand.u32 %v227, 4294901760
      %1794 = vmatpush1.msra.mxu0 %v1793
      %v1795 = vand.u32 %v215, 4294901760
      %1796 = vmatprep.subr.mxu0 %v1795
      %v1797 = vand.u32 %v214, 4294901760
      %1798 = vmatpush1.msra.mxu0 %v1797
      %v1799 = vand.u32 %v202, 4294901760
      %1800 = vmatprep.subr.mxu0 %v1799
      %v1801 = vand.u32 %v201, 4294901760
      %1802 = vmatpush1.msra.mxu0 %v1801
      %1803 = vmatprep.subr.mxu0 0.0
      %1804 = vmatpush2.msra.mxu0 0.0
      %1805 = vmatprep.subr.mxu0 0.0
      %1806 = vmatpush2.msra.mxu0 0.0
      %1807 = vmatprep.subr.mxu0 0.0
      %1808 = vmatpush2.msra.mxu0 0.0
      %1809 = vmatprep.subr.mxu0 0.0
      %1810 = vmatpush2.msra.mxu0 0.0
      %1811 = vmatprep.subr.mxu0 0.0
      %1812 = vmatpush2.msra.mxu0 0.0
      %1813 = vmatprep.subr.mxu0 0.0
      %1814 = vmatpush2.msra.mxu0 0.0
      %1815 = vmatprep.subr.mxu0 0.0
      %1816 = vmatpush2.msra.mxu0 0.0
      %1817 = vmatprep.subr.mxu0 0.0
      %1818 = vmatpush2.msra.mxu0 0.0
      %1819 = vmatprep.subr.mxu0 0.0
      %1820 = vmatpush2.msra.mxu0 0.0
      %1821 = vmatprep.subr.mxu0 0.0
      %1822 = vmatpush2.msra.mxu0 0.0
      %1823 = vmatprep.subr.mxu0 0.0
      %1824 = vmatpush2.msra.mxu0 0.0
      %1825 = vmatprep.subr.mxu0 0.0
      %1826 = vmatpush2.msra.mxu0 0.0
      %1827 = vmatprep.subr.mxu0 0.0
      %1828 = vmatpush2.msra.mxu0 0.0
      %1829 = vmatprep.subr.mxu0 0.0
      %1830 = vmatpush2.msra.mxu0 0.0
      %1831 = vmatprep.subr.mxu0 0.0
      %1832 = vmatpush2.msra.mxu0 0.0
      %1833 = vmatprep.subr.mxu0 0.0
      %1834 = vmatpush2.msra.mxu0 0.0
      %1835 = vmatprep.mubr.f32.mxu0 0.0
      %v1836 = vand.u32 %v198, 4294901760
      %v1837 = vsub.f32 %v198, %v1836
      %v1838 = vand.u32 %v1837, 4294901760
      %1839 = vmatmul.mubr.f32.gmra.mxu0 %v1838
      %v1840 = vpop.f32.mrf.mxu0
      %v1841 = vadd.f32 %v1735, %v1840
      %v1842 = vpop.f32.mrf.mxu0
      %v1843 = vadd.f32 %v1737, %v1842
      %1844 = vdwg.mxu0
      %v1845 = vand.u32 %v397, 4294901760
      %v1846 = vsub.f32 %v397, %v1845
      %v1847 = vand.u32 %v1846, 4294901760
      %1848 = vmatprep.subr.mxu0 %v1847
      %v1849 = vand.u32 %v396, 4294901760
      %v1850 = vsub.f32 %v396, %v1849
      %v1851 = vand.u32 %v1850, 4294901760
      %1852 = vmatpush1.msra.mxu0 %v1851
      %v1853 = vand.u32 %v384, 4294901760
      %v1854 = vsub.f32 %v384, %v1853
      %v1855 = vand.u32 %v1854, 4294901760
      %1856 = vmatprep.subr.mxu0 %v1855
      %v1857 = vand.u32 %v383, 4294901760
      %v1858 = vsub.f32 %v383, %v1857
      %v1859 = vand.u32 %v1858, 4294901760
      %1860 = vmatpush1.msra.mxu0 %v1859
      %v1861 = vand.u32 %v371, 4294901760
      %v1862 = vsub.f32 %v371, %v1861
      %v1863 = vand.u32 %v1862, 4294901760
      %1864 = vmatprep.subr.mxu0 %v1863
      %v1865 = vand.u32 %v370, 4294901760
      %v1866 = vsub.f32 %v370, %v1865
      %v1867 = vand.u32 %v1866, 4294901760
      %1868 = vmatpush1.msra.mxu0 %v1867
      %v1869 = vand.u32 %v358, 4294901760
      %v1870 = vsub.f32 %v358, %v1869
      %v1871 = vand.u32 %v1870, 4294901760
      %1872 = vmatprep.subr.mxu0 %v1871
      %v1873 = vand.u32 %v357, 4294901760
      %v1874 = vsub.f32 %v357, %v1873
      %v1875 = vand.u32 %v1874, 4294901760
      %1876 = vmatpush1.msra.mxu0 %v1875
      %v1877 = vand.u32 %v345, 4294901760
      %v1878 = vsub.f32 %v345, %v1877
      %v1879 = vand.u32 %v1878, 4294901760
      %1880 = vmatprep.subr.mxu0 %v1879
      %v1881 = vand.u32 %v344, 4294901760
      %v1882 = vsub.f32 %v344, %v1881
      %v1883 = vand.u32 %v1882, 4294901760
      %1884 = vmatpush1.msra.mxu0 %v1883
      %v1885 = vand.u32 %v332, 4294901760
      %v1886 = vsub.f32 %v332, %v1885
      %v1887 = vand.u32 %v1886, 4294901760
      %1888 = vmatprep.subr.mxu0 %v1887
      %v1889 = vand.u32 %v331, 4294901760
      %v1890 = vsub.f32 %v331, %v1889
      %v1891 = vand.u32 %v1890, 4294901760
      %1892 = vmatpush1.msra.mxu0 %v1891
      %v1893 = vand.u32 %v319, 4294901760
      %v1894 = vsub.f32 %v319, %v1893
      %v1895 = vand.u32 %v1894, 4294901760
      %1896 = vmatprep.subr.mxu0 %v1895
      %v1897 = vand.u32 %v318, 4294901760
      %v1898 = vsub.f32 %v318, %v1897
      %v1899 = vand.u32 %v1898, 4294901760
      %1900 = vmatpush1.msra.mxu0 %v1899
      %v1901 = vand.u32 %v306, 4294901760
      %v1902 = vsub.f32 %v306, %v1901
      %v1903 = vand.u32 %v1902, 4294901760
      %1904 = vmatprep.subr.mxu0 %v1903
      %v1905 = vand.u32 %v305, 4294901760
      %v1906 = vsub.f32 %v305, %v1905
      %v1907 = vand.u32 %v1906, 4294901760
      %1908 = vmatpush1.msra.mxu0 %v1907
      %v1909 = vand.u32 %v293, 4294901760
      %v1910 = vsub.f32 %v293, %v1909
      %v1911 = vand.u32 %v1910, 4294901760
      %1912 = vmatprep.subr.mxu0 %v1911
      %v1913 = vand.u32 %v292, 4294901760
      %v1914 = vsub.f32 %v292, %v1913
      %v1915 = vand.u32 %v1914, 4294901760
      %1916 = vmatpush1.msra.mxu0 %v1915
      %v1917 = vand.u32 %v280, 4294901760
      %v1918 = vsub.f32 %v280, %v1917
      %v1919 = vand.u32 %v1918, 4294901760
      %1920 = vmatprep.subr.mxu0 %v1919
      %v1921 = vand.u32 %v279, 4294901760
      %v1922 = vsub.f32 %v279, %v1921
      %v1923 = vand.u32 %v1922, 4294901760
      %1924 = vmatpush1.msra.mxu0 %v1923
      %v1925 = vand.u32 %v267, 4294901760
      %v1926 = vsub.f32 %v267, %v1925
      %v1927 = vand.u32 %v1926, 4294901760
      %1928 = vmatprep.subr.mxu0 %v1927
      %v1929 = vand.u32 %v266, 4294901760
      %v1930 = vsub.f32 %v266, %v1929
      %v1931 = vand.u32 %v1930, 4294901760
      %1932 = vmatpush1.msra.mxu0 %v1931
      %v1933 = vand.u32 %v254, 4294901760
      %v1934 = vsub.f32 %v254, %v1933
      %v1935 = vand.u32 %v1934, 4294901760
      %1936 = vmatprep.subr.mxu0 %v1935
      %v1937 = vand.u32 %v253, 4294901760
      %v1938 = vsub.f32 %v253, %v1937
      %v1939 = vand.u32 %v1938, 4294901760
      %1940 = vmatpush1.msra.mxu0 %v1939
      %v1941 = vand.u32 %v241, 4294901760
      %v1942 = vsub.f32 %v241, %v1941
      %v1943 = vand.u32 %v1942, 4294901760
      %1944 = vmatprep.subr.mxu0 %v1943
      %v1945 = vand.u32 %v240, 4294901760
      %v1946 = vsub.f32 %v240, %v1945
      %v1947 = vand.u32 %v1946, 4294901760
      %1948 = vmatpush1.msra.mxu0 %v1947
      %v1949 = vand.u32 %v228, 4294901760
      %v1950 = vsub.f32 %v228, %v1949
      %v1951 = vand.u32 %v1950, 4294901760
      %1952 = vmatprep.subr.mxu0 %v1951
      %v1953 = vand.u32 %v227, 4294901760
      %v1954 = vsub.f32 %v227, %v1953
      %v1955 = vand.u32 %v1954, 4294901760
      %1956 = vmatpush1.msra.mxu0 %v1955
      %v1957 = vand.u32 %v215, 4294901760
      %v1958 = vsub.f32 %v215, %v1957
      %v1959 = vand.u32 %v1958, 4294901760
      %1960 = vmatprep.subr.mxu0 %v1959
      %v1961 = vand.u32 %v214, 4294901760
      %v1962 = vsub.f32 %v214, %v1961
      %v1963 = vand.u32 %v1962, 4294901760
      %1964 = vmatpush1.msra.mxu0 %v1963
      %v1965 = vand.u32 %v202, 4294901760
      %v1966 = vsub.f32 %v202, %v1965
      %v1967 = vand.u32 %v1966, 4294901760
      %1968 = vmatprep.subr.mxu0 %v1967
      %v1969 = vand.u32 %v201, 4294901760
      %v1970 = vsub.f32 %v201, %v1969
      %v1971 = vand.u32 %v1970, 4294901760
      %1972 = vmatpush1.msra.mxu0 %v1971
      %1973 = vmatprep.subr.mxu0 0.0
      %1974 = vmatpush2.msra.mxu0 0.0
      %1975 = vmatprep.subr.mxu0 0.0
      %1976 = vmatpush2.msra.mxu0 0.0
      %1977 = vmatprep.subr.mxu0 0.0
      %1978 = vmatpush2.msra.mxu0 0.0
      %1979 = vmatprep.subr.mxu0 0.0
      %1980 = vmatpush2.msra.mxu0 0.0
      %1981 = vmatprep.subr.mxu0 0.0
      %1982 = vmatpush2.msra.mxu0 0.0
      %1983 = vmatprep.subr.mxu0 0.0
      %1984 = vmatpush2.msra.mxu0 0.0
      %1985 = vmatprep.subr.mxu0 0.0
      %1986 = vmatpush2.msra.mxu0 0.0
      %1987 = vmatprep.subr.mxu0 0.0
      %1988 = vmatpush2.msra.mxu0 0.0
      %1989 = vmatprep.subr.mxu0 0.0
      %1990 = vmatpush2.msra.mxu0 0.0
      %1991 = vmatprep.subr.mxu0 0.0
      %1992 = vmatpush2.msra.mxu0 0.0
      %1993 = vmatprep.subr.mxu0 0.0
      %1994 = vmatpush2.msra.mxu0 0.0
      %1995 = vmatprep.subr.mxu0 0.0
      %1996 = vmatpush2.msra.mxu0 0.0
      %1997 = vmatprep.subr.mxu0 0.0
      %1998 = vmatpush2.msra.mxu0 0.0
      %1999 = vmatprep.subr.mxu0 0.0
      %2000 = vmatpush2.msra.mxu0 0.0
      %2001 = vmatprep.subr.mxu0 0.0
      %2002 = vmatpush2.msra.mxu0 0.0
      %2003 = vmatprep.subr.mxu0 0.0
      %2004 = vmatpush2.msra.mxu0 0.0
      %2005 = vmatprep.mubr.f32.mxu0 0.0
      %v2006 = vand.u32 %v198, 4294901760
      %2007 = vmatmul.mubr.f32.gmra.mxu0 %v2006
      %v2008 = vpop.f32.mrf.mxu0
      %v2009 = vadd.f32 %v1841, %v2008
      %v2010 = vpop.f32.mrf.mxu0
      %v2011 = vadd.f32 %v1843, %v2010
      %2012 = vdwg.mxu0
      %v2013 = vand.u32 %v397, 4294901760
      %2014 = vmatprep.subr.mxu0 %v2013
      %v2015 = vand.u32 %v396, 4294901760
      %2016 = vmatpush1.msra.mxu0 %v2015
      %v2017 = vand.u32 %v384, 4294901760
      %2018 = vmatprep.subr.mxu0 %v2017
      %v2019 = vand.u32 %v383, 4294901760
      %2020 = vmatpush1.msra.mxu0 %v2019
      %v2021 = vand.u32 %v371, 4294901760
      %2022 = vmatprep.subr.mxu0 %v2021
      %v2023 = vand.u32 %v370, 4294901760
      %2024 = vmatpush1.msra.mxu0 %v2023
      %v2025 = vand.u32 %v358, 4294901760
      %2026 = vmatprep.subr.mxu0 %v2025
      %v2027 = vand.u32 %v357, 4294901760
      %2028 = vmatpush1.msra.mxu0 %v2027
      %v2029 = vand.u32 %v345, 4294901760
      %2030 = vmatprep.subr.mxu0 %v2029
      %v2031 = vand.u32 %v344, 4294901760
      %2032 = vmatpush1.msra.mxu0 %v2031
      %v2033 = vand.u32 %v332, 4294901760
      %2034 = vmatprep.subr.mxu0 %v2033
      %v2035 = vand.u32 %v331, 4294901760
      %2036 = vmatpush1.msra.mxu0 %v2035
      %v2037 = vand.u32 %v319, 4294901760
      %2038 = vmatprep.subr.mxu0 %v2037
      %v2039 = vand.u32 %v318, 4294901760
      %2040 = vmatpush1.msra.mxu0 %v2039
      %v2041 = vand.u32 %v306, 4294901760
      %2042 = vmatprep.subr.mxu0 %v2041
      %v2043 = vand.u32 %v305, 4294901760
      %2044 = vmatpush1.msra.mxu0 %v2043
      %v2045 = vand.u32 %v293, 4294901760
      %2046 = vmatprep.subr.mxu0 %v2045
      %v2047 = vand.u32 %v292, 4294901760
      %2048 = vmatpush1.msra.mxu0 %v2047
      %v2049 = vand.u32 %v280, 4294901760
      %2050 = vmatprep.subr.mxu0 %v2049
      %v2051 = vand.u32 %v279, 4294901760
      %2052 = vmatpush1.msra.mxu0 %v2051
      %v2053 = vand.u32 %v267, 4294901760
      %2054 = vmatprep.subr.mxu0 %v2053
      %v2055 = vand.u32 %v266, 4294901760
      %2056 = vmatpush1.msra.mxu0 %v2055
      %v2057 = vand.u32 %v254, 4294901760
      %2058 = vmatprep.subr.mxu0 %v2057
      %v2059 = vand.u32 %v253, 4294901760
      %2060 = vmatpush1.msra.mxu0 %v2059
      %v2061 = vand.u32 %v241, 4294901760
      %2062 = vmatprep.subr.mxu0 %v2061
      %v2063 = vand.u32 %v240, 4294901760
      %2064 = vmatpush1.msra.mxu0 %v2063
      %v2065 = vand.u32 %v228, 4294901760
      %2066 = vmatprep.subr.mxu0 %v2065
      %v2067 = vand.u32 %v227, 4294901760
      %2068 = vmatpush1.msra.mxu0 %v2067
      %v2069 = vand.u32 %v215, 4294901760
      %2070 = vmatprep.subr.mxu0 %v2069
      %v2071 = vand.u32 %v214, 4294901760
      %2072 = vmatpush1.msra.mxu0 %v2071
      %v2073 = vand.u32 %v202, 4294901760
      %2074 = vmatprep.subr.mxu0 %v2073
      %v2075 = vand.u32 %v201, 4294901760
      %2076 = vmatpush1.msra.mxu0 %v2075
      %2077 = vmatprep.subr.mxu0 0.0
      %2078 = vmatpush2.msra.mxu0 0.0
      %2079 = vmatprep.subr.mxu0 0.0
      %2080 = vmatpush2.msra.mxu0 0.0
      %2081 = vmatprep.subr.mxu0 0.0
      %2082 = vmatpush2.msra.mxu0 0.0
      %2083 = vmatprep.subr.mxu0 0.0
      %2084 = vmatpush2.msra.mxu0 0.0
      %2085 = vmatprep.subr.mxu0 0.0
      %2086 = vmatpush2.msra.mxu0 0.0
      %2087 = vmatprep.subr.mxu0 0.0
      %2088 = vmatpush2.msra.mxu0 0.0
      %2089 = vmatprep.subr.mxu0 0.0
      %2090 = vmatpush2.msra.mxu0 0.0
      %2091 = vmatprep.subr.mxu0 0.0
      %2092 = vmatpush2.msra.mxu0 0.0
      %2093 = vmatprep.subr.mxu0 0.0
      %2094 = vmatpush2.msra.mxu0 0.0
      %2095 = vmatprep.subr.mxu0 0.0
      %2096 = vmatpush2.msra.mxu0 0.0
      %2097 = vmatprep.subr.mxu0 0.0
      %2098 = vmatpush2.msra.mxu0 0.0
      %2099 = vmatprep.subr.mxu0 0.0
      %2100 = vmatpush2.msra.mxu0 0.0
      %2101 = vmatprep.subr.mxu0 0.0
      %2102 = vmatpush2.msra.mxu0 0.0
      %2103 = vmatprep.subr.mxu0 0.0
      %2104 = vmatpush2.msra.mxu0 0.0
      %2105 = vmatprep.subr.mxu0 0.0
      %2106 = vmatpush2.msra.mxu0 0.0
      %2107 = vmatprep.subr.mxu0 0.0
      %2108 = vmatpush2.msra.mxu0 0.0
      %2109 = vmatprep.mubr.f32.mxu0 0.0
      %v2110 = vand.u32 %v198, 4294901760
      %2111 = vmatmul.mubr.f32.gmra.mxu0 %v2110
      %v2112 = vpop.f32.mrf.mxu0
      %v2113 = vadd.f32 %v2009, %v2112
      %v2114 = vpop.f32.mrf.mxu0
      %v2115 = vadd.f32 %v2011, %v2114
      %2116 = vdwg.mxu0
      %v2117 = vand.u32 %v399, 4294901760
      %2118 = vmatprep.subr.mxu0 %v2117
      %v2119 = vand.u32 %v398, 4294901760
      %2120 = vmatpush1.msra.mxu0 %v2119
      %v2121 = vand.u32 %v386, 4294901760
      %2122 = vmatprep.subr.mxu0 %v2121
      %v2123 = vand.u32 %v385, 4294901760
      %2124 = vmatpush1.msra.mxu0 %v2123
      %v2125 = vand.u32 %v373, 4294901760
      %2126 = vmatprep.subr.mxu0 %v2125
      %v2127 = vand.u32 %v372, 4294901760
      %2128 = vmatpush1.msra.mxu0 %v2127
      %v2129 = vand.u32 %v360, 4294901760
      %2130 = vmatprep.subr.mxu0 %v2129
      %v2131 = vand.u32 %v359, 4294901760
      %2132 = vmatpush1.msra.mxu0 %v2131
      %v2133 = vand.u32 %v347, 4294901760
      %2134 = vmatprep.subr.mxu0 %v2133
      %v2135 = vand.u32 %v346, 4294901760
      %2136 = vmatpush1.msra.mxu0 %v2135
      %v2137 = vand.u32 %v334, 4294901760
      %2138 = vmatprep.subr.mxu0 %v2137
      %v2139 = vand.u32 %v333, 4294901760
      %2140 = vmatpush1.msra.mxu0 %v2139
      %v2141 = vand.u32 %v321, 4294901760
      %2142 = vmatprep.subr.mxu0 %v2141
      %v2143 = vand.u32 %v320, 4294901760
      %2144 = vmatpush1.msra.mxu0 %v2143
      %v2145 = vand.u32 %v308, 4294901760
      %2146 = vmatprep.subr.mxu0 %v2145
      %v2147 = vand.u32 %v307, 4294901760
      %2148 = vmatpush1.msra.mxu0 %v2147
      %v2149 = vand.u32 %v295, 4294901760
      %2150 = vmatprep.subr.mxu0 %v2149
      %v2151 = vand.u32 %v294, 4294901760
      %2152 = vmatpush1.msra.mxu0 %v2151
      %v2153 = vand.u32 %v282, 4294901760
      %2154 = vmatprep.subr.mxu0 %v2153
      %v2155 = vand.u32 %v281, 4294901760
      %2156 = vmatpush1.msra.mxu0 %v2155
      %v2157 = vand.u32 %v269, 4294901760
      %2158 = vmatprep.subr.mxu0 %v2157
      %v2159 = vand.u32 %v268, 4294901760
      %2160 = vmatpush1.msra.mxu0 %v2159
      %v2161 = vand.u32 %v256, 4294901760
      %2162 = vmatprep.subr.mxu0 %v2161
      %v2163 = vand.u32 %v255, 4294901760
      %2164 = vmatpush1.msra.mxu0 %v2163
      %v2165 = vand.u32 %v243, 4294901760
      %2166 = vmatprep.subr.mxu0 %v2165
      %v2167 = vand.u32 %v242, 4294901760
      %2168 = vmatpush1.msra.mxu0 %v2167
      %v2169 = vand.u32 %v230, 4294901760
      %2170 = vmatprep.subr.mxu0 %v2169
      %v2171 = vand.u32 %v229, 4294901760
      %2172 = vmatpush1.msra.mxu0 %v2171
      %v2173 = vand.u32 %v217, 4294901760
      %2174 = vmatprep.subr.mxu0 %v2173
      %v2175 = vand.u32 %v216, 4294901760
      %2176 = vmatpush1.msra.mxu0 %v2175
      %v2177 = vand.u32 %v204, 4294901760
      %2178 = vmatprep.subr.mxu0 %v2177
      %v2179 = vand.u32 %v203, 4294901760
      %2180 = vmatpush1.msra.mxu0 %v2179
      %2181 = vmatprep.subr.mxu0 0.0
      %2182 = vmatpush2.msra.mxu0 0.0
      %2183 = vmatprep.subr.mxu0 0.0
      %2184 = vmatpush2.msra.mxu0 0.0
      %2185 = vmatprep.subr.mxu0 0.0
      %2186 = vmatpush2.msra.mxu0 0.0
      %2187 = vmatprep.subr.mxu0 0.0
      %2188 = vmatpush2.msra.mxu0 0.0
      %2189 = vmatprep.subr.mxu0 0.0
      %2190 = vmatpush2.msra.mxu0 0.0
      %2191 = vmatprep.subr.mxu0 0.0
      %2192 = vmatpush2.msra.mxu0 0.0
      %2193 = vmatprep.subr.mxu0 0.0
      %2194 = vmatpush2.msra.mxu0 0.0
      %2195 = vmatprep.subr.mxu0 0.0
      %2196 = vmatpush2.msra.mxu0 0.0
      %2197 = vmatprep.subr.mxu0 0.0
      %2198 = vmatpush2.msra.mxu0 0.0
      %2199 = vmatprep.subr.mxu0 0.0
      %2200 = vmatpush2.msra.mxu0 0.0
      %2201 = vmatprep.subr.mxu0 0.0
      %2202 = vmatpush2.msra.mxu0 0.0
      %2203 = vmatprep.subr.mxu0 0.0
      %2204 = vmatpush2.msra.mxu0 0.0
      %2205 = vmatprep.subr.mxu0 0.0
      %2206 = vmatpush2.msra.mxu0 0.0
      %2207 = vmatprep.subr.mxu0 0.0
      %2208 = vmatpush2.msra.mxu0 0.0
      %2209 = vmatprep.subr.mxu0 0.0
      %2210 = vmatpush2.msra.mxu0 0.0
      %2211 = vmatprep.subr.mxu0 0.0
      %2212 = vmatpush2.msra.mxu0 0.0
      %2213 = vmatprep.mubr.f32.mxu0 0.0
      %v2214 = vand.u32 %v198, 4294901760
      %v2215 = vsub.f32 %v198, %v2214
      %v2216 = vand.u32 %v2215, 4294901760
      %v2217 = vsub.f32 %v2215, %v2216
      %v2218 = vand.u32 %v2217, 4294901760
      %2219 = vmatmul.mubr.f32.gmra.mxu0 %v2218
      %v2220 = vpop.f32.mrf.mxu0
      %v2221 = vadd.f32 0.0, %v2220
      %v2222 = vpop.f32.mrf.mxu0
      %v2223 = vadd.f32 0.0, %v2222
      %2224 = vdwg.mxu0
      %v2225 = vand.u32 %v399, 4294901760
      %v2226 = vsub.f32 %v399, %v2225
      %v2227 = vand.u32 %v2226, 4294901760
      %v2228 = vsub.f32 %v2226, %v2227
      %v2229 = vand.u32 %v2228, 4294901760
      %2230 = vmatprep.subr.mxu0 %v2229
      %v2231 = vand.u32 %v398, 4294901760
      %v2232 = vsub.f32 %v398, %v2231
      %v2233 = vand.u32 %v2232, 4294901760
      %v2234 = vsub.f32 %v2232, %v2233
      %v2235 = vand.u32 %v2234, 4294901760
      %2236 = vmatpush1.msra.mxu0 %v2235
      %v2237 = vand.u32 %v386, 4294901760
      %v2238 = vsub.f32 %v386, %v2237
      %v2239 = vand.u32 %v2238, 4294901760
      %v2240 = vsub.f32 %v2238, %v2239
      %v2241 = vand.u32 %v2240, 4294901760
      %2242 = vmatprep.subr.mxu0 %v2241
      %v2243 = vand.u32 %v385, 4294901760
      %v2244 = vsub.f32 %v385, %v2243
      %v2245 = vand.u32 %v2244, 4294901760
      %v2246 = vsub.f32 %v2244, %v2245
      %v2247 = vand.u32 %v2246, 4294901760
      %2248 = vmatpush1.msra.mxu0 %v2247
      %v2249 = vand.u32 %v373, 4294901760
      %v2250 = vsub.f32 %v373, %v2249
      %v2251 = vand.u32 %v2250, 4294901760
      %v2252 = vsub.f32 %v2250, %v2251
      %v2253 = vand.u32 %v2252, 4294901760
      %2254 = vmatprep.subr.mxu0 %v2253
      %v2255 = vand.u32 %v372, 4294901760
      %v2256 = vsub.f32 %v372, %v2255
      %v2257 = vand.u32 %v2256, 4294901760
      %v2258 = vsub.f32 %v2256, %v2257
      %v2259 = vand.u32 %v2258, 4294901760
      %2260 = vmatpush1.msra.mxu0 %v2259
      %v2261 = vand.u32 %v360, 4294901760
      %v2262 = vsub.f32 %v360, %v2261
      %v2263 = vand.u32 %v2262, 4294901760
      %v2264 = vsub.f32 %v2262, %v2263
      %v2265 = vand.u32 %v2264, 4294901760
      %2266 = vmatprep.subr.mxu0 %v2265
      %v2267 = vand.u32 %v359, 4294901760
      %v2268 = vsub.f32 %v359, %v2267
      %v2269 = vand.u32 %v2268, 4294901760
      %v2270 = vsub.f32 %v2268, %v2269
      %v2271 = vand.u32 %v2270, 4294901760
      %2272 = vmatpush1.msra.mxu0 %v2271
      %v2273 = vand.u32 %v347, 4294901760
      %v2274 = vsub.f32 %v347, %v2273
      %v2275 = vand.u32 %v2274, 4294901760
      %v2276 = vsub.f32 %v2274, %v2275
      %v2277 = vand.u32 %v2276, 4294901760
      %2278 = vmatprep.subr.mxu0 %v2277
      %v2279 = vand.u32 %v346, 4294901760
      %v2280 = vsub.f32 %v346, %v2279
      %v2281 = vand.u32 %v2280, 4294901760
      %v2282 = vsub.f32 %v2280, %v2281
      %v2283 = vand.u32 %v2282, 4294901760
      %2284 = vmatpush1.msra.mxu0 %v2283
      %v2285 = vand.u32 %v334, 4294901760
      %v2286 = vsub.f32 %v334, %v2285
      %v2287 = vand.u32 %v2286, 4294901760
      %v2288 = vsub.f32 %v2286, %v2287
      %v2289 = vand.u32 %v2288, 4294901760
      %2290 = vmatprep.subr.mxu0 %v2289
      %v2291 = vand.u32 %v333, 4294901760
      %v2292 = vsub.f32 %v333, %v2291
      %v2293 = vand.u32 %v2292, 4294901760
      %v2294 = vsub.f32 %v2292, %v2293
      %v2295 = vand.u32 %v2294, 4294901760
      %2296 = vmatpush1.msra.mxu0 %v2295
      %v2297 = vand.u32 %v321, 4294901760
      %v2298 = vsub.f32 %v321, %v2297
      %v2299 = vand.u32 %v2298, 4294901760
      %v2300 = vsub.f32 %v2298, %v2299
      %v2301 = vand.u32 %v2300, 4294901760
      %2302 = vmatprep.subr.mxu0 %v2301
      %v2303 = vand.u32 %v320, 4294901760
      %v2304 = vsub.f32 %v320, %v2303
      %v2305 = vand.u32 %v2304, 4294901760
      %v2306 = vsub.f32 %v2304, %v2305
      %v2307 = vand.u32 %v2306, 4294901760
      %2308 = vmatpush1.msra.mxu0 %v2307
      %v2309 = vand.u32 %v308, 4294901760
      %v2310 = vsub.f32 %v308, %v2309
      %v2311 = vand.u32 %v2310, 4294901760
      %v2312 = vsub.f32 %v2310, %v2311
      %v2313 = vand.u32 %v2312, 4294901760
      %2314 = vmatprep.subr.mxu0 %v2313
      %v2315 = vand.u32 %v307, 4294901760
      %v2316 = vsub.f32 %v307, %v2315
      %v2317 = vand.u32 %v2316, 4294901760
      %v2318 = vsub.f32 %v2316, %v2317
      %v2319 = vand.u32 %v2318, 4294901760
      %2320 = vmatpush1.msra.mxu0 %v2319
      %v2321 = vand.u32 %v295, 4294901760
      %v2322 = vsub.f32 %v295, %v2321
      %v2323 = vand.u32 %v2322, 4294901760
      %v2324 = vsub.f32 %v2322, %v2323
      %v2325 = vand.u32 %v2324, 4294901760
      %2326 = vmatprep.subr.mxu0 %v2325
      %v2327 = vand.u32 %v294, 4294901760
      %v2328 = vsub.f32 %v294, %v2327
      %v2329 = vand.u32 %v2328, 4294901760
      %v2330 = vsub.f32 %v2328, %v2329
      %v2331 = vand.u32 %v2330, 4294901760
      %2332 = vmatpush1.msra.mxu0 %v2331
      %v2333 = vand.u32 %v282, 4294901760
      %v2334 = vsub.f32 %v282, %v2333
      %v2335 = vand.u32 %v2334, 4294901760
      %v2336 = vsub.f32 %v2334, %v2335
      %v2337 = vand.u32 %v2336, 4294901760
      %2338 = vmatprep.subr.mxu0 %v2337
      %v2339 = vand.u32 %v281, 4294901760
      %v2340 = vsub.f32 %v281, %v2339
      %v2341 = vand.u32 %v2340, 4294901760
      %v2342 = vsub.f32 %v2340, %v2341
      %v2343 = vand.u32 %v2342, 4294901760
      %2344 = vmatpush1.msra.mxu0 %v2343
      %v2345 = vand.u32 %v269, 4294901760
      %v2346 = vsub.f32 %v269, %v2345
      %v2347 = vand.u32 %v2346, 4294901760
      %v2348 = vsub.f32 %v2346, %v2347
      %v2349 = vand.u32 %v2348, 4294901760
      %2350 = vmatprep.subr.mxu0 %v2349
      %v2351 = vand.u32 %v268, 4294901760
      %v2352 = vsub.f32 %v268, %v2351
      %v2353 = vand.u32 %v2352, 4294901760
      %v2354 = vsub.f32 %v2352, %v2353
      %v2355 = vand.u32 %v2354, 4294901760
      %2356 = vmatpush1.msra.mxu0 %v2355
      %v2357 = vand.u32 %v256, 4294901760
      %v2358 = vsub.f32 %v256, %v2357
      %v2359 = vand.u32 %v2358, 4294901760
      %v2360 = vsub.f32 %v2358, %v2359
      %v2361 = vand.u32 %v2360, 4294901760
      %2362 = vmatprep.subr.mxu0 %v2361
      %v2363 = vand.u32 %v255, 4294901760
      %v2364 = vsub.f32 %v255, %v2363
      %v2365 = vand.u32 %v2364, 4294901760
      %v2366 = vsub.f32 %v2364, %v2365
      %v2367 = vand.u32 %v2366, 4294901760
      %2368 = vmatpush1.msra.mxu0 %v2367
      %v2369 = vand.u32 %v243, 4294901760
      %v2370 = vsub.f32 %v243, %v2369
      %v2371 = vand.u32 %v2370, 4294901760
      %v2372 = vsub.f32 %v2370, %v2371
      %v2373 = vand.u32 %v2372, 4294901760
      %2374 = vmatprep.subr.mxu0 %v2373
      %v2375 = vand.u32 %v242, 4294901760
      %v2376 = vsub.f32 %v242, %v2375
      %v2377 = vand.u32 %v2376, 4294901760
      %v2378 = vsub.f32 %v2376, %v2377
      %v2379 = vand.u32 %v2378, 4294901760
      %2380 = vmatpush1.msra.mxu0 %v2379
      %v2381 = vand.u32 %v230, 4294901760
      %v2382 = vsub.f32 %v230, %v2381
      %v2383 = vand.u32 %v2382, 4294901760
      %v2384 = vsub.f32 %v2382, %v2383
      %v2385 = vand.u32 %v2384, 4294901760
      %2386 = vmatprep.subr.mxu0 %v2385
      %v2387 = vand.u32 %v229, 4294901760
      %v2388 = vsub.f32 %v229, %v2387
      %v2389 = vand.u32 %v2388, 4294901760
      %v2390 = vsub.f32 %v2388, %v2389
      %v2391 = vand.u32 %v2390, 4294901760
      %2392 = vmatpush1.msra.mxu0 %v2391
      %v2393 = vand.u32 %v217, 4294901760
      %v2394 = vsub.f32 %v217, %v2393
      %v2395 = vand.u32 %v2394, 4294901760
      %v2396 = vsub.f32 %v2394, %v2395
      %v2397 = vand.u32 %v2396, 4294901760
      %2398 = vmatprep.subr.mxu0 %v2397
      %v2399 = vand.u32 %v216, 4294901760
      %v2400 = vsub.f32 %v216, %v2399
      %v2401 = vand.u32 %v2400, 4294901760
      %v2402 = vsub.f32 %v2400, %v2401
      %v2403 = vand.u32 %v2402, 4294901760
      %2404 = vmatpush1.msra.mxu0 %v2403
      %v2405 = vand.u32 %v204, 4294901760
      %v2406 = vsub.f32 %v204, %v2405
      %v2407 = vand.u32 %v2406, 4294901760
      %v2408 = vsub.f32 %v2406, %v2407
      %v2409 = vand.u32 %v2408, 4294901760
      %2410 = vmatprep.subr.mxu0 %v2409
      %v2411 = vand.u32 %v203, 4294901760
      %v2412 = vsub.f32 %v203, %v2411
      %v2413 = vand.u32 %v2412, 4294901760
      %v2414 = vsub.f32 %v2412, %v2413
      %v2415 = vand.u32 %v2414, 4294901760
      %2416 = vmatpush1.msra.mxu0 %v2415
      %2417 = vmatprep.subr.mxu0 0.0
      %2418 = vmatpush2.msra.mxu0 0.0
      %2419 = vmatprep.subr.mxu0 0.0
      %2420 = vmatpush2.msra.mxu0 0.0
      %2421 = vmatprep.subr.mxu0 0.0
      %2422 = vmatpush2.msra.mxu0 0.0
      %2423 = vmatprep.subr.mxu0 0.0
      %2424 = vmatpush2.msra.mxu0 0.0
      %2425 = vmatprep.subr.mxu0 0.0
      %2426 = vmatpush2.msra.mxu0 0.0
      %2427 = vmatprep.subr.mxu0 0.0
      %2428 = vmatpush2.msra.mxu0 0.0
      %2429 = vmatprep.subr.mxu0 0.0
      %2430 = vmatpush2.msra.mxu0 0.0
      %2431 = vmatprep.subr.mxu0 0.0
      %2432 = vmatpush2.msra.mxu0 0.0
      %2433 = vmatprep.subr.mxu0 0.0
      %2434 = vmatpush2.msra.mxu0 0.0
      %2435 = vmatprep.subr.mxu0 0.0
      %2436 = vmatpush2.msra.mxu0 0.0
      %2437 = vmatprep.subr.mxu0 0.0
      %2438 = vmatpush2.msra.mxu0 0.0
      %2439 = vmatprep.subr.mxu0 0.0
      %2440 = vmatpush2.msra.mxu0 0.0
      %2441 = vmatprep.subr.mxu0 0.0
      %2442 = vmatpush2.msra.mxu0 0.0
      %2443 = vmatprep.subr.mxu0 0.0
      %2444 = vmatpush2.msra.mxu0 0.0
      %2445 = vmatprep.subr.mxu0 0.0
      %2446 = vmatpush2.msra.mxu0 0.0
      %2447 = vmatprep.subr.mxu0 0.0
      %2448 = vmatpush2.msra.mxu0 0.0
      %2449 = vmatprep.mubr.f32.mxu0 0.0
      %v2450 = vand.u32 %v198, 4294901760
      %2451 = vmatmul.mubr.f32.gmra.mxu0 %v2450
      %v2452 = vpop.f32.mrf.mxu0
      %v2453 = vadd.f32 %v2221, %v2452
      %v2454 = vpop.f32.mrf.mxu0
      %v2455 = vadd.f32 %v2223, %v2454
      %2456 = vdwg.mxu0
      %v2457 = vand.u32 %v399, 4294901760
      %v2458 = vsub.f32 %v399, %v2457
      %2459 = vmatprep.subr.mxu0 %v2458
      %v2460 = vand.u32 %v398, 4294901760
      %v2461 = vsub.f32 %v398, %v2460
      %2462 = vmatpush1.msra.mxu0 %v2461
      %v2463 = vand.u32 %v386, 4294901760
      %v2464 = vsub.f32 %v386, %v2463
      %2465 = vmatprep.subr.mxu0 %v2464
      %v2466 = vand.u32 %v385, 4294901760
      %v2467 = vsub.f32 %v385, %v2466
      %2468 = vmatpush1.msra.mxu0 %v2467
      %v2469 = vand.u32 %v373, 4294901760
      %v2470 = vsub.f32 %v373, %v2469
      %2471 = vmatprep.subr.mxu0 %v2470
      %v2472 = vand.u32 %v372, 4294901760
      %v2473 = vsub.f32 %v372, %v2472
      %2474 = vmatpush1.msra.mxu0 %v2473
      %v2475 = vand.u32 %v360, 4294901760
      %v2476 = vsub.f32 %v360, %v2475
      %2477 = vmatprep.subr.mxu0 %v2476
      %v2478 = vand.u32 %v359, 4294901760
      %v2479 = vsub.f32 %v359, %v2478
      %2480 = vmatpush1.msra.mxu0 %v2479
      %v2481 = vand.u32 %v347, 4294901760
      %v2482 = vsub.f32 %v347, %v2481
      %2483 = vmatprep.subr.mxu0 %v2482
      %v2484 = vand.u32 %v346, 4294901760
      %v2485 = vsub.f32 %v346, %v2484
      %2486 = vmatpush1.msra.mxu0 %v2485
      %v2487 = vand.u32 %v334, 4294901760
      %v2488 = vsub.f32 %v334, %v2487
      %2489 = vmatprep.subr.mxu0 %v2488
      %v2490 = vand.u32 %v333, 4294901760
      %v2491 = vsub.f32 %v333, %v2490
      %2492 = vmatpush1.msra.mxu0 %v2491
      %v2493 = vand.u32 %v321, 4294901760
      %v2494 = vsub.f32 %v321, %v2493
      %2495 = vmatprep.subr.mxu0 %v2494
      %v2496 = vand.u32 %v320, 4294901760
      %v2497 = vsub.f32 %v320, %v2496
      %2498 = vmatpush1.msra.mxu0 %v2497
      %v2499 = vand.u32 %v308, 4294901760
      %v2500 = vsub.f32 %v308, %v2499
      %2501 = vmatprep.subr.mxu0 %v2500
      %v2502 = vand.u32 %v307, 4294901760
      %v2503 = vsub.f32 %v307, %v2502
      %2504 = vmatpush1.msra.mxu0 %v2503
      %v2505 = vand.u32 %v295, 4294901760
      %v2506 = vsub.f32 %v295, %v2505
      %2507 = vmatprep.subr.mxu0 %v2506
      %v2508 = vand.u32 %v294, 4294901760
      %v2509 = vsub.f32 %v294, %v2508
      %2510 = vmatpush1.msra.mxu0 %v2509
      %v2511 = vand.u32 %v282, 4294901760
      %v2512 = vsub.f32 %v282, %v2511
      %2513 = vmatprep.subr.mxu0 %v2512
      %v2514 = vand.u32 %v281, 4294901760
      %v2515 = vsub.f32 %v281, %v2514
      %2516 = vmatpush1.msra.mxu0 %v2515
      %v2517 = vand.u32 %v269, 4294901760
      %v2518 = vsub.f32 %v269, %v2517
      %2519 = vmatprep.subr.mxu0 %v2518
      %v2520 = vand.u32 %v268, 4294901760
      %v2521 = vsub.f32 %v268, %v2520
      %2522 = vmatpush1.msra.mxu0 %v2521
      %v2523 = vand.u32 %v256, 4294901760
      %v2524 = vsub.f32 %v256, %v2523
      %2525 = vmatprep.subr.mxu0 %v2524
      %v2526 = vand.u32 %v255, 4294901760
      %v2527 = vsub.f32 %v255, %v2526
      %2528 = vmatpush1.msra.mxu0 %v2527
      %v2529 = vand.u32 %v243, 4294901760
      %v2530 = vsub.f32 %v243, %v2529
      %2531 = vmatprep.subr.mxu0 %v2530
      %v2532 = vand.u32 %v242, 4294901760
      %v2533 = vsub.f32 %v242, %v2532
      %2534 = vmatpush1.msra.mxu0 %v2533
      %v2535 = vand.u32 %v230, 4294901760
      %v2536 = vsub.f32 %v230, %v2535
      %2537 = vmatprep.subr.mxu0 %v2536
      %v2538 = vand.u32 %v229, 4294901760
      %v2539 = vsub.f32 %v229, %v2538
      %2540 = vmatpush1.msra.mxu0 %v2539
      %v2541 = vand.u32 %v217, 4294901760
      %v2542 = vsub.f32 %v217, %v2541
      %2543 = vmatprep.subr.mxu0 %v2542
      %v2544 = vand.u32 %v216, 4294901760
      %v2545 = vsub.f32 %v216, %v2544
      %2546 = vmatpush1.msra.mxu0 %v2545
      %v2547 = vand.u32 %v204, 4294901760
      %v2548 = vsub.f32 %v204, %v2547
      %2549 = vmatprep.subr.mxu0 %v2548
      %v2550 = vand.u32 %v203, 4294901760
      %v2551 = vsub.f32 %v203, %v2550
      %2552 = vmatpush1.msra.mxu0 %v2551
      %2553 = vmatprep.subr.mxu0 0.0
      %2554 = vmatpush2.msra.mxu0 0.0
      %2555 = vmatprep.subr.mxu0 0.0
      %2556 = vmatpush2.msra.mxu0 0.0
      %2557 = vmatprep.subr.mxu0 0.0
      %2558 = vmatpush2.msra.mxu0 0.0
      %2559 = vmatprep.subr.mxu0 0.0
      %2560 = vmatpush2.msra.mxu0 0.0
      %2561 = vmatprep.subr.mxu0 0.0
      %2562 = vmatpush2.msra.mxu0 0.0
      %2563 = vmatprep.subr.mxu0 0.0
      %2564 = vmatpush2.msra.mxu0 0.0
      %2565 = vmatprep.subr.mxu0 0.0
      %2566 = vmatpush2.msra.mxu0 0.0
      %2567 = vmatprep.subr.mxu0 0.0
      %2568 = vmatpush2.msra.mxu0 0.0
      %2569 = vmatprep.subr.mxu0 0.0
      %2570 = vmatpush2.msra.mxu0 0.0
      %2571 = vmatprep.subr.mxu0 0.0
      %2572 = vmatpush2.msra.mxu0 0.0
      %2573 = vmatprep.subr.mxu0 0.0
      %2574 = vmatpush2.msra.mxu0 0.0
      %2575 = vmatprep.subr.mxu0 0.0
      %2576 = vmatpush2.msra.mxu0 0.0
      %2577 = vmatprep.subr.mxu0 0.0
      %2578 = vmatpush2.msra.mxu0 0.0
      %2579 = vmatprep.subr.mxu0 0.0
      %2580 = vmatpush2.msra.mxu0 0.0
      %2581 = vmatprep.subr.mxu0 0.0
      %2582 = vmatpush2.msra.mxu0 0.0
      %2583 = vmatprep.subr.mxu0 0.0
      %2584 = vmatpush2.msra.mxu0 0.0
      %2585 = vmatprep.mubr.f32.mxu0 0.0
      %v2586 = vand.u32 %v198, 4294901760
      %v2587 = vsub.f32 %v198, %v2586
      %2588 = vmatmul.mubr.f32.gmra.mxu0 %v2587
      %v2589 = vpop.f32.mrf.mxu0
      %v2590 = vadd.f32 %v2453, %v2589
      %v2591 = vpop.f32.mrf.mxu0
      %v2592 = vadd.f32 %v2455, %v2591
      %2593 = vdwg.mxu0
      %v2594 = vand.u32 %v399, 4294901760
      %2595 = vmatprep.subr.mxu0 %v2594
      %v2596 = vand.u32 %v398, 4294901760
      %2597 = vmatpush1.msra.mxu0 %v2596
      %v2598 = vand.u32 %v386, 4294901760
      %2599 = vmatprep.subr.mxu0 %v2598
      %v2600 = vand.u32 %v385, 4294901760
      %2601 = vmatpush1.msra.mxu0 %v2600
      %v2602 = vand.u32 %v373, 4294901760
      %2603 = vmatprep.subr.mxu0 %v2602
      %v2604 = vand.u32 %v372, 4294901760
      %2605 = vmatpush1.msra.mxu0 %v2604
      %v2606 = vand.u32 %v360, 4294901760
      %2607 = vmatprep.subr.mxu0 %v2606
      %v2608 = vand.u32 %v359, 4294901760
      %2609 = vmatpush1.msra.mxu0 %v2608
      %v2610 = vand.u32 %v347, 4294901760
      %2611 = vmatprep.subr.mxu0 %v2610
      %v2612 = vand.u32 %v346, 4294901760
      %2613 = vmatpush1.msra.mxu0 %v2612
      %v2614 = vand.u32 %v334, 4294901760
      %2615 = vmatprep.subr.mxu0 %v2614
      %v2616 = vand.u32 %v333, 4294901760
      %2617 = vmatpush1.msra.mxu0 %v2616
      %v2618 = vand.u32 %v321, 4294901760
      %2619 = vmatprep.subr.mxu0 %v2618
      %v2620 = vand.u32 %v320, 4294901760
      %2621 = vmatpush1.msra.mxu0 %v2620
      %v2622 = vand.u32 %v308, 4294901760
      %2623 = vmatprep.subr.mxu0 %v2622
      %v2624 = vand.u32 %v307, 4294901760
      %2625 = vmatpush1.msra.mxu0 %v2624
      %v2626 = vand.u32 %v295, 4294901760
      %2627 = vmatprep.subr.mxu0 %v2626
      %v2628 = vand.u32 %v294, 4294901760
      %2629 = vmatpush1.msra.mxu0 %v2628
      %v2630 = vand.u32 %v282, 4294901760
      %2631 = vmatprep.subr.mxu0 %v2630
      %v2632 = vand.u32 %v281, 4294901760
      %2633 = vmatpush1.msra.mxu0 %v2632
      %v2634 = vand.u32 %v269, 4294901760
      %2635 = vmatprep.subr.mxu0 %v2634
      %v2636 = vand.u32 %v268, 4294901760
      %2637 = vmatpush1.msra.mxu0 %v2636
      %v2638 = vand.u32 %v256, 4294901760
      %2639 = vmatprep.subr.mxu0 %v2638
      %v2640 = vand.u32 %v255, 4294901760
      %2641 = vmatpush1.msra.mxu0 %v2640
      %v2642 = vand.u32 %v243, 4294901760
      %2643 = vmatprep.subr.mxu0 %v2642
      %v2644 = vand.u32 %v242, 4294901760
      %2645 = vmatpush1.msra.mxu0 %v2644
      %v2646 = vand.u32 %v230, 4294901760
      %2647 = vmatprep.subr.mxu0 %v2646
      %v2648 = vand.u32 %v229, 4294901760
      %2649 = vmatpush1.msra.mxu0 %v2648
      %v2650 = vand.u32 %v217, 4294901760
      %2651 = vmatprep.subr.mxu0 %v2650
      %v2652 = vand.u32 %v216, 4294901760
      %2653 = vmatpush1.msra.mxu0 %v2652
      %v2654 = vand.u32 %v204, 4294901760
      %2655 = vmatprep.subr.mxu0 %v2654
      %v2656 = vand.u32 %v203, 4294901760
      %2657 = vmatpush1.msra.mxu0 %v2656
      %2658 = vmatprep.subr.mxu0 0.0
      %2659 = vmatpush2.msra.mxu0 0.0
      %2660 = vmatprep.subr.mxu0 0.0
      %2661 = vmatpush2.msra.mxu0 0.0
      %2662 = vmatprep.subr.mxu0 0.0
      %2663 = vmatpush2.msra.mxu0 0.0
      %2664 = vmatprep.subr.mxu0 0.0
      %2665 = vmatpush2.msra.mxu0 0.0
      %2666 = vmatprep.subr.mxu0 0.0
      %2667 = vmatpush2.msra.mxu0 0.0
      %2668 = vmatprep.subr.mxu0 0.0
      %2669 = vmatpush2.msra.mxu0 0.0
      %2670 = vmatprep.subr.mxu0 0.0
      %2671 = vmatpush2.msra.mxu0 0.0
      %2672 = vmatprep.subr.mxu0 0.0
      %2673 = vmatpush2.msra.mxu0 0.0
      %2674 = vmatprep.subr.mxu0 0.0
      %2675 = vmatpush2.msra.mxu0 0.0
      %2676 = vmatprep.subr.mxu0 0.0
      %2677 = vmatpush2.msra.mxu0 0.0
      %2678 = vmatprep.subr.mxu0 0.0
      %2679 = vmatpush2.msra.mxu0 0.0
      %2680 = vmatprep.subr.mxu0 0.0
      %2681 = vmatpush2.msra.mxu0 0.0
      %2682 = vmatprep.subr.mxu0 0.0
      %2683 = vmatpush2.msra.mxu0 0.0
      %2684 = vmatprep.subr.mxu0 0.0
      %2685 = vmatpush2.msra.mxu0 0.0
      %2686 = vmatprep.subr.mxu0 0.0
      %2687 = vmatpush2.msra.mxu0 0.0
      %2688 = vmatprep.subr.mxu0 0.0
      %2689 = vmatpush2.msra.mxu0 0.0
      %2690 = vmatprep.mubr.f32.mxu0 0.0
      %v2691 = vand.u32 %v198, 4294901760
      %v2692 = vsub.f32 %v198, %v2691
      %v2693 = vand.u32 %v2692, 4294901760
      %2694 = vmatmul.mubr.f32.gmra.mxu0 %v2693
      %v2695 = vpop.f32.mrf.mxu0
      %v2696 = vadd.f32 %v2590, %v2695
      %v2697 = vpop.f32.mrf.mxu0
      %v2698 = vadd.f32 %v2592, %v2697
      %2699 = vdwg.mxu0
      %v2700 = vand.u32 %v399, 4294901760
      %v2701 = vsub.f32 %v399, %v2700
      %v2702 = vand.u32 %v2701, 4294901760
      %2703 = vmatprep.subr.mxu0 %v2702
      %v2704 = vand.u32 %v398, 4294901760
      %v2705 = vsub.f32 %v398, %v2704
      %v2706 = vand.u32 %v2705, 4294901760
      %2707 = vmatpush1.msra.mxu0 %v2706
      %v2708 = vand.u32 %v386, 4294901760
      %v2709 = vsub.f32 %v386, %v2708
      %v2710 = vand.u32 %v2709, 4294901760
      %2711 = vmatprep.subr.mxu0 %v2710
      %v2712 = vand.u32 %v385, 4294901760
      %v2713 = vsub.f32 %v385, %v2712
      %v2714 = vand.u32 %v2713, 4294901760
      %2715 = vmatpush1.msra.mxu0 %v2714
      %v2716 = vand.u32 %v373, 4294901760
      %v2717 = vsub.f32 %v373, %v2716
      %v2718 = vand.u32 %v2717, 4294901760
      %2719 = vmatprep.subr.mxu0 %v2718
      %v2720 = vand.u32 %v372, 4294901760
      %v2721 = vsub.f32 %v372, %v2720
      %v2722 = vand.u32 %v2721, 4294901760
      %2723 = vmatpush1.msra.mxu0 %v2722
      %v2724 = vand.u32 %v360, 4294901760
      %v2725 = vsub.f32 %v360, %v2724
      %v2726 = vand.u32 %v2725, 4294901760
      %2727 = vmatprep.subr.mxu0 %v2726
      %v2728 = vand.u32 %v359, 4294901760
      %v2729 = vsub.f32 %v359, %v2728
      %v2730 = vand.u32 %v2729, 4294901760
      %2731 = vmatpush1.msra.mxu0 %v2730
      %v2732 = vand.u32 %v347, 4294901760
      %v2733 = vsub.f32 %v347, %v2732
      %v2734 = vand.u32 %v2733, 4294901760
      %2735 = vmatprep.subr.mxu0 %v2734
      %v2736 = vand.u32 %v346, 4294901760
      %v2737 = vsub.f32 %v346, %v2736
      %v2738 = vand.u32 %v2737, 4294901760
      %2739 = vmatpush1.msra.mxu0 %v2738
      %v2740 = vand.u32 %v334, 4294901760
      %v2741 = vsub.f32 %v334, %v2740
      %v2742 = vand.u32 %v2741, 4294901760
      %2743 = vmatprep.subr.mxu0 %v2742
      %v2744 = vand.u32 %v333, 4294901760
      %v2745 = vsub.f32 %v333, %v2744
      %v2746 = vand.u32 %v2745, 4294901760
      %2747 = vmatpush1.msra.mxu0 %v2746
      %v2748 = vand.u32 %v321, 4294901760
      %v2749 = vsub.f32 %v321, %v2748
      %v2750 = vand.u32 %v2749, 4294901760
      %2751 = vmatprep.subr.mxu0 %v2750
      %v2752 = vand.u32 %v320, 4294901760
      %v2753 = vsub.f32 %v320, %v2752
      %v2754 = vand.u32 %v2753, 4294901760
      %2755 = vmatpush1.msra.mxu0 %v2754
      %v2756 = vand.u32 %v308, 4294901760
      %v2757 = vsub.f32 %v308, %v2756
      %v2758 = vand.u32 %v2757, 4294901760
      %2759 = vmatprep.subr.mxu0 %v2758
      %v2760 = vand.u32 %v307, 4294901760
      %v2761 = vsub.f32 %v307, %v2760
      %v2762 = vand.u32 %v2761, 4294901760
      %2763 = vmatpush1.msra.mxu0 %v2762
      %v2764 = vand.u32 %v295, 4294901760
      %v2765 = vsub.f32 %v295, %v2764
      %v2766 = vand.u32 %v2765, 4294901760
      %2767 = vmatprep.subr.mxu0 %v2766
      %v2768 = vand.u32 %v294, 4294901760
      %v2769 = vsub.f32 %v294, %v2768
      %v2770 = vand.u32 %v2769, 4294901760
      %2771 = vmatpush1.msra.mxu0 %v2770
      %v2772 = vand.u32 %v282, 4294901760
      %v2773 = vsub.f32 %v282, %v2772
      %v2774 = vand.u32 %v2773, 4294901760
      %2775 = vmatprep.subr.mxu0 %v2774
      %v2776 = vand.u32 %v281, 4294901760
      %v2777 = vsub.f32 %v281, %v2776
      %v2778 = vand.u32 %v2777, 4294901760
      %2779 = vmatpush1.msra.mxu0 %v2778
      %v2780 = vand.u32 %v269, 4294901760
      %v2781 = vsub.f32 %v269, %v2780
      %v2782 = vand.u32 %v2781, 4294901760
      %2783 = vmatprep.subr.mxu0 %v2782
      %v2784 = vand.u32 %v268, 4294901760
      %v2785 = vsub.f32 %v268, %v2784
      %v2786 = vand.u32 %v2785, 4294901760
      %2787 = vmatpush1.msra.mxu0 %v2786
      %v2788 = vand.u32 %v256, 4294901760
      %v2789 = vsub.f32 %v256, %v2788
      %v2790 = vand.u32 %v2789, 4294901760
      %2791 = vmatprep.subr.mxu0 %v2790
      %v2792 = vand.u32 %v255, 4294901760
      %v2793 = vsub.f32 %v255, %v2792
      %v2794 = vand.u32 %v2793, 4294901760
      %2795 = vmatpush1.msra.mxu0 %v2794
      %v2796 = vand.u32 %v243, 4294901760
      %v2797 = vsub.f32 %v243, %v2796
      %v2798 = vand.u32 %v2797, 4294901760
      %2799 = vmatprep.subr.mxu0 %v2798
      %v2800 = vand.u32 %v242, 4294901760
      %v2801 = vsub.f32 %v242, %v2800
      %v2802 = vand.u32 %v2801, 4294901760
      %2803 = vmatpush1.msra.mxu0 %v2802
      %v2804 = vand.u32 %v230, 4294901760
      %v2805 = vsub.f32 %v230, %v2804
      %v2806 = vand.u32 %v2805, 4294901760
      %2807 = vmatprep.subr.mxu0 %v2806
      %v2808 = vand.u32 %v229, 4294901760
      %v2809 = vsub.f32 %v229, %v2808
      %v2810 = vand.u32 %v2809, 4294901760
      %2811 = vmatpush1.msra.mxu0 %v2810
      %v2812 = vand.u32 %v217, 4294901760
      %v2813 = vsub.f32 %v217, %v2812
      %v2814 = vand.u32 %v2813, 4294901760
      %2815 = vmatprep.subr.mxu0 %v2814
      %v2816 = vand.u32 %v216, 4294901760
      %v2817 = vsub.f32 %v216, %v2816
      %v2818 = vand.u32 %v2817, 4294901760
      %2819 = vmatpush1.msra.mxu0 %v2818
      %v2820 = vand.u32 %v204, 4294901760
      %v2821 = vsub.f32 %v204, %v2820
      %v2822 = vand.u32 %v2821, 4294901760
      %2823 = vmatprep.subr.mxu0 %v2822
      %v2824 = vand.u32 %v203, 4294901760
      %v2825 = vsub.f32 %v203, %v2824
      %v2826 = vand.u32 %v2825, 4294901760
      %2827 = vmatpush1.msra.mxu0 %v2826
      %2828 = vmatprep.subr.mxu0 0.0
      %2829 = vmatpush2.msra.mxu0 0.0
      %2830 = vmatprep.subr.mxu0 0.0
      %2831 = vmatpush2.msra.mxu0 0.0
      %2832 = vmatprep.subr.mxu0 0.0
      %2833 = vmatpush2.msra.mxu0 0.0
      %2834 = vmatprep.subr.mxu0 0.0
      %2835 = vmatpush2.msra.mxu0 0.0
      %2836 = vmatprep.subr.mxu0 0.0
      %2837 = vmatpush2.msra.mxu0 0.0
      %2838 = vmatprep.subr.mxu0 0.0
      %2839 = vmatpush2.msra.mxu0 0.0
      %2840 = vmatprep.subr.mxu0 0.0
      %2841 = vmatpush2.msra.mxu0 0.0
      %2842 = vmatprep.subr.mxu0 0.0
      %2843 = vmatpush2.msra.mxu0 0.0
      %2844 = vmatprep.subr.mxu0 0.0
      %2845 = vmatpush2.msra.mxu0 0.0
      %2846 = vmatprep.subr.mxu0 0.0
      %2847 = vmatpush2.msra.mxu0 0.0
      %2848 = vmatprep.subr.mxu0 0.0
      %2849 = vmatpush2.msra.mxu0 0.0
      %2850 = vmatprep.subr.mxu0 0.0
      %2851 = vmatpush2.msra.mxu0 0.0
      %2852 = vmatprep.subr.mxu0 0.0
      %2853 = vmatpush2.msra.mxu0 0.0
      %2854 = vmatprep.subr.mxu0 0.0
      %2855 = vmatpush2.msra.mxu0 0.0
      %2856 = vmatprep.subr.mxu0 0.0
      %2857 = vmatpush2.msra.mxu0 0.0
      %2858 = vmatprep.subr.mxu0 0.0
      %2859 = vmatpush2.msra.mxu0 0.0
      %2860 = vmatprep.mubr.f32.mxu0 0.0
      %v2861 = vand.u32 %v198, 4294901760
      %2862 = vmatmul.mubr.f32.gmra.mxu0 %v2861
      %v2863 = vpop.f32.mrf.mxu0
      %v2864 = vadd.f32 %v2696, %v2863
      %v2865 = vpop.f32.mrf.mxu0
      %v2866 = vadd.f32 %v2698, %v2865
      %2867 = vdwg.mxu0
      %v2868 = vand.u32 %v399, 4294901760
      %2869 = vmatprep.subr.mxu0 %v2868
      %v2870 = vand.u32 %v398, 4294901760
      %2871 = vmatpush1.msra.mxu0 %v2870
      %v2872 = vand.u32 %v386, 4294901760
      %2873 = vmatprep.subr.mxu0 %v2872
      %v2874 = vand.u32 %v385, 4294901760
      %2875 = vmatpush1.msra.mxu0 %v2874
      %v2876 = vand.u32 %v373, 4294901760
      %2877 = vmatprep.subr.mxu0 %v2876
      %v2878 = vand.u32 %v372, 4294901760
      %2879 = vmatpush1.msra.mxu0 %v2878
      %v2880 = vand.u32 %v360, 4294901760
      %2881 = vmatprep.subr.mxu0 %v2880
      %v2882 = vand.u32 %v359, 4294901760
      %2883 = vmatpush1.msra.mxu0 %v2882
      %v2884 = vand.u32 %v347, 4294901760
      %2885 = vmatprep.subr.mxu0 %v2884
      %v2886 = vand.u32 %v346, 4294901760
      %2887 = vmatpush1.msra.mxu0 %v2886
      %v2888 = vand.u32 %v334, 4294901760
      %2889 = vmatprep.subr.mxu0 %v2888
      %v2890 = vand.u32 %v333, 4294901760
      %2891 = vmatpush1.msra.mxu0 %v2890
      %v2892 = vand.u32 %v321, 4294901760
      %2893 = vmatprep.subr.mxu0 %v2892
      %v2894 = vand.u32 %v320, 4294901760
      %2895 = vmatpush1.msra.mxu0 %v2894
      %v2896 = vand.u32 %v308, 4294901760
      %2897 = vmatprep.subr.mxu0 %v2896
      %v2898 = vand.u32 %v307, 4294901760
      %2899 = vmatpush1.msra.mxu0 %v2898
      %v2900 = vand.u32 %v295, 4294901760
      %2901 = vmatprep.subr.mxu0 %v2900
      %v2902 = vand.u32 %v294, 4294901760
      %2903 = vmatpush1.msra.mxu0 %v2902
      %v2904 = vand.u32 %v282, 4294901760
      %2905 = vmatprep.subr.mxu0 %v2904
      %v2906 = vand.u32 %v281, 4294901760
      %2907 = vmatpush1.msra.mxu0 %v2906
      %v2908 = vand.u32 %v269, 4294901760
      %2909 = vmatprep.subr.mxu0 %v2908
      %v2910 = vand.u32 %v268, 4294901760
      %2911 = vmatpush1.msra.mxu0 %v2910
      %v2912 = vand.u32 %v256, 4294901760
      %2913 = vmatprep.subr.mxu0 %v2912
      %v2914 = vand.u32 %v255, 4294901760
      %2915 = vmatpush1.msra.mxu0 %v2914
      %v2916 = vand.u32 %v243, 4294901760
      %2917 = vmatprep.subr.mxu0 %v2916
      %v2918 = vand.u32 %v242, 4294901760
      %2919 = vmatpush1.msra.mxu0 %v2918
      %v2920 = vand.u32 %v230, 4294901760
      %2921 = vmatprep.subr.mxu0 %v2920
      %v2922 = vand.u32 %v229, 4294901760
      %2923 = vmatpush1.msra.mxu0 %v2922
      %v2924 = vand.u32 %v217, 4294901760
      %2925 = vmatprep.subr.mxu0 %v2924
      %v2926 = vand.u32 %v216, 4294901760
      %2927 = vmatpush1.msra.mxu0 %v2926
      %v2928 = vand.u32 %v204, 4294901760
      %2929 = vmatprep.subr.mxu0 %v2928
      %v2930 = vand.u32 %v203, 4294901760
      %2931 = vmatpush1.msra.mxu0 %v2930
      %2932 = vmatprep.subr.mxu0 0.0
      %2933 = vmatpush2.msra.mxu0 0.0
      %2934 = vmatprep.subr.mxu0 0.0
      %2935 = vmatpush2.msra.mxu0 0.0
      %2936 = vmatprep.subr.mxu0 0.0
      %2937 = vmatpush2.msra.mxu0 0.0
      %2938 = vmatprep.subr.mxu0 0.0
      %2939 = vmatpush2.msra.mxu0 0.0
      %2940 = vmatprep.subr.mxu0 0.0
      %2941 = vmatpush2.msra.mxu0 0.0
      %2942 = vmatprep.subr.mxu0 0.0
      %2943 = vmatpush2.msra.mxu0 0.0
      %2944 = vmatprep.subr.mxu0 0.0
      %2945 = vmatpush2.msra.mxu0 0.0
      %2946 = vmatprep.subr.mxu0 0.0
      %2947 = vmatpush2.msra.mxu0 0.0
      %2948 = vmatprep.subr.mxu0 0.0
      %2949 = vmatpush2.msra.mxu0 0.0
      %2950 = vmatprep.subr.mxu0 0.0
      %2951 = vmatpush2.msra.mxu0 0.0
      %2952 = vmatprep.subr.mxu0 0.0
      %2953 = vmatpush2.msra.mxu0 0.0
      %2954 = vmatprep.subr.mxu0 0.0
      %2955 = vmatpush2.msra.mxu0 0.0
      %2956 = vmatprep.subr.mxu0 0.0
      %2957 = vmatpush2.msra.mxu0 0.0
      %2958 = vmatprep.subr.mxu0 0.0
      %2959 = vmatpush2.msra.mxu0 0.0
      %2960 = vmatprep.subr.mxu0 0.0
      %2961 = vmatpush2.msra.mxu0 0.0
      %2962 = vmatprep.subr.mxu0 0.0
      %2963 = vmatpush2.msra.mxu0 0.0
      %2964 = vmatprep.mubr.f32.mxu0 0.0
      %v2965 = vand.u32 %v198, 4294901760
      %2966 = vmatmul.mubr.f32.gmra.mxu0 %v2965
      %v2967 = vpop.f32.mrf.mxu0
      %v2968 = vadd.f32 %v2864, %v2967
      %v2969 = vpop.f32.mrf.mxu0
      %v2970 = vadd.f32 %v2866, %v2969
      %2971 = vdwg.mxu0
      %v2972 = vand.u32 %v401, 4294901760
      %2973 = vmatprep.subr.mxu0 %v2972
      %v2974 = vand.u32 %v400, 4294901760
      %2975 = vmatpush1.msra.mxu0 %v2974
      %v2976 = vand.u32 %v388, 4294901760
      %2977 = vmatprep.subr.mxu0 %v2976
      %v2978 = vand.u32 %v387, 4294901760
      %2979 = vmatpush1.msra.mxu0 %v2978
      %v2980 = vand.u32 %v375, 4294901760
      %2981 = vmatprep.subr.mxu0 %v2980
      %v2982 = vand.u32 %v374, 4294901760
      %2983 = vmatpush1.msra.mxu0 %v2982
      %v2984 = vand.u32 %v362, 4294901760
      %2985 = vmatprep.subr.mxu0 %v2984
      %v2986 = vand.u32 %v361, 4294901760
      %2987 = vmatpush1.msra.mxu0 %v2986
      %v2988 = vand.u32 %v349, 4294901760
      %2989 = vmatprep.subr.mxu0 %v2988
      %v2990 = vand.u32 %v348, 4294901760
      %2991 = vmatpush1.msra.mxu0 %v2990
      %v2992 = vand.u32 %v336, 4294901760
      %2993 = vmatprep.subr.mxu0 %v2992
      %v2994 = vand.u32 %v335, 4294901760
      %2995 = vmatpush1.msra.mxu0 %v2994
      %v2996 = vand.u32 %v323, 4294901760
      %2997 = vmatprep.subr.mxu0 %v2996
      %v2998 = vand.u32 %v322, 4294901760
      %2999 = vmatpush1.msra.mxu0 %v2998
      %v3000 = vand.u32 %v310, 4294901760
      %3001 = vmatprep.subr.mxu0 %v3000
      %v3002 = vand.u32 %v309, 4294901760
      %3003 = vmatpush1.msra.mxu0 %v3002
      %v3004 = vand.u32 %v297, 4294901760
      %3005 = vmatprep.subr.mxu0 %v3004
      %v3006 = vand.u32 %v296, 4294901760
      %3007 = vmatpush1.msra.mxu0 %v3006
      %v3008 = vand.u32 %v284, 4294901760
      %3009 = vmatprep.subr.mxu0 %v3008
      %v3010 = vand.u32 %v283, 4294901760
      %3011 = vmatpush1.msra.mxu0 %v3010
      %v3012 = vand.u32 %v271, 4294901760
      %3013 = vmatprep.subr.mxu0 %v3012
      %v3014 = vand.u32 %v270, 4294901760
      %3015 = vmatpush1.msra.mxu0 %v3014
      %v3016 = vand.u32 %v258, 4294901760
      %3017 = vmatprep.subr.mxu0 %v3016
      %v3018 = vand.u32 %v257, 4294901760
      %3019 = vmatpush1.msra.mxu0 %v3018
      %v3020 = vand.u32 %v245, 4294901760
      %3021 = vmatprep.subr.mxu0 %v3020
      %v3022 = vand.u32 %v244, 4294901760
      %3023 = vmatpush1.msra.mxu0 %v3022
      %v3024 = vand.u32 %v232, 4294901760
      %3025 = vmatprep.subr.mxu0 %v3024
      %v3026 = vand.u32 %v231, 4294901760
      %3027 = vmatpush1.msra.mxu0 %v3026
      %v3028 = vand.u32 %v219, 4294901760
      %3029 = vmatprep.subr.mxu0 %v3028
      %v3030 = vand.u32 %v218, 4294901760
      %3031 = vmatpush1.msra.mxu0 %v3030
      %v3032 = vand.u32 %v206, 4294901760
      %3033 = vmatprep.subr.mxu0 %v3032
      %v3034 = vand.u32 %v205, 4294901760
      %3035 = vmatpush1.msra.mxu0 %v3034
      %3036 = vmatprep.subr.mxu0 0.0
      %3037 = vmatpush2.msra.mxu0 0.0
      %3038 = vmatprep.subr.mxu0 0.0
      %3039 = vmatpush2.msra.mxu0 0.0
      %3040 = vmatprep.subr.mxu0 0.0
      %3041 = vmatpush2.msra.mxu0 0.0
      %3042 = vmatprep.subr.mxu0 0.0
      %3043 = vmatpush2.msra.mxu0 0.0
      %3044 = vmatprep.subr.mxu0 0.0
      %3045 = vmatpush2.msra.mxu0 0.0
      %3046 = vmatprep.subr.mxu0 0.0
      %3047 = vmatpush2.msra.mxu0 0.0
      %3048 = vmatprep.subr.mxu0 0.0
      %3049 = vmatpush2.msra.mxu0 0.0
      %3050 = vmatprep.subr.mxu0 0.0
      %3051 = vmatpush2.msra.mxu0 0.0
      %3052 = vmatprep.subr.mxu0 0.0
      %3053 = vmatpush2.msra.mxu0 0.0
      %3054 = vmatprep.subr.mxu0 0.0
      %3055 = vmatpush2.msra.mxu0 0.0
      %3056 = vmatprep.subr.mxu0 0.0
      %3057 = vmatpush2.msra.mxu0 0.0
      %3058 = vmatprep.subr.mxu0 0.0
      %3059 = vmatpush2.msra.mxu0 0.0
      %3060 = vmatprep.subr.mxu0 0.0
      %3061 = vmatpush2.msra.mxu0 0.0
      %3062 = vmatprep.subr.mxu0 0.0
      %3063 = vmatpush2.msra.mxu0 0.0
      %3064 = vmatprep.subr.mxu0 0.0
      %3065 = vmatpush2.msra.mxu0 0.0
      %3066 = vmatprep.subr.mxu0 0.0
      %3067 = vmatpush2.msra.mxu0 0.0
      %3068 = vmatprep.mubr.f32.mxu0 0.0
      %v3069 = vand.u32 %v198, 4294901760
      %v3070 = vsub.f32 %v198, %v3069
      %v3071 = vand.u32 %v3070, 4294901760
      %v3072 = vsub.f32 %v3070, %v3071
      %v3073 = vand.u32 %v3072, 4294901760
      %3074 = vmatmul.mubr.f32.gmra.mxu0 %v3073
      %v3075 = vpop.f32.mrf.mxu0
      %v3076 = vadd.f32 0.0, %v3075
      %v3077 = vpop.f32.mrf.mxu0
      %v3078 = vadd.f32 0.0, %v3077
      %3079 = vdwg.mxu0
      %v3080 = vand.u32 %v401, 4294901760
      %v3081 = vsub.f32 %v401, %v3080
      %v3082 = vand.u32 %v3081, 4294901760
      %v3083 = vsub.f32 %v3081, %v3082
      %v3084 = vand.u32 %v3083, 4294901760
      %3085 = vmatprep.subr.mxu0 %v3084
      %v3086 = vand.u32 %v400, 4294901760
      %v3087 = vsub.f32 %v400, %v3086
      %v3088 = vand.u32 %v3087, 4294901760
      %v3089 = vsub.f32 %v3087, %v3088
      %v3090 = vand.u32 %v3089, 4294901760
      %3091 = vmatpush1.msra.mxu0 %v3090
      %v3092 = vand.u32 %v388, 4294901760
      %v3093 = vsub.f32 %v388, %v3092
      %v3094 = vand.u32 %v3093, 4294901760
      %v3095 = vsub.f32 %v3093, %v3094
      %v3096 = vand.u32 %v3095, 4294901760
      %3097 = vmatprep.subr.mxu0 %v3096
      %v3098 = vand.u32 %v387, 4294901760
      %v3099 = vsub.f32 %v387, %v3098
      %v3100 = vand.u32 %v3099, 4294901760
      %v3101 = vsub.f32 %v3099, %v3100
      %v3102 = vand.u32 %v3101, 4294901760
      %3103 = vmatpush1.msra.mxu0 %v3102
      %v3104 = vand.u32 %v375, 4294901760
      %v3105 = vsub.f32 %v375, %v3104
      %v3106 = vand.u32 %v3105, 4294901760
      %v3107 = vsub.f32 %v3105, %v3106
      %v3108 = vand.u32 %v3107, 4294901760
      %3109 = vmatprep.subr.mxu0 %v3108
      %v3110 = vand.u32 %v374, 4294901760
      %v3111 = vsub.f32 %v374, %v3110
      %v3112 = vand.u32 %v3111, 4294901760
      %v3113 = vsub.f32 %v3111, %v3112
      %v3114 = vand.u32 %v3113, 4294901760
      %3115 = vmatpush1.msra.mxu0 %v3114
      %v3116 = vand.u32 %v362, 4294901760
      %v3117 = vsub.f32 %v362, %v3116
      %v3118 = vand.u32 %v3117, 4294901760
      %v3119 = vsub.f32 %v3117, %v3118
      %v3120 = vand.u32 %v3119, 4294901760
      %3121 = vmatprep.subr.mxu0 %v3120
      %v3122 = vand.u32 %v361, 4294901760
      %v3123 = vsub.f32 %v361, %v3122
      %v3124 = vand.u32 %v3123, 4294901760
      %v3125 = vsub.f32 %v3123, %v3124
      %v3126 = vand.u32 %v3125, 4294901760
      %3127 = vmatpush1.msra.mxu0 %v3126
      %v3128 = vand.u32 %v349, 4294901760
      %v3129 = vsub.f32 %v349, %v3128
      %v3130 = vand.u32 %v3129, 4294901760
      %v3131 = vsub.f32 %v3129, %v3130
      %v3132 = vand.u32 %v3131, 4294901760
      %3133 = vmatprep.subr.mxu0 %v3132
      %v3134 = vand.u32 %v348, 4294901760
      %v3135 = vsub.f32 %v348, %v3134
      %v3136 = vand.u32 %v3135, 4294901760
      %v3137 = vsub.f32 %v3135, %v3136
      %v3138 = vand.u32 %v3137, 4294901760
      %3139 = vmatpush1.msra.mxu0 %v3138
      %v3140 = vand.u32 %v336, 4294901760
      %v3141 = vsub.f32 %v336, %v3140
      %v3142 = vand.u32 %v3141, 4294901760
      %v3143 = vsub.f32 %v3141, %v3142
      %v3144 = vand.u32 %v3143, 4294901760
      %3145 = vmatprep.subr.mxu0 %v3144
      %v3146 = vand.u32 %v335, 4294901760
      %v3147 = vsub.f32 %v335, %v3146
      %v3148 = vand.u32 %v3147, 4294901760
      %v3149 = vsub.f32 %v3147, %v3148
      %v3150 = vand.u32 %v3149, 4294901760
      %3151 = vmatpush1.msra.mxu0 %v3150
      %v3152 = vand.u32 %v323, 4294901760
      %v3153 = vsub.f32 %v323, %v3152
      %v3154 = vand.u32 %v3153, 4294901760
      %v3155 = vsub.f32 %v3153, %v3154
      %v3156 = vand.u32 %v3155, 4294901760
      %3157 = vmatprep.subr.mxu0 %v3156
      %v3158 = vand.u32 %v322, 4294901760
      %v3159 = vsub.f32 %v322, %v3158
      %v3160 = vand.u32 %v3159, 4294901760
      %v3161 = vsub.f32 %v3159, %v3160
      %v3162 = vand.u32 %v3161, 4294901760
      %3163 = vmatpush1.msra.mxu0 %v3162
      %v3164 = vand.u32 %v310, 4294901760
      %v3165 = vsub.f32 %v310, %v3164
      %v3166 = vand.u32 %v3165, 4294901760
      %v3167 = vsub.f32 %v3165, %v3166
      %v3168 = vand.u32 %v3167, 4294901760
      %3169 = vmatprep.subr.mxu0 %v3168
      %v3170 = vand.u32 %v309, 4294901760
      %v3171 = vsub.f32 %v309, %v3170
      %v3172 = vand.u32 %v3171, 4294901760
      %v3173 = vsub.f32 %v3171, %v3172
      %v3174 = vand.u32 %v3173, 4294901760
      %3175 = vmatpush1.msra.mxu0 %v3174
      %v3176 = vand.u32 %v297, 4294901760
      %v3177 = vsub.f32 %v297, %v3176
      %v3178 = vand.u32 %v3177, 4294901760
      %v3179 = vsub.f32 %v3177, %v3178
      %v3180 = vand.u32 %v3179, 4294901760
      %3181 = vmatprep.subr.mxu0 %v3180
      %v3182 = vand.u32 %v296, 4294901760
      %v3183 = vsub.f32 %v296, %v3182
      %v3184 = vand.u32 %v3183, 4294901760
      %v3185 = vsub.f32 %v3183, %v3184
      %v3186 = vand.u32 %v3185, 4294901760
      %3187 = vmatpush1.msra.mxu0 %v3186
      %v3188 = vand.u32 %v284, 4294901760
      %v3189 = vsub.f32 %v284, %v3188
      %v3190 = vand.u32 %v3189, 4294901760
      %v3191 = vsub.f32 %v3189, %v3190
      %v3192 = vand.u32 %v3191, 4294901760
      %3193 = vmatprep.subr.mxu0 %v3192
      %v3194 = vand.u32 %v283, 4294901760
      %v3195 = vsub.f32 %v283, %v3194
      %v3196 = vand.u32 %v3195, 4294901760
      %v3197 = vsub.f32 %v3195, %v3196
      %v3198 = vand.u32 %v3197, 4294901760
      %3199 = vmatpush1.msra.mxu0 %v3198
      %v3200 = vand.u32 %v271, 4294901760
      %v3201 = vsub.f32 %v271, %v3200
      %v3202 = vand.u32 %v3201, 4294901760
      %v3203 = vsub.f32 %v3201, %v3202
      %v3204 = vand.u32 %v3203, 4294901760
      %3205 = vmatprep.subr.mxu0 %v3204
      %v3206 = vand.u32 %v270, 4294901760
      %v3207 = vsub.f32 %v270, %v3206
      %v3208 = vand.u32 %v3207, 4294901760
      %v3209 = vsub.f32 %v3207, %v3208
      %v3210 = vand.u32 %v3209, 4294901760
      %3211 = vmatpush1.msra.mxu0 %v3210
      %v3212 = vand.u32 %v258, 4294901760
      %v3213 = vsub.f32 %v258, %v3212
      %v3214 = vand.u32 %v3213, 4294901760
      %v3215 = vsub.f32 %v3213, %v3214
      %v3216 = vand.u32 %v3215, 4294901760
      %3217 = vmatprep.subr.mxu0 %v3216
      %v3218 = vand.u32 %v257, 4294901760
      %v3219 = vsub.f32 %v257, %v3218
      %v3220 = vand.u32 %v3219, 4294901760
      %v3221 = vsub.f32 %v3219, %v3220
      %v3222 = vand.u32 %v3221, 4294901760
      %3223 = vmatpush1.msra.mxu0 %v3222
      %v3224 = vand.u32 %v245, 4294901760
      %v3225 = vsub.f32 %v245, %v3224
      %v3226 = vand.u32 %v3225, 4294901760
      %v3227 = vsub.f32 %v3225, %v3226
      %v3228 = vand.u32 %v3227, 4294901760
      %3229 = vmatprep.subr.mxu0 %v3228
      %v3230 = vand.u32 %v244, 4294901760
      %v3231 = vsub.f32 %v244, %v3230
      %v3232 = vand.u32 %v3231, 4294901760
      %v3233 = vsub.f32 %v3231, %v3232
      %v3234 = vand.u32 %v3233, 4294901760
      %3235 = vmatpush1.msra.mxu0 %v3234
      %v3236 = vand.u32 %v232, 4294901760
      %v3237 = vsub.f32 %v232, %v3236
      %v3238 = vand.u32 %v3237, 4294901760
      %v3239 = vsub.f32 %v3237, %v3238
      %v3240 = vand.u32 %v3239, 4294901760
      %3241 = vmatprep.subr.mxu0 %v3240
      %v3242 = vand.u32 %v231, 4294901760
      %v3243 = vsub.f32 %v231, %v3242
      %v3244 = vand.u32 %v3243, 4294901760
      %v3245 = vsub.f32 %v3243, %v3244
      %v3246 = vand.u32 %v3245, 4294901760
      %3247 = vmatpush1.msra.mxu0 %v3246
      %v3248 = vand.u32 %v219, 4294901760
      %v3249 = vsub.f32 %v219, %v3248
      %v3250 = vand.u32 %v3249, 4294901760
      %v3251 = vsub.f32 %v3249, %v3250
      %v3252 = vand.u32 %v3251, 4294901760
      %3253 = vmatprep.subr.mxu0 %v3252
      %v3254 = vand.u32 %v218, 4294901760
      %v3255 = vsub.f32 %v218, %v3254
      %v3256 = vand.u32 %v3255, 4294901760
      %v3257 = vsub.f32 %v3255, %v3256
      %v3258 = vand.u32 %v3257, 4294901760
      %3259 = vmatpush1.msra.mxu0 %v3258
      %v3260 = vand.u32 %v206, 4294901760
      %v3261 = vsub.f32 %v206, %v3260
      %v3262 = vand.u32 %v3261, 4294901760
      %v3263 = vsub.f32 %v3261, %v3262
      %v3264 = vand.u32 %v3263, 4294901760
      %3265 = vmatprep.subr.mxu0 %v3264
      %v3266 = vand.u32 %v205, 4294901760
      %v3267 = vsub.f32 %v205, %v3266
      %v3268 = vand.u32 %v3267, 4294901760
      %v3269 = vsub.f32 %v3267, %v3268
      %v3270 = vand.u32 %v3269, 4294901760
      %3271 = vmatpush1.msra.mxu0 %v3270
      %3272 = vmatprep.subr.mxu0 0.0
      %3273 = vmatpush2.msra.mxu0 0.0
      %3274 = vmatprep.subr.mxu0 0.0
      %3275 = vmatpush2.msra.mxu0 0.0
      %3276 = vmatprep.subr.mxu0 0.0
      %3277 = vmatpush2.msra.mxu0 0.0
      %3278 = vmatprep.subr.mxu0 0.0
      %3279 = vmatpush2.msra.mxu0 0.0
      %3280 = vmatprep.subr.mxu0 0.0
      %3281 = vmatpush2.msra.mxu0 0.0
      %3282 = vmatprep.subr.mxu0 0.0
      %3283 = vmatpush2.msra.mxu0 0.0
      %3284 = vmatprep.subr.mxu0 0.0
      %3285 = vmatpush2.msra.mxu0 0.0
      %3286 = vmatprep.subr.mxu0 0.0
      %3287 = vmatpush2.msra.mxu0 0.0
      %3288 = vmatprep.subr.mxu0 0.0
      %3289 = vmatpush2.msra.mxu0 0.0
      %3290 = vmatprep.subr.mxu0 0.0
      %3291 = vmatpush2.msra.mxu0 0.0
      %3292 = vmatprep.subr.mxu0 0.0
      %3293 = vmatpush2.msra.mxu0 0.0
      %3294 = vmatprep.subr.mxu0 0.0
      %3295 = vmatpush2.msra.mxu0 0.0
      %3296 = vmatprep.subr.mxu0 0.0
      %3297 = vmatpush2.msra.mxu0 0.0
      %3298 = vmatprep.subr.mxu0 0.0
      %3299 = vmatpush2.msra.mxu0 0.0
      %3300 = vmatprep.subr.mxu0 0.0
      %3301 = vmatpush2.msra.mxu0 0.0
      %3302 = vmatprep.subr.mxu0 0.0
      %3303 = vmatpush2.msra.mxu0 0.0
      %3304 = vmatprep.mubr.f32.mxu0 0.0
      %v3305 = vand.u32 %v198, 4294901760
      %3306 = vmatmul.mubr.f32.gmra.mxu0 %v3305
      %v3307 = vpop.f32.mrf.mxu0
      %v3308 = vadd.f32 %v3076, %v3307
      %v3309 = vpop.f32.mrf.mxu0
      %v3310 = vadd.f32 %v3078, %v3309
      %3311 = vdwg.mxu0
      %v3312 = vand.u32 %v401, 4294901760
      %v3313 = vsub.f32 %v401, %v3312
      %3314 = vmatprep.subr.mxu0 %v3313
      %v3315 = vand.u32 %v400, 4294901760
      %v3316 = vsub.f32 %v400, %v3315
      %3317 = vmatpush1.msra.mxu0 %v3316
      %v3318 = vand.u32 %v388, 4294901760
      %v3319 = vsub.f32 %v388, %v3318
      %3320 = vmatprep.subr.mxu0 %v3319
      %v3321 = vand.u32 %v387, 4294901760
      %v3322 = vsub.f32 %v387, %v3321
      %3323 = vmatpush1.msra.mxu0 %v3322
      %v3324 = vand.u32 %v375, 4294901760
      %v3325 = vsub.f32 %v375, %v3324
      %3326 = vmatprep.subr.mxu0 %v3325
      %v3327 = vand.u32 %v374, 4294901760
      %v3328 = vsub.f32 %v374, %v3327
      %3329 = vmatpush1.msra.mxu0 %v3328
      %v3330 = vand.u32 %v362, 4294901760
      %v3331 = vsub.f32 %v362, %v3330
      %3332 = vmatprep.subr.mxu0 %v3331
      %v3333 = vand.u32 %v361, 4294901760
      %v3334 = vsub.f32 %v361, %v3333
      %3335 = vmatpush1.msra.mxu0 %v3334
      %v3336 = vand.u32 %v349, 4294901760
      %v3337 = vsub.f32 %v349, %v3336
      %3338 = vmatprep.subr.mxu0 %v3337
      %v3339 = vand.u32 %v348, 4294901760
      %v3340 = vsub.f32 %v348, %v3339
      %3341 = vmatpush1.msra.mxu0 %v3340
      %v3342 = vand.u32 %v336, 4294901760
      %v3343 = vsub.f32 %v336, %v3342
      %3344 = vmatprep.subr.mxu0 %v3343
      %v3345 = vand.u32 %v335, 4294901760
      %v3346 = vsub.f32 %v335, %v3345
      %3347 = vmatpush1.msra.mxu0 %v3346
      %v3348 = vand.u32 %v323, 4294901760
      %v3349 = vsub.f32 %v323, %v3348
      %3350 = vmatprep.subr.mxu0 %v3349
      %v3351 = vand.u32 %v322, 4294901760
      %v3352 = vsub.f32 %v322, %v3351
      %3353 = vmatpush1.msra.mxu0 %v3352
      %v3354 = vand.u32 %v310, 4294901760
      %v3355 = vsub.f32 %v310, %v3354
      %3356 = vmatprep.subr.mxu0 %v3355
      %v3357 = vand.u32 %v309, 4294901760
      %v3358 = vsub.f32 %v309, %v3357
      %3359 = vmatpush1.msra.mxu0 %v3358
      %v3360 = vand.u32 %v297, 4294901760
      %v3361 = vsub.f32 %v297, %v3360
      %3362 = vmatprep.subr.mxu0 %v3361
      %v3363 = vand.u32 %v296, 4294901760
      %v3364 = vsub.f32 %v296, %v3363
      %3365 = vmatpush1.msra.mxu0 %v3364
      %v3366 = vand.u32 %v284, 4294901760
      %v3367 = vsub.f32 %v284, %v3366
      %3368 = vmatprep.subr.mxu0 %v3367
      %v3369 = vand.u32 %v283, 4294901760
      %v3370 = vsub.f32 %v283, %v3369
      %3371 = vmatpush1.msra.mxu0 %v3370
      %v3372 = vand.u32 %v271, 4294901760
      %v3373 = vsub.f32 %v271, %v3372
      %3374 = vmatprep.subr.mxu0 %v3373
      %v3375 = vand.u32 %v270, 4294901760
      %v3376 = vsub.f32 %v270, %v3375
      %3377 = vmatpush1.msra.mxu0 %v3376
      %v3378 = vand.u32 %v258, 4294901760
      %v3379 = vsub.f32 %v258, %v3378
      %3380 = vmatprep.subr.mxu0 %v3379
      %v3381 = vand.u32 %v257, 4294901760
      %v3382 = vsub.f32 %v257, %v3381
      %3383 = vmatpush1.msra.mxu0 %v3382
      %v3384 = vand.u32 %v245, 4294901760
      %v3385 = vsub.f32 %v245, %v3384
      %3386 = vmatprep.subr.mxu0 %v3385
      %v3387 = vand.u32 %v244, 4294901760
      %v3388 = vsub.f32 %v244, %v3387
      %3389 = vmatpush1.msra.mxu0 %v3388
      %v3390 = vand.u32 %v232, 4294901760
      %v3391 = vsub.f32 %v232, %v3390
      %3392 = vmatprep.subr.mxu0 %v3391
      %v3393 = vand.u32 %v231, 4294901760
      %v3394 = vsub.f32 %v231, %v3393
      %3395 = vmatpush1.msra.mxu0 %v3394
      %v3396 = vand.u32 %v219, 4294901760
      %v3397 = vsub.f32 %v219, %v3396
      %3398 = vmatprep.subr.mxu0 %v3397
      %v3399 = vand.u32 %v218, 4294901760
      %v3400 = vsub.f32 %v218, %v3399
      %3401 = vmatpush1.msra.mxu0 %v3400
      %v3402 = vand.u32 %v206, 4294901760
      %v3403 = vsub.f32 %v206, %v3402
      %3404 = vmatprep.subr.mxu0 %v3403
      %v3405 = vand.u32 %v205, 4294901760
      %v3406 = vsub.f32 %v205, %v3405
      %3407 = vmatpush1.msra.mxu0 %v3406
      %3408 = vmatprep.subr.mxu0 0.0
      %3409 = vmatpush2.msra.mxu0 0.0
      %3410 = vmatprep.subr.mxu0 0.0
      %3411 = vmatpush2.msra.mxu0 0.0
      %3412 = vmatprep.subr.mxu0 0.0
      %3413 = vmatpush2.msra.mxu0 0.0
      %3414 = vmatprep.subr.mxu0 0.0
      %3415 = vmatpush2.msra.mxu0 0.0
      %3416 = vmatprep.subr.mxu0 0.0
      %3417 = vmatpush2.msra.mxu0 0.0
      %3418 = vmatprep.subr.mxu0 0.0
      %3419 = vmatpush2.msra.mxu0 0.0
      %3420 = vmatprep.subr.mxu0 0.0
      %3421 = vmatpush2.msra.mxu0 0.0
      %3422 = vmatprep.subr.mxu0 0.0
      %3423 = vmatpush2.msra.mxu0 0.0
      %3424 = vmatprep.subr.mxu0 0.0
      %3425 = vmatpush2.msra.mxu0 0.0
      %3426 = vmatprep.subr.mxu0 0.0
      %3427 = vmatpush2.msra.mxu0 0.0
      %3428 = vmatprep.subr.mxu0 0.0
      %3429 = vmatpush2.msra.mxu0 0.0
      %3430 = vmatprep.subr.mxu0 0.0
      %3431 = vmatpush2.msra.mxu0 0.0
      %3432 = vmatprep.subr.mxu0 0.0
      %3433 = vmatpush2.msra.mxu0 0.0
      %3434 = vmatprep.subr.mxu0 0.0
      %3435 = vmatpush2.msra.mxu0 0.0
      %3436 = vmatprep.subr.mxu0 0.0
      %3437 = vmatpush2.msra.mxu0 0.0
      %3438 = vmatprep.subr.mxu0 0.0
      %3439 = vmatpush2.msra.mxu0 0.0
      %3440 = vmatprep.mubr.f32.mxu0 0.0
      %v3441 = vand.u32 %v198, 4294901760
      %v3442 = vsub.f32 %v198, %v3441
      %3443 = vmatmul.mubr.f32.gmra.mxu0 %v3442
      %v3444 = vpop.f32.mrf.mxu0
      %v3445 = vadd.f32 %v3308, %v3444
      %v3446 = vpop.f32.mrf.mxu0
      %v3447 = vadd.f32 %v3310, %v3446
      %3448 = vdwg.mxu0
      %v3449 = vand.u32 %v401, 4294901760
      %3450 = vmatprep.subr.mxu0 %v3449
      %v3451 = vand.u32 %v400, 4294901760
      %3452 = vmatpush1.msra.mxu0 %v3451
      %v3453 = vand.u32 %v388, 4294901760
      %3454 = vmatprep.subr.mxu0 %v3453
      %v3455 = vand.u32 %v387, 4294901760
      %3456 = vmatpush1.msra.mxu0 %v3455
      %v3457 = vand.u32 %v375, 4294901760
      %3458 = vmatprep.subr.mxu0 %v3457
      %v3459 = vand.u32 %v374, 4294901760
      %3460 = vmatpush1.msra.mxu0 %v3459
      %v3461 = vand.u32 %v362, 4294901760
      %3462 = vmatprep.subr.mxu0 %v3461
      %v3463 = vand.u32 %v361, 4294901760
      %3464 = vmatpush1.msra.mxu0 %v3463
      %v3465 = vand.u32 %v349, 4294901760
      %3466 = vmatprep.subr.mxu0 %v3465
      %v3467 = vand.u32 %v348, 4294901760
      %3468 = vmatpush1.msra.mxu0 %v3467
      %v3469 = vand.u32 %v336, 4294901760
      %3470 = vmatprep.subr.mxu0 %v3469
      %v3471 = vand.u32 %v335, 4294901760
      %3472 = vmatpush1.msra.mxu0 %v3471
      %v3473 = vand.u32 %v323, 4294901760
      %3474 = vmatprep.subr.mxu0 %v3473
      %v3475 = vand.u32 %v322, 4294901760
      %3476 = vmatpush1.msra.mxu0 %v3475
      %v3477 = vand.u32 %v310, 4294901760
      %3478 = vmatprep.subr.mxu0 %v3477
      %v3479 = vand.u32 %v309, 4294901760
      %3480 = vmatpush1.msra.mxu0 %v3479
      %v3481 = vand.u32 %v297, 4294901760
      %3482 = vmatprep.subr.mxu0 %v3481
      %v3483 = vand.u32 %v296, 4294901760
      %3484 = vmatpush1.msra.mxu0 %v3483
      %v3485 = vand.u32 %v284, 4294901760
      %3486 = vmatprep.subr.mxu0 %v3485
      %v3487 = vand.u32 %v283, 4294901760
      %3488 = vmatpush1.msra.mxu0 %v3487
      %v3489 = vand.u32 %v271, 4294901760
      %3490 = vmatprep.subr.mxu0 %v3489
      %v3491 = vand.u32 %v270, 4294901760
      %3492 = vmatpush1.msra.mxu0 %v3491
      %v3493 = vand.u32 %v258, 4294901760
      %3494 = vmatprep.subr.mxu0 %v3493
      %v3495 = vand.u32 %v257, 4294901760
      %3496 = vmatpush1.msra.mxu0 %v3495
      %v3497 = vand.u32 %v245, 4294901760
      %3498 = vmatprep.subr.mxu0 %v3497
      %v3499 = vand.u32 %v244, 4294901760
      %3500 = vmatpush1.msra.mxu0 %v3499
      %v3501 = vand.u32 %v232, 4294901760
      %3502 = vmatprep.subr.mxu0 %v3501
      %v3503 = vand.u32 %v231, 4294901760
      %3504 = vmatpush1.msra.mxu0 %v3503
      %v3505 = vand.u32 %v219, 4294901760
      %3506 = vmatprep.subr.mxu0 %v3505
      %v3507 = vand.u32 %v218, 4294901760
      %3508 = vmatpush1.msra.mxu0 %v3507
      %v3509 = vand.u32 %v206, 4294901760
      %3510 = vmatprep.subr.mxu0 %v3509
      %v3511 = vand.u32 %v205, 4294901760
      %3512 = vmatpush1.msra.mxu0 %v3511
      %3513 = vmatprep.subr.mxu0 0.0
      %3514 = vmatpush2.msra.mxu0 0.0
      %3515 = vmatprep.subr.mxu0 0.0
      %3516 = vmatpush2.msra.mxu0 0.0
      %3517 = vmatprep.subr.mxu0 0.0
      %3518 = vmatpush2.msra.mxu0 0.0
      %3519 = vmatprep.subr.mxu0 0.0
      %3520 = vmatpush2.msra.mxu0 0.0
      %3521 = vmatprep.subr.mxu0 0.0
      %3522 = vmatpush2.msra.mxu0 0.0
      %3523 = vmatprep.subr.mxu0 0.0
      %3524 = vmatpush2.msra.mxu0 0.0
      %3525 = vmatprep.subr.mxu0 0.0
      %3526 = vmatpush2.msra.mxu0 0.0
      %3527 = vmatprep.subr.mxu0 0.0
      %3528 = vmatpush2.msra.mxu0 0.0
      %3529 = vmatprep.subr.mxu0 0.0
      %3530 = vmatpush2.msra.mxu0 0.0
      %3531 = vmatprep.subr.mxu0 0.0
      %3532 = vmatpush2.msra.mxu0 0.0
      %3533 = vmatprep.subr.mxu0 0.0
      %3534 = vmatpush2.msra.mxu0 0.0
      %3535 = vmatprep.subr.mxu0 0.0
      %3536 = vmatpush2.msra.mxu0 0.0
      %3537 = vmatprep.subr.mxu0 0.0
      %3538 = vmatpush2.msra.mxu0 0.0
      %3539 = vmatprep.subr.mxu0 0.0
      %3540 = vmatpush2.msra.mxu0 0.0
      %3541 = vmatprep.subr.mxu0 0.0
      %3542 = vmatpush2.msra.mxu0 0.0
      %3543 = vmatprep.subr.mxu0 0.0
      %3544 = vmatpush2.msra.mxu0 0.0
      %3545 = vmatprep.mubr.f32.mxu0 0.0
      %v3546 = vand.u32 %v198, 4294901760
      %v3547 = vsub.f32 %v198, %v3546
      %v3548 = vand.u32 %v3547, 4294901760
      %3549 = vmatmul.mubr.f32.gmra.mxu0 %v3548
      %v3550 = vpop.f32.mrf.mxu0
      %v3551 = vadd.f32 %v3445, %v3550
      %v3552 = vpop.f32.mrf.mxu0
      %v3553 = vadd.f32 %v3447, %v3552
      %3554 = vdwg.mxu0
      %v3555 = vand.u32 %v401, 4294901760
      %v3556 = vsub.f32 %v401, %v3555
      %v3557 = vand.u32 %v3556, 4294901760
      %3558 = vmatprep.subr.mxu0 %v3557
      %v3559 = vand.u32 %v400, 4294901760
      %v3560 = vsub.f32 %v400, %v3559
      %v3561 = vand.u32 %v3560, 4294901760
      %3562 = vmatpush1.msra.mxu0 %v3561
      %v3563 = vand.u32 %v388, 4294901760
      %v3564 = vsub.f32 %v388, %v3563
      %v3565 = vand.u32 %v3564, 4294901760
      %3566 = vmatprep.subr.mxu0 %v3565
      %v3567 = vand.u32 %v387, 4294901760
      %v3568 = vsub.f32 %v387, %v3567
      %v3569 = vand.u32 %v3568, 4294901760
      %3570 = vmatpush1.msra.mxu0 %v3569
      %v3571 = vand.u32 %v375, 4294901760
      %v3572 = vsub.f32 %v375, %v3571
      %v3573 = vand.u32 %v3572, 4294901760
      %3574 = vmatprep.subr.mxu0 %v3573
      %v3575 = vand.u32 %v374, 4294901760
      %v3576 = vsub.f32 %v374, %v3575
      %v3577 = vand.u32 %v3576, 4294901760
      %3578 = vmatpush1.msra.mxu0 %v3577
      %v3579 = vand.u32 %v362, 4294901760
      %v3580 = vsub.f32 %v362, %v3579
      %v3581 = vand.u32 %v3580, 4294901760
      %3582 = vmatprep.subr.mxu0 %v3581
      %v3583 = vand.u32 %v361, 4294901760
      %v3584 = vsub.f32 %v361, %v3583
      %v3585 = vand.u32 %v3584, 4294901760
      %3586 = vmatpush1.msra.mxu0 %v3585
      %v3587 = vand.u32 %v349, 4294901760
      %v3588 = vsub.f32 %v349, %v3587
      %v3589 = vand.u32 %v3588, 4294901760
      %3590 = vmatprep.subr.mxu0 %v3589
      %v3591 = vand.u32 %v348, 4294901760
      %v3592 = vsub.f32 %v348, %v3591
      %v3593 = vand.u32 %v3592, 4294901760
      %3594 = vmatpush1.msra.mxu0 %v3593
      %v3595 = vand.u32 %v336, 4294901760
      %v3596 = vsub.f32 %v336, %v3595
      %v3597 = vand.u32 %v3596, 4294901760
      %3598 = vmatprep.subr.mxu0 %v3597
      %v3599 = vand.u32 %v335, 4294901760
      %v3600 = vsub.f32 %v335, %v3599
      %v3601 = vand.u32 %v3600, 4294901760
      %3602 = vmatpush1.msra.mxu0 %v3601
      %v3603 = vand.u32 %v323, 4294901760
      %v3604 = vsub.f32 %v323, %v3603
      %v3605 = vand.u32 %v3604, 4294901760
      %3606 = vmatprep.subr.mxu0 %v3605
      %v3607 = vand.u32 %v322, 4294901760
      %v3608 = vsub.f32 %v322, %v3607
      %v3609 = vand.u32 %v3608, 4294901760
      %3610 = vmatpush1.msra.mxu0 %v3609
      %v3611 = vand.u32 %v310, 4294901760
      %v3612 = vsub.f32 %v310, %v3611
      %v3613 = vand.u32 %v3612, 4294901760
      %3614 = vmatprep.subr.mxu0 %v3613
      %v3615 = vand.u32 %v309, 4294901760
      %v3616 = vsub.f32 %v309, %v3615
      %v3617 = vand.u32 %v3616, 4294901760
      %3618 = vmatpush1.msra.mxu0 %v3617
      %v3619 = vand.u32 %v297, 4294901760
      %v3620 = vsub.f32 %v297, %v3619
      %v3621 = vand.u32 %v3620, 4294901760
      %3622 = vmatprep.subr.mxu0 %v3621
      %v3623 = vand.u32 %v296, 4294901760
      %v3624 = vsub.f32 %v296, %v3623
      %v3625 = vand.u32 %v3624, 4294901760
      %3626 = vmatpush1.msra.mxu0 %v3625
      %v3627 = vand.u32 %v284, 4294901760
      %v3628 = vsub.f32 %v284, %v3627
      %v3629 = vand.u32 %v3628, 4294901760
      %3630 = vmatprep.subr.mxu0 %v3629
      %v3631 = vand.u32 %v283, 4294901760
      %v3632 = vsub.f32 %v283, %v3631
      %v3633 = vand.u32 %v3632, 4294901760
      %3634 = vmatpush1.msra.mxu0 %v3633
      %v3635 = vand.u32 %v271, 4294901760
      %v3636 = vsub.f32 %v271, %v3635
      %v3637 = vand.u32 %v3636, 4294901760
      %3638 = vmatprep.subr.mxu0 %v3637
      %v3639 = vand.u32 %v270, 4294901760
      %v3640 = vsub.f32 %v270, %v3639
      %v3641 = vand.u32 %v3640, 4294901760
      %3642 = vmatpush1.msra.mxu0 %v3641
      %v3643 = vand.u32 %v258, 4294901760
      %v3644 = vsub.f32 %v258, %v3643
      %v3645 = vand.u32 %v3644, 4294901760
      %3646 = vmatprep.subr.mxu0 %v3645
      %v3647 = vand.u32 %v257, 4294901760
      %v3648 = vsub.f32 %v257, %v3647
      %v3649 = vand.u32 %v3648, 4294901760
      %3650 = vmatpush1.msra.mxu0 %v3649
      %v3651 = vand.u32 %v245, 4294901760
      %v3652 = vsub.f32 %v245, %v3651
      %v3653 = vand.u32 %v3652, 4294901760
      %3654 = vmatprep.subr.mxu0 %v3653
      %v3655 = vand.u32 %v244, 4294901760
      %v3656 = vsub.f32 %v244, %v3655
      %v3657 = vand.u32 %v3656, 4294901760
      %3658 = vmatpush1.msra.mxu0 %v3657
      %v3659 = vand.u32 %v232, 4294901760
      %v3660 = vsub.f32 %v232, %v3659
      %v3661 = vand.u32 %v3660, 4294901760
      %3662 = vmatprep.subr.mxu0 %v3661
      %v3663 = vand.u32 %v231, 4294901760
      %v3664 = vsub.f32 %v231, %v3663
      %v3665 = vand.u32 %v3664, 4294901760
      %3666 = vmatpush1.msra.mxu0 %v3665
      %v3667 = vand.u32 %v219, 4294901760
      %v3668 = vsub.f32 %v219, %v3667
      %v3669 = vand.u32 %v3668, 4294901760
      %3670 = vmatprep.subr.mxu0 %v3669
      %v3671 = vand.u32 %v218, 4294901760
      %v3672 = vsub.f32 %v218, %v3671
      %v3673 = vand.u32 %v3672, 4294901760
      %3674 = vmatpush1.msra.mxu0 %v3673
      %v3675 = vand.u32 %v206, 4294901760
      %v3676 = vsub.f32 %v206, %v3675
      %v3677 = vand.u32 %v3676, 4294901760
      %3678 = vmatprep.subr.mxu0 %v3677
      %v3679 = vand.u32 %v205, 4294901760
      %v3680 = vsub.f32 %v205, %v3679
      %v3681 = vand.u32 %v3680, 4294901760
      %3682 = vmatpush1.msra.mxu0 %v3681
      %3683 = vmatprep.subr.mxu0 0.0
      %3684 = vmatpush2.msra.mxu0 0.0
      %3685 = vmatprep.subr.mxu0 0.0
      %3686 = vmatpush2.msra.mxu0 0.0
      %3687 = vmatprep.subr.mxu0 0.0
      %3688 = vmatpush2.msra.mxu0 0.0
      %3689 = vmatprep.subr.mxu0 0.0
      %3690 = vmatpush2.msra.mxu0 0.0
      %3691 = vmatprep.subr.mxu0 0.0
      %3692 = vmatpush2.msra.mxu0 0.0
      %3693 = vmatprep.subr.mxu0 0.0
      %3694 = vmatpush2.msra.mxu0 0.0
      %3695 = vmatprep.subr.mxu0 0.0
      %3696 = vmatpush2.msra.mxu0 0.0
      %3697 = vmatprep.subr.mxu0 0.0
      %3698 = vmatpush2.msra.mxu0 0.0
      %3699 = vmatprep.subr.mxu0 0.0
      %3700 = vmatpush2.msra.mxu0 0.0
      %3701 = vmatprep.subr.mxu0 0.0
      %3702 = vmatpush2.msra.mxu0 0.0
      %3703 = vmatprep.subr.mxu0 0.0
      %3704 = vmatpush2.msra.mxu0 0.0
      %3705 = vmatprep.subr.mxu0 0.0
      %3706 = vmatpush2.msra.mxu0 0.0
      %3707 = vmatprep.subr.mxu0 0.0
      %3708 = vmatpush2.msra.mxu0 0.0
      %3709 = vmatprep.subr.mxu0 0.0
      %3710 = vmatpush2.msra.mxu0 0.0
      %3711 = vmatprep.subr.mxu0 0.0
      %3712 = vmatpush2.msra.mxu0 0.0
      %3713 = vmatprep.subr.mxu0 0.0
      %3714 = vmatpush2.msra.mxu0 0.0
      %3715 = vmatprep.mubr.f32.mxu0 0.0
      %v3716 = vand.u32 %v198, 4294901760
      %3717 = vmatmul.mubr.f32.gmra.mxu0 %v3716
      %v3718 = vpop.f32.mrf.mxu0
      %v3719 = vadd.f32 %v3551, %v3718
      %v3720 = vpop.f32.mrf.mxu0
      %v3721 = vadd.f32 %v3553, %v3720
      %3722 = vdwg.mxu0
      %v3723 = vand.u32 %v401, 4294901760
      %3724 = vmatprep.subr.mxu0 %v3723
      %v3725 = vand.u32 %v400, 4294901760
      %3726 = vmatpush1.msra.mxu0 %v3725
      %v3727 = vand.u32 %v388, 4294901760
      %3728 = vmatprep.subr.mxu0 %v3727
      %v3729 = vand.u32 %v387, 4294901760
      %3730 = vmatpush1.msra.mxu0 %v3729
      %v3731 = vand.u32 %v375, 4294901760
      %3732 = vmatprep.subr.mxu0 %v3731
      %v3733 = vand.u32 %v374, 4294901760
      %3734 = vmatpush1.msra.mxu0 %v3733
      %v3735 = vand.u32 %v362, 4294901760
      %3736 = vmatprep.subr.mxu0 %v3735
      %v3737 = vand.u32 %v361, 4294901760
      %3738 = vmatpush1.msra.mxu0 %v3737
      %v3739 = vand.u32 %v349, 4294901760
      %3740 = vmatprep.subr.mxu0 %v3739
      %v3741 = vand.u32 %v348, 4294901760
      %3742 = vmatpush1.msra.mxu0 %v3741
      %v3743 = vand.u32 %v336, 4294901760
      %3744 = vmatprep.subr.mxu0 %v3743
      %v3745 = vand.u32 %v335, 4294901760
      %3746 = vmatpush1.msra.mxu0 %v3745
      %v3747 = vand.u32 %v323, 4294901760
      %3748 = vmatprep.subr.mxu0 %v3747
      %v3749 = vand.u32 %v322, 4294901760
      %3750 = vmatpush1.msra.mxu0 %v3749
      %v3751 = vand.u32 %v310, 4294901760
      %3752 = vmatprep.subr.mxu0 %v3751
      %v3753 = vand.u32 %v309, 4294901760
      %3754 = vmatpush1.msra.mxu0 %v3753
      %v3755 = vand.u32 %v297, 4294901760
      %3756 = vmatprep.subr.mxu0 %v3755
      %v3757 = vand.u32 %v296, 4294901760
      %3758 = vmatpush1.msra.mxu0 %v3757
      %v3759 = vand.u32 %v284, 4294901760
      %3760 = vmatprep.subr.mxu0 %v3759
      %v3761 = vand.u32 %v283, 4294901760
      %3762 = vmatpush1.msra.mxu0 %v3761
      %v3763 = vand.u32 %v271, 4294901760
      %3764 = vmatprep.subr.mxu0 %v3763
      %v3765 = vand.u32 %v270, 4294901760
      %3766 = vmatpush1.msra.mxu0 %v3765
      %v3767 = vand.u32 %v258, 4294901760
      %3768 = vmatprep.subr.mxu0 %v3767
      %v3769 = vand.u32 %v257, 4294901760
      %3770 = vmatpush1.msra.mxu0 %v3769
      %v3771 = vand.u32 %v245, 4294901760
      %3772 = vmatprep.subr.mxu0 %v3771
      %v3773 = vand.u32 %v244, 4294901760
      %3774 = vmatpush1.msra.mxu0 %v3773
      %v3775 = vand.u32 %v232, 4294901760
      %3776 = vmatprep.subr.mxu0 %v3775
      %v3777 = vand.u32 %v231, 4294901760
      %3778 = vmatpush1.msra.mxu0 %v3777
      %v3779 = vand.u32 %v219, 4294901760
      %3780 = vmatprep.subr.mxu0 %v3779
      %v3781 = vand.u32 %v218, 4294901760
      %3782 = vmatpush1.msra.mxu0 %v3781
      %v3783 = vand.u32 %v206, 4294901760
      %3784 = vmatprep.subr.mxu0 %v3783
      %v3785 = vand.u32 %v205, 4294901760
      %3786 = vmatpush1.msra.mxu0 %v3785
      %3787 = vmatprep.subr.mxu0 0.0
      %3788 = vmatpush2.msra.mxu0 0.0
      %3789 = vmatprep.subr.mxu0 0.0
      %3790 = vmatpush2.msra.mxu0 0.0
      %3791 = vmatprep.subr.mxu0 0.0
      %3792 = vmatpush2.msra.mxu0 0.0
      %3793 = vmatprep.subr.mxu0 0.0
      %3794 = vmatpush2.msra.mxu0 0.0
      %3795 = vmatprep.subr.mxu0 0.0
      %3796 = vmatpush2.msra.mxu0 0.0
      %3797 = vmatprep.subr.mxu0 0.0
      %3798 = vmatpush2.msra.mxu0 0.0
      %3799 = vmatprep.subr.mxu0 0.0
      %3800 = vmatpush2.msra.mxu0 0.0
      %3801 = vmatprep.subr.mxu0 0.0
      %3802 = vmatpush2.msra.mxu0 0.0
      %3803 = vmatprep.subr.mxu0 0.0
      %3804 = vmatpush2.msra.mxu0 0.0
      %3805 = vmatprep.subr.mxu0 0.0
      %3806 = vmatpush2.msra.mxu0 0.0
      %3807 = vmatprep.subr.mxu0 0.0
      %3808 = vmatpush2.msra.mxu0 0.0
      %3809 = vmatprep.subr.mxu0 0.0
      %3810 = vmatpush2.msra.mxu0 0.0
      %3811 = vmatprep.subr.mxu0 0.0
      %3812 = vmatpush2.msra.mxu0 0.0
      %3813 = vmatprep.subr.mxu0 0.0
      %3814 = vmatpush2.msra.mxu0 0.0
      %3815 = vmatprep.subr.mxu0 0.0
      %3816 = vmatpush2.msra.mxu0 0.0
      %3817 = vmatprep.subr.mxu0 0.0
      %3818 = vmatpush2.msra.mxu0 0.0
      %3819 = vmatprep.mubr.f32.mxu0 0.0
      %v3820 = vand.u32 %v198, 4294901760
      %3821 = vmatmul.mubr.f32.gmra.mxu0 %v3820
      %v3822 = vpop.f32.mrf.mxu0
      %v3823 = vadd.f32 %v3719, %v3822
      %v3824 = vpop.f32.mrf.mxu0
      %v3825 = vadd.f32 %v3721, %v3824
      %3826 = vdwg.mxu0
      %v3827 = vand.u32 %v403, 4294901760
      %3828 = vmatprep.subr.mxu0 %v3827
      %v3829 = vand.u32 %v402, 4294901760
      %3830 = vmatpush1.msra.mxu0 %v3829
      %v3831 = vand.u32 %v390, 4294901760
      %3832 = vmatprep.subr.mxu0 %v3831
      %v3833 = vand.u32 %v389, 4294901760
      %3834 = vmatpush1.msra.mxu0 %v3833
      %v3835 = vand.u32 %v377, 4294901760
      %3836 = vmatprep.subr.mxu0 %v3835
      %v3837 = vand.u32 %v376, 4294901760
      %3838 = vmatpush1.msra.mxu0 %v3837
      %v3839 = vand.u32 %v364, 4294901760
      %3840 = vmatprep.subr.mxu0 %v3839
      %v3841 = vand.u32 %v363, 4294901760
      %3842 = vmatpush1.msra.mxu0 %v3841
      %v3843 = vand.u32 %v351, 4294901760
      %3844 = vmatprep.subr.mxu0 %v3843
      %v3845 = vand.u32 %v350, 4294901760
      %3846 = vmatpush1.msra.mxu0 %v3845
      %v3847 = vand.u32 %v338, 4294901760
      %3848 = vmatprep.subr.mxu0 %v3847
      %v3849 = vand.u32 %v337, 4294901760
      %3850 = vmatpush1.msra.mxu0 %v3849
      %v3851 = vand.u32 %v325, 4294901760
      %3852 = vmatprep.subr.mxu0 %v3851
      %v3853 = vand.u32 %v324, 4294901760
      %3854 = vmatpush1.msra.mxu0 %v3853
      %v3855 = vand.u32 %v312, 4294901760
      %3856 = vmatprep.subr.mxu0 %v3855
      %v3857 = vand.u32 %v311, 4294901760
      %3858 = vmatpush1.msra.mxu0 %v3857
      %v3859 = vand.u32 %v299, 4294901760
      %3860 = vmatprep.subr.mxu0 %v3859
      %v3861 = vand.u32 %v298, 4294901760
      %3862 = vmatpush1.msra.mxu0 %v3861
      %v3863 = vand.u32 %v286, 4294901760
      %3864 = vmatprep.subr.mxu0 %v3863
      %v3865 = vand.u32 %v285, 4294901760
      %3866 = vmatpush1.msra.mxu0 %v3865
      %v3867 = vand.u32 %v273, 4294901760
      %3868 = vmatprep.subr.mxu0 %v3867
      %v3869 = vand.u32 %v272, 4294901760
      %3870 = vmatpush1.msra.mxu0 %v3869
      %v3871 = vand.u32 %v260, 4294901760
      %3872 = vmatprep.subr.mxu0 %v3871
      %v3873 = vand.u32 %v259, 4294901760
      %3874 = vmatpush1.msra.mxu0 %v3873
      %v3875 = vand.u32 %v247, 4294901760
      %3876 = vmatprep.subr.mxu0 %v3875
      %v3877 = vand.u32 %v246, 4294901760
      %3878 = vmatpush1.msra.mxu0 %v3877
      %v3879 = vand.u32 %v234, 4294901760
      %3880 = vmatprep.subr.mxu0 %v3879
      %v3881 = vand.u32 %v233, 4294901760
      %3882 = vmatpush1.msra.mxu0 %v3881
      %v3883 = vand.u32 %v221, 4294901760
      %3884 = vmatprep.subr.mxu0 %v3883
      %v3885 = vand.u32 %v220, 4294901760
      %3886 = vmatpush1.msra.mxu0 %v3885
      %v3887 = vand.u32 %v208, 4294901760
      %3888 = vmatprep.subr.mxu0 %v3887
      %v3889 = vand.u32 %v207, 4294901760
      %3890 = vmatpush1.msra.mxu0 %v3889
      %3891 = vmatprep.subr.mxu0 0.0
      %3892 = vmatpush2.msra.mxu0 0.0
      %3893 = vmatprep.subr.mxu0 0.0
      %3894 = vmatpush2.msra.mxu0 0.0
      %3895 = vmatprep.subr.mxu0 0.0
      %3896 = vmatpush2.msra.mxu0 0.0
      %3897 = vmatprep.subr.mxu0 0.0
      %3898 = vmatpush2.msra.mxu0 0.0
      %3899 = vmatprep.subr.mxu0 0.0
      %3900 = vmatpush2.msra.mxu0 0.0
      %3901 = vmatprep.subr.mxu0 0.0
      %3902 = vmatpush2.msra.mxu0 0.0
      %3903 = vmatprep.subr.mxu0 0.0
      %3904 = vmatpush2.msra.mxu0 0.0
      %3905 = vmatprep.subr.mxu0 0.0
      %3906 = vmatpush2.msra.mxu0 0.0
      %3907 = vmatprep.subr.mxu0 0.0
      %3908 = vmatpush2.msra.mxu0 0.0
      %3909 = vmatprep.subr.mxu0 0.0
      %3910 = vmatpush2.msra.mxu0 0.0
      %3911 = vmatprep.subr.mxu0 0.0
      %3912 = vmatpush2.msra.mxu0 0.0
      %3913 = vmatprep.subr.mxu0 0.0
      %3914 = vmatpush2.msra.mxu0 0.0
      %3915 = vmatprep.subr.mxu0 0.0
      %3916 = vmatpush2.msra.mxu0 0.0
      %3917 = vmatprep.subr.mxu0 0.0
      %3918 = vmatpush2.msra.mxu0 0.0
      %3919 = vmatprep.subr.mxu0 0.0
      %3920 = vmatpush2.msra.mxu0 0.0
      %3921 = vmatprep.subr.mxu0 0.0
      %3922 = vmatpush2.msra.mxu0 0.0
      %3923 = vmatprep.mubr.f32.mxu0 0.0
      %v3924 = vand.u32 %v198, 4294901760
      %v3925 = vsub.f32 %v198, %v3924
      %v3926 = vand.u32 %v3925, 4294901760
      %v3927 = vsub.f32 %v3925, %v3926
      %v3928 = vand.u32 %v3927, 4294901760
      %3929 = vmatmul.mubr.f32.gmra.mxu0 %v3928
      %v3930 = vpop.f32.mrf.mxu0
      %v3931 = vadd.f32 0.0, %v3930
      %v3932 = vpop.f32.mrf.mxu0
      %v3933 = vadd.f32 0.0, %v3932
      %3934 = vdwg.mxu0
      %v3935 = vand.u32 %v403, 4294901760
      %v3936 = vsub.f32 %v403, %v3935
      %v3937 = vand.u32 %v3936, 4294901760
      %v3938 = vsub.f32 %v3936, %v3937
      %v3939 = vand.u32 %v3938, 4294901760
      %3940 = vmatprep.subr.mxu0 %v3939
      %v3941 = vand.u32 %v402, 4294901760
      %v3942 = vsub.f32 %v402, %v3941
      %v3943 = vand.u32 %v3942, 4294901760
      %v3944 = vsub.f32 %v3942, %v3943
      %v3945 = vand.u32 %v3944, 4294901760
      %3946 = vmatpush1.msra.mxu0 %v3945
      %v3947 = vand.u32 %v390, 4294901760
      %v3948 = vsub.f32 %v390, %v3947
      %v3949 = vand.u32 %v3948, 4294901760
      %v3950 = vsub.f32 %v3948, %v3949
      %v3951 = vand.u32 %v3950, 4294901760
      %3952 = vmatprep.subr.mxu0 %v3951
      %v3953 = vand.u32 %v389, 4294901760
      %v3954 = vsub.f32 %v389, %v3953
      %v3955 = vand.u32 %v3954, 4294901760
      %v3956 = vsub.f32 %v3954, %v3955
      %v3957 = vand.u32 %v3956, 4294901760
      %3958 = vmatpush1.msra.mxu0 %v3957
      %v3959 = vand.u32 %v377, 4294901760
      %v3960 = vsub.f32 %v377, %v3959
      %v3961 = vand.u32 %v3960, 4294901760
      %v3962 = vsub.f32 %v3960, %v3961
      %v3963 = vand.u32 %v3962, 4294901760
      %3964 = vmatprep.subr.mxu0 %v3963
      %v3965 = vand.u32 %v376, 4294901760
      %v3966 = vsub.f32 %v376, %v3965
      %v3967 = vand.u32 %v3966, 4294901760
      %v3968 = vsub.f32 %v3966, %v3967
      %v3969 = vand.u32 %v3968, 4294901760
      %3970 = vmatpush1.msra.mxu0 %v3969
      %v3971 = vand.u32 %v364, 4294901760
      %v3972 = vsub.f32 %v364, %v3971
      %v3973 = vand.u32 %v3972, 4294901760
      %v3974 = vsub.f32 %v3972, %v3973
      %v3975 = vand.u32 %v3974, 4294901760
      %3976 = vmatprep.subr.mxu0 %v3975
      %v3977 = vand.u32 %v363, 4294901760
      %v3978 = vsub.f32 %v363, %v3977
      %v3979 = vand.u32 %v3978, 4294901760
      %v3980 = vsub.f32 %v3978, %v3979
      %v3981 = vand.u32 %v3980, 4294901760
      %3982 = vmatpush1.msra.mxu0 %v3981
      %v3983 = vand.u32 %v351, 4294901760
      %v3984 = vsub.f32 %v351, %v3983
      %v3985 = vand.u32 %v3984, 4294901760
      %v3986 = vsub.f32 %v3984, %v3985
      %v3987 = vand.u32 %v3986, 4294901760
      %3988 = vmatprep.subr.mxu0 %v3987
      %v3989 = vand.u32 %v350, 4294901760
      %v3990 = vsub.f32 %v350, %v3989
      %v3991 = vand.u32 %v3990, 4294901760
      %v3992 = vsub.f32 %v3990, %v3991
      %v3993 = vand.u32 %v3992, 4294901760
      %3994 = vmatpush1.msra.mxu0 %v3993
      %v3995 = vand.u32 %v338, 4294901760
      %v3996 = vsub.f32 %v338, %v3995
      %v3997 = vand.u32 %v3996, 4294901760
      %v3998 = vsub.f32 %v3996, %v3997
      %v3999 = vand.u32 %v3998, 4294901760
      %4000 = vmatprep.subr.mxu0 %v3999
      %v4001 = vand.u32 %v337, 4294901760
      %v4002 = vsub.f32 %v337, %v4001
      %v4003 = vand.u32 %v4002, 4294901760
      %v4004 = vsub.f32 %v4002, %v4003
      %v4005 = vand.u32 %v4004, 4294901760
      %4006 = vmatpush1.msra.mxu0 %v4005
      %v4007 = vand.u32 %v325, 4294901760
      %v4008 = vsub.f32 %v325, %v4007
      %v4009 = vand.u32 %v4008, 4294901760
      %v4010 = vsub.f32 %v4008, %v4009
      %v4011 = vand.u32 %v4010, 4294901760
      %4012 = vmatprep.subr.mxu0 %v4011
      %v4013 = vand.u32 %v324, 4294901760
      %v4014 = vsub.f32 %v324, %v4013
      %v4015 = vand.u32 %v4014, 4294901760
      %v4016 = vsub.f32 %v4014, %v4015
      %v4017 = vand.u32 %v4016, 4294901760
      %4018 = vmatpush1.msra.mxu0 %v4017
      %v4019 = vand.u32 %v312, 4294901760
      %v4020 = vsub.f32 %v312, %v4019
      %v4021 = vand.u32 %v4020, 4294901760
      %v4022 = vsub.f32 %v4020, %v4021
      %v4023 = vand.u32 %v4022, 4294901760
      %4024 = vmatprep.subr.mxu0 %v4023
      %v4025 = vand.u32 %v311, 4294901760
      %v4026 = vsub.f32 %v311, %v4025
      %v4027 = vand.u32 %v4026, 4294901760
      %v4028 = vsub.f32 %v4026, %v4027
      %v4029 = vand.u32 %v4028, 4294901760
      %4030 = vmatpush1.msra.mxu0 %v4029
      %v4031 = vand.u32 %v299, 4294901760
      %v4032 = vsub.f32 %v299, %v4031
      %v4033 = vand.u32 %v4032, 4294901760
      %v4034 = vsub.f32 %v4032, %v4033
      %v4035 = vand.u32 %v4034, 4294901760
      %4036 = vmatprep.subr.mxu0 %v4035
      %v4037 = vand.u32 %v298, 4294901760
      %v4038 = vsub.f32 %v298, %v4037
      %v4039 = vand.u32 %v4038, 4294901760
      %v4040 = vsub.f32 %v4038, %v4039
      %v4041 = vand.u32 %v4040, 4294901760
      %4042 = vmatpush1.msra.mxu0 %v4041
      %v4043 = vand.u32 %v286, 4294901760
      %v4044 = vsub.f32 %v286, %v4043
      %v4045 = vand.u32 %v4044, 4294901760
      %v4046 = vsub.f32 %v4044, %v4045
      %v4047 = vand.u32 %v4046, 4294901760
      %4048 = vmatprep.subr.mxu0 %v4047
      %v4049 = vand.u32 %v285, 4294901760
      %v4050 = vsub.f32 %v285, %v4049
      %v4051 = vand.u32 %v4050, 4294901760
      %v4052 = vsub.f32 %v4050, %v4051
      %v4053 = vand.u32 %v4052, 4294901760
      %4054 = vmatpush1.msra.mxu0 %v4053
      %v4055 = vand.u32 %v273, 4294901760
      %v4056 = vsub.f32 %v273, %v4055
      %v4057 = vand.u32 %v4056, 4294901760
      %v4058 = vsub.f32 %v4056, %v4057
      %v4059 = vand.u32 %v4058, 4294901760
      %4060 = vmatprep.subr.mxu0 %v4059
      %v4061 = vand.u32 %v272, 4294901760
      %v4062 = vsub.f32 %v272, %v4061
      %v4063 = vand.u32 %v4062, 4294901760
      %v4064 = vsub.f32 %v4062, %v4063
      %v4065 = vand.u32 %v4064, 4294901760
      %4066 = vmatpush1.msra.mxu0 %v4065
      %v4067 = vand.u32 %v260, 4294901760
      %v4068 = vsub.f32 %v260, %v4067
      %v4069 = vand.u32 %v4068, 4294901760
      %v4070 = vsub.f32 %v4068, %v4069
      %v4071 = vand.u32 %v4070, 4294901760
      %4072 = vmatprep.subr.mxu0 %v4071
      %v4073 = vand.u32 %v259, 4294901760
      %v4074 = vsub.f32 %v259, %v4073
      %v4075 = vand.u32 %v4074, 4294901760
      %v4076 = vsub.f32 %v4074, %v4075
      %v4077 = vand.u32 %v4076, 4294901760
      %4078 = vmatpush1.msra.mxu0 %v4077
      %v4079 = vand.u32 %v247, 4294901760
      %v4080 = vsub.f32 %v247, %v4079
      %v4081 = vand.u32 %v4080, 4294901760
      %v4082 = vsub.f32 %v4080, %v4081
      %v4083 = vand.u32 %v4082, 4294901760
      %4084 = vmatprep.subr.mxu0 %v4083
      %v4085 = vand.u32 %v246, 4294901760
      %v4086 = vsub.f32 %v246, %v4085
      %v4087 = vand.u32 %v4086, 4294901760
      %v4088 = vsub.f32 %v4086, %v4087
      %v4089 = vand.u32 %v4088, 4294901760
      %4090 = vmatpush1.msra.mxu0 %v4089
      %v4091 = vand.u32 %v234, 4294901760
      %v4092 = vsub.f32 %v234, %v4091
      %v4093 = vand.u32 %v4092, 4294901760
      %v4094 = vsub.f32 %v4092, %v4093
      %v4095 = vand.u32 %v4094, 4294901760
      %4096 = vmatprep.subr.mxu0 %v4095
      %v4097 = vand.u32 %v233, 4294901760
      %v4098 = vsub.f32 %v233, %v4097
      %v4099 = vand.u32 %v4098, 4294901760
      %v4100 = vsub.f32 %v4098, %v4099
      %v4101 = vand.u32 %v4100, 4294901760
      %4102 = vmatpush1.msra.mxu0 %v4101
      %v4103 = vand.u32 %v221, 4294901760
      %v4104 = vsub.f32 %v221, %v4103
      %v4105 = vand.u32 %v4104, 4294901760
      %v4106 = vsub.f32 %v4104, %v4105
      %v4107 = vand.u32 %v4106, 4294901760
      %4108 = vmatprep.subr.mxu0 %v4107
      %v4109 = vand.u32 %v220, 4294901760
      %v4110 = vsub.f32 %v220, %v4109
      %v4111 = vand.u32 %v4110, 4294901760
      %v4112 = vsub.f32 %v4110, %v4111
      %v4113 = vand.u32 %v4112, 4294901760
      %4114 = vmatpush1.msra.mxu0 %v4113
      %v4115 = vand.u32 %v208, 4294901760
      %v4116 = vsub.f32 %v208, %v4115
      %v4117 = vand.u32 %v4116, 4294901760
      %v4118 = vsub.f32 %v4116, %v4117
      %v4119 = vand.u32 %v4118, 4294901760
      %4120 = vmatprep.subr.mxu0 %v4119
      %v4121 = vand.u32 %v207, 4294901760
      %v4122 = vsub.f32 %v207, %v4121
      %v4123 = vand.u32 %v4122, 4294901760
      %v4124 = vsub.f32 %v4122, %v4123
      %v4125 = vand.u32 %v4124, 4294901760
      %4126 = vmatpush1.msra.mxu0 %v4125
      %4127 = vmatprep.subr.mxu0 0.0
      %4128 = vmatpush2.msra.mxu0 0.0
      %4129 = vmatprep.subr.mxu0 0.0
      %4130 = vmatpush2.msra.mxu0 0.0
      %4131 = vmatprep.subr.mxu0 0.0
      %4132 = vmatpush2.msra.mxu0 0.0
      %4133 = vmatprep.subr.mxu0 0.0
      %4134 = vmatpush2.msra.mxu0 0.0
      %4135 = vmatprep.subr.mxu0 0.0
      %4136 = vmatpush2.msra.mxu0 0.0
      %4137 = vmatprep.subr.mxu0 0.0
      %4138 = vmatpush2.msra.mxu0 0.0
      %4139 = vmatprep.subr.mxu0 0.0
      %4140 = vmatpush2.msra.mxu0 0.0
      %4141 = vmatprep.subr.mxu0 0.0
      %4142 = vmatpush2.msra.mxu0 0.0
      %4143 = vmatprep.subr.mxu0 0.0
      %4144 = vmatpush2.msra.mxu0 0.0
      %4145 = vmatprep.subr.mxu0 0.0
      %4146 = vmatpush2.msra.mxu0 0.0
      %4147 = vmatprep.subr.mxu0 0.0
      %4148 = vmatpush2.msra.mxu0 0.0
      %4149 = vmatprep.subr.mxu0 0.0
      %4150 = vmatpush2.msra.mxu0 0.0
      %4151 = vmatprep.subr.mxu0 0.0
      %4152 = vmatpush2.msra.mxu0 0.0
      %4153 = vmatprep.subr.mxu0 0.0
      %4154 = vmatpush2.msra.mxu0 0.0
      %4155 = vmatprep.subr.mxu0 0.0
      %4156 = vmatpush2.msra.mxu0 0.0
      %4157 = vmatprep.subr.mxu0 0.0
      %4158 = vmatpush2.msra.mxu0 0.0
      %4159 = vmatprep.mubr.f32.mxu0 0.0
      %v4160 = vand.u32 %v198, 4294901760
      %4161 = vmatmul.mubr.f32.gmra.mxu0 %v4160
      %v4162 = vpop.f32.mrf.mxu0
      %v4163 = vadd.f32 %v3931, %v4162
      %v4164 = vpop.f32.mrf.mxu0
      %v4165 = vadd.f32 %v3933, %v4164
      %4166 = vdwg.mxu0
      %v4167 = vand.u32 %v403, 4294901760
      %v4168 = vsub.f32 %v403, %v4167
      %4169 = vmatprep.subr.mxu0 %v4168
      %v4170 = vand.u32 %v402, 4294901760
      %v4171 = vsub.f32 %v402, %v4170
      %4172 = vmatpush1.msra.mxu0 %v4171
      %v4173 = vand.u32 %v390, 4294901760
      %v4174 = vsub.f32 %v390, %v4173
      %4175 = vmatprep.subr.mxu0 %v4174
      %v4176 = vand.u32 %v389, 4294901760
      %v4177 = vsub.f32 %v389, %v4176
      %4178 = vmatpush1.msra.mxu0 %v4177
      %v4179 = vand.u32 %v377, 4294901760
      %v4180 = vsub.f32 %v377, %v4179
      %4181 = vmatprep.subr.mxu0 %v4180
      %v4182 = vand.u32 %v376, 4294901760
      %v4183 = vsub.f32 %v376, %v4182
      %4184 = vmatpush1.msra.mxu0 %v4183
      %v4185 = vand.u32 %v364, 4294901760
      %v4186 = vsub.f32 %v364, %v4185
      %4187 = vmatprep.subr.mxu0 %v4186
      %v4188 = vand.u32 %v363, 4294901760
      %v4189 = vsub.f32 %v363, %v4188
      %4190 = vmatpush1.msra.mxu0 %v4189
      %v4191 = vand.u32 %v351, 4294901760
      %v4192 = vsub.f32 %v351, %v4191
      %4193 = vmatprep.subr.mxu0 %v4192
      %v4194 = vand.u32 %v350, 4294901760
      %v4195 = vsub.f32 %v350, %v4194
      %4196 = vmatpush1.msra.mxu0 %v4195
      %v4197 = vand.u32 %v338, 4294901760
      %v4198 = vsub.f32 %v338, %v4197
      %4199 = vmatprep.subr.mxu0 %v4198
      %v4200 = vand.u32 %v337, 4294901760
      %v4201 = vsub.f32 %v337, %v4200
      %4202 = vmatpush1.msra.mxu0 %v4201
      %v4203 = vand.u32 %v325, 4294901760
      %v4204 = vsub.f32 %v325, %v4203
      %4205 = vmatprep.subr.mxu0 %v4204
      %v4206 = vand.u32 %v324, 4294901760
      %v4207 = vsub.f32 %v324, %v4206
      %4208 = vmatpush1.msra.mxu0 %v4207
      %v4209 = vand.u32 %v312, 4294901760
      %v4210 = vsub.f32 %v312, %v4209
      %4211 = vmatprep.subr.mxu0 %v4210
      %v4212 = vand.u32 %v311, 4294901760
      %v4213 = vsub.f32 %v311, %v4212
      %4214 = vmatpush1.msra.mxu0 %v4213
      %v4215 = vand.u32 %v299, 4294901760
      %v4216 = vsub.f32 %v299, %v4215
      %4217 = vmatprep.subr.mxu0 %v4216
      %v4218 = vand.u32 %v298, 4294901760
      %v4219 = vsub.f32 %v298, %v4218
      %4220 = vmatpush1.msra.mxu0 %v4219
      %v4221 = vand.u32 %v286, 4294901760
      %v4222 = vsub.f32 %v286, %v4221
      %4223 = vmatprep.subr.mxu0 %v4222
      %v4224 = vand.u32 %v285, 4294901760
      %v4225 = vsub.f32 %v285, %v4224
      %4226 = vmatpush1.msra.mxu0 %v4225
      %v4227 = vand.u32 %v273, 4294901760
      %v4228 = vsub.f32 %v273, %v4227
      %4229 = vmatprep.subr.mxu0 %v4228
      %v4230 = vand.u32 %v272, 4294901760
      %v4231 = vsub.f32 %v272, %v4230
      %4232 = vmatpush1.msra.mxu0 %v4231
      %v4233 = vand.u32 %v260, 4294901760
      %v4234 = vsub.f32 %v260, %v4233
      %4235 = vmatprep.subr.mxu0 %v4234
      %v4236 = vand.u32 %v259, 4294901760
      %v4237 = vsub.f32 %v259, %v4236
      %4238 = vmatpush1.msra.mxu0 %v4237
      %v4239 = vand.u32 %v247, 4294901760
      %v4240 = vsub.f32 %v247, %v4239
      %4241 = vmatprep.subr.mxu0 %v4240
      %v4242 = vand.u32 %v246, 4294901760
      %v4243 = vsub.f32 %v246, %v4242
      %4244 = vmatpush1.msra.mxu0 %v4243
      %v4245 = vand.u32 %v234, 4294901760
      %v4246 = vsub.f32 %v234, %v4245
      %4247 = vmatprep.subr.mxu0 %v4246
      %v4248 = vand.u32 %v233, 4294901760
      %v4249 = vsub.f32 %v233, %v4248
      %4250 = vmatpush1.msra.mxu0 %v4249
      %v4251 = vand.u32 %v221, 4294901760
      %v4252 = vsub.f32 %v221, %v4251
      %4253 = vmatprep.subr.mxu0 %v4252
      %v4254 = vand.u32 %v220, 4294901760
      %v4255 = vsub.f32 %v220, %v4254
      %4256 = vmatpush1.msra.mxu0 %v4255
      %v4257 = vand.u32 %v208, 4294901760
      %v4258 = vsub.f32 %v208, %v4257
      %4259 = vmatprep.subr.mxu0 %v4258
      %v4260 = vand.u32 %v207, 4294901760
      %v4261 = vsub.f32 %v207, %v4260
      %4262 = vmatpush1.msra.mxu0 %v4261
      %4263 = vmatprep.subr.mxu0 0.0
      %4264 = vmatpush2.msra.mxu0 0.0
      %4265 = vmatprep.subr.mxu0 0.0
      %4266 = vmatpush2.msra.mxu0 0.0
      %4267 = vmatprep.subr.mxu0 0.0
      %4268 = vmatpush2.msra.mxu0 0.0
      %4269 = vmatprep.subr.mxu0 0.0
      %4270 = vmatpush2.msra.mxu0 0.0
      %4271 = vmatprep.subr.mxu0 0.0
      %4272 = vmatpush2.msra.mxu0 0.0
      %4273 = vmatprep.subr.mxu0 0.0
      %4274 = vmatpush2.msra.mxu0 0.0
      %4275 = vmatprep.subr.mxu0 0.0
      %4276 = vmatpush2.msra.mxu0 0.0
      %4277 = vmatprep.subr.mxu0 0.0
      %4278 = vmatpush2.msra.mxu0 0.0
      %4279 = vmatprep.subr.mxu0 0.0
      %4280 = vmatpush2.msra.mxu0 0.0
      %4281 = vmatprep.subr.mxu0 0.0
      %4282 = vmatpush2.msra.mxu0 0.0
      %4283 = vmatprep.subr.mxu0 0.0
      %4284 = vmatpush2.msra.mxu0 0.0
      %4285 = vmatprep.subr.mxu0 0.0
      %4286 = vmatpush2.msra.mxu0 0.0
      %4287 = vmatprep.subr.mxu0 0.0
      %4288 = vmatpush2.msra.mxu0 0.0
      %4289 = vmatprep.subr.mxu0 0.0
      %4290 = vmatpush2.msra.mxu0 0.0
      %4291 = vmatprep.subr.mxu0 0.0
      %4292 = vmatpush2.msra.mxu0 0.0
      %4293 = vmatprep.subr.mxu0 0.0
      %4294 = vmatpush2.msra.mxu0 0.0
      %4295 = vmatprep.mubr.f32.mxu0 0.0
      %v4296 = vand.u32 %v198, 4294901760
      %v4297 = vsub.f32 %v198, %v4296
      %4298 = vmatmul.mubr.f32.gmra.mxu0 %v4297
      %v4299 = vpop.f32.mrf.mxu0
      %v4300 = vadd.f32 %v4163, %v4299
      %v4301 = vpop.f32.mrf.mxu0
      %v4302 = vadd.f32 %v4165, %v4301
      %4303 = vdwg.mxu0
      %v4304 = vand.u32 %v403, 4294901760
      %4305 = vmatprep.subr.mxu0 %v4304
      %v4306 = vand.u32 %v402, 4294901760
      %4307 = vmatpush1.msra.mxu0 %v4306
      %v4308 = vand.u32 %v390, 4294901760
      %4309 = vmatprep.subr.mxu0 %v4308
      %v4310 = vand.u32 %v389, 4294901760
      %4311 = vmatpush1.msra.mxu0 %v4310
      %v4312 = vand.u32 %v377, 4294901760
      %4313 = vmatprep.subr.mxu0 %v4312
      %v4314 = vand.u32 %v376, 4294901760
      %4315 = vmatpush1.msra.mxu0 %v4314
      %v4316 = vand.u32 %v364, 4294901760
      %4317 = vmatprep.subr.mxu0 %v4316
      %v4318 = vand.u32 %v363, 4294901760
      %4319 = vmatpush1.msra.mxu0 %v4318
      %v4320 = vand.u32 %v351, 4294901760
      %4321 = vmatprep.subr.mxu0 %v4320
      %v4322 = vand.u32 %v350, 4294901760
      %4323 = vmatpush1.msra.mxu0 %v4322
      %v4324 = vand.u32 %v338, 4294901760
      %4325 = vmatprep.subr.mxu0 %v4324
      %v4326 = vand.u32 %v337, 4294901760
      %4327 = vmatpush1.msra.mxu0 %v4326
      %v4328 = vand.u32 %v325, 4294901760
      %4329 = vmatprep.subr.mxu0 %v4328
      %v4330 = vand.u32 %v324, 4294901760
      %4331 = vmatpush1.msra.mxu0 %v4330
      %v4332 = vand.u32 %v312, 4294901760
      %4333 = vmatprep.subr.mxu0 %v4332
      %v4334 = vand.u32 %v311, 4294901760
      %4335 = vmatpush1.msra.mxu0 %v4334
      %v4336 = vand.u32 %v299, 4294901760
      %4337 = vmatprep.subr.mxu0 %v4336
      %v4338 = vand.u32 %v298, 4294901760
      %4339 = vmatpush1.msra.mxu0 %v4338
      %v4340 = vand.u32 %v286, 4294901760
      %4341 = vmatprep.subr.mxu0 %v4340
      %v4342 = vand.u32 %v285, 4294901760
      %4343 = vmatpush1.msra.mxu0 %v4342
      %v4344 = vand.u32 %v273, 4294901760
      %4345 = vmatprep.subr.mxu0 %v4344
      %v4346 = vand.u32 %v272, 4294901760
      %4347 = vmatpush1.msra.mxu0 %v4346
      %v4348 = vand.u32 %v260, 4294901760
      %4349 = vmatprep.subr.mxu0 %v4348
      %v4350 = vand.u32 %v259, 4294901760
      %4351 = vmatpush1.msra.mxu0 %v4350
      %v4352 = vand.u32 %v247, 4294901760
      %4353 = vmatprep.subr.mxu0 %v4352
      %v4354 = vand.u32 %v246, 4294901760
      %4355 = vmatpush1.msra.mxu0 %v4354
      %v4356 = vand.u32 %v234, 4294901760
      %4357 = vmatprep.subr.mxu0 %v4356
      %v4358 = vand.u32 %v233, 4294901760
      %4359 = vmatpush1.msra.mxu0 %v4358
      %v4360 = vand.u32 %v221, 4294901760
      %4361 = vmatprep.subr.mxu0 %v4360
      %v4362 = vand.u32 %v220, 4294901760
      %4363 = vmatpush1.msra.mxu0 %v4362
      %v4364 = vand.u32 %v208, 4294901760
      %4365 = vmatprep.subr.mxu0 %v4364
      %v4366 = vand.u32 %v207, 4294901760
      %4367 = vmatpush1.msra.mxu0 %v4366
      %4368 = vmatprep.subr.mxu0 0.0
      %4369 = vmatpush2.msra.mxu0 0.0
      %4370 = vmatprep.subr.mxu0 0.0
      %4371 = vmatpush2.msra.mxu0 0.0
      %4372 = vmatprep.subr.mxu0 0.0
      %4373 = vmatpush2.msra.mxu0 0.0
      %4374 = vmatprep.subr.mxu0 0.0
      %4375 = vmatpush2.msra.mxu0 0.0
      %4376 = vmatprep.subr.mxu0 0.0
      %4377 = vmatpush2.msra.mxu0 0.0
      %4378 = vmatprep.subr.mxu0 0.0
      %4379 = vmatpush2.msra.mxu0 0.0
      %4380 = vmatprep.subr.mxu0 0.0
      %4381 = vmatpush2.msra.mxu0 0.0
      %4382 = vmatprep.subr.mxu0 0.0
      %4383 = vmatpush2.msra.mxu0 0.0
      %4384 = vmatprep.subr.mxu0 0.0
      %4385 = vmatpush2.msra.mxu0 0.0
      %4386 = vmatprep.subr.mxu0 0.0
      %4387 = vmatpush2.msra.mxu0 0.0
      %4388 = vmatprep.subr.mxu0 0.0
      %4389 = vmatpush2.msra.mxu0 0.0
      %4390 = vmatprep.subr.mxu0 0.0
      %4391 = vmatpush2.msra.mxu0 0.0
      %4392 = vmatprep.subr.mxu0 0.0
      %4393 = vmatpush2.msra.mxu0 0.0
      %4394 = vmatprep.subr.mxu0 0.0
      %4395 = vmatpush2.msra.mxu0 0.0
      %4396 = vmatprep.subr.mxu0 0.0
      %4397 = vmatpush2.msra.mxu0 0.0
      %4398 = vmatprep.subr.mxu0 0.0
      %4399 = vmatpush2.msra.mxu0 0.0
      %4400 = vmatprep.mubr.f32.mxu0 0.0
      %v4401 = vand.u32 %v198, 4294901760
      %v4402 = vsub.f32 %v198, %v4401
      %v4403 = vand.u32 %v4402, 4294901760
      %4404 = vmatmul.mubr.f32.gmra.mxu0 %v4403
      %v4405 = vpop.f32.mrf.mxu0
      %v4406 = vadd.f32 %v4300, %v4405
      %v4407 = vpop.f32.mrf.mxu0
      %v4408 = vadd.f32 %v4302, %v4407
      %4409 = vdwg.mxu0
      %v4410 = vand.u32 %v403, 4294901760
      %v4411 = vsub.f32 %v403, %v4410
      %v4412 = vand.u32 %v4411, 4294901760
      %4413 = vmatprep.subr.mxu0 %v4412
      %v4414 = vand.u32 %v402, 4294901760
      %v4415 = vsub.f32 %v402, %v4414
      %v4416 = vand.u32 %v4415, 4294901760
      %4417 = vmatpush1.msra.mxu0 %v4416
      %v4418 = vand.u32 %v390, 4294901760
      %v4419 = vsub.f32 %v390, %v4418
      %v4420 = vand.u32 %v4419, 4294901760
      %4421 = vmatprep.subr.mxu0 %v4420
      %v4422 = vand.u32 %v389, 4294901760
      %v4423 = vsub.f32 %v389, %v4422
      %v4424 = vand.u32 %v4423, 4294901760
      %4425 = vmatpush1.msra.mxu0 %v4424
      %v4426 = vand.u32 %v377, 4294901760
      %v4427 = vsub.f32 %v377, %v4426
      %v4428 = vand.u32 %v4427, 4294901760
      %4429 = vmatprep.subr.mxu0 %v4428
      %v4430 = vand.u32 %v376, 4294901760
      %v4431 = vsub.f32 %v376, %v4430
      %v4432 = vand.u32 %v4431, 4294901760
      %4433 = vmatpush1.msra.mxu0 %v4432
      %v4434 = vand.u32 %v364, 4294901760
      %v4435 = vsub.f32 %v364, %v4434
      %v4436 = vand.u32 %v4435, 4294901760
      %4437 = vmatprep.subr.mxu0 %v4436
      %v4438 = vand.u32 %v363, 4294901760
      %v4439 = vsub.f32 %v363, %v4438
      %v4440 = vand.u32 %v4439, 4294901760
      %4441 = vmatpush1.msra.mxu0 %v4440
      %v4442 = vand.u32 %v351, 4294901760
      %v4443 = vsub.f32 %v351, %v4442
      %v4444 = vand.u32 %v4443, 4294901760
      %4445 = vmatprep.subr.mxu0 %v4444
      %v4446 = vand.u32 %v350, 4294901760
      %v4447 = vsub.f32 %v350, %v4446
      %v4448 = vand.u32 %v4447, 4294901760
      %4449 = vmatpush1.msra.mxu0 %v4448
      %v4450 = vand.u32 %v338, 4294901760
      %v4451 = vsub.f32 %v338, %v4450
      %v4452 = vand.u32 %v4451, 4294901760
      %4453 = vmatprep.subr.mxu0 %v4452
      %v4454 = vand.u32 %v337, 4294901760
      %v4455 = vsub.f32 %v337, %v4454
      %v4456 = vand.u32 %v4455, 4294901760
      %4457 = vmatpush1.msra.mxu0 %v4456
      %v4458 = vand.u32 %v325, 4294901760
      %v4459 = vsub.f32 %v325, %v4458
      %v4460 = vand.u32 %v4459, 4294901760
      %4461 = vmatprep.subr.mxu0 %v4460
      %v4462 = vand.u32 %v324, 4294901760
      %v4463 = vsub.f32 %v324, %v4462
      %v4464 = vand.u32 %v4463, 4294901760
      %4465 = vmatpush1.msra.mxu0 %v4464
      %v4466 = vand.u32 %v312, 4294901760
      %v4467 = vsub.f32 %v312, %v4466
      %v4468 = vand.u32 %v4467, 4294901760
      %4469 = vmatprep.subr.mxu0 %v4468
      %v4470 = vand.u32 %v311, 4294901760
      %v4471 = vsub.f32 %v311, %v4470
      %v4472 = vand.u32 %v4471, 4294901760
      %4473 = vmatpush1.msra.mxu0 %v4472
      %v4474 = vand.u32 %v299, 4294901760
      %v4475 = vsub.f32 %v299, %v4474
      %v4476 = vand.u32 %v4475, 4294901760
      %4477 = vmatprep.subr.mxu0 %v4476
      %v4478 = vand.u32 %v298, 4294901760
      %v4479 = vsub.f32 %v298, %v4478
      %v4480 = vand.u32 %v4479, 4294901760
      %4481 = vmatpush1.msra.mxu0 %v4480
      %v4482 = vand.u32 %v286, 4294901760
      %v4483 = vsub.f32 %v286, %v4482
      %v4484 = vand.u32 %v4483, 4294901760
      %4485 = vmatprep.subr.mxu0 %v4484
      %v4486 = vand.u32 %v285, 4294901760
      %v4487 = vsub.f32 %v285, %v4486
      %v4488 = vand.u32 %v4487, 4294901760
      %4489 = vmatpush1.msra.mxu0 %v4488
      %v4490 = vand.u32 %v273, 4294901760
      %v4491 = vsub.f32 %v273, %v4490
      %v4492 = vand.u32 %v4491, 4294901760
      %4493 = vmatprep.subr.mxu0 %v4492
      %v4494 = vand.u32 %v272, 4294901760
      %v4495 = vsub.f32 %v272, %v4494
      %v4496 = vand.u32 %v4495, 4294901760
      %4497 = vmatpush1.msra.mxu0 %v4496
      %v4498 = vand.u32 %v260, 4294901760
      %v4499 = vsub.f32 %v260, %v4498
      %v4500 = vand.u32 %v4499, 4294901760
      %4501 = vmatprep.subr.mxu0 %v4500
      %v4502 = vand.u32 %v259, 4294901760
      %v4503 = vsub.f32 %v259, %v4502
      %v4504 = vand.u32 %v4503, 4294901760
      %4505 = vmatpush1.msra.mxu0 %v4504
      %v4506 = vand.u32 %v247, 4294901760
      %v4507 = vsub.f32 %v247, %v4506
      %v4508 = vand.u32 %v4507, 4294901760
      %4509 = vmatprep.subr.mxu0 %v4508
      %v4510 = vand.u32 %v246, 4294901760
      %v4511 = vsub.f32 %v246, %v4510
      %v4512 = vand.u32 %v4511, 4294901760
      %4513 = vmatpush1.msra.mxu0 %v4512
      %v4514 = vand.u32 %v234, 4294901760
      %v4515 = vsub.f32 %v234, %v4514
      %v4516 = vand.u32 %v4515, 4294901760
      %4517 = vmatprep.subr.mxu0 %v4516
      %v4518 = vand.u32 %v233, 4294901760
      %v4519 = vsub.f32 %v233, %v4518
      %v4520 = vand.u32 %v4519, 4294901760
      %4521 = vmatpush1.msra.mxu0 %v4520
      %v4522 = vand.u32 %v221, 4294901760
      %v4523 = vsub.f32 %v221, %v4522
      %v4524 = vand.u32 %v4523, 4294901760
      %4525 = vmatprep.subr.mxu0 %v4524
      %v4526 = vand.u32 %v220, 4294901760
      %v4527 = vsub.f32 %v220, %v4526
      %v4528 = vand.u32 %v4527, 4294901760
      %4529 = vmatpush1.msra.mxu0 %v4528
      %v4530 = vand.u32 %v208, 4294901760
      %v4531 = vsub.f32 %v208, %v4530
      %v4532 = vand.u32 %v4531, 4294901760
      %4533 = vmatprep.subr.mxu0 %v4532
      %v4534 = vand.u32 %v207, 4294901760
      %v4535 = vsub.f32 %v207, %v4534
      %v4536 = vand.u32 %v4535, 4294901760
      %4537 = vmatpush1.msra.mxu0 %v4536
      %4538 = vmatprep.subr.mxu0 0.0
      %4539 = vmatpush2.msra.mxu0 0.0
      %4540 = vmatprep.subr.mxu0 0.0
      %4541 = vmatpush2.msra.mxu0 0.0
      %4542 = vmatprep.subr.mxu0 0.0
      %4543 = vmatpush2.msra.mxu0 0.0
      %4544 = vmatprep.subr.mxu0 0.0
      %4545 = vmatpush2.msra.mxu0 0.0
      %4546 = vmatprep.subr.mxu0 0.0
      %4547 = vmatpush2.msra.mxu0 0.0
      %4548 = vmatprep.subr.mxu0 0.0
      %4549 = vmatpush2.msra.mxu0 0.0
      %4550 = vmatprep.subr.mxu0 0.0
      %4551 = vmatpush2.msra.mxu0 0.0
      %4552 = vmatprep.subr.mxu0 0.0
      %4553 = vmatpush2.msra.mxu0 0.0
      %4554 = vmatprep.subr.mxu0 0.0
      %4555 = vmatpush2.msra.mxu0 0.0
      %4556 = vmatprep.subr.mxu0 0.0
      %4557 = vmatpush2.msra.mxu0 0.0
      %4558 = vmatprep.subr.mxu0 0.0
      %4559 = vmatpush2.msra.mxu0 0.0
      %4560 = vmatprep.subr.mxu0 0.0
      %4561 = vmatpush2.msra.mxu0 0.0
      %4562 = vmatprep.subr.mxu0 0.0
      %4563 = vmatpush2.msra.mxu0 0.0
      %4564 = vmatprep.subr.mxu0 0.0
      %4565 = vmatpush2.msra.mxu0 0.0
      %4566 = vmatprep.subr.mxu0 0.0
      %4567 = vmatpush2.msra.mxu0 0.0
      %4568 = vmatprep.subr.mxu0 0.0
      %4569 = vmatpush2.msra.mxu0 0.0
      %4570 = vmatprep.mubr.f32.mxu0 0.0
      %v4571 = vand.u32 %v198, 4294901760
      %4572 = vmatmul.mubr.f32.gmra.mxu0 %v4571
      %v4573 = vpop.f32.mrf.mxu0
      %v4574 = vadd.f32 %v4406, %v4573
      %v4575 = vpop.f32.mrf.mxu0
      %v4576 = vadd.f32 %v4408, %v4575
      %4577 = vdwg.mxu0
      %v4578 = vand.u32 %v403, 4294901760
      %4579 = vmatprep.subr.mxu0 %v4578
      %v4580 = vand.u32 %v402, 4294901760
      %4581 = vmatpush1.msra.mxu0 %v4580
      %v4582 = vand.u32 %v390, 4294901760
      %4583 = vmatprep.subr.mxu0 %v4582
      %v4584 = vand.u32 %v389, 4294901760
      %4585 = vmatpush1.msra.mxu0 %v4584
      %v4586 = vand.u32 %v377, 4294901760
      %4587 = vmatprep.subr.mxu0 %v4586
      %v4588 = vand.u32 %v376, 4294901760
      %4589 = vmatpush1.msra.mxu0 %v4588
      %v4590 = vand.u32 %v364, 4294901760
      %4591 = vmatprep.subr.mxu0 %v4590
      %v4592 = vand.u32 %v363, 4294901760
      %4593 = vmatpush1.msra.mxu0 %v4592
      %v4594 = vand.u32 %v351, 4294901760
      %4595 = vmatprep.subr.mxu0 %v4594
      %v4596 = vand.u32 %v350, 4294901760
      %4597 = vmatpush1.msra.mxu0 %v4596
      %v4598 = vand.u32 %v338, 4294901760
      %4599 = vmatprep.subr.mxu0 %v4598
      %v4600 = vand.u32 %v337, 4294901760
      %4601 = vmatpush1.msra.mxu0 %v4600
      %v4602 = vand.u32 %v325, 4294901760
      %4603 = vmatprep.subr.mxu0 %v4602
      %v4604 = vand.u32 %v324, 4294901760
      %4605 = vmatpush1.msra.mxu0 %v4604
      %v4606 = vand.u32 %v312, 4294901760
      %4607 = vmatprep.subr.mxu0 %v4606
      %v4608 = vand.u32 %v311, 4294901760
      %4609 = vmatpush1.msra.mxu0 %v4608
      %v4610 = vand.u32 %v299, 4294901760
      %4611 = vmatprep.subr.mxu0 %v4610
      %v4612 = vand.u32 %v298, 4294901760
      %4613 = vmatpush1.msra.mxu0 %v4612
      %v4614 = vand.u32 %v286, 4294901760
      %4615 = vmatprep.subr.mxu0 %v4614
      %v4616 = vand.u32 %v285, 4294901760
      %4617 = vmatpush1.msra.mxu0 %v4616
      %v4618 = vand.u32 %v273, 4294901760
      %4619 = vmatprep.subr.mxu0 %v4618
      %v4620 = vand.u32 %v272, 4294901760
      %4621 = vmatpush1.msra.mxu0 %v4620
      %v4622 = vand.u32 %v260, 4294901760
      %4623 = vmatprep.subr.mxu0 %v4622
      %v4624 = vand.u32 %v259, 4294901760
      %4625 = vmatpush1.msra.mxu0 %v4624
      %v4626 = vand.u32 %v247, 4294901760
      %4627 = vmatprep.subr.mxu0 %v4626
      %v4628 = vand.u32 %v246, 4294901760
      %4629 = vmatpush1.msra.mxu0 %v4628
      %v4630 = vand.u32 %v234, 4294901760
      %4631 = vmatprep.subr.mxu0 %v4630
      %v4632 = vand.u32 %v233, 4294901760
      %4633 = vmatpush1.msra.mxu0 %v4632
      %v4634 = vand.u32 %v221, 4294901760
      %4635 = vmatprep.subr.mxu0 %v4634
      %v4636 = vand.u32 %v220, 4294901760
      %4637 = vmatpush1.msra.mxu0 %v4636
      %v4638 = vand.u32 %v208, 4294901760
      %4639 = vmatprep.subr.mxu0 %v4638
      %v4640 = vand.u32 %v207, 4294901760
      %4641 = vmatpush1.msra.mxu0 %v4640
      %4642 = vmatprep.subr.mxu0 0.0
      %4643 = vmatpush2.msra.mxu0 0.0
      %4644 = vmatprep.subr.mxu0 0.0
      %4645 = vmatpush2.msra.mxu0 0.0
      %4646 = vmatprep.subr.mxu0 0.0
      %4647 = vmatpush2.msra.mxu0 0.0
      %4648 = vmatprep.subr.mxu0 0.0
      %4649 = vmatpush2.msra.mxu0 0.0
      %4650 = vmatprep.subr.mxu0 0.0
      %4651 = vmatpush2.msra.mxu0 0.0
      %4652 = vmatprep.subr.mxu0 0.0
      %4653 = vmatpush2.msra.mxu0 0.0
      %4654 = vmatprep.subr.mxu0 0.0
      %4655 = vmatpush2.msra.mxu0 0.0
      %4656 = vmatprep.subr.mxu0 0.0
      %4657 = vmatpush2.msra.mxu0 0.0
      %4658 = vmatprep.subr.mxu0 0.0
      %4659 = vmatpush2.msra.mxu0 0.0
      %4660 = vmatprep.subr.mxu0 0.0
      %4661 = vmatpush2.msra.mxu0 0.0
      %4662 = vmatprep.subr.mxu0 0.0
      %4663 = vmatpush2.msra.mxu0 0.0
      %4664 = vmatprep.subr.mxu0 0.0
      %4665 = vmatpush2.msra.mxu0 0.0
      %4666 = vmatprep.subr.mxu0 0.0
      %4667 = vmatpush2.msra.mxu0 0.0
      %4668 = vmatprep.subr.mxu0 0.0
      %4669 = vmatpush2.msra.mxu0 0.0
      %4670 = vmatprep.subr.mxu0 0.0
      %4671 = vmatpush2.msra.mxu0 0.0
      %4672 = vmatprep.subr.mxu0 0.0
      %4673 = vmatpush2.msra.mxu0 0.0
      %4674 = vmatprep.mubr.f32.mxu0 0.0
      %v4675 = vand.u32 %v198, 4294901760
      %4676 = vmatmul.mubr.f32.gmra.mxu0 %v4675
      %v4677 = vpop.f32.mrf.mxu0
      %v4678 = vadd.f32 %v4574, %v4677
      %v4679 = vpop.f32.mrf.mxu0
      %v4680 = vadd.f32 %v4576, %v4679
      %4681 = vdwg.mxu0
      %v4682 = vand.u32 %v405, 4294901760
      %4683 = vmatprep.subr.mxu0 %v4682
      %v4684 = vand.u32 %v404, 4294901760
      %4685 = vmatpush1.msra.mxu0 %v4684
      %v4686 = vand.u32 %v392, 4294901760
      %4687 = vmatprep.subr.mxu0 %v4686
      %v4688 = vand.u32 %v391, 4294901760
      %4689 = vmatpush1.msra.mxu0 %v4688
      %v4690 = vand.u32 %v379, 4294901760
      %4691 = vmatprep.subr.mxu0 %v4690
      %v4692 = vand.u32 %v378, 4294901760
      %4693 = vmatpush1.msra.mxu0 %v4692
      %v4694 = vand.u32 %v366, 4294901760
      %4695 = vmatprep.subr.mxu0 %v4694
      %v4696 = vand.u32 %v365, 4294901760
      %4697 = vmatpush1.msra.mxu0 %v4696
      %v4698 = vand.u32 %v353, 4294901760
      %4699 = vmatprep.subr.mxu0 %v4698
      %v4700 = vand.u32 %v352, 4294901760
      %4701 = vmatpush1.msra.mxu0 %v4700
      %v4702 = vand.u32 %v340, 4294901760
      %4703 = vmatprep.subr.mxu0 %v4702
      %v4704 = vand.u32 %v339, 4294901760
      %4705 = vmatpush1.msra.mxu0 %v4704
      %v4706 = vand.u32 %v327, 4294901760
      %4707 = vmatprep.subr.mxu0 %v4706
      %v4708 = vand.u32 %v326, 4294901760
      %4709 = vmatpush1.msra.mxu0 %v4708
      %v4710 = vand.u32 %v314, 4294901760
      %4711 = vmatprep.subr.mxu0 %v4710
      %v4712 = vand.u32 %v313, 4294901760
      %4713 = vmatpush1.msra.mxu0 %v4712
      %v4714 = vand.u32 %v301, 4294901760
      %4715 = vmatprep.subr.mxu0 %v4714
      %v4716 = vand.u32 %v300, 4294901760
      %4717 = vmatpush1.msra.mxu0 %v4716
      %v4718 = vand.u32 %v288, 4294901760
      %4719 = vmatprep.subr.mxu0 %v4718
      %v4720 = vand.u32 %v287, 4294901760
      %4721 = vmatpush1.msra.mxu0 %v4720
      %v4722 = vand.u32 %v275, 4294901760
      %4723 = vmatprep.subr.mxu0 %v4722
      %v4724 = vand.u32 %v274, 4294901760
      %4725 = vmatpush1.msra.mxu0 %v4724
      %v4726 = vand.u32 %v262, 4294901760
      %4727 = vmatprep.subr.mxu0 %v4726
      %v4728 = vand.u32 %v261, 4294901760
      %4729 = vmatpush1.msra.mxu0 %v4728
      %v4730 = vand.u32 %v249, 4294901760
      %4731 = vmatprep.subr.mxu0 %v4730
      %v4732 = vand.u32 %v248, 4294901760
      %4733 = vmatpush1.msra.mxu0 %v4732
      %v4734 = vand.u32 %v236, 4294901760
      %4735 = vmatprep.subr.mxu0 %v4734
      %v4736 = vand.u32 %v235, 4294901760
      %4737 = vmatpush1.msra.mxu0 %v4736
      %v4738 = vand.u32 %v223, 4294901760
      %4739 = vmatprep.subr.mxu0 %v4738
      %v4740 = vand.u32 %v222, 4294901760
      %4741 = vmatpush1.msra.mxu0 %v4740
      %v4742 = vand.u32 %v210, 4294901760
      %4743 = vmatprep.subr.mxu0 %v4742
      %v4744 = vand.u32 %v209, 4294901760
      %4745 = vmatpush1.msra.mxu0 %v4744
      %4746 = vmatprep.subr.mxu0 0.0
      %4747 = vmatpush2.msra.mxu0 0.0
      %4748 = vmatprep.subr.mxu0 0.0
      %4749 = vmatpush2.msra.mxu0 0.0
      %4750 = vmatprep.subr.mxu0 0.0
      %4751 = vmatpush2.msra.mxu0 0.0
      %4752 = vmatprep.subr.mxu0 0.0
      %4753 = vmatpush2.msra.mxu0 0.0
      %4754 = vmatprep.subr.mxu0 0.0
      %4755 = vmatpush2.msra.mxu0 0.0
      %4756 = vmatprep.subr.mxu0 0.0
      %4757 = vmatpush2.msra.mxu0 0.0
      %4758 = vmatprep.subr.mxu0 0.0
      %4759 = vmatpush2.msra.mxu0 0.0
      %4760 = vmatprep.subr.mxu0 0.0
      %4761 = vmatpush2.msra.mxu0 0.0
      %4762 = vmatprep.subr.mxu0 0.0
      %4763 = vmatpush2.msra.mxu0 0.0
      %4764 = vmatprep.subr.mxu0 0.0
      %4765 = vmatpush2.msra.mxu0 0.0
      %4766 = vmatprep.subr.mxu0 0.0
      %4767 = vmatpush2.msra.mxu0 0.0
      %4768 = vmatprep.subr.mxu0 0.0
      %4769 = vmatpush2.msra.mxu0 0.0
      %4770 = vmatprep.subr.mxu0 0.0
      %4771 = vmatpush2.msra.mxu0 0.0
      %4772 = vmatprep.subr.mxu0 0.0
      %4773 = vmatpush2.msra.mxu0 0.0
      %4774 = vmatprep.subr.mxu0 0.0
      %4775 = vmatpush2.msra.mxu0 0.0
      %4776 = vmatprep.subr.mxu0 0.0
      %4777 = vmatpush2.msra.mxu0 0.0
      %4778 = vmatprep.mubr.f32.mxu0 0.0
      %v4779 = vand.u32 %v198, 4294901760
      %v4780 = vsub.f32 %v198, %v4779
      %v4781 = vand.u32 %v4780, 4294901760
      %v4782 = vsub.f32 %v4780, %v4781
      %v4783 = vand.u32 %v4782, 4294901760
      %4784 = vmatmul.mubr.f32.gmra.mxu0 %v4783
      %v4785 = vpop.f32.mrf.mxu0
      %v4786 = vadd.f32 0.0, %v4785
      %v4787 = vpop.f32.mrf.mxu0
      %v4788 = vadd.f32 0.0, %v4787
      %4789 = vdwg.mxu0
      %v4790 = vand.u32 %v405, 4294901760
      %v4791 = vsub.f32 %v405, %v4790
      %v4792 = vand.u32 %v4791, 4294901760
      %v4793 = vsub.f32 %v4791, %v4792
      %v4794 = vand.u32 %v4793, 4294901760
      %4795 = vmatprep.subr.mxu0 %v4794
      %v4796 = vand.u32 %v404, 4294901760
      %v4797 = vsub.f32 %v404, %v4796
      %v4798 = vand.u32 %v4797, 4294901760
      %v4799 = vsub.f32 %v4797, %v4798
      %v4800 = vand.u32 %v4799, 4294901760
      %4801 = vmatpush1.msra.mxu0 %v4800
      %v4802 = vand.u32 %v392, 4294901760
      %v4803 = vsub.f32 %v392, %v4802
      %v4804 = vand.u32 %v4803, 4294901760
      %v4805 = vsub.f32 %v4803, %v4804
      %v4806 = vand.u32 %v4805, 4294901760
      %4807 = vmatprep.subr.mxu0 %v4806
      %v4808 = vand.u32 %v391, 4294901760
      %v4809 = vsub.f32 %v391, %v4808
      %v4810 = vand.u32 %v4809, 4294901760
      %v4811 = vsub.f32 %v4809, %v4810
      %v4812 = vand.u32 %v4811, 4294901760
      %4813 = vmatpush1.msra.mxu0 %v4812
      %v4814 = vand.u32 %v379, 4294901760
      %v4815 = vsub.f32 %v379, %v4814
      %v4816 = vand.u32 %v4815, 4294901760
      %v4817 = vsub.f32 %v4815, %v4816
      %v4818 = vand.u32 %v4817, 4294901760
      %4819 = vmatprep.subr.mxu0 %v4818
      %v4820 = vand.u32 %v378, 4294901760
      %v4821 = vsub.f32 %v378, %v4820
      %v4822 = vand.u32 %v4821, 4294901760
      %v4823 = vsub.f32 %v4821, %v4822
      %v4824 = vand.u32 %v4823, 4294901760
      %4825 = vmatpush1.msra.mxu0 %v4824
      %v4826 = vand.u32 %v366, 4294901760
      %v4827 = vsub.f32 %v366, %v4826
      %v4828 = vand.u32 %v4827, 4294901760
      %v4829 = vsub.f32 %v4827, %v4828
      %v4830 = vand.u32 %v4829, 4294901760
      %4831 = vmatprep.subr.mxu0 %v4830
      %v4832 = vand.u32 %v365, 4294901760
      %v4833 = vsub.f32 %v365, %v4832
      %v4834 = vand.u32 %v4833, 4294901760
      %v4835 = vsub.f32 %v4833, %v4834
      %v4836 = vand.u32 %v4835, 4294901760
      %4837 = vmatpush1.msra.mxu0 %v4836
      %v4838 = vand.u32 %v353, 4294901760
      %v4839 = vsub.f32 %v353, %v4838
      %v4840 = vand.u32 %v4839, 4294901760
      %v4841 = vsub.f32 %v4839, %v4840
      %v4842 = vand.u32 %v4841, 4294901760
      %4843 = vmatprep.subr.mxu0 %v4842
      %v4844 = vand.u32 %v352, 4294901760
      %v4845 = vsub.f32 %v352, %v4844
      %v4846 = vand.u32 %v4845, 4294901760
      %v4847 = vsub.f32 %v4845, %v4846
      %v4848 = vand.u32 %v4847, 4294901760
      %4849 = vmatpush1.msra.mxu0 %v4848
      %v4850 = vand.u32 %v340, 4294901760
      %v4851 = vsub.f32 %v340, %v4850
      %v4852 = vand.u32 %v4851, 4294901760
      %v4853 = vsub.f32 %v4851, %v4852
      %v4854 = vand.u32 %v4853, 4294901760
      %4855 = vmatprep.subr.mxu0 %v4854
      %v4856 = vand.u32 %v339, 4294901760
      %v4857 = vsub.f32 %v339, %v4856
      %v4858 = vand.u32 %v4857, 4294901760
      %v4859 = vsub.f32 %v4857, %v4858
      %v4860 = vand.u32 %v4859, 4294901760
      %4861 = vmatpush1.msra.mxu0 %v4860
      %v4862 = vand.u32 %v327, 4294901760
      %v4863 = vsub.f32 %v327, %v4862
      %v4864 = vand.u32 %v4863, 4294901760
      %v4865 = vsub.f32 %v4863, %v4864
      %v4866 = vand.u32 %v4865, 4294901760
      %4867 = vmatprep.subr.mxu0 %v4866
      %v4868 = vand.u32 %v326, 4294901760
      %v4869 = vsub.f32 %v326, %v4868
      %v4870 = vand.u32 %v4869, 4294901760
      %v4871 = vsub.f32 %v4869, %v4870
      %v4872 = vand.u32 %v4871, 4294901760
      %4873 = vmatpush1.msra.mxu0 %v4872
      %v4874 = vand.u32 %v314, 4294901760
      %v4875 = vsub.f32 %v314, %v4874
      %v4876 = vand.u32 %v4875, 4294901760
      %v4877 = vsub.f32 %v4875, %v4876
      %v4878 = vand.u32 %v4877, 4294901760
      %4879 = vmatprep.subr.mxu0 %v4878
      %v4880 = vand.u32 %v313, 4294901760
      %v4881 = vsub.f32 %v313, %v4880
      %v4882 = vand.u32 %v4881, 4294901760
      %v4883 = vsub.f32 %v4881, %v4882
      %v4884 = vand.u32 %v4883, 4294901760
      %4885 = vmatpush1.msra.mxu0 %v4884
      %v4886 = vand.u32 %v301, 4294901760
      %v4887 = vsub.f32 %v301, %v4886
      %v4888 = vand.u32 %v4887, 4294901760
      %v4889 = vsub.f32 %v4887, %v4888
      %v4890 = vand.u32 %v4889, 4294901760
      %4891 = vmatprep.subr.mxu0 %v4890
      %v4892 = vand.u32 %v300, 4294901760
      %v4893 = vsub.f32 %v300, %v4892
      %v4894 = vand.u32 %v4893, 4294901760
      %v4895 = vsub.f32 %v4893, %v4894
      %v4896 = vand.u32 %v4895, 4294901760
      %4897 = vmatpush1.msra.mxu0 %v4896
      %v4898 = vand.u32 %v288, 4294901760
      %v4899 = vsub.f32 %v288, %v4898
      %v4900 = vand.u32 %v4899, 4294901760
      %v4901 = vsub.f32 %v4899, %v4900
      %v4902 = vand.u32 %v4901, 4294901760
      %4903 = vmatprep.subr.mxu0 %v4902
      %v4904 = vand.u32 %v287, 4294901760
      %v4905 = vsub.f32 %v287, %v4904
      %v4906 = vand.u32 %v4905, 4294901760
      %v4907 = vsub.f32 %v4905, %v4906
      %v4908 = vand.u32 %v4907, 4294901760
      %4909 = vmatpush1.msra.mxu0 %v4908
      %v4910 = vand.u32 %v275, 4294901760
      %v4911 = vsub.f32 %v275, %v4910
      %v4912 = vand.u32 %v4911, 4294901760
      %v4913 = vsub.f32 %v4911, %v4912
      %v4914 = vand.u32 %v4913, 4294901760
      %4915 = vmatprep.subr.mxu0 %v4914
      %v4916 = vand.u32 %v274, 4294901760
      %v4917 = vsub.f32 %v274, %v4916
      %v4918 = vand.u32 %v4917, 4294901760
      %v4919 = vsub.f32 %v4917, %v4918
      %v4920 = vand.u32 %v4919, 4294901760
      %4921 = vmatpush1.msra.mxu0 %v4920
      %v4922 = vand.u32 %v262, 4294901760
      %v4923 = vsub.f32 %v262, %v4922
      %v4924 = vand.u32 %v4923, 4294901760
      %v4925 = vsub.f32 %v4923, %v4924
      %v4926 = vand.u32 %v4925, 4294901760
      %4927 = vmatprep.subr.mxu0 %v4926
      %v4928 = vand.u32 %v261, 4294901760
      %v4929 = vsub.f32 %v261, %v4928
      %v4930 = vand.u32 %v4929, 4294901760
      %v4931 = vsub.f32 %v4929, %v4930
      %v4932 = vand.u32 %v4931, 4294901760
      %4933 = vmatpush1.msra.mxu0 %v4932
      %v4934 = vand.u32 %v249, 4294901760
      %v4935 = vsub.f32 %v249, %v4934
      %v4936 = vand.u32 %v4935, 4294901760
      %v4937 = vsub.f32 %v4935, %v4936
      %v4938 = vand.u32 %v4937, 4294901760
      %4939 = vmatprep.subr.mxu0 %v4938
      %v4940 = vand.u32 %v248, 4294901760
      %v4941 = vsub.f32 %v248, %v4940
      %v4942 = vand.u32 %v4941, 4294901760
      %v4943 = vsub.f32 %v4941, %v4942
      %v4944 = vand.u32 %v4943, 4294901760
      %4945 = vmatpush1.msra.mxu0 %v4944
      %v4946 = vand.u32 %v236, 4294901760
      %v4947 = vsub.f32 %v236, %v4946
      %v4948 = vand.u32 %v4947, 4294901760
      %v4949 = vsub.f32 %v4947, %v4948
      %v4950 = vand.u32 %v4949, 4294901760
      %4951 = vmatprep.subr.mxu0 %v4950
      %v4952 = vand.u32 %v235, 4294901760
      %v4953 = vsub.f32 %v235, %v4952
      %v4954 = vand.u32 %v4953, 4294901760
      %v4955 = vsub.f32 %v4953, %v4954
      %v4956 = vand.u32 %v4955, 4294901760
      %4957 = vmatpush1.msra.mxu0 %v4956
      %v4958 = vand.u32 %v223, 4294901760
      %v4959 = vsub.f32 %v223, %v4958
      %v4960 = vand.u32 %v4959, 4294901760
      %v4961 = vsub.f32 %v4959, %v4960
      %v4962 = vand.u32 %v4961, 4294901760
      %4963 = vmatprep.subr.mxu0 %v4962
      %v4964 = vand.u32 %v222, 4294901760
      %v4965 = vsub.f32 %v222, %v4964
      %v4966 = vand.u32 %v4965, 4294901760
      %v4967 = vsub.f32 %v4965, %v4966
      %v4968 = vand.u32 %v4967, 4294901760
      %4969 = vmatpush1.msra.mxu0 %v4968
      %v4970 = vand.u32 %v210, 4294901760
      %v4971 = vsub.f32 %v210, %v4970
      %v4972 = vand.u32 %v4971, 4294901760
      %v4973 = vsub.f32 %v4971, %v4972
      %v4974 = vand.u32 %v4973, 4294901760
      %4975 = vmatprep.subr.mxu0 %v4974
      %v4976 = vand.u32 %v209, 4294901760
      %v4977 = vsub.f32 %v209, %v4976
      %v4978 = vand.u32 %v4977, 4294901760
      %v4979 = vsub.f32 %v4977, %v4978
      %v4980 = vand.u32 %v4979, 4294901760
      %4981 = vmatpush1.msra.mxu0 %v4980
      %4982 = vmatprep.subr.mxu0 0.0
      %4983 = vmatpush2.msra.mxu0 0.0
      %4984 = vmatprep.subr.mxu0 0.0
      %4985 = vmatpush2.msra.mxu0 0.0
      %4986 = vmatprep.subr.mxu0 0.0
      %4987 = vmatpush2.msra.mxu0 0.0
      %4988 = vmatprep.subr.mxu0 0.0
      %4989 = vmatpush2.msra.mxu0 0.0
      %4990 = vmatprep.subr.mxu0 0.0
      %4991 = vmatpush2.msra.mxu0 0.0
      %4992 = vmatprep.subr.mxu0 0.0
      %4993 = vmatpush2.msra.mxu0 0.0
      %4994 = vmatprep.subr.mxu0 0.0
      %4995 = vmatpush2.msra.mxu0 0.0
      %4996 = vmatprep.subr.mxu0 0.0
      %4997 = vmatpush2.msra.mxu0 0.0
      %4998 = vmatprep.subr.mxu0 0.0
      %4999 = vmatpush2.msra.mxu0 0.0
      %5000 = vmatprep.subr.mxu0 0.0
      %5001 = vmatpush2.msra.mxu0 0.0
      %5002 = vmatprep.subr.mxu0 0.0
      %5003 = vmatpush2.msra.mxu0 0.0
      %5004 = vmatprep.subr.mxu0 0.0
      %5005 = vmatpush2.msra.mxu0 0.0
      %5006 = vmatprep.subr.mxu0 0.0
      %5007 = vmatpush2.msra.mxu0 0.0
      %5008 = vmatprep.subr.mxu0 0.0
      %5009 = vmatpush2.msra.mxu0 0.0
      %5010 = vmatprep.subr.mxu0 0.0
      %5011 = vmatpush2.msra.mxu0 0.0
      %5012 = vmatprep.subr.mxu0 0.0
      %5013 = vmatpush2.msra.mxu0 0.0
      %5014 = vmatprep.mubr.f32.mxu0 0.0
      %v5015 = vand.u32 %v198, 4294901760
      %5016 = vmatmul.mubr.f32.gmra.mxu0 %v5015
      %v5017 = vpop.f32.mrf.mxu0
      %v5018 = vadd.f32 %v4786, %v5017
      %v5019 = vpop.f32.mrf.mxu0
      %v5020 = vadd.f32 %v4788, %v5019
      %5021 = vdwg.mxu0
      %v5022 = vand.u32 %v405, 4294901760
      %v5023 = vsub.f32 %v405, %v5022
      %5024 = vmatprep.subr.mxu0 %v5023
      %v5025 = vand.u32 %v404, 4294901760
      %v5026 = vsub.f32 %v404, %v5025
      %5027 = vmatpush1.msra.mxu0 %v5026
      %v5028 = vand.u32 %v392, 4294901760
      %v5029 = vsub.f32 %v392, %v5028
      %5030 = vmatprep.subr.mxu0 %v5029
      %v5031 = vand.u32 %v391, 4294901760
      %v5032 = vsub.f32 %v391, %v5031
      %5033 = vmatpush1.msra.mxu0 %v5032
      %v5034 = vand.u32 %v379, 4294901760
      %v5035 = vsub.f32 %v379, %v5034
      %5036 = vmatprep.subr.mxu0 %v5035
      %v5037 = vand.u32 %v378, 4294901760
      %v5038 = vsub.f32 %v378, %v5037
      %5039 = vmatpush1.msra.mxu0 %v5038
      %v5040 = vand.u32 %v366, 4294901760
      %v5041 = vsub.f32 %v366, %v5040
      %5042 = vmatprep.subr.mxu0 %v5041
      %v5043 = vand.u32 %v365, 4294901760
      %v5044 = vsub.f32 %v365, %v5043
      %5045 = vmatpush1.msra.mxu0 %v5044
      %v5046 = vand.u32 %v353, 4294901760
      %v5047 = vsub.f32 %v353, %v5046
      %5048 = vmatprep.subr.mxu0 %v5047
      %v5049 = vand.u32 %v352, 4294901760
      %v5050 = vsub.f32 %v352, %v5049
      %5051 = vmatpush1.msra.mxu0 %v5050
      %v5052 = vand.u32 %v340, 4294901760
      %v5053 = vsub.f32 %v340, %v5052
      %5054 = vmatprep.subr.mxu0 %v5053
      %v5055 = vand.u32 %v339, 4294901760
      %v5056 = vsub.f32 %v339, %v5055
      %5057 = vmatpush1.msra.mxu0 %v5056
      %v5058 = vand.u32 %v327, 4294901760
      %v5059 = vsub.f32 %v327, %v5058
      %5060 = vmatprep.subr.mxu0 %v5059
      %v5061 = vand.u32 %v326, 4294901760
      %v5062 = vsub.f32 %v326, %v5061
      %5063 = vmatpush1.msra.mxu0 %v5062
      %v5064 = vand.u32 %v314, 4294901760
      %v5065 = vsub.f32 %v314, %v5064
      %5066 = vmatprep.subr.mxu0 %v5065
      %v5067 = vand.u32 %v313, 4294901760
      %v5068 = vsub.f32 %v313, %v5067
      %5069 = vmatpush1.msra.mxu0 %v5068
      %v5070 = vand.u32 %v301, 4294901760
      %v5071 = vsub.f32 %v301, %v5070
      %5072 = vmatprep.subr.mxu0 %v5071
      %v5073 = vand.u32 %v300, 4294901760
      %v5074 = vsub.f32 %v300, %v5073
      %5075 = vmatpush1.msra.mxu0 %v5074
      %v5076 = vand.u32 %v288, 4294901760
      %v5077 = vsub.f32 %v288, %v5076
      %5078 = vmatprep.subr.mxu0 %v5077
      %v5079 = vand.u32 %v287, 4294901760
      %v5080 = vsub.f32 %v287, %v5079
      %5081 = vmatpush1.msra.mxu0 %v5080
      %v5082 = vand.u32 %v275, 4294901760
      %v5083 = vsub.f32 %v275, %v5082
      %5084 = vmatprep.subr.mxu0 %v5083
      %v5085 = vand.u32 %v274, 4294901760
      %v5086 = vsub.f32 %v274, %v5085
      %5087 = vmatpush1.msra.mxu0 %v5086
      %v5088 = vand.u32 %v262, 4294901760
      %v5089 = vsub.f32 %v262, %v5088
      %5090 = vmatprep.subr.mxu0 %v5089
      %v5091 = vand.u32 %v261, 4294901760
      %v5092 = vsub.f32 %v261, %v5091
      %5093 = vmatpush1.msra.mxu0 %v5092
      %v5094 = vand.u32 %v249, 4294901760
      %v5095 = vsub.f32 %v249, %v5094
      %5096 = vmatprep.subr.mxu0 %v5095
      %v5097 = vand.u32 %v248, 4294901760
      %v5098 = vsub.f32 %v248, %v5097
      %5099 = vmatpush1.msra.mxu0 %v5098
      %v5100 = vand.u32 %v236, 4294901760
      %v5101 = vsub.f32 %v236, %v5100
      %5102 = vmatprep.subr.mxu0 %v5101
      %v5103 = vand.u32 %v235, 4294901760
      %v5104 = vsub.f32 %v235, %v5103
      %5105 = vmatpush1.msra.mxu0 %v5104
      %v5106 = vand.u32 %v223, 4294901760
      %v5107 = vsub.f32 %v223, %v5106
      %5108 = vmatprep.subr.mxu0 %v5107
      %v5109 = vand.u32 %v222, 4294901760
      %v5110 = vsub.f32 %v222, %v5109
      %5111 = vmatpush1.msra.mxu0 %v5110
      %v5112 = vand.u32 %v210, 4294901760
      %v5113 = vsub.f32 %v210, %v5112
      %5114 = vmatprep.subr.mxu0 %v5113
      %v5115 = vand.u32 %v209, 4294901760
      %v5116 = vsub.f32 %v209, %v5115
      %5117 = vmatpush1.msra.mxu0 %v5116
      %5118 = vmatprep.subr.mxu0 0.0
      %5119 = vmatpush2.msra.mxu0 0.0
      %5120 = vmatprep.subr.mxu0 0.0
      %5121 = vmatpush2.msra.mxu0 0.0
      %5122 = vmatprep.subr.mxu0 0.0
      %5123 = vmatpush2.msra.mxu0 0.0
      %5124 = vmatprep.subr.mxu0 0.0
      %5125 = vmatpush2.msra.mxu0 0.0
      %5126 = vmatprep.subr.mxu0 0.0
      %5127 = vmatpush2.msra.mxu0 0.0
      %5128 = vmatprep.subr.mxu0 0.0
      %5129 = vmatpush2.msra.mxu0 0.0
      %5130 = vmatprep.subr.mxu0 0.0
      %5131 = vmatpush2.msra.mxu0 0.0
      %5132 = vmatprep.subr.mxu0 0.0
      %5133 = vmatpush2.msra.mxu0 0.0
      %5134 = vmatprep.subr.mxu0 0.0
      %5135 = vmatpush2.msra.mxu0 0.0
      %5136 = vmatprep.subr.mxu0 0.0
      %5137 = vmatpush2.msra.mxu0 0.0
      %5138 = vmatprep.subr.mxu0 0.0
      %5139 = vmatpush2.msra.mxu0 0.0
      %5140 = vmatprep.subr.mxu0 0.0
      %5141 = vmatpush2.msra.mxu0 0.0
      %5142 = vmatprep.subr.mxu0 0.0
      %5143 = vmatpush2.msra.mxu0 0.0
      %5144 = vmatprep.subr.mxu0 0.0
      %5145 = vmatpush2.msra.mxu0 0.0
      %5146 = vmatprep.subr.mxu0 0.0
      %5147 = vmatpush2.msra.mxu0 0.0
      %5148 = vmatprep.subr.mxu0 0.0
      %5149 = vmatpush2.msra.mxu0 0.0
      %5150 = vmatprep.mubr.f32.mxu0 0.0
      %v5151 = vand.u32 %v198, 4294901760
      %v5152 = vsub.f32 %v198, %v5151
      %5153 = vmatmul.mubr.f32.gmra.mxu0 %v5152
      %v5154 = vpop.f32.mrf.mxu0
      %v5155 = vadd.f32 %v5018, %v5154
      %v5156 = vpop.f32.mrf.mxu0
      %v5157 = vadd.f32 %v5020, %v5156
      %5158 = vdwg.mxu0
      %v5159 = vand.u32 %v405, 4294901760
      %5160 = vmatprep.subr.mxu0 %v5159
      %v5161 = vand.u32 %v404, 4294901760
      %5162 = vmatpush1.msra.mxu0 %v5161
      %v5163 = vand.u32 %v392, 4294901760
      %5164 = vmatprep.subr.mxu0 %v5163
      %v5165 = vand.u32 %v391, 4294901760
      %5166 = vmatpush1.msra.mxu0 %v5165
      %v5167 = vand.u32 %v379, 4294901760
      %5168 = vmatprep.subr.mxu0 %v5167
      %v5169 = vand.u32 %v378, 4294901760
      %5170 = vmatpush1.msra.mxu0 %v5169
      %v5171 = vand.u32 %v366, 4294901760
      %5172 = vmatprep.subr.mxu0 %v5171
      %v5173 = vand.u32 %v365, 4294901760
      %5174 = vmatpush1.msra.mxu0 %v5173
      %v5175 = vand.u32 %v353, 4294901760
      %5176 = vmatprep.subr.mxu0 %v5175
      %v5177 = vand.u32 %v352, 4294901760
      %5178 = vmatpush1.msra.mxu0 %v5177
      %v5179 = vand.u32 %v340, 4294901760
      %5180 = vmatprep.subr.mxu0 %v5179
      %v5181 = vand.u32 %v339, 4294901760
      %5182 = vmatpush1.msra.mxu0 %v5181
      %v5183 = vand.u32 %v327, 4294901760
      %5184 = vmatprep.subr.mxu0 %v5183
      %v5185 = vand.u32 %v326, 4294901760
      %5186 = vmatpush1.msra.mxu0 %v5185
      %v5187 = vand.u32 %v314, 4294901760
      %5188 = vmatprep.subr.mxu0 %v5187
      %v5189 = vand.u32 %v313, 4294901760
      %5190 = vmatpush1.msra.mxu0 %v5189
      %v5191 = vand.u32 %v301, 4294901760
      %5192 = vmatprep.subr.mxu0 %v5191
      %v5193 = vand.u32 %v300, 4294901760
      %5194 = vmatpush1.msra.mxu0 %v5193
      %v5195 = vand.u32 %v288, 4294901760
      %5196 = vmatprep.subr.mxu0 %v5195
      %v5197 = vand.u32 %v287, 4294901760
      %5198 = vmatpush1.msra.mxu0 %v5197
      %v5199 = vand.u32 %v275, 4294901760
      %5200 = vmatprep.subr.mxu0 %v5199
      %v5201 = vand.u32 %v274, 4294901760
      %5202 = vmatpush1.msra.mxu0 %v5201
      %v5203 = vand.u32 %v262, 4294901760
      %5204 = vmatprep.subr.mxu0 %v5203
      %v5205 = vand.u32 %v261, 4294901760
      %5206 = vmatpush1.msra.mxu0 %v5205
      %v5207 = vand.u32 %v249, 4294901760
      %5208 = vmatprep.subr.mxu0 %v5207
      %v5209 = vand.u32 %v248, 4294901760
      %5210 = vmatpush1.msra.mxu0 %v5209
      %v5211 = vand.u32 %v236, 4294901760
      %5212 = vmatprep.subr.mxu0 %v5211
      %v5213 = vand.u32 %v235, 4294901760
      %5214 = vmatpush1.msra.mxu0 %v5213
      %v5215 = vand.u32 %v223, 4294901760
      %5216 = vmatprep.subr.mxu0 %v5215
      %v5217 = vand.u32 %v222, 4294901760
      %5218 = vmatpush1.msra.mxu0 %v5217
      %v5219 = vand.u32 %v210, 4294901760
      %5220 = vmatprep.subr.mxu0 %v5219
      %v5221 = vand.u32 %v209, 4294901760
      %5222 = vmatpush1.msra.mxu0 %v5221
      %5223 = vmatprep.subr.mxu0 0.0
      %5224 = vmatpush2.msra.mxu0 0.0
      %5225 = vmatprep.subr.mxu0 0.0
      %5226 = vmatpush2.msra.mxu0 0.0
      %5227 = vmatprep.subr.mxu0 0.0
      %5228 = vmatpush2.msra.mxu0 0.0
      %5229 = vmatprep.subr.mxu0 0.0
      %5230 = vmatpush2.msra.mxu0 0.0
      %5231 = vmatprep.subr.mxu0 0.0
      %5232 = vmatpush2.msra.mxu0 0.0
      %5233 = vmatprep.subr.mxu0 0.0
      %5234 = vmatpush2.msra.mxu0 0.0
      %5235 = vmatprep.subr.mxu0 0.0
      %5236 = vmatpush2.msra.mxu0 0.0
      %5237 = vmatprep.subr.mxu0 0.0
      %5238 = vmatpush2.msra.mxu0 0.0
      %5239 = vmatprep.subr.mxu0 0.0
      %5240 = vmatpush2.msra.mxu0 0.0
      %5241 = vmatprep.subr.mxu0 0.0
      %5242 = vmatpush2.msra.mxu0 0.0
      %5243 = vmatprep.subr.mxu0 0.0
      %5244 = vmatpush2.msra.mxu0 0.0
      %5245 = vmatprep.subr.mxu0 0.0
      %5246 = vmatpush2.msra.mxu0 0.0
      %5247 = vmatprep.subr.mxu0 0.0
      %5248 = vmatpush2.msra.mxu0 0.0
      %5249 = vmatprep.subr.mxu0 0.0
      %5250 = vmatpush2.msra.mxu0 0.0
      %5251 = vmatprep.subr.mxu0 0.0
      %5252 = vmatpush2.msra.mxu0 0.0
      %5253 = vmatprep.subr.mxu0 0.0
      %5254 = vmatpush2.msra.mxu0 0.0
      %5255 = vmatprep.mubr.f32.mxu0 0.0
      %v5256 = vand.u32 %v198, 4294901760
      %v5257 = vsub.f32 %v198, %v5256
      %v5258 = vand.u32 %v5257, 4294901760
      %5259 = vmatmul.mubr.f32.gmra.mxu0 %v5258
      %v5260 = vpop.f32.mrf.mxu0
      %v5261 = vadd.f32 %v5155, %v5260
      %v5262 = vpop.f32.mrf.mxu0
      %v5263 = vadd.f32 %v5157, %v5262
      %5264 = vdwg.mxu0
      %v5265 = vand.u32 %v405, 4294901760
      %v5266 = vsub.f32 %v405, %v5265
      %v5267 = vand.u32 %v5266, 4294901760
      %5268 = vmatprep.subr.mxu0 %v5267
      %v5269 = vand.u32 %v404, 4294901760
      %v5270 = vsub.f32 %v404, %v5269
      %v5271 = vand.u32 %v5270, 4294901760
      %5272 = vmatpush1.msra.mxu0 %v5271
      %v5273 = vand.u32 %v392, 4294901760
      %v5274 = vsub.f32 %v392, %v5273
      %v5275 = vand.u32 %v5274, 4294901760
      %5276 = vmatprep.subr.mxu0 %v5275
      %v5277 = vand.u32 %v391, 4294901760
      %v5278 = vsub.f32 %v391, %v5277
      %v5279 = vand.u32 %v5278, 4294901760
      %5280 = vmatpush1.msra.mxu0 %v5279
      %v5281 = vand.u32 %v379, 4294901760
      %v5282 = vsub.f32 %v379, %v5281
      %v5283 = vand.u32 %v5282, 4294901760
      %5284 = vmatprep.subr.mxu0 %v5283
      %v5285 = vand.u32 %v378, 4294901760
      %v5286 = vsub.f32 %v378, %v5285
      %v5287 = vand.u32 %v5286, 4294901760
      %5288 = vmatpush1.msra.mxu0 %v5287
      %v5289 = vand.u32 %v366, 4294901760
      %v5290 = vsub.f32 %v366, %v5289
      %v5291 = vand.u32 %v5290, 4294901760
      %5292 = vmatprep.subr.mxu0 %v5291
      %v5293 = vand.u32 %v365, 4294901760
      %v5294 = vsub.f32 %v365, %v5293
      %v5295 = vand.u32 %v5294, 4294901760
      %5296 = vmatpush1.msra.mxu0 %v5295
      %v5297 = vand.u32 %v353, 4294901760
      %v5298 = vsub.f32 %v353, %v5297
      %v5299 = vand.u32 %v5298, 4294901760
      %5300 = vmatprep.subr.mxu0 %v5299
      %v5301 = vand.u32 %v352, 4294901760
      %v5302 = vsub.f32 %v352, %v5301
      %v5303 = vand.u32 %v5302, 4294901760
      %5304 = vmatpush1.msra.mxu0 %v5303
      %v5305 = vand.u32 %v340, 4294901760
      %v5306 = vsub.f32 %v340, %v5305
      %v5307 = vand.u32 %v5306, 4294901760
      %5308 = vmatprep.subr.mxu0 %v5307
      %v5309 = vand.u32 %v339, 4294901760
      %v5310 = vsub.f32 %v339, %v5309
      %v5311 = vand.u32 %v5310, 4294901760
      %5312 = vmatpush1.msra.mxu0 %v5311
      %v5313 = vand.u32 %v327, 4294901760
      %v5314 = vsub.f32 %v327, %v5313
      %v5315 = vand.u32 %v5314, 4294901760
      %5316 = vmatprep.subr.mxu0 %v5315
      %v5317 = vand.u32 %v326, 4294901760
      %v5318 = vsub.f32 %v326, %v5317
      %v5319 = vand.u32 %v5318, 4294901760
      %5320 = vmatpush1.msra.mxu0 %v5319
      %v5321 = vand.u32 %v314, 4294901760
      %v5322 = vsub.f32 %v314, %v5321
      %v5323 = vand.u32 %v5322, 4294901760
      %5324 = vmatprep.subr.mxu0 %v5323
      %v5325 = vand.u32 %v313, 4294901760
      %v5326 = vsub.f32 %v313, %v5325
      %v5327 = vand.u32 %v5326, 4294901760
      %5328 = vmatpush1.msra.mxu0 %v5327
      %v5329 = vand.u32 %v301, 4294901760
      %v5330 = vsub.f32 %v301, %v5329
      %v5331 = vand.u32 %v5330, 4294901760
      %5332 = vmatprep.subr.mxu0 %v5331
      %v5333 = vand.u32 %v300, 4294901760
      %v5334 = vsub.f32 %v300, %v5333
      %v5335 = vand.u32 %v5334, 4294901760
      %5336 = vmatpush1.msra.mxu0 %v5335
      %v5337 = vand.u32 %v288, 4294901760
      %v5338 = vsub.f32 %v288, %v5337
      %v5339 = vand.u32 %v5338, 4294901760
      %5340 = vmatprep.subr.mxu0 %v5339
      %v5341 = vand.u32 %v287, 4294901760
      %v5342 = vsub.f32 %v287, %v5341
      %v5343 = vand.u32 %v5342, 4294901760
      %5344 = vmatpush1.msra.mxu0 %v5343
      %v5345 = vand.u32 %v275, 4294901760
      %v5346 = vsub.f32 %v275, %v5345
      %v5347 = vand.u32 %v5346, 4294901760
      %5348 = vmatprep.subr.mxu0 %v5347
      %v5349 = vand.u32 %v274, 4294901760
      %v5350 = vsub.f32 %v274, %v5349
      %v5351 = vand.u32 %v5350, 4294901760
      %5352 = vmatpush1.msra.mxu0 %v5351
      %v5353 = vand.u32 %v262, 4294901760
      %v5354 = vsub.f32 %v262, %v5353
      %v5355 = vand.u32 %v5354, 4294901760
      %5356 = vmatprep.subr.mxu0 %v5355
      %v5357 = vand.u32 %v261, 4294901760
      %v5358 = vsub.f32 %v261, %v5357
      %v5359 = vand.u32 %v5358, 4294901760
      %5360 = vmatpush1.msra.mxu0 %v5359
      %v5361 = vand.u32 %v249, 4294901760
      %v5362 = vsub.f32 %v249, %v5361
      %v5363 = vand.u32 %v5362, 4294901760
      %5364 = vmatprep.subr.mxu0 %v5363
      %v5365 = vand.u32 %v248, 4294901760
      %v5366 = vsub.f32 %v248, %v5365
      %v5367 = vand.u32 %v5366, 4294901760
      %5368 = vmatpush1.msra.mxu0 %v5367
      %v5369 = vand.u32 %v236, 4294901760
      %v5370 = vsub.f32 %v236, %v5369
      %v5371 = vand.u32 %v5370, 4294901760
      %5372 = vmatprep.subr.mxu0 %v5371
      %v5373 = vand.u32 %v235, 4294901760
      %v5374 = vsub.f32 %v235, %v5373
      %v5375 = vand.u32 %v5374, 4294901760
      %5376 = vmatpush1.msra.mxu0 %v5375
      %v5377 = vand.u32 %v223, 4294901760
      %v5378 = vsub.f32 %v223, %v5377
      %v5379 = vand.u32 %v5378, 4294901760
      %5380 = vmatprep.subr.mxu0 %v5379
      %v5381 = vand.u32 %v222, 4294901760
      %v5382 = vsub.f32 %v222, %v5381
      %v5383 = vand.u32 %v5382, 4294901760
      %5384 = vmatpush1.msra.mxu0 %v5383
      %v5385 = vand.u32 %v210, 4294901760
      %v5386 = vsub.f32 %v210, %v5385
      %v5387 = vand.u32 %v5386, 4294901760
      %5388 = vmatprep.subr.mxu0 %v5387
      %v5389 = vand.u32 %v209, 4294901760
      %v5390 = vsub.f32 %v209, %v5389
      %v5391 = vand.u32 %v5390, 4294901760
      %5392 = vmatpush1.msra.mxu0 %v5391
      %5393 = vmatprep.subr.mxu0 0.0
      %5394 = vmatpush2.msra.mxu0 0.0
      %5395 = vmatprep.subr.mxu0 0.0
      %5396 = vmatpush2.msra.mxu0 0.0
      %5397 = vmatprep.subr.mxu0 0.0
      %5398 = vmatpush2.msra.mxu0 0.0
      %5399 = vmatprep.subr.mxu0 0.0
      %5400 = vmatpush2.msra.mxu0 0.0
      %5401 = vmatprep.subr.mxu0 0.0
      %5402 = vmatpush2.msra.mxu0 0.0
      %5403 = vmatprep.subr.mxu0 0.0
      %5404 = vmatpush2.msra.mxu0 0.0
      %5405 = vmatprep.subr.mxu0 0.0
      %5406 = vmatpush2.msra.mxu0 0.0
      %5407 = vmatprep.subr.mxu0 0.0
      %5408 = vmatpush2.msra.mxu0 0.0
      %5409 = vmatprep.subr.mxu0 0.0
      %5410 = vmatpush2.msra.mxu0 0.0
      %5411 = vmatprep.subr.mxu0 0.0
      %5412 = vmatpush2.msra.mxu0 0.0
      %5413 = vmatprep.subr.mxu0 0.0
      %5414 = vmatpush2.msra.mxu0 0.0
      %5415 = vmatprep.subr.mxu0 0.0
      %5416 = vmatpush2.msra.mxu0 0.0
      %5417 = vmatprep.subr.mxu0 0.0
      %5418 = vmatpush2.msra.mxu0 0.0
      %5419 = vmatprep.subr.mxu0 0.0
      %5420 = vmatpush2.msra.mxu0 0.0
      %5421 = vmatprep.subr.mxu0 0.0
      %5422 = vmatpush2.msra.mxu0 0.0
      %5423 = vmatprep.subr.mxu0 0.0
      %5424 = vmatpush2.msra.mxu0 0.0
      %5425 = vmatprep.mubr.f32.mxu0 0.0
      %v5426 = vand.u32 %v198, 4294901760
      %5427 = vmatmul.mubr.f32.gmra.mxu0 %v5426
      %v5428 = vpop.f32.mrf.mxu0
      %v5429 = vadd.f32 %v5261, %v5428
      %v5430 = vpop.f32.mrf.mxu0
      %v5431 = vadd.f32 %v5263, %v5430
      %5432 = vdwg.mxu0
      %v5433 = vand.u32 %v405, 4294901760
      %5434 = vmatprep.subr.mxu0 %v5433
      %v5435 = vand.u32 %v404, 4294901760
      %5436 = vmatpush1.msra.mxu0 %v5435
      %v5437 = vand.u32 %v392, 4294901760
      %5438 = vmatprep.subr.mxu0 %v5437
      %v5439 = vand.u32 %v391, 4294901760
      %5440 = vmatpush1.msra.mxu0 %v5439
      %v5441 = vand.u32 %v379, 4294901760
      %5442 = vmatprep.subr.mxu0 %v5441
      %v5443 = vand.u32 %v378, 4294901760
      %5444 = vmatpush1.msra.mxu0 %v5443
      %v5445 = vand.u32 %v366, 4294901760
      %5446 = vmatprep.subr.mxu0 %v5445
      %v5447 = vand.u32 %v365, 4294901760
      %5448 = vmatpush1.msra.mxu0 %v5447
      %v5449 = vand.u32 %v353, 4294901760
      %5450 = vmatprep.subr.mxu0 %v5449
      %v5451 = vand.u32 %v352, 4294901760
      %5452 = vmatpush1.msra.mxu0 %v5451
      %v5453 = vand.u32 %v340, 4294901760
      %5454 = vmatprep.subr.mxu0 %v5453
      %v5455 = vand.u32 %v339, 4294901760
      %5456 = vmatpush1.msra.mxu0 %v5455
      %v5457 = vand.u32 %v327, 4294901760
      %5458 = vmatprep.subr.mxu0 %v5457
      %v5459 = vand.u32 %v326, 4294901760
      %5460 = vmatpush1.msra.mxu0 %v5459
      %v5461 = vand.u32 %v314, 4294901760
      %5462 = vmatprep.subr.mxu0 %v5461
      %v5463 = vand.u32 %v313, 4294901760
      %5464 = vmatpush1.msra.mxu0 %v5463
      %v5465 = vand.u32 %v301, 4294901760
      %5466 = vmatprep.subr.mxu0 %v5465
      %v5467 = vand.u32 %v300, 4294901760
      %5468 = vmatpush1.msra.mxu0 %v5467
      %v5469 = vand.u32 %v288, 4294901760
      %5470 = vmatprep.subr.mxu0 %v5469
      %v5471 = vand.u32 %v287, 4294901760
      %5472 = vmatpush1.msra.mxu0 %v5471
      %v5473 = vand.u32 %v275, 4294901760
      %5474 = vmatprep.subr.mxu0 %v5473
      %v5475 = vand.u32 %v274, 4294901760
      %5476 = vmatpush1.msra.mxu0 %v5475
      %v5477 = vand.u32 %v262, 4294901760
      %5478 = vmatprep.subr.mxu0 %v5477
      %v5479 = vand.u32 %v261, 4294901760
      %5480 = vmatpush1.msra.mxu0 %v5479
      %v5481 = vand.u32 %v249, 4294901760
      %5482 = vmatprep.subr.mxu0 %v5481
      %v5483 = vand.u32 %v248, 4294901760
      %5484 = vmatpush1.msra.mxu0 %v5483
      %v5485 = vand.u32 %v236, 4294901760
      %5486 = vmatprep.subr.mxu0 %v5485
      %v5487 = vand.u32 %v235, 4294901760
      %5488 = vmatpush1.msra.mxu0 %v5487
      %v5489 = vand.u32 %v223, 4294901760
      %5490 = vmatprep.subr.mxu0 %v5489
      %v5491 = vand.u32 %v222, 4294901760
      %5492 = vmatpush1.msra.mxu0 %v5491
      %v5493 = vand.u32 %v210, 4294901760
      %5494 = vmatprep.subr.mxu0 %v5493
      %v5495 = vand.u32 %v209, 4294901760
      %5496 = vmatpush1.msra.mxu0 %v5495
      %5497 = vmatprep.subr.mxu0 0.0
      %5498 = vmatpush2.msra.mxu0 0.0
      %5499 = vmatprep.subr.mxu0 0.0
      %5500 = vmatpush2.msra.mxu0 0.0
      %5501 = vmatprep.subr.mxu0 0.0
      %5502 = vmatpush2.msra.mxu0 0.0
      %5503 = vmatprep.subr.mxu0 0.0
      %5504 = vmatpush2.msra.mxu0 0.0
      %5505 = vmatprep.subr.mxu0 0.0
      %5506 = vmatpush2.msra.mxu0 0.0
      %5507 = vmatprep.subr.mxu0 0.0
      %5508 = vmatpush2.msra.mxu0 0.0
      %5509 = vmatprep.subr.mxu0 0.0
      %5510 = vmatpush2.msra.mxu0 0.0
      %5511 = vmatprep.subr.mxu0 0.0
      %5512 = vmatpush2.msra.mxu0 0.0
      %5513 = vmatprep.subr.mxu0 0.0
      %5514 = vmatpush2.msra.mxu0 0.0
      %5515 = vmatprep.subr.mxu0 0.0
      %5516 = vmatpush2.msra.mxu0 0.0
      %5517 = vmatprep.subr.mxu0 0.0
      %5518 = vmatpush2.msra.mxu0 0.0
      %5519 = vmatprep.subr.mxu0 0.0
      %5520 = vmatpush2.msra.mxu0 0.0
      %5521 = vmatprep.subr.mxu0 0.0
      %5522 = vmatpush2.msra.mxu0 0.0
      %5523 = vmatprep.subr.mxu0 0.0
      %5524 = vmatpush2.msra.mxu0 0.0
      %5525 = vmatprep.subr.mxu0 0.0
      %5526 = vmatpush2.msra.mxu0 0.0
      %5527 = vmatprep.subr.mxu0 0.0
      %5528 = vmatpush2.msra.mxu0 0.0
      %5529 = vmatprep.mubr.f32.mxu0 0.0
      %v5530 = vand.u32 %v198, 4294901760
      %5531 = vmatmul.mubr.f32.gmra.mxu0 %v5530
      %v5532 = vpop.f32.mrf.mxu0
      %v5533 = vadd.f32 %v5429, %v5532
      %v5534 = vpop.f32.mrf.mxu0
      %v5535 = vadd.f32 %v5431, %v5534
      %5536 = vdwg.mxu0
      %5537 = vmatprep.subr.mxu0 0.0
      %v5538 = vand.u32 %v406, 4294901760
      %5539 = vmatpush1.msra.mxu0 %v5538
      %5540 = vmatprep.subr.mxu0 0.0
      %v5541 = vand.u32 %v393, 4294901760
      %5542 = vmatpush1.msra.mxu0 %v5541
      %5543 = vmatprep.subr.mxu0 0.0
      %v5544 = vand.u32 %v380, 4294901760
      %5545 = vmatpush1.msra.mxu0 %v5544
      %5546 = vmatprep.subr.mxu0 0.0
      %v5547 = vand.u32 %v367, 4294901760
      %5548 = vmatpush1.msra.mxu0 %v5547
      %5549 = vmatprep.subr.mxu0 0.0
      %v5550 = vand.u32 %v354, 4294901760
      %5551 = vmatpush1.msra.mxu0 %v5550
      %5552 = vmatprep.subr.mxu0 0.0
      %v5553 = vand.u32 %v341, 4294901760
      %5554 = vmatpush1.msra.mxu0 %v5553
      %5555 = vmatprep.subr.mxu0 0.0
      %v5556 = vand.u32 %v328, 4294901760
      %5557 = vmatpush1.msra.mxu0 %v5556
      %5558 = vmatprep.subr.mxu0 0.0
      %v5559 = vand.u32 %v315, 4294901760
      %5560 = vmatpush1.msra.mxu0 %v5559
      %5561 = vmatprep.subr.mxu0 0.0
      %v5562 = vand.u32 %v302, 4294901760
      %5563 = vmatpush1.msra.mxu0 %v5562
      %5564 = vmatprep.subr.mxu0 0.0
      %v5565 = vand.u32 %v289, 4294901760
      %5566 = vmatpush1.msra.mxu0 %v5565
      %5567 = vmatprep.subr.mxu0 0.0
      %v5568 = vand.u32 %v276, 4294901760
      %5569 = vmatpush1.msra.mxu0 %v5568
      %5570 = vmatprep.subr.mxu0 0.0
      %v5571 = vand.u32 %v263, 4294901760
      %5572 = vmatpush1.msra.mxu0 %v5571
      %5573 = vmatprep.subr.mxu0 0.0
      %v5574 = vand.u32 %v250, 4294901760
      %5575 = vmatpush1.msra.mxu0 %v5574
      %5576 = vmatprep.subr.mxu0 0.0
      %v5577 = vand.u32 %v237, 4294901760
      %5578 = vmatpush1.msra.mxu0 %v5577
      %5579 = vmatprep.subr.mxu0 0.0
      %v5580 = vand.u32 %v224, 4294901760
      %5581 = vmatpush1.msra.mxu0 %v5580
      %5582 = vmatprep.subr.mxu0 0.0
      %v5583 = vand.u32 %v211, 4294901760
      %5584 = vmatpush1.msra.mxu0 %v5583
      %5585 = vmatprep.subr.mxu0 0.0
      %5586 = vmatpush2.msra.mxu0 0.0
      %5587 = vmatprep.subr.mxu0 0.0
      %5588 = vmatpush2.msra.mxu0 0.0
      %5589 = vmatprep.subr.mxu0 0.0
      %5590 = vmatpush2.msra.mxu0 0.0
      %5591 = vmatprep.subr.mxu0 0.0
      %5592 = vmatpush2.msra.mxu0 0.0
      %5593 = vmatprep.subr.mxu0 0.0
      %5594 = vmatpush2.msra.mxu0 0.0
      %5595 = vmatprep.subr.mxu0 0.0
      %5596 = vmatpush2.msra.mxu0 0.0
      %5597 = vmatprep.subr.mxu0 0.0
      %5598 = vmatpush2.msra.mxu0 0.0
      %5599 = vmatprep.subr.mxu0 0.0
      %5600 = vmatpush2.msra.mxu0 0.0
      %5601 = vmatprep.subr.mxu0 0.0
      %5602 = vmatpush2.msra.mxu0 0.0
      %5603 = vmatprep.subr.mxu0 0.0
      %5604 = vmatpush2.msra.mxu0 0.0
      %5605 = vmatprep.subr.mxu0 0.0
      %5606 = vmatpush2.msra.mxu0 0.0
      %5607 = vmatprep.subr.mxu0 0.0
      %5608 = vmatpush2.msra.mxu0 0.0
      %5609 = vmatprep.subr.mxu0 0.0
      %5610 = vmatpush2.msra.mxu0 0.0
      %5611 = vmatprep.subr.mxu0 0.0
      %5612 = vmatpush2.msra.mxu0 0.0
      %5613 = vmatprep.subr.mxu0 0.0
      %5614 = vmatpush2.msra.mxu0 0.0
      %5615 = vmatprep.subr.mxu0 0.0
      %5616 = vmatpush2.msra.mxu0 0.0
      %5617 = vmatprep.mubr.f32.mxu0 0.0
      %v5618 = vand.u32 %v198, 4294901760
      %v5619 = vsub.f32 %v198, %v5618
      %v5620 = vand.u32 %v5619, 4294901760
      %v5621 = vsub.f32 %v5619, %v5620
      %v5622 = vand.u32 %v5621, 4294901760
      %5623 = vmatmul.mubr.f32.gmra.mxu0 %v5622
      %v5624 = vpop.f32.mrf.mxu0
      %v5625 = vadd.f32 0.0, %v5624
      %v5626 = vpop.f32.mrf.mxu0
      %5627 = vdwg.mxu0
      %5628 = vmatprep.subr.mxu0 0.0
      %v5629 = vand.u32 %v406, 4294901760
      %v5630 = vsub.f32 %v406, %v5629
      %v5631 = vand.u32 %v5630, 4294901760
      %v5632 = vsub.f32 %v5630, %v5631
      %v5633 = vand.u32 %v5632, 4294901760
      %5634 = vmatpush1.msra.mxu0 %v5633
      %5635 = vmatprep.subr.mxu0 0.0
      %v5636 = vand.u32 %v393, 4294901760
      %v5637 = vsub.f32 %v393, %v5636
      %v5638 = vand.u32 %v5637, 4294901760
      %v5639 = vsub.f32 %v5637, %v5638
      %v5640 = vand.u32 %v5639, 4294901760
      %5641 = vmatpush1.msra.mxu0 %v5640
      %5642 = vmatprep.subr.mxu0 0.0
      %v5643 = vand.u32 %v380, 4294901760
      %v5644 = vsub.f32 %v380, %v5643
      %v5645 = vand.u32 %v5644, 4294901760
      %v5646 = vsub.f32 %v5644, %v5645
      %v5647 = vand.u32 %v5646, 4294901760
      %5648 = vmatpush1.msra.mxu0 %v5647
      %5649 = vmatprep.subr.mxu0 0.0
      %v5650 = vand.u32 %v367, 4294901760
      %v5651 = vsub.f32 %v367, %v5650
      %v5652 = vand.u32 %v5651, 4294901760
      %v5653 = vsub.f32 %v5651, %v5652
      %v5654 = vand.u32 %v5653, 4294901760
      %5655 = vmatpush1.msra.mxu0 %v5654
      %5656 = vmatprep.subr.mxu0 0.0
      %v5657 = vand.u32 %v354, 4294901760
      %v5658 = vsub.f32 %v354, %v5657
      %v5659 = vand.u32 %v5658, 4294901760
      %v5660 = vsub.f32 %v5658, %v5659
      %v5661 = vand.u32 %v5660, 4294901760
      %5662 = vmatpush1.msra.mxu0 %v5661
      %5663 = vmatprep.subr.mxu0 0.0
      %v5664 = vand.u32 %v341, 4294901760
      %v5665 = vsub.f32 %v341, %v5664
      %v5666 = vand.u32 %v5665, 4294901760
      %v5667 = vsub.f32 %v5665, %v5666
      %v5668 = vand.u32 %v5667, 4294901760
      %5669 = vmatpush1.msra.mxu0 %v5668
      %5670 = vmatprep.subr.mxu0 0.0
      %v5671 = vand.u32 %v328, 4294901760
      %v5672 = vsub.f32 %v328, %v5671
      %v5673 = vand.u32 %v5672, 4294901760
      %v5674 = vsub.f32 %v5672, %v5673
      %v5675 = vand.u32 %v5674, 4294901760
      %5676 = vmatpush1.msra.mxu0 %v5675
      %5677 = vmatprep.subr.mxu0 0.0
      %v5678 = vand.u32 %v315, 4294901760
      %v5679 = vsub.f32 %v315, %v5678
      %v5680 = vand.u32 %v5679, 4294901760
      %v5681 = vsub.f32 %v5679, %v5680
      %v5682 = vand.u32 %v5681, 4294901760
      %5683 = vmatpush1.msra.mxu0 %v5682
      %5684 = vmatprep.subr.mxu0 0.0
      %v5685 = vand.u32 %v302, 4294901760
      %v5686 = vsub.f32 %v302, %v5685
      %v5687 = vand.u32 %v5686, 4294901760
      %v5688 = vsub.f32 %v5686, %v5687
      %v5689 = vand.u32 %v5688, 4294901760
      %5690 = vmatpush1.msra.mxu0 %v5689
      %5691 = vmatprep.subr.mxu0 0.0
      %v5692 = vand.u32 %v289, 4294901760
      %v5693 = vsub.f32 %v289, %v5692
      %v5694 = vand.u32 %v5693, 4294901760
      %v5695 = vsub.f32 %v5693, %v5694
      %v5696 = vand.u32 %v5695, 4294901760
      %5697 = vmatpush1.msra.mxu0 %v5696
      %5698 = vmatprep.subr.mxu0 0.0
      %v5699 = vand.u32 %v276, 4294901760
      %v5700 = vsub.f32 %v276, %v5699
      %v5701 = vand.u32 %v5700, 4294901760
      %v5702 = vsub.f32 %v5700, %v5701
      %v5703 = vand.u32 %v5702, 4294901760
      %5704 = vmatpush1.msra.mxu0 %v5703
      %5705 = vmatprep.subr.mxu0 0.0
      %v5706 = vand.u32 %v263, 4294901760
      %v5707 = vsub.f32 %v263, %v5706
      %v5708 = vand.u32 %v5707, 4294901760
      %v5709 = vsub.f32 %v5707, %v5708
      %v5710 = vand.u32 %v5709, 4294901760
      %5711 = vmatpush1.msra.mxu0 %v5710
      %5712 = vmatprep.subr.mxu0 0.0
      %v5713 = vand.u32 %v250, 4294901760
      %v5714 = vsub.f32 %v250, %v5713
      %v5715 = vand.u32 %v5714, 4294901760
      %v5716 = vsub.f32 %v5714, %v5715
      %v5717 = vand.u32 %v5716, 4294901760
      %5718 = vmatpush1.msra.mxu0 %v5717
      %5719 = vmatprep.subr.mxu0 0.0
      %v5720 = vand.u32 %v237, 4294901760
      %v5721 = vsub.f32 %v237, %v5720
      %v5722 = vand.u32 %v5721, 4294901760
      %v5723 = vsub.f32 %v5721, %v5722
      %v5724 = vand.u32 %v5723, 4294901760
      %5725 = vmatpush1.msra.mxu0 %v5724
      %5726 = vmatprep.subr.mxu0 0.0
      %v5727 = vand.u32 %v224, 4294901760
      %v5728 = vsub.f32 %v224, %v5727
      %v5729 = vand.u32 %v5728, 4294901760
      %v5730 = vsub.f32 %v5728, %v5729
      %v5731 = vand.u32 %v5730, 4294901760
      %5732 = vmatpush1.msra.mxu0 %v5731
      %5733 = vmatprep.subr.mxu0 0.0
      %v5734 = vand.u32 %v211, 4294901760
      %v5735 = vsub.f32 %v211, %v5734
      %v5736 = vand.u32 %v5735, 4294901760
      %v5737 = vsub.f32 %v5735, %v5736
      %v5738 = vand.u32 %v5737, 4294901760
      %5739 = vmatpush1.msra.mxu0 %v5738
      %5740 = vmatprep.subr.mxu0 0.0
      %5741 = vmatpush2.msra.mxu0 0.0
      %5742 = vmatprep.subr.mxu0 0.0
      %5743 = vmatpush2.msra.mxu0 0.0
      %5744 = vmatprep.subr.mxu0 0.0
      %5745 = vmatpush2.msra.mxu0 0.0
      %5746 = vmatprep.subr.mxu0 0.0
      %5747 = vmatpush2.msra.mxu0 0.0
      %5748 = vmatprep.subr.mxu0 0.0
      %5749 = vmatpush2.msra.mxu0 0.0
      %5750 = vmatprep.subr.mxu0 0.0
      %5751 = vmatpush2.msra.mxu0 0.0
      %5752 = vmatprep.subr.mxu0 0.0
      %5753 = vmatpush2.msra.mxu0 0.0
      %5754 = vmatprep.subr.mxu0 0.0
      %5755 = vmatpush2.msra.mxu0 0.0
      %5756 = vmatprep.subr.mxu0 0.0
      %5757 = vmatpush2.msra.mxu0 0.0
      %5758 = vmatprep.subr.mxu0 0.0
      %5759 = vmatpush2.msra.mxu0 0.0
      %5760 = vmatprep.subr.mxu0 0.0
      %5761 = vmatpush2.msra.mxu0 0.0
      %5762 = vmatprep.subr.mxu0 0.0
      %5763 = vmatpush2.msra.mxu0 0.0
      %5764 = vmatprep.subr.mxu0 0.0
      %5765 = vmatpush2.msra.mxu0 0.0
      %5766 = vmatprep.subr.mxu0 0.0
      %5767 = vmatpush2.msra.mxu0 0.0
      %5768 = vmatprep.subr.mxu0 0.0
      %5769 = vmatpush2.msra.mxu0 0.0
      %5770 = vmatprep.subr.mxu0 0.0
      %5771 = vmatpush2.msra.mxu0 0.0
      %5772 = vmatprep.mubr.f32.mxu0 0.0
      %v5773 = vand.u32 %v198, 4294901760
      %5774 = vmatmul.mubr.f32.gmra.mxu0 %v5773
      %v5775 = vpop.f32.mrf.mxu0
      %v5776 = vadd.f32 %v5625, %v5775
      %v5777 = vpop.f32.mrf.mxu0
      %5778 = vdwg.mxu0
      %5779 = vmatprep.subr.mxu0 0.0
      %v5780 = vand.u32 %v406, 4294901760
      %v5781 = vsub.f32 %v406, %v5780
      %5782 = vmatpush1.msra.mxu0 %v5781
      %5783 = vmatprep.subr.mxu0 0.0
      %v5784 = vand.u32 %v393, 4294901760
      %v5785 = vsub.f32 %v393, %v5784
      %5786 = vmatpush1.msra.mxu0 %v5785
      %5787 = vmatprep.subr.mxu0 0.0
      %v5788 = vand.u32 %v380, 4294901760
      %v5789 = vsub.f32 %v380, %v5788
      %5790 = vmatpush1.msra.mxu0 %v5789
      %5791 = vmatprep.subr.mxu0 0.0
      %v5792 = vand.u32 %v367, 4294901760
      %v5793 = vsub.f32 %v367, %v5792
      %5794 = vmatpush1.msra.mxu0 %v5793
      %5795 = vmatprep.subr.mxu0 0.0
      %v5796 = vand.u32 %v354, 4294901760
      %v5797 = vsub.f32 %v354, %v5796
      %5798 = vmatpush1.msra.mxu0 %v5797
      %5799 = vmatprep.subr.mxu0 0.0
      %v5800 = vand.u32 %v341, 4294901760
      %v5801 = vsub.f32 %v341, %v5800
      %5802 = vmatpush1.msra.mxu0 %v5801
      %5803 = vmatprep.subr.mxu0 0.0
      %v5804 = vand.u32 %v328, 4294901760
      %v5805 = vsub.f32 %v328, %v5804
      %5806 = vmatpush1.msra.mxu0 %v5805
      %5807 = vmatprep.subr.mxu0 0.0
      %v5808 = vand.u32 %v315, 4294901760
      %v5809 = vsub.f32 %v315, %v5808
      %5810 = vmatpush1.msra.mxu0 %v5809
      %5811 = vmatprep.subr.mxu0 0.0
      %v5812 = vand.u32 %v302, 4294901760
      %v5813 = vsub.f32 %v302, %v5812
      %5814 = vmatpush1.msra.mxu0 %v5813
      %5815 = vmatprep.subr.mxu0 0.0
      %v5816 = vand.u32 %v289, 4294901760
      %v5817 = vsub.f32 %v289, %v5816
      %5818 = vmatpush1.msra.mxu0 %v5817
      %5819 = vmatprep.subr.mxu0 0.0
      %v5820 = vand.u32 %v276, 4294901760
      %v5821 = vsub.f32 %v276, %v5820
      %5822 = vmatpush1.msra.mxu0 %v5821
      %5823 = vmatprep.subr.mxu0 0.0
      %v5824 = vand.u32 %v263, 4294901760
      %v5825 = vsub.f32 %v263, %v5824
      %5826 = vmatpush1.msra.mxu0 %v5825
      %5827 = vmatprep.subr.mxu0 0.0
      %v5828 = vand.u32 %v250, 4294901760
      %v5829 = vsub.f32 %v250, %v5828
      %5830 = vmatpush1.msra.mxu0 %v5829
      %5831 = vmatprep.subr.mxu0 0.0
      %v5832 = vand.u32 %v237, 4294901760
      %v5833 = vsub.f32 %v237, %v5832
      %5834 = vmatpush1.msra.mxu0 %v5833
      %5835 = vmatprep.subr.mxu0 0.0
      %v5836 = vand.u32 %v224, 4294901760
      %v5837 = vsub.f32 %v224, %v5836
      %5838 = vmatpush1.msra.mxu0 %v5837
      %5839 = vmatprep.subr.mxu0 0.0
      %v5840 = vand.u32 %v211, 4294901760
      %v5841 = vsub.f32 %v211, %v5840
      %5842 = vmatpush1.msra.mxu0 %v5841
      %5843 = vmatprep.subr.mxu0 0.0
      %5844 = vmatpush2.msra.mxu0 0.0
      %5845 = vmatprep.subr.mxu0 0.0
      %5846 = vmatpush2.msra.mxu0 0.0
      %5847 = vmatprep.subr.mxu0 0.0
      %5848 = vmatpush2.msra.mxu0 0.0
      %5849 = vmatprep.subr.mxu0 0.0
      %5850 = vmatpush2.msra.mxu0 0.0
      %5851 = vmatprep.subr.mxu0 0.0
      %5852 = vmatpush2.msra.mxu0 0.0
      %5853 = vmatprep.subr.mxu0 0.0
      %5854 = vmatpush2.msra.mxu0 0.0
      %5855 = vmatprep.subr.mxu0 0.0
      %5856 = vmatpush2.msra.mxu0 0.0
      %5857 = vmatprep.subr.mxu0 0.0
      %5858 = vmatpush2.msra.mxu0 0.0
      %5859 = vmatprep.subr.mxu0 0.0
      %5860 = vmatpush2.msra.mxu0 0.0
      %5861 = vmatprep.subr.mxu0 0.0
      %5862 = vmatpush2.msra.mxu0 0.0
      %5863 = vmatprep.subr.mxu0 0.0
      %5864 = vmatpush2.msra.mxu0 0.0
      %5865 = vmatprep.subr.mxu0 0.0
      %5866 = vmatpush2.msra.mxu0 0.0
      %5867 = vmatprep.subr.mxu0 0.0
      %5868 = vmatpush2.msra.mxu0 0.0
      %5869 = vmatprep.subr.mxu0 0.0
      %5870 = vmatpush2.msra.mxu0 0.0
      %5871 = vmatprep.subr.mxu0 0.0
      %5872 = vmatpush2.msra.mxu0 0.0
      %5873 = vmatprep.subr.mxu0 0.0
      %5874 = vmatpush2.msra.mxu0 0.0
      %5875 = vmatprep.mubr.f32.mxu0 0.0
      %v5876 = vand.u32 %v198, 4294901760
      %v5877 = vsub.f32 %v198, %v5876
      %5878 = vmatmul.mubr.f32.gmra.mxu0 %v5877
      %v5879 = vpop.f32.mrf.mxu0
      %v5880 = vadd.f32 %v5776, %v5879
      %v5881 = vpop.f32.mrf.mxu0
      %5882 = vdwg.mxu0
      %5883 = vmatprep.subr.mxu0 0.0
      %v5884 = vand.u32 %v406, 4294901760
      %5885 = vmatpush1.msra.mxu0 %v5884
      %5886 = vmatprep.subr.mxu0 0.0
      %v5887 = vand.u32 %v393, 4294901760
      %5888 = vmatpush1.msra.mxu0 %v5887
      %5889 = vmatprep.subr.mxu0 0.0
      %v5890 = vand.u32 %v380, 4294901760
      %5891 = vmatpush1.msra.mxu0 %v5890
      %5892 = vmatprep.subr.mxu0 0.0
      %v5893 = vand.u32 %v367, 4294901760
      %5894 = vmatpush1.msra.mxu0 %v5893
      %5895 = vmatprep.subr.mxu0 0.0
      %v5896 = vand.u32 %v354, 4294901760
      %5897 = vmatpush1.msra.mxu0 %v5896
      %5898 = vmatprep.subr.mxu0 0.0
      %v5899 = vand.u32 %v341, 4294901760
      %5900 = vmatpush1.msra.mxu0 %v5899
      %5901 = vmatprep.subr.mxu0 0.0
      %v5902 = vand.u32 %v328, 4294901760
      %5903 = vmatpush1.msra.mxu0 %v5902
      %5904 = vmatprep.subr.mxu0 0.0
      %v5905 = vand.u32 %v315, 4294901760
      %5906 = vmatpush1.msra.mxu0 %v5905
      %5907 = vmatprep.subr.mxu0 0.0
      %v5908 = vand.u32 %v302, 4294901760
      %5909 = vmatpush1.msra.mxu0 %v5908
      %5910 = vmatprep.subr.mxu0 0.0
      %v5911 = vand.u32 %v289, 4294901760
      %5912 = vmatpush1.msra.mxu0 %v5911
      %5913 = vmatprep.subr.mxu0 0.0
      %v5914 = vand.u32 %v276, 4294901760
      %5915 = vmatpush1.msra.mxu0 %v5914
      %5916 = vmatprep.subr.mxu0 0.0
      %v5917 = vand.u32 %v263, 4294901760
      %5918 = vmatpush1.msra.mxu0 %v5917
      %5919 = vmatprep.subr.mxu0 0.0
      %v5920 = vand.u32 %v250, 4294901760
      %5921 = vmatpush1.msra.mxu0 %v5920
      %5922 = vmatprep.subr.mxu0 0.0
      %v5923 = vand.u32 %v237, 4294901760
      %5924 = vmatpush1.msra.mxu0 %v5923
      %5925 = vmatprep.subr.mxu0 0.0
      %v5926 = vand.u32 %v224, 4294901760
      %5927 = vmatpush1.msra.mxu0 %v5926
      %5928 = vmatprep.subr.mxu0 0.0
      %v5929 = vand.u32 %v211, 4294901760
      %5930 = vmatpush1.msra.mxu0 %v5929
      %5931 = vmatprep.subr.mxu0 0.0
      %5932 = vmatpush2.msra.mxu0 0.0
      %5933 = vmatprep.subr.mxu0 0.0
      %5934 = vmatpush2.msra.mxu0 0.0
      %5935 = vmatprep.subr.mxu0 0.0
      %5936 = vmatpush2.msra.mxu0 0.0
      %5937 = vmatprep.subr.mxu0 0.0
      %5938 = vmatpush2.msra.mxu0 0.0
      %5939 = vmatprep.subr.mxu0 0.0
      %5940 = vmatpush2.msra.mxu0 0.0
      %5941 = vmatprep.subr.mxu0 0.0
      %5942 = vmatpush2.msra.mxu0 0.0
      %5943 = vmatprep.subr.mxu0 0.0
      %5944 = vmatpush2.msra.mxu0 0.0
      %5945 = vmatprep.subr.mxu0 0.0
      %5946 = vmatpush2.msra.mxu0 0.0
      %5947 = vmatprep.subr.mxu0 0.0
      %5948 = vmatpush2.msra.mxu0 0.0
      %5949 = vmatprep.subr.mxu0 0.0
      %5950 = vmatpush2.msra.mxu0 0.0
      %5951 = vmatprep.subr.mxu0 0.0
      %5952 = vmatpush2.msra.mxu0 0.0
      %5953 = vmatprep.subr.mxu0 0.0
      %5954 = vmatpush2.msra.mxu0 0.0
      %5955 = vmatprep.subr.mxu0 0.0
      %5956 = vmatpush2.msra.mxu0 0.0
      %5957 = vmatprep.subr.mxu0 0.0
      %5958 = vmatpush2.msra.mxu0 0.0
      %5959 = vmatprep.subr.mxu0 0.0
      %5960 = vmatpush2.msra.mxu0 0.0
      %5961 = vmatprep.subr.mxu0 0.0
      %5962 = vmatpush2.msra.mxu0 0.0
      %5963 = vmatprep.mubr.f32.mxu0 0.0
      %v5964 = vand.u32 %v198, 4294901760
      %v5965 = vsub.f32 %v198, %v5964
      %v5966 = vand.u32 %v5965, 4294901760
      %5967 = vmatmul.mubr.f32.gmra.mxu0 %v5966
      %v5968 = vpop.f32.mrf.mxu0
      %v5969 = vadd.f32 %v5880, %v5968
      %v5970 = vpop.f32.mrf.mxu0
      %5971 = vdwg.mxu0
      %5972 = vmatprep.subr.mxu0 0.0
      %v5973 = vand.u32 %v406, 4294901760
      %v5974 = vsub.f32 %v406, %v5973
      %v5975 = vand.u32 %v5974, 4294901760
      %5976 = vmatpush1.msra.mxu0 %v5975
      %5977 = vmatprep.subr.mxu0 0.0
      %v5978 = vand.u32 %v393, 4294901760
      %v5979 = vsub.f32 %v393, %v5978
      %v5980 = vand.u32 %v5979, 4294901760
      %5981 = vmatpush1.msra.mxu0 %v5980
      %5982 = vmatprep.subr.mxu0 0.0
      %v5983 = vand.u32 %v380, 4294901760
      %v5984 = vsub.f32 %v380, %v5983
      %v5985 = vand.u32 %v5984, 4294901760
      %5986 = vmatpush1.msra.mxu0 %v5985
      %5987 = vmatprep.subr.mxu0 0.0
      %v5988 = vand.u32 %v367, 4294901760
      %v5989 = vsub.f32 %v367, %v5988
      %v5990 = vand.u32 %v5989, 4294901760
      %5991 = vmatpush1.msra.mxu0 %v5990
      %5992 = vmatprep.subr.mxu0 0.0
      %v5993 = vand.u32 %v354, 4294901760
      %v5994 = vsub.f32 %v354, %v5993
      %v5995 = vand.u32 %v5994, 4294901760
      %5996 = vmatpush1.msra.mxu0 %v5995
      %5997 = vmatprep.subr.mxu0 0.0
      %v5998 = vand.u32 %v341, 4294901760
      %v5999 = vsub.f32 %v341, %v5998
      %v6000 = vand.u32 %v5999, 4294901760
      %6001 = vmatpush1.msra.mxu0 %v6000
      %6002 = vmatprep.subr.mxu0 0.0
      %v6003 = vand.u32 %v328, 4294901760
      %v6004 = vsub.f32 %v328, %v6003
      %v6005 = vand.u32 %v6004, 4294901760
      %6006 = vmatpush1.msra.mxu0 %v6005
      %6007 = vmatprep.subr.mxu0 0.0
      %v6008 = vand.u32 %v315, 4294901760
      %v6009 = vsub.f32 %v315, %v6008
      %v6010 = vand.u32 %v6009, 4294901760
      %6011 = vmatpush1.msra.mxu0 %v6010
      %6012 = vmatprep.subr.mxu0 0.0
      %v6013 = vand.u32 %v302, 4294901760
      %v6014 = vsub.f32 %v302, %v6013
      %v6015 = vand.u32 %v6014, 4294901760
      %6016 = vmatpush1.msra.mxu0 %v6015
      %6017 = vmatprep.subr.mxu0 0.0
      %v6018 = vand.u32 %v289, 4294901760
      %v6019 = vsub.f32 %v289, %v6018
      %v6020 = vand.u32 %v6019, 4294901760
      %6021 = vmatpush1.msra.mxu0 %v6020
      %6022 = vmatprep.subr.mxu0 0.0
      %v6023 = vand.u32 %v276, 4294901760
      %v6024 = vsub.f32 %v276, %v6023
      %v6025 = vand.u32 %v6024, 4294901760
      %6026 = vmatpush1.msra.mxu0 %v6025
      %6027 = vmatprep.subr.mxu0 0.0
      %v6028 = vand.u32 %v263, 4294901760
      %v6029 = vsub.f32 %v263, %v6028
      %v6030 = vand.u32 %v6029, 4294901760
      %6031 = vmatpush1.msra.mxu0 %v6030
      %6032 = vmatprep.subr.mxu0 0.0
      %v6033 = vand.u32 %v250, 4294901760
      %v6034 = vsub.f32 %v250, %v6033
      %v6035 = vand.u32 %v6034, 4294901760
      %6036 = vmatpush1.msra.mxu0 %v6035
      %6037 = vmatprep.subr.mxu0 0.0
      %v6038 = vand.u32 %v237, 4294901760
      %v6039 = vsub.f32 %v237, %v6038
      %v6040 = vand.u32 %v6039, 4294901760
      %6041 = vmatpush1.msra.mxu0 %v6040
      %6042 = vmatprep.subr.mxu0 0.0
      %v6043 = vand.u32 %v224, 4294901760
      %v6044 = vsub.f32 %v224, %v6043
      %v6045 = vand.u32 %v6044, 4294901760
      %6046 = vmatpush1.msra.mxu0 %v6045
      %6047 = vmatprep.subr.mxu0 0.0
      %v6048 = vand.u32 %v211, 4294901760
      %v6049 = vsub.f32 %v211, %v6048
      %v6050 = vand.u32 %v6049, 4294901760
      %6051 = vmatpush1.msra.mxu0 %v6050
      %6052 = vmatprep.subr.mxu0 0.0
      %6053 = vmatpush2.msra.mxu0 0.0
      %6054 = vmatprep.subr.mxu0 0.0
      %6055 = vmatpush2.msra.mxu0 0.0
      %6056 = vmatprep.subr.mxu0 0.0
      %6057 = vmatpush2.msra.mxu0 0.0
      %6058 = vmatprep.subr.mxu0 0.0
      %6059 = vmatpush2.msra.mxu0 0.0
      %6060 = vmatprep.subr.mxu0 0.0
      %6061 = vmatpush2.msra.mxu0 0.0
      %6062 = vmatprep.subr.mxu0 0.0
      %6063 = vmatpush2.msra.mxu0 0.0
      %6064 = vmatprep.subr.mxu0 0.0
      %6065 = vmatpush2.msra.mxu0 0.0
      %6066 = vmatprep.subr.mxu0 0.0
      %6067 = vmatpush2.msra.mxu0 0.0
      %6068 = vmatprep.subr.mxu0 0.0
      %6069 = vmatpush2.msra.mxu0 0.0
      %6070 = vmatprep.subr.mxu0 0.0
      %6071 = vmatpush2.msra.mxu0 0.0
      %6072 = vmatprep.subr.mxu0 0.0
      %6073 = vmatpush2.msra.mxu0 0.0
      %6074 = vmatprep.subr.mxu0 0.0
      %6075 = vmatpush2.msra.mxu0 0.0
      %6076 = vmatprep.subr.mxu0 0.0
      %6077 = vmatpush2.msra.mxu0 0.0
      %6078 = vmatprep.subr.mxu0 0.0
      %6079 = vmatpush2.msra.mxu0 0.0
      %6080 = vmatprep.subr.mxu0 0.0
      %6081 = vmatpush2.msra.mxu0 0.0
      %6082 = vmatprep.subr.mxu0 0.0
      %6083 = vmatpush2.msra.mxu0 0.0
      %6084 = vmatprep.mubr.f32.mxu0 0.0
      %v6085 = vand.u32 %v198, 4294901760
      %6086 = vmatmul.mubr.f32.gmra.mxu0 %v6085
      %v6087 = vpop.f32.mrf.mxu0
      %v6088 = vadd.f32 %v5969, %v6087
      %v6089 = vpop.f32.mrf.mxu0
      %6090 = vdwg.mxu0
      %6091 = vmatprep.subr.mxu0 0.0
      %v6092 = vand.u32 %v406, 4294901760
      %6093 = vmatpush1.msra.mxu0 %v6092
      %6094 = vmatprep.subr.mxu0 0.0
      %v6095 = vand.u32 %v393, 4294901760
      %6096 = vmatpush1.msra.mxu0 %v6095
      %6097 = vmatprep.subr.mxu0 0.0
      %v6098 = vand.u32 %v380, 4294901760
      %6099 = vmatpush1.msra.mxu0 %v6098
      %6100 = vmatprep.subr.mxu0 0.0
      %v6101 = vand.u32 %v367, 4294901760
      %6102 = vmatpush1.msra.mxu0 %v6101
      %6103 = vmatprep.subr.mxu0 0.0
      %v6104 = vand.u32 %v354, 4294901760
      %6105 = vmatpush1.msra.mxu0 %v6104
      %6106 = vmatprep.subr.mxu0 0.0
      %v6107 = vand.u32 %v341, 4294901760
      %6108 = vmatpush1.msra.mxu0 %v6107
      %6109 = vmatprep.subr.mxu0 0.0
      %v6110 = vand.u32 %v328, 4294901760
      %6111 = vmatpush1.msra.mxu0 %v6110
      %6112 = vmatprep.subr.mxu0 0.0
      %v6113 = vand.u32 %v315, 4294901760
      %6114 = vmatpush1.msra.mxu0 %v6113
      %6115 = vmatprep.subr.mxu0 0.0
      %v6116 = vand.u32 %v302, 4294901760
      %6117 = vmatpush1.msra.mxu0 %v6116
      %6118 = vmatprep.subr.mxu0 0.0
      %v6119 = vand.u32 %v289, 4294901760
      %6120 = vmatpush1.msra.mxu0 %v6119
      %6121 = vmatprep.subr.mxu0 0.0
      %v6122 = vand.u32 %v276, 4294901760
      %6123 = vmatpush1.msra.mxu0 %v6122
      %6124 = vmatprep.subr.mxu0 0.0
      %v6125 = vand.u32 %v263, 4294901760
      %6126 = vmatpush1.msra.mxu0 %v6125
      %6127 = vmatprep.subr.mxu0 0.0
      %v6128 = vand.u32 %v250, 4294901760
      %6129 = vmatpush1.msra.mxu0 %v6128
      %6130 = vmatprep.subr.mxu0 0.0
      %v6131 = vand.u32 %v237, 4294901760
      %6132 = vmatpush1.msra.mxu0 %v6131
      %6133 = vmatprep.subr.mxu0 0.0
      %v6134 = vand.u32 %v224, 4294901760
      %6135 = vmatpush1.msra.mxu0 %v6134
      %6136 = vmatprep.subr.mxu0 0.0
      %v6137 = vand.u32 %v211, 4294901760
      %6138 = vmatpush1.msra.mxu0 %v6137
      %6139 = vmatprep.subr.mxu0 0.0
      %6140 = vmatpush2.msra.mxu0 0.0
      %6141 = vmatprep.subr.mxu0 0.0
      %6142 = vmatpush2.msra.mxu0 0.0
      %6143 = vmatprep.subr.mxu0 0.0
      %6144 = vmatpush2.msra.mxu0 0.0
      %6145 = vmatprep.subr.mxu0 0.0
      %6146 = vmatpush2.msra.mxu0 0.0
      %6147 = vmatprep.subr.mxu0 0.0
      %6148 = vmatpush2.msra.mxu0 0.0
      %6149 = vmatprep.subr.mxu0 0.0
      %6150 = vmatpush2.msra.mxu0 0.0
      %6151 = vmatprep.subr.mxu0 0.0
      %6152 = vmatpush2.msra.mxu0 0.0
      %6153 = vmatprep.subr.mxu0 0.0
      %6154 = vmatpush2.msra.mxu0 0.0
      %6155 = vmatprep.subr.mxu0 0.0
      %6156 = vmatpush2.msra.mxu0 0.0
      %6157 = vmatprep.subr.mxu0 0.0
      %6158 = vmatpush2.msra.mxu0 0.0
      %6159 = vmatprep.subr.mxu0 0.0
      %6160 = vmatpush2.msra.mxu0 0.0
      %6161 = vmatprep.subr.mxu0 0.0
      %6162 = vmatpush2.msra.mxu0 0.0
      %6163 = vmatprep.subr.mxu0 0.0
      %6164 = vmatpush2.msra.mxu0 0.0
      %6165 = vmatprep.subr.mxu0 0.0
      %6166 = vmatpush2.msra.mxu0 0.0
      %6167 = vmatprep.subr.mxu0 0.0
      %6168 = vmatpush2.msra.mxu0 0.0
      %6169 = vmatprep.subr.mxu0 0.0
      %6170 = vmatpush2.msra.mxu0 0.0
      %6171 = vmatprep.mubr.f32.mxu0 0.0
      %v6172 = vand.u32 %v198, 4294901760
      %6173 = vmatmul.mubr.f32.gmra.mxu0 %v6172
      %v6174 = vpop.f32.mrf.mxu0
      %v6175 = vadd.f32 %v6088, %v6174
      %v6176 = vpop.f32.mrf.mxu0
      %6177 = vdwg.mxu0
      %v6178 = vadd.f32 %v1258, %v1260
      %v6179 = vadd.f32 %v6178, %v2113
      %v6180 = vadd.f32 %v6179, %v2115
      %v6181 = vadd.f32 %v6180, %v2968
      %v6182 = vadd.f32 %v6181, %v2970
      %v6183 = vadd.f32 %v6182, %v3823
      %v6184 = vadd.f32 %v6183, %v3825
      %v6185 = vadd.f32 %v6184, %v4678
      %v6186 = vadd.f32 %v6185, %v4680
      %v6187 = vadd.f32 %v6186, %v5533
      %v6188 = vadd.f32 %v6187, %v5535
      %v6189 = vadd.f32 %v6188, %v6175
      %6190 = vadd.xlane.f32.xlu0 %v6189
      %v6191 = vpop.xlane.xlu0 %6190
      %v6192 = vmul.f32 %v6191, 0.0006349206
      %v6193 = vld [vmem:[%s2] sm:$0xff]
      %v6194 = vld [vmem:[%s3] sm:$0xff]
      %v6195 = vlaneseq
      %v6196 = vshrl.u32 %v6195, 7
      %v6197 = vsub.s32 0, %v6196
      %v6198 = vrot.slane %v6192, %v6197
      %v6199 = vmul.f32 %v6193, %v6198
      %v6200 = vadd.f32 %v6194, %v6199
      %v6201 = vlaneseq
      %v6202 = vshrl.u32 %v6201, 7
      %v6203 = vsub.s32 1, %v6202
      %v6204 = vrot.slane %v6192, %v6203
      %v6205 = vmul.f32 %v6193, %v6204
      %6207 = vrot.lane.b32.xlu0 %v6205, 127
      %v6208 = vpop.permute.xlu0 %6207
      %v6210 = vadd.f32 %v6200, %v6208
      %v6211 = vlaneseq
      %v6212 = vshrl.u32 %v6211, 7
      %v6213 = vsub.s32 2, %v6212
      %v6214 = vrot.slane %v6192, %v6213
      %v6215 = vmul.f32 %v6193, %v6214
      %6217 = vrot.lane.b32.xlu0 %v6215, 126
      %v6218 = vpop.permute.xlu0 %6217
      %v6220 = vadd.f32 %v6210, %v6218
      %v6221 = vlaneseq
      %v6222 = vshrl.u32 %v6221, 7
      %v6223 = vsub.s32 3, %v6222
      %v6224 = vrot.slane %v6192, %v6223
      %v6225 = vmul.f32 %v6193, %v6224
      %6227 = vrot.lane.b32.xlu0 %v6225, 125
      %v6228 = vpop.permute.xlu0 %6227
      %v6230 = vadd.f32 %v6220, %v6228
      %v6231 = vxor.u32 %v6230, 2147483648
      %v6232 = vmul.f32 %v6231, 1.442695
      %v6233 = vpow.pop %v6232
      %v6234 = vadd.f32 %v6233, 1.0
      %v6235 = vrcp.pop %v6234
      %v6236 = vmul.f32 1.0, %v6235
      %6238 = vset.pattern.permute.xlu0 0
      %6239 = vperm.xlu0 %6238, %v6236
      %v6240 = vpop.permute.xlu0 %6239
      %v6242 = vmul.f32 %v1258, %v6240
      %v6243 = vmul.f32 %v1260, %v6240
      %v6244 = vmul.f32 %v2113, %v6240
      %v6245 = vmul.f32 %v2115, %v6240
      %v6246 = vmul.f32 %v2968, %v6240
      %v6247 = vmul.f32 %v2970, %v6240
      %v6248 = vmul.f32 %v3823, %v6240
      %v6249 = vmul.f32 %v3825, %v6240
      %v6250 = vmul.f32 %v4678, %v6240
      %v6251 = vmul.f32 %v4680, %v6240
      %v6252 = vmul.f32 %v5533, %v6240
      %v6253 = vmul.f32 %v5535, %v6240
      %v6254 = vmul.f32 %v6175, %v6240
      %v6255 = vmax.f32 %v6242, 0.0
      %v6256 = vmax.f32 %v6243, 0.0
      %v6257 = vmax.f32 %v6244, 0.0
      %v6258 = vmax.f32 %v6245, 0.0
      %v6259 = vmax.f32 %v6246, 0.0
      %v6260 = vmax.f32 %v6247, 0.0
      %v6261 = vmax.f32 %v6248, 0.0
      %v6262 = vmax.f32 %v6249, 0.0
      %v6263 = vmax.f32 %v6250, 0.0
      %v6264 = vmax.f32 %v6251, 0.0
      %v6265 = vmax.f32 %v6252, 0.0
      %v6266 = vmax.f32 %v6253, 0.0
      %v6267 = vmax.f32 %v6254, 0.0
      %6268 = vst [vmem:[%s197] sm:$0xff] %v6255
      %6269 = vst [vmem:[%s197 + $0x8] sm:$0xff] %v6256
      %6270 = vst [vmem:[%s197 + $0x10] sm:$0xff] %v6257
      %6271 = vst [vmem:[%s197 + $0x18] sm:$0xff] %v6258
      %6272 = vst [vmem:[%s197 + $0x20] sm:$0xff] %v6259
      %6273 = vst [vmem:[%s197 + $0x28] sm:$0xff] %v6260
      %6274 = vst [vmem:[%s197 + $0x30] sm:$0xff] %v6261
      %6275 = vst [vmem:[%s197 + $0x38] sm:$0xff] %v6262
      %6276 = vst [vmem:[%s197 + $0x40] sm:$0xff] %v6263
      %6277 = vst [vmem:[%s197 + $0x48] sm:$0xff] %v6264
      %6278 = vst [vmem:[%s197 + $0x50] sm:$0xff] %v6265
      %6279 = vst [vmem:[%s197 + $0x58] sm:$0xff] %v6266
      %6280 = vst [vmem:[%s197 + $0x60] sm:$0xff] %v6267
      %p6281 = scmp.lt.s32.totalorder %s15, 1
      %s6282 = scalar_select %p6281, %s15, 1
      %s6283 = smul.addr %s6282, 13
      %s6284 = smul.addr %s6283, 8
      %s6285 = scalar_lea.vmem %s4, %s6284
      // Predicated region
      $region37: #{bin_conv_transpose3d.1} parent=35 // pred_check
        %p6286 = pneg %p122
      $region38: #{bin_conv_transpose3d.1} parent=35 // pred_check_branch
        %6288 = sbr.rel (%p6286) target = $region40
      $region39: #{bin_conv_transpose3d.1} parent=35 // pred_region
        _
      $region40: #{bin_conv_transpose3d.1} parent=35 // pred_fallthru
        _
    $region36: #{bin_conv_transpose3d.1} parent=5 // pred_fallthru
      _
    %p6289 = scmp.le.s32.totalorder 2, %s10
    // Predicated region
    $region41: #{bin_conv_transpose3d.1} parent=5 // pred_check
      %p6290 = pneg %p6289
    $region42: #{bin_conv_transpose3d.1} parent=5 // pred_check_branch
      %6292 = sbr.rel (%p6290) target = $region44
    $region43: #{bin_conv_transpose3d.1} parent=5 // pred_region
      %s6293 = ssub.s32 %s10, 2
      // Predicated region
      $region45: #{bin_conv_transpose3d.1} parent=43 // pred_check
        %p6294 = pneg %p128
      $region46: #{bin_conv_transpose3d.1} parent=43 // pred_check_branch
        %6296 = sbr.rel (%p6294) target = $region48
      $region47: #{bin_conv_transpose3d.1} parent=43 // pred_region
        %p6297 = scmp.lt.s32.totalorder %s16, 1
        %s6298 = scalar_select %p6297, %s16, 1
        %s6299 = smul.addr %s6298, 13
        %s6300 = smul.addr %s6299, 8
        %s6301 = scalar_lea.vmem %s4, %s6300
      $region48: #{bin_conv_transpose3d.1} parent=43 // pred_fallthru
        _
    $region44: #{bin_conv_transpose3d.1} parent=5 // pred_fallthru
      _
  $region6: #{bin_conv_transpose3d.1} parent=0 // loop_footer
    %s14 = sadd.s32 1, %s10
  $region7: #{bin_conv_transpose3d.1} parent=0 // loop_footer_branch
    %9 = sbr.rel target = $region3
  $region8: #{bin_conv_transpose3d.1} parent=0 // loop_exit
    _

</llo_original>
